<compile_context>
chip_gen: v7x
topology: tpu7x:2x2x1
jax: 0.10.0
libtpu: 0.0.40
codegen_flags: <defaults>
</compile_context>

<pallas_src>
import functools

import jax
import jax.numpy as jnp
from jax import lax
from jax.experimental import pallas as pl
from jax.experimental.pallas import tpu as pltpu

TN = 128     # output-channel tile width (lane-dense)
LANE = 128   # lane width for activation-channel padding


def _round_up(x, m):
    return (x + m - 1) // m * m


def _pick_rh(ho, wo, target_rows=128):
    """Largest divisor of `ho` whose row chunk (rh*wo output pixels) stays at
    ~128 rows, so the per-chunk (rh*wo, TN) f32 accumulator fits in vregs."""
    best = 1
    for r in range(1, ho + 1):
        if ho % r == 0 and r * wo <= target_rows:
            best = r
    return best


# --------------------------------------------------------------------------
# Fused kernel: 3x3 conv (stride 1, pad 1; bf16 MXU operands, f32 accumulate)
#               + train-mode BatchNorm + optional residual add + optional ReLU
# Grid: one step per 128-wide output-channel tile ("parallel").
# --------------------------------------------------------------------------
def _conv3x3_bn_act_kernel(x_ref, w_ref, g_ref, beta_ref, *rest,
                           rh, relu, add_res, eps):
    """
    x_ref    : (B, Hp, Wp, Cinp)   bf16, spatially zero-padded NHWC input
    w_ref    : (9*Cinp, TN)        bf16, one output-channel tile of the weights
    g_ref    : (1, TN)             f32 BN gamma   (lane padded with zeros)
    beta_ref : (1, TN)             f32 BN beta    (lane padded with zeros)
    res_ref  : (B, Ho, Wo, TN)     bf16 residual (only when add_res)
    o_ref    : (B, Ho, Wo, TN)     bf16/f32 output
    conv_ref : (B, Ho, Wo, TN)     f32 VMEM scratch holding the raw conv result
    sum_ref  : (1, TN)             f32 VMEM scratch, per-channel sum partials
    sq_ref   : (1, TN)             f32 VMEM scratch, per-channel sum-of-squares
    """
    if add_res:
        res_ref, o_ref, conv_ref, sum_ref, sq_ref = rest
    else:
        o_ref, conv_ref, sum_ref, sq_ref = rest

    bsz, ho, wo, tn = conv_ref.shape
    cinp = x_ref.shape[3]
    chunk_m = rh * wo
    chunks_per_b = ho // rh
    m_total = bsz * ho * wo

    sum_ref[...] = jnp.zeros_like(sum_ref)
    sq_ref[...] = jnp.zeros_like(sq_ref)

    # ---- Phase 1: conv, M-chunked. Accumulator lives in vregs across the
    #      9 taps; one store per chunk + (1, TN) BN partials.
    for b in range(bsz):                                   # static, B is small
        def p1_body(ci, carry, b=b):
            h0 = ci * rh
            acc = jnp.zeros((chunk_m, tn), jnp.float32)
            for di in range(3):
                # one aligned row-block load per kh tap; kw shifts are static
                # slices of the register-resident value (no per-tap reload)
                rb = x_ref[b, pl.ds(h0 + di, rh), :, :]    # (rh, Wp, Cinp) bf16
                for dj in range(3):
                    win = rb[:, dj:dj + wo, :].reshape(chunk_m, cinp)
                    t = di * 3 + dj
                    acc = acc + jnp.dot(
                        win, w_ref[t * cinp:(t + 1) * cinp, :],
                        preferred_element_type=jnp.float32)
            conv_ref[b, pl.ds(h0, rh), :, :] = acc.reshape(rh, wo, tn)
            sum_ref[...] += jnp.sum(acc, axis=0, keepdims=True)
            sq_ref[...] += jnp.sum(acc * acc, axis=0, keepdims=True)
            return carry
        lax.fori_loop(0, chunks_per_b, p1_body, 0)

    # ---- Train-mode BatchNorm affine from the partials (biased variance).
    #      Conv bias omitted: the batch-mean subtraction cancels it exactly.
    inv_m = 1.0 / m_total
    mean = sum_ref[...] * inv_m                            # (1, TN)
    var = sq_ref[...] * inv_m - mean * mean
    scale = g_ref[...] * lax.rsqrt(var + eps)
    shift = beta_ref[...] - mean * scale
    scale3 = scale.reshape(1, 1, tn)
    shift3 = shift.reshape(1, 1, tn)

    # ---- Phase 2: normalize (+ residual) (+ ReLU), lane-dense aligned stores.
    for b in range(bsz):
        def p2_body(ci, carry, b=b):
            h0 = ci * rh
            y = conv_ref[b, pl.ds(h0, rh), :, :] * scale3 + shift3
            if add_res:
                y = y + res_ref[b, pl.ds(h0, rh), :, :].astype(jnp.float32)
            if relu:
                y = jnp.maximum(y, 0.0)
            o_ref[b, pl.ds(h0, rh), :, :] = y.astype(o_ref.dtype)
            return carry
        lax.fori_loop(0, chunks_per_b, p2_body, 0)


def _maybe_single_buffered_spec(shape, index_map):
    """Single-buffer a constant-index full-input block when supported."""
    if hasattr(pl, "Buffered"):
        try:
            return pl.BlockSpec(shape, index_map, pipeline_mode=pl.Buffered(1))
        except TypeError:
            pass
    return pl.BlockSpec(shape, index_map)


def conv3x3_bn_act(x_pad, cp, *, relu=True, residual=None,
                   out_dtype=jnp.float32, eps=1e-5):
    """Fused 3x3 conv (stride 1, pad 1) + train-mode BN [+ residual] [+ ReLU].

    x_pad    : (B, H+2, W+2, Cinp) bf16, spatially zero-padded, lane-padded NHWC
    residual : optional (B, H, W, Coutp) bf16
    returns  : (B, H, W, Coutp) `out_dtype`
    """
    B, Hp, Wp, cinp = x_pad.shape
    ho, wo = Hp - 2, Wp - 2
    kdim, coutp = cp['w'].shape
    assert kdim == 9 * cinp, (kdim, cinp)
    assert coutp % TN == 0, coutp
    rh = _pick_rh(ho, wo)

    add_res = residual is not None
    if add_res:
        assert residual.shape == (B, ho, wo, coutp), residual.shape

    in_specs = [
        _maybe_single_buffered_spec((B, Hp, Wp, cinp), lambda j: (0, 0, 0, 0)),
        pl.BlockSpec((9 * cinp, TN), lambda j: (0, j)),
        pl.BlockSpec((1, TN), lambda j: (0, j)),
        pl.BlockSpec((1, TN), lambda j: (0, j)),
    ]
    args = [x_pad, cp['w'], cp['gamma'], cp['beta']]
    if add_res:
        in_specs.append(pl.BlockSpec((B, ho, wo, TN), lambda j: (0, 0, 0, j)))
        args.append(residual)

    kern = functools.partial(_conv3x3_bn_act_kernel, rh=rh, relu=relu,
                             add_res=add_res, eps=eps)

    return pl.pallas_call(
        kern,
        out_shape=jax.ShapeDtypeStruct((B, ho, wo, coutp), out_dtype),
        grid_spec=pltpu.PrefetchScalarGridSpec(
            num_scalar_prefetch=0,
            grid=(coutp // TN,),
            in_specs=in_specs,
            out_specs=pl.BlockSpec((B, ho, wo, TN), lambda j: (0, 0, 0, j)),
            scratch_shapes=[pltpu.VMEM((B, ho, wo, TN), jnp.float32),
                            pltpu.VMEM((1, TN), jnp.float32),
                            pltpu.VMEM((1, TN), jnp.float32)]),
        compiler_params=pltpu.CompilerParams(
            dimension_semantics=("parallel",),
            vmem_limit_bytes=48 * 1024 * 1024),
    )(*args)


# --------------------------------------------------------------------------
# One-time parameter preparation (transpose / lane-pad / bf16-cast at init).
# --------------------------------------------------------------------------
def prepare_conv_bn(w, gamma, beta, *, cin_pad, cout_pad):
    """w: (Cout, Cin, 3, 3) PyTorch layout; gamma/beta: (Cout,)."""
    cout, cin, kh, kw = w.shape
    assert (kh, kw) == (3, 3)
    w_t = jnp.transpose(w.astype(jnp.float32), (2, 3, 1, 0))   # (3,3,Cin,Cout)
    w_pad = jnp.zeros((kh, kw, cin_pad, cout_pad), jnp.float32)
    w_pad = w_pad.at[:, :, :cin, :cout].set(w_t)
    w_mat = w_pad.reshape(kh * kw * cin_pad, cout_pad).astype(jnp.bfloat16)

    def pad_row(v):
        return jnp.zeros((1, cout_pad), jnp.float32).at[0, :cout].set(
            v.astype(jnp.float32))

    # NOTE: the nn.Conv2d bias is intentionally not a kernel parameter —
    # train-mode BatchNorm's mean subtraction cancels it exactly.
    return dict(w=w_mat, gamma=pad_row(gamma), beta=pad_row(beta))


# --------------------------------------------------------------------------
# Forward pass (mirrors RestNetBasicBlock.forward)
# --------------------------------------------------------------------------
def restnet_basic_block_forward(x_nchw, params, *, stride=1):
    # The residual add (x + output) only shape-checks with stride == 1 and
    # in_channels == out_channels, exactly as in the PyTorch module.
    assert stride == 1, "stride > 1 breaks the residual add (as in PyTorch)"
    B, cin, H, W = x_nchw.shape
    cinp = params['c1']['w'].shape[0] // 9          # lane-padded Cin (static)

    # One-time NHWC transpose + lane pad + bf16 cast; the dense bf16 array is
    # reused as conv2's residual (no per-call f32 repack), and its spatial pad
    # feeds conv1.
    x_nhwc = jnp.transpose(x_nchw, (0, 2, 3, 1)).astype(jnp.bfloat16)
    x_dense = jnp.zeros((B, H, W, cinp), jnp.bfloat16).at[..., :cin].set(x_nhwc)
    x_pad = jnp.pad(x_dense, ((0, 0), (1, 1), (1, 1), (0, 0)))

    # conv1 + BN + ReLU  (bf16 intermediate, consumed directly by conv2)
    h1 = conv3x3_bn_act(x_pad, params['c1'], relu=True, out_dtype=jnp.bfloat16)
    h1_pad = jnp.pad(h1, ((0, 0), (1, 1), (1, 1), (0, 0)))
    # conv2 + BN + residual + ReLU  (final, f32)
    out = conv3x3_bn_act(h1_pad, params['c2'], relu=True, residual=x_dense,
                         out_dtype=jnp.float32)

    out = out[..., :cin]                            # drop lane padding
    return jnp.transpose(out, (0, 3, 1, 2))         # back to NCHW


# --------------------------------------------------------------------------
# Pure-JAX reference (f32) and deterministic parameter init
# --------------------------------------------------------------------------
def _reference_forward(x_nchw, raw, *, eps=1e-5):
    def conv(x, w, b):
        y = lax.conv_general_dilated(
            x, w, window_strides=(1, 1), padding=((1, 1), (1, 1)),
            dimension_numbers=('NCHW', 'OIHW', 'NCHW'))
        return y + b[None, :, None, None]

    def bn(x, g, be):
        mean = jnp.mean(x, axis=(0, 2, 3), keepdims=True)
        var = jnp.mean((x - mean) ** 2, axis=(0, 2, 3), keepdims=True)
        return ((x - mean) * lax.rsqrt(var + eps) * g[None, :, None, None]
                + be[None, :, None, None])

    o = jax.nn.relu(bn(conv(x_nchw, raw['w1'], raw['b1']), raw['g1'], raw['be1']))
    o = bn(conv(o, raw['w2'], raw['b2']), raw['g2'], raw['be2'])
    return jax.nn.relu(x_nchw + o)


def init_params(key, channels):
    ks = jax.random.split(key, 8)
    std = (channels * 9) ** -0.5
    cin_pad = _round_up(channels, LANE)
    cout_pad = _round_up(channels, TN)

    def conv_w(k):
        return std * jax.random.normal(k, (channels, channels, 3, 3), jnp.float32)

    raw = dict(
        w1=conv_w(ks[0]),
        b1=0.05 * jax.random.normal(ks[1], (channels,), jnp.float32),
        g1=1.0 + 0.1 * jax.random.normal(ks[2], (channels,), jnp.float32),
        be1=0.05 * jax.random.normal(ks[3], (channels,), jnp.float32),
        w2=conv_w(ks[4]),
        b2=0.05 * jax.random.normal(ks[5], (channels,), jnp.float32),
        g2=1.0 + 0.1 * jax.random.normal(ks[6], (channels,), jnp.float32),
        be2=0.05 * jax.random.normal(ks[7], (channels,), jnp.float32),
    )
    prepared = dict(
        c1=prepare_conv_bn(raw['w1'], raw['g1'], raw['be1'],
                           cin_pad=cin_pad, cout_pad=cout_pad),
        c2=prepare_conv_bn(raw['w2'], raw['g2'], raw['be2'],
                           cin_pad=cout_pad, cout_pad=cout_pad),
    )
    return raw, prepared


# --------------------------------------------------------------------------
if __name__ == "__main__":
    batch, channels, height, width = 2, 16, 16, 16   # residual needs Cin == Cout

    root = jax.random.PRNGKey(0)
    k_params, k_x = jax.random.split(root)
    raw, params = init_params(k_params, channels)
    x = jax.random.normal(k_x, (batch, channels, height, width), jnp.float32)

    fwd = jax.jit(restnet_basic_block_forward)
    out = jax.block_until_ready(fwd(x, params))

    assert out.shape == (batch, channels, height, width), out.shape
    assert bool(jnp.all(jnp.isfinite(out)))

    # Correctness vs a pure-JAX f32 reference; the Pallas path feeds the MXU
    # bf16 operands (and a bf16 residual), so allow a small absolute tolerance.
    ref = _reference_forward(x, raw)
    max_err = float(jnp.max(jnp.abs(out - ref)))
    assert max_err < 0.1, f"max abs error vs reference = {max_err}"

    print("KERNEL_OK")
</pallas_src>

<mosaic_0001>
module attributes {stable_mosaic.version = 11 : i64} {
  func.func @_conv3x3_bn_act_kernel(%arg0: i32, %arg1: memref<2x18x18x128xbf16, #tpu.memory_space<vmem>>, %arg2: memref<1152x128xbf16, #tpu.memory_space<vmem>>, %arg3: memref<1x128xf32, #tpu.memory_space<vmem>>, %arg4: memref<1x128xf32, #tpu.memory_space<vmem>>, %arg5: memref<2x16x16x128xbf16, #tpu.memory_space<vmem>>, %arg6: memref<2x16x16x128xf32, #tpu.memory_space<vmem>>, %arg7: memref<1x128xf32, #tpu.memory_space<vmem>>, %arg8: memref<1x128xf32, #tpu.memory_space<vmem>>) attributes {dimension_semantics = [#tpu.dimension_semantics<parallel>], iteration_bounds = array<i64: 1>, scalar_prefetch = 0 : i64, scratch_operands = 3 : i64, tpu.core_type = #tpu.core_type<tc>, window_params = [{pipeline_mode = #tpu.pipeline_mode<synchronous>, transform_indices = @transform_0, window_bounds = array<i64: 2, 18, 18, 128>}, {transform_indices = @transform_1, window_bounds = array<i64: 1152, 128>}, {transform_indices = @transform_2, window_bounds = array<i64: 1, 128>}, {transform_indices = @transform_3, window_bounds = array<i64: 1, 128>}, {transform_indices = @transform_4, window_bounds = array<i64: 2, 16, 16, 128>}]} {
    %cst = arith.constant 0.000000e+00 : f32
    %0 = vector.broadcast %cst : f32 to vector<1x128xf32>
    %c0 = arith.constant 0 : index
    %c0_0 = arith.constant 0 : index
    %1 = vector.load %arg7[%c0, %c0_0] : memref<1x128xf32, #tpu.memory_space<vmem>>, vector<1x128xf32>
    tpu.vector_store %arg7[%c0, %c0_0], %0 {strides = array<i32>} : memref<1x128xf32, #tpu.memory_space<vmem>>, vector<1x128xf32>,
    %cst_1 = arith.constant 0.000000e+00 : f32
    %2 = vector.broadcast %cst_1 : f32 to vector<1x128xf32>
    %c0_2 = arith.constant 0 : index
    %c0_3 = arith.constant 0 : index
    %3 = vector.load %arg8[%c0_2, %c0_3] : memref<1x128xf32, #tpu.memory_space<vmem>>, vector<1x128xf32>
    tpu.vector_store %arg8[%c0_2, %c0_3], %2 {strides = array<i32>} : memref<1x128xf32, #tpu.memory_space<vmem>>, vector<1x128xf32>,
    %c0_i32 = arith.constant 0 : i32
    %c2_i32 = arith.constant 2 : i32
    %4 = arith.addi %c0_i32, %c2_i32 : i32
    %c1_i32 = arith.constant 1 : i32
    scf.for %arg9 = %c0_i32 to %4 step %c1_i32  : i32 {
      %c8_i32 = arith.constant 8 : i32
      %26 = arith.muli %arg9, %c8_i32 : i32
      %cst_28 = arith.constant 0.000000e+00 : f32
      %27 = vector.broadcast %cst_28 : f32 to vector<128x128xf32>
      %c0_i32_29 = arith.constant 0 : i32
      %28 = arith.addi %26, %c0_i32_29 : i32
      %c0_30 = arith.constant 0 : index
      %29 = arith.index_cast %28 : i32 to index
      %c0_31 = arith.constant 0 : index
      %c0_32 = arith.constant 0 : index
      %30 = vector.load %arg1[%c0_30, %29, %c0_31, %c0_32] : memref<2x18x18x128xbf16, #tpu.memory_space<vmem>>, vector<1x8x18x128xbf16>
      %31 = vector.shape_cast %30 : vector<1x8x18x128xbf16> to vector<8x18x128xbf16>
      %32 = vector.extract_strided_slice %31 {offsets = [0, 0, 0], sizes = [8, 16, 128], strides = [1, 1, 1]} : vector<8x18x128xbf16> to vector<8x16x128xbf16>
      %33 = vector.shape_cast %32 : vector<8x16x128xbf16> to vector<128x128xbf16>
      %c0_33 = arith.constant 0 : index
      %c0_34 = arith.constant 0 : index
      %34 = vector.load %arg2[%c0_33, %c0_34] : memref<1152x128xbf16, #tpu.memory_space<vmem>>, vector<128x128xbf16>
      %cst_35 = arith.constant dense<0.000000e+00> : vector<128x128xf32>
      %35 = tpu.matmul %33, %34, %cst_35 {dimension_numbers = #tpu.dot_dimension_numbers<[1], [0], [0], [1], [0, 0, 1, 1], [], []>} : vector<128x128xbf16>, vector<128x128xbf16>, vector<128x128xf32> -> vector<128x128xf32>
      %36 = arith.addf %27, %35 : vector<128x128xf32>
      %37 = vector.extract_strided_slice %31 {offsets = [0, 1, 0], sizes = [8, 16, 128], strides = [1, 1, 1]} : vector<8x18x128xbf16> to vector<8x16x128xbf16>
      %38 = vector.shape_cast %37 : vector<8x16x128xbf16> to vector<128x128xbf16>
      %c128 = arith.constant 128 : index
      %c0_36 = arith.constant 0 : index
      %39 = vector.load %arg2[%c128, %c0_36] : memref<1152x128xbf16, #tpu.memory_space<vmem>>, vector<128x128xbf16>
      %cst_37 = arith.constant dense<0.000000e+00> : vector<128x128xf32>
      %40 = tpu.matmul %38, %39, %cst_37 {dimension_numbers = #tpu.dot_dimension_numbers<[1], [0], [0], [1], [0, 0, 1, 1], [], []>} : vector<128x128xbf16>, vector<128x128xbf16>, vector<128x128xf32> -> vector<128x128xf32>
      %41 = arith.addf %36, %40 : vector<128x128xf32>
      %42 = vector.extract_strided_slice %31 {offsets = [0, 2, 0], sizes = [8, 16, 128], strides = [1, 1, 1]} : vector<8x18x128xbf16> to vector<8x16x128xbf16>
      %43 = vector.shape_cast %42 : vector<8x16x128xbf16> to vector<128x128xbf16>
      %c256 = arith.constant 256 : index
      %c0_38 = arith.constant 0 : index
      %44 = vector.load %arg2[%c256, %c0_38] : memref<1152x128xbf16, #tpu.memory_space<vmem>>, vector<128x128xbf16>
      %cst_39 = arith.constant dense<0.000000e+00> : vector<128x128xf32>
      %45 = tpu.matmul %43, %44, %cst_39 {dimension_numbers = #tpu.dot_dimension_numbers<[1], [0], [0], [1], [0, 0, 1, 1], [], []>} : vector<128x128xbf16>, vector<128x128xbf16>, vector<128x128xf32> -> vector<128x128xf32>
      %46 = arith.addf %41, %45 : vector<128x128xf32>
      %c1_i32_40 = arith.constant 1 : i32
      %47 = arith.addi %26, %c1_i32_40 : i32
      %c0_41 = arith.constant 0 : index
      %48 = arith.index_cast %47 : i32 to index
      %c0_42 = arith.constant 0 : index
      %c0_43 = arith.constant 0 : index
      %49 = vector.load %arg1[%c0_41, %48, %c0_42, %c0_43] : memref<2x18x18x128xbf16, #tpu.memory_space<vmem>>, vector<1x8x18x128xbf16>
      %50 = vector.shape_cast %49 : vector<1x8x18x128xbf16> to vector<8x18x128xbf16>
      %51 = vector.extract_strided_slice %50 {offsets = [0, 0, 0], sizes = [8, 16, 128], strides = [1, 1, 1]} : vector<8x18x128xbf16> to vector<8x16x128xbf16>
      %52 = vector.shape_cast %51 : vector<8x16x128xbf16> to vector<128x128xbf16>
      %c384 = arith.constant 384 : index
      %c0_44 = arith.constant 0 : index
      %53 = vector.load %arg2[%c384, %c0_44] : memref<1152x128xbf16, #tpu.memory_space<vmem>>, vector<128x128xbf16>
      %cst_45 = arith.constant dense<0.000000e+00> : vector<128x128xf32>
      %54 = tpu.matmul %52, %53, %cst_45 {dimension_numbers = #tpu.dot_dimension_numbers<[1], [0], [0], [1], [0, 0, 1, 1], [], []>} : vector<128x128xbf16>, vector<128x128xbf16>, vector<128x128xf32> -> vector<128x128xf32>
      %55 = arith.addf %46, %54 : vector<128x128xf32>
      %56 = vector.extract_strided_slice %50 {offsets = [0, 1, 0], sizes = [8, 16, 128], strides = [1, 1, 1]} : vector<8x18x128xbf16> to vector<8x16x128xbf16>
      %57 = vector.shape_cast %56 : vector<8x16x128xbf16> to vector<128x128xbf16>
      %c512 = arith.constant 512 : index
      %c0_46 = arith.constant 0 : index
      %58 = vector.load %arg2[%c512, %c0_46] : memref<1152x128xbf16, #tpu.memory_space<vmem>>, vector<128x128xbf16>
      %cst_47 = arith.constant dense<0.000000e+00> : vector<128x128xf32>
      %59 = tpu.matmul %57, %58, %cst_47 {dimension_numbers = #tpu.dot_dimension_numbers<[1], [0], [0], [1], [0, 0, 1, 1], [], []>} : vector<128x128xbf16>, vector<128x128xbf16>, vector<128x128xf32> -> vector<128x128xf32>
      %60 = arith.addf %55, %59 : vector<128x128xf32>
      %61 = vector.extract_strided_slice %50 {offsets = [0, 2, 0], sizes = [8, 16, 128], strides = [1, 1, 1]} : vector<8x18x128xbf16> to vector<8x16x128xbf16>
      %62 = vector.shape_cast %61 : vector<8x16x128xbf16> to vector<128x128xbf16>
      %c640 = arith.constant 640 : index
      %c0_48 = arith.constant 0 : index
      %63 = vector.load %arg2[%c640, %c0_48] : memref<1152x128xbf16, #tpu.memory_space<vmem>>, vector<128x128xbf16>
      %cst_49 = arith.constant dense<0.000000e+00> : vector<128x128xf32>
      %64 = tpu.matmul %62, %63, %cst_49 {dimension_numbers = #tpu.dot_dimension_numbers<[1], [0], [0], [1], [0, 0, 1, 1], [], []>} : vector<128x128xbf16>, vector<128x128xbf16>, vector<128x128xf32> -> vector<128x128xf32>
      %65 = arith.addf %60, %64 : vector<128x128xf32>
      %c2_i32_50 = arith.constant 2 : i32
      %66 = arith.addi %26, %c2_i32_50 : i32
      %c0_51 = arith.constant 0 : index
      %67 = arith.index_cast %66 : i32 to index
      %c0_52 = arith.constant 0 : index
      %c0_53 = arith.constant 0 : index
      %68 = vector.load %arg1[%c0_51, %67, %c0_52, %c0_53] : memref<2x18x18x128xbf16, #tpu.memory_space<vmem>>, vector<1x8x18x128xbf16>
      %69 = vector.shape_cast %68 : vector<1x8x18x128xbf16> to vector<8x18x128xbf16>
      %70 = vector.extract_strided_slice %69 {offsets = [0, 0, 0], sizes = [8, 16, 128], strides = [1, 1, 1]} : vector<8x18x128xbf16> to vector<8x16x128xbf16>
      %71 = vector.shape_cast %70 : vector<8x16x128xbf16> to vector<128x128xbf16>
      %c768 = arith.constant 768 : index
      %c0_54 = arith.constant 0 : index
      %72 = vector.load %arg2[%c768, %c0_54] : memref<1152x128xbf16, #tpu.memory_space<vmem>>, vector<128x128xbf16>
      %cst_55 = arith.constant dense<0.000000e+00> : vector<128x128xf32>
      %73 = tpu.matmul %71, %72, %cst_55 {dimension_numbers = #tpu.dot_dimension_numbers<[1], [0], [0], [1], [0, 0, 1, 1], [], []>} : vector<128x128xbf16>, vector<128x128xbf16>, vector<128x128xf32> -> vector<128x128xf32>
      %74 = arith.addf %65, %73 : vector<128x128xf32>
      %75 = vector.extract_strided_slice %69 {offsets = [0, 1, 0], sizes = [8, 16, 128], strides = [1, 1, 1]} : vector<8x18x128xbf16> to vector<8x16x128xbf16>
      %76 = vector.shape_cast %75 : vector<8x16x128xbf16> to vector<128x128xbf16>
      %c896 = arith.constant 896 : index
      %c0_56 = arith.constant 0 : index
      %77 = vector.load %arg2[%c896, %c0_56] : memref<1152x128xbf16, #tpu.memory_space<vmem>>, vector<128x128xbf16>
      %cst_57 = arith.constant dense<0.000000e+00> : vector<128x128xf32>
      %78 = tpu.matmul %76, %77, %cst_57 {dimension_numbers = #tpu.dot_dimension_numbers<[1], [0], [0], [1], [0, 0, 1, 1], [], []>} : vector<128x128xbf16>, vector<128x128xbf16>, vector<128x128xf32> -> vector<128x128xf32>
      %79 = arith.addf %74, %78 : vector<128x128xf32>
      %80 = vector.extract_strided_slice %69 {offsets = [0, 2, 0], sizes = [8, 16, 128], strides = [1, 1, 1]} : vector<8x18x128xbf16> to vector<8x16x128xbf16>
      %81 = vector.shape_cast %80 : vector<8x16x128xbf16> to vector<128x128xbf16>
      %c1024 = arith.constant 1024 : index
      %c0_58 = arith.constant 0 : index
      %82 = vector.load %arg2[%c1024, %c0_58] : memref<1152x128xbf16, #tpu.memory_space<vmem>>, vector<128x128xbf16>
      %cst_59 = arith.constant dense<0.000000e+00> : vector<128x128xf32>
      %83 = tpu.matmul %81, %82, %cst_59 {dimension_numbers = #tpu.dot_dimension_numbers<[1], [0], [0], [1], [0, 0, 1, 1], [], []>} : vector<128x128xbf16>, vector<128x128xbf16>, vector<128x128xf32> -> vector<128x128xf32>
      %84 = arith.addf %79, %83 : vector<128x128xf32>
      %85 = vector.shape_cast %84 : vector<128x128xf32> to vector<8x16x128xf32>
      %c0_60 = arith.constant 0 : index
      %86 = arith.index_cast %26 : i32 to index
      %c0_61 = arith.constant 0 : index
      %c0_62 = arith.constant 0 : index
      %87 = vector.load %arg6[%c0_60, %86, %c0_61, %c0_62] : memref<2x16x16x128xf32, #tpu.memory_space<vmem>>, vector<1x8x16x128xf32>
      %88 = vector.shape_cast %87 : vector<1x8x16x128xf32> to vector<8x16x128xf32>
      %89 = vector.shape_cast %85 : vector<8x16x128xf32> to vector<1x8x16x128xf32>
      tpu.vector_store %arg6[%c0_60, %86, %c0_61, %c0_62], %89 {strides = array<i32>} : memref<2x16x16x128xf32, #tpu.memory_space<vmem>>, vector<1x8x16x128xf32>,
      %c0_63 = arith.constant 0 : index
      %c0_64 = arith.constant 0 : index
      %90 = vector.load %arg7[%c0_63, %c0_64] : memref<1x128xf32, #tpu.memory_space<vmem>>, vector<1x128xf32>
      %cst_65 = arith.constant dense<0.000000e+00> : vector<128xf32>
      %91 = vector.multi_reduction <add>, %84, %cst_65 [0] : vector<128x128xf32> to vector<128xf32>
      %92 = vector.shape_cast %91 : vector<128xf32> to vector<1x128xf32>
      %93 = arith.addf %90, %92 : vector<1x128xf32>
      %c0_66 = arith.constant 0 : index
      %c0_67 = arith.constant 0 : index
      %94 = vector.load %arg7[%c0_66, %c0_67] : memref<1x128xf32, #tpu.memory_space<vmem>>, vector<1x128xf32>
      tpu.vector_store %arg7[%c0_66, %c0_67], %93 {strides = array<i32>} : memref<1x128xf32, #tpu.memory_space<vmem>>, vector<1x128xf32>,
      %c0_68 = arith.constant 0 : index
      %c0_69 = arith.constant 0 : index
      %95 = vector.load %arg8[%c0_68, %c0_69] : memref<1x128xf32, #tpu.memory_space<vmem>>, vector<1x128xf32>
      %96 = arith.mulf %84, %84 : vector<128x128xf32>
      %cst_70 = arith.constant dense<0.000000e+00> : vector<128xf32>
      %97 = vector.multi_reduction <add>, %96, %cst_70 [0] : vector<128x128xf32> to vector<128xf32>
      %98 = vector.shape_cast %97 : vector<128xf32> to vector<1x128xf32>
      %99 = arith.addf %95, %98 : vector<1x128xf32>
      %c0_71 = arith.constant 0 : index
      %c0_72 = arith.constant 0 : index
      %100 = vector.load %arg8[%c0_71, %c0_72] : memref<1x128xf32, #tpu.memory_space<vmem>>, vector<1x128xf32>
      tpu.vector_store %arg8[%c0_71, %c0_72], %99 {strides = array<i32>} : memref<1x128xf32, #tpu.memory_space<vmem>>, vector<1x128xf32>,
    }
    %c2_i32_4 = arith.constant 2 : i32
    %c0_i32_5 = arith.constant 0 : i32
    %c2_i32_6 = arith.constant 2 : i32
    %5 = arith.addi %c0_i32_5, %c2_i32_6 : i32
    %c1_i32_7 = arith.constant 1 : i32
    scf.for %arg9 = %c0_i32_5 to %5 step %c1_i32_7  : i32 {
      %c8_i32 = arith.constant 8 : i32
      %26 = arith.muli %arg9, %c8_i32 : i32
      %cst_28 = arith.constant 0.000000e+00 : f32
      %27 = vector.broadcast %cst_28 : f32 to vector<128x128xf32>
      %c0_i32_29 = arith.constant 0 : i32
      %28 = arith.addi %26, %c0_i32_29 : i32
      %c1 = arith.constant 1 : index
      %29 = arith.index_cast %28 : i32 to index
      %c0_30 = arith.constant 0 : index
      %c0_31 = arith.constant 0 : index
      %30 = vector.load %arg1[%c1, %29, %c0_30, %c0_31] : memref<2x18x18x128xbf16, #tpu.memory_space<vmem>>, vector<1x8x18x128xbf16>
      %31 = vector.shape_cast %30 : vector<1x8x18x128xbf16> to vector<8x18x128xbf16>
      %32 = vector.extract_strided_slice %31 {offsets = [0, 0, 0], sizes = [8, 16, 128], strides = [1, 1, 1]} : vector<8x18x128xbf16> to vector<8x16x128xbf16>
      %33 = vector.shape_cast %32 : vector<8x16x128xbf16> to vector<128x128xbf16>
      %c0_32 = arith.constant 0 : index
      %c0_33 = arith.constant 0 : index
      %34 = vector.load %arg2[%c0_32, %c0_33] : memref<1152x128xbf16, #tpu.memory_space<vmem>>, vector<128x128xbf16>
      %cst_34 = arith.constant dense<0.000000e+00> : vector<128x128xf32>
      %35 = tpu.matmul %33, %34, %cst_34 {dimension_numbers = #tpu.dot_dimension_numbers<[1], [0], [0], [1], [0, 0, 1, 1], [], []>} : vector<128x128xbf16>, vector<128x128xbf16>, vector<128x128xf32> -> vector<128x128xf32>
      %36 = arith.addf %27, %35 : vector<128x128xf32>
      %37 = vector.extract_strided_slice %31 {offsets = [0, 1, 0], sizes = [8, 16, 128], strides = [1, 1, 1]} : vector<8x18x128xbf16> to vector<8x16x128xbf16>
      %38 = vector.shape_cast %37 : vector<8x16x128xbf16> to vector<128x128xbf16>
      %c128 = arith.constant 128 : index
      %c0_35 = arith.constant 0 : index
      %39 = vector.load %arg2[%c128, %c0_35] : memref<1152x128xbf16, #tpu.memory_space<vmem>>, vector<128x128xbf16>
      %cst_36 = arith.constant dense<0.000000e+00> : vector<128x128xf32>
      %40 = tpu.matmul %38, %39, %cst_36 {dimension_numbers = #tpu.dot_dimension_numbers<[1], [0], [0], [1], [0, 0, 1, 1], [], []>} : vector<128x128xbf16>, vector<128x128xbf16>, vector<128x128xf32> -> vector<128x128xf32>
      %41 = arith.addf %36, %40 : vector<128x128xf32>
      %42 = vector.extract_strided_slice %31 {offsets = [0, 2, 0], sizes = [8, 16, 128], strides = [1, 1, 1]} : vector<8x18x128xbf16> to vector<8x16x128xbf16>
      %43 = vector.shape_cast %42 : vector<8x16x128xbf16> to vector<128x128xbf16>
      %c256 = arith.constant 256 : index
      %c0_37 = arith.constant 0 : index
      %44 = vector.load %arg2[%c256, %c0_37] : memref<1152x128xbf16, #tpu.memory_space<vmem>>, vector<128x128xbf16>
      %cst_38 = arith.constant dense<0.000000e+00> : vector<128x128xf32>
      %45 = tpu.matmul %43, %44, %cst_38 {dimension_numbers = #tpu.dot_dimension_numbers<[1], [0], [0], [1], [0, 0, 1, 1], [], []>} : vector<128x128xbf16>, vector<128x128xbf16>, vector<128x128xf32> -> vector<128x128xf32>
      %46 = arith.addf %41, %45 : vector<128x128xf32>
      %c1_i32_39 = arith.constant 1 : i32
      %47 = arith.addi %26, %c1_i32_39 : i32
      %c1_40 = arith.constant 1 : index
      %48 = arith.index_cast %47 : i32 to index
      %c0_41 = arith.constant 0 : index
      %c0_42 = arith.constant 0 : index
      %49 = vector.load %arg1[%c1_40, %48, %c0_41, %c0_42] : memref<2x18x18x128xbf16, #tpu.memory_space<vmem>>, vector<1x8x18x128xbf16>
      %50 = vector.shape_cast %49 : vector<1x8x18x128xbf16> to vector<8x18x128xbf16>
      %51 = vector.extract_strided_slice %50 {offsets = [0, 0, 0], sizes = [8, 16, 128], strides = [1, 1, 1]} : vector<8x18x128xbf16> to vector<8x16x128xbf16>
      %52 = vector.shape_cast %51 : vector<8x16x128xbf16> to vector<128x128xbf16>
      %c384 = arith.constant 384 : index
      %c0_43 = arith.constant 0 : index
      %53 = vector.load %arg2[%c384, %c0_43] : memref<1152x128xbf16, #tpu.memory_space<vmem>>, vector<128x128xbf16>
      %cst_44 = arith.constant dense<0.000000e+00> : vector<128x128xf32>
      %54 = tpu.matmul %52, %53, %cst_44 {dimension_numbers = #tpu.dot_dimension_numbers<[1], [0], [0], [1], [0, 0, 1, 1], [], []>} : vector<128x128xbf16>, vector<128x128xbf16>, vector<128x128xf32> -> vector<128x128xf32>
      %55 = arith.addf %46, %54 : vector<128x128xf32>
      %56 = vector.extract_strided_slice %50 {offsets = [0, 1, 0], sizes = [8, 16, 128], strides = [1, 1, 1]} : vector<8x18x128xbf16> to vector<8x16x128xbf16>
      %57 = vector.shape_cast %56 : vector<8x16x128xbf16> to vector<128x128xbf16>
      %c512 = arith.constant 512 : index
      %c0_45 = arith.constant 0 : index
      %58 = vector.load %arg2[%c512, %c0_45] : memref<1152x128xbf16, #tpu.memory_space<vmem>>, vector<128x128xbf16>
      %cst_46 = arith.constant dense<0.000000e+00> : vector<128x128xf32>
      %59 = tpu.matmul %57, %58, %cst_46 {dimension_numbers = #tpu.dot_dimension_numbers<[1], [0], [0], [1], [0, 0, 1, 1], [], []>} : vector<128x128xbf16>, vector<128x128xbf16>, vector<128x128xf32> -> vector<128x128xf32>
      %60 = arith.addf %55, %59 : vector<128x128xf32>
      %61 = vector.extract_strided_slice %50 {offsets = [0, 2, 0], sizes = [8, 16, 128], strides = [1, 1, 1]} : vector<8x18x128xbf16> to vector<8x16x128xbf16>
      %62 = vector.shape_cast %61 : vector<8x16x128xbf16> to vector<128x128xbf16>
      %c640 = arith.constant 640 : index
      %c0_47 = arith.constant 0 : index
      %63 = vector.load %arg2[%c640, %c0_47] : memref<1152x128xbf16, #tpu.memory_space<vmem>>, vector<128x128xbf16>
      %cst_48 = arith.constant dense<0.000000e+00> : vector<128x128xf32>
      %64 = tpu.matmul %62, %63, %cst_48 {dimension_numbers = #tpu.dot_dimension_numbers<[1], [0], [0], [1], [0, 0, 1, 1], [], []>} : vector<128x128xbf16>, vector<128x128xbf16>, vector<128x128xf32> -> vector<128x128xf32>
      %65 = arith.addf %60, %64 : vector<128x128xf32>
      %c2_i32_49 = arith.constant 2 : i32
      %66 = arith.addi %26, %c2_i32_49 : i32
      %c1_50 = arith.constant 1 : index
      %67 = arith.index_cast %66 : i32 to index
      %c0_51 = arith.constant 0 : index
      %c0_52 = arith.constant 0 : index
      %68 = vector.load %arg1[%c1_50, %67, %c0_51, %c0_52] : memref<2x18x18x128xbf16, #tpu.memory_space<vmem>>, vector<1x8x18x128xbf16>
      %69 = vector.shape_cast %68 : vector<1x8x18x128xbf16> to vector<8x18x128xbf16>
      %70 = vector.extract_strided_slice %69 {offsets = [0, 0, 0], sizes = [8, 16, 128], strides = [1, 1, 1]} : vector<8x18x128xbf16> to vector<8x16x128xbf16>
      %71 = vector.shape_cast %70 : vector<8x16x128xbf16> to vector<128x128xbf16>
      %c768 = arith.constant 768 : index
      %c0_53 = arith.constant 0 : index
      %72 = vector.load %arg2[%c768, %c0_53] : memref<1152x128xbf16, #tpu.memory_space<vmem>>, vector<128x128xbf16>
      %cst_54 = arith.constant dense<0.000000e+00> : vector<128x128xf32>
      %73 = tpu.matmul %71, %72, %cst_54 {dimension_numbers = #tpu.dot_dimension_numbers<[1], [0], [0], [1], [0, 0, 1, 1], [], []>} : vector<128x128xbf16>, vector<128x128xbf16>, vector<128x128xf32> -> vector<128x128xf32>
      %74 = arith.addf %65, %73 : vector<128x128xf32>
      %75 = vector.extract_strided_slice %69 {offsets = [0, 1, 0], sizes = [8, 16, 128], strides = [1, 1, 1]} : vector<8x18x128xbf16> to vector<8x16x128xbf16>
      %76 = vector.shape_cast %75 : vector<8x16x128xbf16> to vector<128x128xbf16>
      %c896 = arith.constant 896 : index
      %c0_55 = arith.constant 0 : index
      %77 = vector.load %arg2[%c896, %c0_55] : memref<1152x128xbf16, #tpu.memory_space<vmem>>, vector<128x128xbf16>
      %cst_56 = arith.constant dense<0.000000e+00> : vector<128x128xf32>
      %78 = tpu.matmul %76, %77, %cst_56 {dimension_numbers = #tpu.dot_dimension_numbers<[1], [0], [0], [1], [0, 0, 1, 1], [], []>} : vector<128x128xbf16>, vector<128x128xbf16>, vector<128x128xf32> -> vector<128x128xf32>
      %79 = arith.addf %74, %78 : vector<128x128xf32>
      %80 = vector.extract_strided_slice %69 {offsets = [0, 2, 0], sizes = [8, 16, 128], strides = [1, 1, 1]} : vector<8x18x128xbf16> to vector<8x16x128xbf16>
      %81 = vector.shape_cast %80 : vector<8x16x128xbf16> to vector<128x128xbf16>
      %c1024 = arith.constant 1024 : index
      %c0_57 = arith.constant 0 : index
      %82 = vector.load %arg2[%c1024, %c0_57] : memref<1152x128xbf16, #tpu.memory_space<vmem>>, vector<128x128xbf16>
      %cst_58 = arith.constant dense<0.000000e+00> : vector<128x128xf32>
      %83 = tpu.matmul %81, %82, %cst_58 {dimension_numbers = #tpu.dot_dimension_numbers<[1], [0], [0], [1], [0, 0, 1, 1], [], []>} : vector<128x128xbf16>, vector<128x128xbf16>, vector<128x128xf32> -> vector<128x128xf32>
      %84 = arith.addf %79, %83 : vector<128x128xf32>
      %85 = vector.shape_cast %84 : vector<128x128xf32> to vector<8x16x128xf32>
      %c1_59 = arith.constant 1 : index
      %86 = arith.index_cast %26 : i32 to index
      %c0_60 = arith.constant 0 : index
      %c0_61 = arith.constant 0 : index
      %87 = vector.load %arg6[%c1_59, %86, %c0_60, %c0_61] : memref<2x16x16x128xf32, #tpu.memory_space<vmem>>, vector<1x8x16x128xf32>
      %88 = vector.shape_cast %87 : vector<1x8x16x128xf32> to vector<8x16x128xf32>
      %89 = vector.shape_cast %85 : vector<8x16x128xf32> to vector<1x8x16x128xf32>
      tpu.vector_store %arg6[%c1_59, %86, %c0_60, %c0_61], %89 {strides = array<i32>} : memref<2x16x16x128xf32, #tpu.memory_space<vmem>>, vector<1x8x16x128xf32>,
      %c0_62 = arith.constant 0 : index
      %c0_63 = arith.constant 0 : index
      %90 = vector.load %arg7[%c0_62, %c0_63] : memref<1x128xf32, #tpu.memory_space<vmem>>, vector<1x128xf32>
      %cst_64 = arith.constant dense<0.000000e+00> : vector<128xf32>
      %91 = vector.multi_reduction <add>, %84, %cst_64 [0] : vector<128x128xf32> to vector<128xf32>
      %92 = vector.shape_cast %91 : vector<128xf32> to vector<1x128xf32>
      %93 = arith.addf %90, %92 : vector<1x128xf32>
      %c0_65 = arith.constant 0 : index
      %c0_66 = arith.constant 0 : index
      %94 = vector.load %arg7[%c0_65, %c0_66] : memref<1x128xf32, #tpu.memory_space<vmem>>, vector<1x128xf32>
      tpu.vector_store %arg7[%c0_65, %c0_66], %93 {strides = array<i32>} : memref<1x128xf32, #tpu.memory_space<vmem>>, vector<1x128xf32>,
      %c0_67 = arith.constant 0 : index
      %c0_68 = arith.constant 0 : index
      %95 = vector.load %arg8[%c0_67, %c0_68] : memref<1x128xf32, #tpu.memory_space<vmem>>, vector<1x128xf32>
      %96 = arith.mulf %84, %84 : vector<128x128xf32>
      %cst_69 = arith.constant dense<0.000000e+00> : vector<128xf32>
      %97 = vector.multi_reduction <add>, %96, %cst_69 [0] : vector<128x128xf32> to vector<128xf32>
      %98 = vector.shape_cast %97 : vector<128xf32> to vector<1x128xf32>
      %99 = arith.addf %95, %98 : vector<1x128xf32>
      %c0_70 = arith.constant 0 : index
      %c0_71 = arith.constant 0 : index
      %100 = vector.load %arg8[%c0_70, %c0_71] : memref<1x128xf32, #tpu.memory_space<vmem>>, vector<1x128xf32>
      tpu.vector_store %arg8[%c0_70, %c0_71], %99 {strides = array<i32>} : memref<1x128xf32, #tpu.memory_space<vmem>>, vector<1x128xf32>,
    }
    %c2_i32_8 = arith.constant 2 : i32
    %c0_9 = arith.constant 0 : index
    %c0_10 = arith.constant 0 : index
    %6 = vector.load %arg7[%c0_9, %c0_10] : memref<1x128xf32, #tpu.memory_space<vmem>>, vector<1x128xf32>
    %cst_11 = arith.constant 0.001953125 : f32
    %7 = vector.broadcast %cst_11 : f32 to vector<1x128xf32>
    %8 = arith.mulf %6, %7 : vector<1x128xf32>
    %c0_12 = arith.constant 0 : index
    %c0_13 = arith.constant 0 : index
    %9 = vector.load %arg8[%c0_12, %c0_13] : memref<1x128xf32, #tpu.memory_space<vmem>>, vector<1x128xf32>
    %cst_14 = arith.constant 0.001953125 : f32
    %10 = vector.broadcast %cst_14 : f32 to vector<1x128xf32>
    %11 = arith.mulf %9, %10 : vector<1x128xf32>
    %12 = arith.mulf %8, %8 : vector<1x128xf32>
    %13 = arith.subf %11, %12 : vector<1x128xf32>
    %c0_15 = arith.constant 0 : index
    %c0_16 = arith.constant 0 : index
    %14 = vector.load %arg3[%c0_15, %c0_16] : memref<1x128xf32, #tpu.memory_space<vmem>>, vector<1x128xf32>
    %cst_17 = arith.constant 9.99999974E-6 : f32
    %15 = vector.broadcast %cst_17 : f32 to vector<1x128xf32>
    %16 = arith.addf %13, %15 : vector<1x128xf32>
    %17 = math.rsqrt %16 : vector<1x128xf32>
    %18 = arith.mulf %14, %17 : vector<1x128xf32>
    %c0_18 = arith.constant 0 : index
    %c0_19 = arith.constant 0 : index
    %19 = vector.load %arg4[%c0_18, %c0_19] : memref<1x128xf32, #tpu.memory_space<vmem>>, vector<1x128xf32>
    %20 = arith.mulf %8, %18 : vector<1x128xf32>
    %21 = arith.subf %19, %20 : vector<1x128xf32>
    %22 = vector.shape_cast %18 : vector<1x128xf32> to vector<1x1x128xf32>
    %23 = vector.shape_cast %21 : vector<1x128xf32> to vector<1x1x128xf32>
    %c0_i32_20 = arith.constant 0 : i32
    %c2_i32_21 = arith.constant 2 : i32
    %24 = arith.addi %c0_i32_20, %c2_i32_21 : i32
    %c1_i32_22 = arith.constant 1 : i32
    scf.for %arg9 = %c0_i32_20 to %24 step %c1_i32_22  : i32 {
      %c8_i32 = arith.constant 8 : i32
      %26 = arith.muli %arg9, %c8_i32 : i32
      %c0_28 = arith.constant 0 : index
      %27 = arith.index_cast %26 : i32 to index
      %c0_29 = arith.constant 0 : index
      %c0_30 = arith.constant 0 : index
      %28 = vector.load %arg6[%c0_28, %27, %c0_29, %c0_30] : memref<2x16x16x128xf32, #tpu.memory_space<vmem>>, vector<1x8x16x128xf32>
      %29 = vector.shape_cast %28 : vector<1x8x16x128xf32> to vector<8x16x128xf32>
      %30 = vector.broadcast %22 : vector<1x1x128xf32> to vector<8x16x128xf32>
      %31 = arith.mulf %29, %30 : vector<8x16x128xf32>
      %32 = vector.broadcast %23 : vector<1x1x128xf32> to vector<8x16x128xf32>
      %33 = arith.addf %31, %32 : vector<8x16x128xf32>
      %cst_31 = arith.constant 0.000000e+00 : f32
      %34 = vector.broadcast %cst_31 : f32 to vector<8x16x128xf32>
      %35 = arith.maximumf %33, %34 : vector<8x16x128xf32>
      %36 = arith.truncf %35 : vector<8x16x128xf32> to vector<8x16x128xbf16>
      %c0_32 = arith.constant 0 : index
      %37 = arith.index_cast %26 : i32 to index
      %c0_33 = arith.constant 0 : index
      %c0_34 = arith.constant 0 : index
      %38 = vector.load %arg5[%c0_32, %37, %c0_33, %c0_34] : memref<2x16x16x128xbf16, #tpu.memory_space<vmem>>, vector<1x8x16x128xbf16>
      %39 = vector.shape_cast %38 : vector<1x8x16x128xbf16> to vector<8x16x128xbf16>
      %40 = vector.shape_cast %36 : vector<8x16x128xbf16> to vector<1x8x16x128xbf16>
      tpu.vector_store %arg5[%c0_32, %37, %c0_33, %c0_34], %40 {strides = array<i32>} : memref<2x16x16x128xbf16, #tpu.memory_space<vmem>>, vector<1x8x16x128xbf16>,
    }
    %c2_i32_23 = arith.constant 2 : i32
    %c0_i32_24 = arith.constant 0 : i32
    %c2_i32_25 = arith.constant 2 : i32
    %25 = arith.addi %c0_i32_24, %c2_i32_25 : i32
    %c1_i32_26 = arith.constant 1 : i32
    scf.for %arg9 = %c0_i32_24 to %25 step %c1_i32_26  : i32 {
      %c8_i32 = arith.constant 8 : i32
      %26 = arith.muli %arg9, %c8_i32 : i32
      %c1 = arith.constant 1 : index
      %27 = arith.index_cast %26 : i32 to index
      %c0_28 = arith.constant 0 : index
      %c0_29 = arith.constant 0 : index
      %28 = vector.load %arg6[%c1, %27, %c0_28, %c0_29] : memref<2x16x16x128xf32, #tpu.memory_space<vmem>>, vector<1x8x16x128xf32>
      %29 = vector.shape_cast %28 : vector<1x8x16x128xf32> to vector<8x16x128xf32>
      %30 = vector.broadcast %22 : vector<1x1x128xf32> to vector<8x16x128xf32>
      %31 = arith.mulf %29, %30 : vector<8x16x128xf32>
      %32 = vector.broadcast %23 : vector<1x1x128xf32> to vector<8x16x128xf32>
      %33 = arith.addf %31, %32 : vector<8x16x128xf32>
      %cst_30 = arith.constant 0.000000e+00 : f32
      %34 = vector.broadcast %cst_30 : f32 to vector<8x16x128xf32>
      %35 = arith.maximumf %33, %34 : vector<8x16x128xf32>
      %36 = arith.truncf %35 : vector<8x16x128xf32> to vector<8x16x128xbf16>
      %c1_31 = arith.constant 1 : index
      %37 = arith.index_cast %26 : i32 to index
      %c0_32 = arith.constant 0 : index
      %c0_33 = arith.constant 0 : index
      %38 = vector.load %arg5[%c1_31, %37, %c0_32, %c0_33] : memref<2x16x16x128xbf16, #tpu.memory_space<vmem>>, vector<1x8x16x128xbf16>
      %39 = vector.shape_cast %38 : vector<1x8x16x128xbf16> to vector<8x16x128xbf16>
      %40 = vector.shape_cast %36 : vector<8x16x128xbf16> to vector<1x8x16x128xbf16>
      tpu.vector_store %arg5[%c1_31, %37, %c0_32, %c0_33], %40 {strides = array<i32>} : memref<2x16x16x128xbf16, #tpu.memory_space<vmem>>, vector<1x8x16x128xbf16>,
    }
    %c2_i32_27 = arith.constant 2 : i32
    return
  }
  func.func @transform_0(%arg0: i32) -> (i32, i32, i32, i32) {
    %c0_i32 = arith.constant 0 : i32
    %c0_i32_0 = arith.constant 0 : i32
    %c0_i32_1 = arith.constant 0 : i32
    %c0_i32_2 = arith.constant 0 : i32
    %c0_i32_3 = arith.constant 0 : i32
    return %c0_i32, %c0_i32_0, %c0_i32_1, %c0_i32_2 : i32, i32, i32, i32
  }
  func.func @transform_1(%arg0: i32) -> (i32, i32) {
    %c0_i32 = arith.constant 0 : i32
    %c0_i32_0 = arith.constant 0 : i32
    return %c0_i32, %arg0 : i32, i32
  }
  func.func @transform_2(%arg0: i32) -> (i32, i32) {
    %c0_i32 = arith.constant 0 : i32
    %c0_i32_0 = arith.constant 0 : i32
    return %c0_i32, %arg0 : i32, i32
  }
  func.func @transform_3(%arg0: i32) -> (i32, i32) {
    %c0_i32 = arith.constant 0 : i32
    %c0_i32_0 = arith.constant 0 : i32
    return %c0_i32, %arg0 : i32, i32
  }
  func.func @transform_4(%arg0: i32) -> (i32, i32, i32, i32) {
    %c0_i32 = arith.constant 0 : i32
    %c0_i32_0 = arith.constant 0 : i32
    %c0_i32_1 = arith.constant 0 : i32
    %c0_i32_2 = arith.constant 0 : i32
    return %c0_i32, %c0_i32_0, %c0_i32_1, %arg0 : i32, i32, i32, i32
  }
}

module attributes {stable_mosaic.version = 11 : i64} {
  func.func @_conv3x3_bn_act_kernel(%arg0: i32, %arg1: memref<2x18x18x128xbf16, #tpu.memory_space<vmem>>, %arg2: memref<1152x128xbf16, #tpu.memory_space<vmem>>, %arg3: memref<1x128xf32, #tpu.memory_space<vmem>>, %arg4: memref<1x128xf32, #tpu.memory_space<vmem>>, %arg5: memref<2x16x16x128xbf16, #tpu.memory_space<vmem>>, %arg6: memref<2x16x16x128xf32, #tpu.memory_space<vmem>>, %arg7: memref<2x16x16x128xf32, #tpu.memory_space<vmem>>, %arg8: memref<1x128xf32, #tpu.memory_space<vmem>>, %arg9: memref<1x128xf32, #tpu.memory_space<vmem>>) attributes {dimension_semantics = [#tpu.dimension_semantics<parallel>], iteration_bounds = array<i64: 1>, scalar_prefetch = 0 : i64, scratch_operands = 3 : i64, tpu.core_type = #tpu.core_type<tc>, window_params = [{pipeline_mode = #tpu.pipeline_mode<synchronous>, transform_indices = @transform_0, window_bounds = array<i64: 2, 18, 18, 128>}, {transform_indices = @transform_1, window_bounds = array<i64: 1152, 128>}, {transform_indices = @transform_2, window_bounds = array<i64: 1, 128>}, {transform_indices = @transform_3, window_bounds = array<i64: 1, 128>}, {transform_indices = @transform_4, window_bounds = array<i64: 2, 16, 16, 128>}, {transform_indices = @transform_5, window_bounds = array<i64: 2, 16, 16, 128>}]} {
    %cst = arith.constant 0.000000e+00 : f32
    %0 = vector.broadcast %cst : f32 to vector<1x128xf32>
    %c0 = arith.constant 0 : index
    %c0_0 = arith.constant 0 : index
    %1 = vector.load %arg8[%c0, %c0_0] : memref<1x128xf32, #tpu.memory_space<vmem>>, vector<1x128xf32>
    tpu.vector_store %arg8[%c0, %c0_0], %0 {strides = array<i32>} : memref<1x128xf32, #tpu.memory_space<vmem>>, vector<1x128xf32>,
    %cst_1 = arith.constant 0.000000e+00 : f32
    %2 = vector.broadcast %cst_1 : f32 to vector<1x128xf32>
    %c0_2 = arith.constant 0 : index
    %c0_3 = arith.constant 0 : index
    %3 = vector.load %arg9[%c0_2, %c0_3] : memref<1x128xf32, #tpu.memory_space<vmem>>, vector<1x128xf32>
    tpu.vector_store %arg9[%c0_2, %c0_3], %2 {strides = array<i32>} : memref<1x128xf32, #tpu.memory_space<vmem>>, vector<1x128xf32>,
    %c0_i32 = arith.constant 0 : i32
    %c2_i32 = arith.constant 2 : i32
    %4 = arith.addi %c0_i32, %c2_i32 : i32
    %c1_i32 = arith.constant 1 : i32
    scf.for %arg10 = %c0_i32 to %4 step %c1_i32  : i32 {
      %c8_i32 = arith.constant 8 : i32
      %26 = arith.muli %arg10, %c8_i32 : i32
      %cst_28 = arith.constant 0.000000e+00 : f32
      %27 = vector.broadcast %cst_28 : f32 to vector<128x128xf32>
      %c0_i32_29 = arith.constant 0 : i32
      %28 = arith.addi %26, %c0_i32_29 : i32
      %c0_30 = arith.constant 0 : index
      %29 = arith.index_cast %28 : i32 to index
      %c0_31 = arith.constant 0 : index
      %c0_32 = arith.constant 0 : index
      %30 = vector.load %arg1[%c0_30, %29, %c0_31, %c0_32] : memref<2x18x18x128xbf16, #tpu.memory_space<vmem>>, vector<1x8x18x128xbf16>
      %31 = vector.shape_cast %30 : vector<1x8x18x128xbf16> to vector<8x18x128xbf16>
      %32 = vector.extract_strided_slice %31 {offsets = [0, 0, 0], sizes = [8, 16, 128], strides = [1, 1, 1]} : vector<8x18x128xbf16> to vector<8x16x128xbf16>
      %33 = vector.shape_cast %32 : vector<8x16x128xbf16> to vector<128x128xbf16>
      %c0_33 = arith.constant 0 : index
      %c0_34 = arith.constant 0 : index
      %34 = vector.load %arg2[%c0_33, %c0_34] : memref<1152x128xbf16, #tpu.memory_space<vmem>>, vector<128x128xbf16>
      %cst_35 = arith.constant dense<0.000000e+00> : vector<128x128xf32>
      %35 = tpu.matmul %33, %34, %cst_35 {dimension_numbers = #tpu.dot_dimension_numbers<[1], [0], [0], [1], [0, 0, 1, 1], [], []>} : vector<128x128xbf16>, vector<128x128xbf16>, vector<128x128xf32> -> vector<128x128xf32>
      %36 = arith.addf %27, %35 : vector<128x128xf32>
      %37 = vector.extract_strided_slice %31 {offsets = [0, 1, 0], sizes = [8, 16, 128], strides = [1, 1, 1]} : vector<8x18x128xbf16> to vector<8x16x128xbf16>
      %38 = vector.shape_cast %37 : vector<8x16x128xbf16> to vector<128x128xbf16>
      %c128 = arith.constant 128 : index
      %c0_36 = arith.constant 0 : index
      %39 = vector.load %arg2[%c128, %c0_36] : memref<1152x128xbf16, #tpu.memory_space<vmem>>, vector<128x128xbf16>
      %cst_37 = arith.constant dense<0.000000e+00> : vector<128x128xf32>
      %40 = tpu.matmul %38, %39, %cst_37 {dimension_numbers = #tpu.dot_dimension_numbers<[1], [0], [0], [1], [0, 0, 1, 1], [], []>} : vector<128x128xbf16>, vector<128x128xbf16>, vector<128x128xf32> -> vector<128x128xf32>
      %41 = arith.addf %36, %40 : vector<128x128xf32>
      %42 = vector.extract_strided_slice %31 {offsets = [0, 2, 0], sizes = [8, 16, 128], strides = [1, 1, 1]} : vector<8x18x128xbf16> to vector<8x16x128xbf16>
      %43 = vector.shape_cast %42 : vector<8x16x128xbf16> to vector<128x128xbf16>
      %c256 = arith.constant 256 : index
      %c0_38 = arith.constant 0 : index
      %44 = vector.load %arg2[%c256, %c0_38] : memref<1152x128xbf16, #tpu.memory_space<vmem>>, vector<128x128xbf16>
      %cst_39 = arith.constant dense<0.000000e+00> : vector<128x128xf32>
      %45 = tpu.matmul %43, %44, %cst_39 {dimension_numbers = #tpu.dot_dimension_numbers<[1], [0], [0], [1], [0, 0, 1, 1], [], []>} : vector<128x128xbf16>, vector<128x128xbf16>, vector<128x128xf32> -> vector<128x128xf32>
      %46 = arith.addf %41, %45 : vector<128x128xf32>
      %c1_i32_40 = arith.constant 1 : i32
      %47 = arith.addi %26, %c1_i32_40 : i32
      %c0_41 = arith.constant 0 : index
      %48 = arith.index_cast %47 : i32 to index
      %c0_42 = arith.constant 0 : index
      %c0_43 = arith.constant 0 : index
      %49 = vector.load %arg1[%c0_41, %48, %c0_42, %c0_43] : memref<2x18x18x128xbf16, #tpu.memory_space<vmem>>, vector<1x8x18x128xbf16>
      %50 = vector.shape_cast %49 : vector<1x8x18x128xbf16> to vector<8x18x128xbf16>
      %51 = vector.extract_strided_slice %50 {offsets = [0, 0, 0], sizes = [8, 16, 128], strides = [1, 1, 1]} : vector<8x18x128xbf16> to vector<8x16x128xbf16>
      %52 = vector.shape_cast %51 : vector<8x16x128xbf16> to vector<128x128xbf16>
      %c384 = arith.constant 384 : index
      %c0_44 = arith.constant 0 : index
      %53 = vector.load %arg2[%c384, %c0_44] : memref<1152x128xbf16, #tpu.memory_space<vmem>>, vector<128x128xbf16>
      %cst_45 = arith.constant dense<0.000000e+00> : vector<128x128xf32>
      %54 = tpu.matmul %52, %53, %cst_45 {dimension_numbers = #tpu.dot_dimension_numbers<[1], [0], [0], [1], [0, 0, 1, 1], [], []>} : vector<128x128xbf16>, vector<128x128xbf16>, vector<128x128xf32> -> vector<128x128xf32>
      %55 = arith.addf %46, %54 : vector<128x128xf32>
      %56 = vector.extract_strided_slice %50 {offsets = [0, 1, 0], sizes = [8, 16, 128], strides = [1, 1, 1]} : vector<8x18x128xbf16> to vector<8x16x128xbf16>
      %57 = vector.shape_cast %56 : vector<8x16x128xbf16> to vector<128x128xbf16>
      %c512 = arith.constant 512 : index
      %c0_46 = arith.constant 0 : index
      %58 = vector.load %arg2[%c512, %c0_46] : memref<1152x128xbf16, #tpu.memory_space<vmem>>, vector<128x128xbf16>
      %cst_47 = arith.constant dense<0.000000e+00> : vector<128x128xf32>
      %59 = tpu.matmul %57, %58, %cst_47 {dimension_numbers = #tpu.dot_dimension_numbers<[1], [0], [0], [1], [0, 0, 1, 1], [], []>} : vector<128x128xbf16>, vector<128x128xbf16>, vector<128x128xf32> -> vector<128x128xf32>
      %60 = arith.addf %55, %59 : vector<128x128xf32>
      %61 = vector.extract_strided_slice %50 {offsets = [0, 2, 0], sizes = [8, 16, 128], strides = [1, 1, 1]} : vector<8x18x128xbf16> to vector<8x16x128xbf16>
      %62 = vector.shape_cast %61 : vector<8x16x128xbf16> to vector<128x128xbf16>
      %c640 = arith.constant 640 : index
      %c0_48 = arith.constant 0 : index
      %63 = vector.load %arg2[%c640, %c0_48] : memref<1152x128xbf16, #tpu.memory_space<vmem>>, vector<128x128xbf16>
      %cst_49 = arith.constant dense<0.000000e+00> : vector<128x128xf32>
      %64 = tpu.matmul %62, %63, %cst_49 {dimension_numbers = #tpu.dot_dimension_numbers<[1], [0], [0], [1], [0, 0, 1, 1], [], []>} : vector<128x128xbf16>, vector<128x128xbf16>, vector<128x128xf32> -> vector<128x128xf32>
      %65 = arith.addf %60, %64 : vector<128x128xf32>
      %c2_i32_50 = arith.constant 2 : i32
      %66 = arith.addi %26, %c2_i32_50 : i32
      %c0_51 = arith.constant 0 : index
      %67 = arith.index_cast %66 : i32 to index
      %c0_52 = arith.constant 0 : index
      %c0_53 = arith.constant 0 : index
      %68 = vector.load %arg1[%c0_51, %67, %c0_52, %c0_53] : memref<2x18x18x128xbf16, #tpu.memory_space<vmem>>, vector<1x8x18x128xbf16>
      %69 = vector.shape_cast %68 : vector<1x8x18x128xbf16> to vector<8x18x128xbf16>
      %70 = vector.extract_strided_slice %69 {offsets = [0, 0, 0], sizes = [8, 16, 128], strides = [1, 1, 1]} : vector<8x18x128xbf16> to vector<8x16x128xbf16>
      %71 = vector.shape_cast %70 : vector<8x16x128xbf16> to vector<128x128xbf16>
      %c768 = arith.constant 768 : index
      %c0_54 = arith.constant 0 : index
      %72 = vector.load %arg2[%c768, %c0_54] : memref<1152x128xbf16, #tpu.memory_space<vmem>>, vector<128x128xbf16>
      %cst_55 = arith.constant dense<0.000000e+00> : vector<128x128xf32>
      %73 = tpu.matmul %71, %72, %cst_55 {dimension_numbers = #tpu.dot_dimension_numbers<[1], [0], [0], [1], [0, 0, 1, 1], [], []>} : vector<128x128xbf16>, vector<128x128xbf16>, vector<128x128xf32> -> vector<128x128xf32>
      %74 = arith.addf %65, %73 : vector<128x128xf32>
      %75 = vector.extract_strided_slice %69 {offsets = [0, 1, 0], sizes = [8, 16, 128], strides = [1, 1, 1]} : vector<8x18x128xbf16> to vector<8x16x128xbf16>
      %76 = vector.shape_cast %75 : vector<8x16x128xbf16> to vector<128x128xbf16>
      %c896 = arith.constant 896 : index
      %c0_56 = arith.constant 0 : index
      %77 = vector.load %arg2[%c896, %c0_56] : memref<1152x128xbf16, #tpu.memory_space<vmem>>, vector<128x128xbf16>
      %cst_57 = arith.constant dense<0.000000e+00> : vector<128x128xf32>
      %78 = tpu.matmul %76, %77, %cst_57 {dimension_numbers = #tpu.dot_dimension_numbers<[1], [0], [0], [1], [0, 0, 1, 1], [], []>} : vector<128x128xbf16>, vector<128x128xbf16>, vector<128x128xf32> -> vector<128x128xf32>
      %79 = arith.addf %74, %78 : vector<128x128xf32>
      %80 = vector.extract_strided_slice %69 {offsets = [0, 2, 0], sizes = [8, 16, 128], strides = [1, 1, 1]} : vector<8x18x128xbf16> to vector<8x16x128xbf16>
      %81 = vector.shape_cast %80 : vector<8x16x128xbf16> to vector<128x128xbf16>
      %c1024 = arith.constant 1024 : index
      %c0_58 = arith.constant 0 : index
      %82 = vector.load %arg2[%c1024, %c0_58] : memref<1152x128xbf16, #tpu.memory_space<vmem>>, vector<128x128xbf16>
      %cst_59 = arith.constant dense<0.000000e+00> : vector<128x128xf32>
      %83 = tpu.matmul %81, %82, %cst_59 {dimension_numbers = #tpu.dot_dimension_numbers<[1], [0], [0], [1], [0, 0, 1, 1], [], []>} : vector<128x128xbf16>, vector<128x128xbf16>, vector<128x128xf32> -> vector<128x128xf32>
      %84 = arith.addf %79, %83 : vector<128x128xf32>
      %85 = vector.shape_cast %84 : vector<128x128xf32> to vector<8x16x128xf32>
      %c0_60 = arith.constant 0 : index
      %86 = arith.index_cast %26 : i32 to index
      %c0_61 = arith.constant 0 : index
      %c0_62 = arith.constant 0 : index
      %87 = vector.load %arg7[%c0_60, %86, %c0_61, %c0_62] : memref<2x16x16x128xf32, #tpu.memory_space<vmem>>, vector<1x8x16x128xf32>
      %88 = vector.shape_cast %87 : vector<1x8x16x128xf32> to vector<8x16x128xf32>
      %89 = vector.shape_cast %85 : vector<8x16x128xf32> to vector<1x8x16x128xf32>
      tpu.vector_store %arg7[%c0_60, %86, %c0_61, %c0_62], %89 {strides = array<i32>} : memref<2x16x16x128xf32, #tpu.memory_space<vmem>>, vector<1x8x16x128xf32>,
      %c0_63 = arith.constant 0 : index
      %c0_64 = arith.constant 0 : index
      %90 = vector.load %arg8[%c0_63, %c0_64] : memref<1x128xf32, #tpu.memory_space<vmem>>, vector<1x128xf32>
      %cst_65 = arith.constant dense<0.000000e+00> : vector<128xf32>
      %91 = vector.multi_reduction <add>, %84, %cst_65 [0] : vector<128x128xf32> to vector<128xf32>
      %92 = vector.shape_cast %91 : vector<128xf32> to vector<1x128xf32>
      %93 = arith.addf %90, %92 : vector<1x128xf32>
      %c0_66 = arith.constant 0 : index
      %c0_67 = arith.constant 0 : index
      %94 = vector.load %arg8[%c0_66, %c0_67] : memref<1x128xf32, #tpu.memory_space<vmem>>, vector<1x128xf32>
      tpu.vector_store %arg8[%c0_66, %c0_67], %93 {strides = array<i32>} : memref<1x128xf32, #tpu.memory_space<vmem>>, vector<1x128xf32>,
      %c0_68 = arith.constant 0 : index
      %c0_69 = arith.constant 0 : index
      %95 = vector.load %arg9[%c0_68, %c0_69] : memref<1x128xf32, #tpu.memory_space<vmem>>, vector<1x128xf32>
      %96 = arith.mulf %84, %84 : vector<128x128xf32>
      %cst_70 = arith.constant dense<0.000000e+00> : vector<128xf32>
      %97 = vector.multi_reduction <add>, %96, %cst_70 [0] : vector<128x128xf32> to vector<128xf32>
      %98 = vector.shape_cast %97 : vector<128xf32> to vector<1x128xf32>
      %99 = arith.addf %95, %98 : vector<1x128xf32>
      %c0_71 = arith.constant 0 : index
      %c0_72 = arith.constant 0 : index
      %100 = vector.load %arg9[%c0_71, %c0_72] : memref<1x128xf32, #tpu.memory_space<vmem>>, vector<1x128xf32>
      tpu.vector_store %arg9[%c0_71, %c0_72], %99 {strides = array<i32>} : memref<1x128xf32, #tpu.memory_space<vmem>>, vector<1x128xf32>,
    }
    %c2_i32_4 = arith.constant 2 : i32
    %c0_i32_5 = arith.constant 0 : i32
    %c2_i32_6 = arith.constant 2 : i32
    %5 = arith.addi %c0_i32_5, %c2_i32_6 : i32
    %c1_i32_7 = arith.constant 1 : i32
    scf.for %arg10 = %c0_i32_5 to %5 step %c1_i32_7  : i32 {
      %c8_i32 = arith.constant 8 : i32
      %26 = arith.muli %arg10, %c8_i32 : i32
      %cst_28 = arith.constant 0.000000e+00 : f32
      %27 = vector.broadcast %cst_28 : f32 to vector<128x128xf32>
      %c0_i32_29 = arith.constant 0 : i32
      %28 = arith.addi %26, %c0_i32_29 : i32
      %c1 = arith.constant 1 : index
      %29 = arith.index_cast %28 : i32 to index
      %c0_30 = arith.constant 0 : index
      %c0_31 = arith.constant 0 : index
      %30 = vector.load %arg1[%c1, %29, %c0_30, %c0_31] : memref<2x18x18x128xbf16, #tpu.memory_space<vmem>>, vector<1x8x18x128xbf16>
      %31 = vector.shape_cast %30 : vector<1x8x18x128xbf16> to vector<8x18x128xbf16>
      %32 = vector.extract_strided_slice %31 {offsets = [0, 0, 0], sizes = [8, 16, 128], strides = [1, 1, 1]} : vector<8x18x128xbf16> to vector<8x16x128xbf16>
      %33 = vector.shape_cast %32 : vector<8x16x128xbf16> to vector<128x128xbf16>
      %c0_32 = arith.constant 0 : index
      %c0_33 = arith.constant 0 : index
      %34 = vector.load %arg2[%c0_32, %c0_33] : memref<1152x128xbf16, #tpu.memory_space<vmem>>, vector<128x128xbf16>
      %cst_34 = arith.constant dense<0.000000e+00> : vector<128x128xf32>
      %35 = tpu.matmul %33, %34, %cst_34 {dimension_numbers = #tpu.dot_dimension_numbers<[1], [0], [0], [1], [0, 0, 1, 1], [], []>} : vector<128x128xbf16>, vector<128x128xbf16>, vector<128x128xf32> -> vector<128x128xf32>
      %36 = arith.addf %27, %35 : vector<128x128xf32>
      %37 = vector.extract_strided_slice %31 {offsets = [0, 1, 0], sizes = [8, 16, 128], strides = [1, 1, 1]} : vector<8x18x128xbf16> to vector<8x16x128xbf16>
      %38 = vector.shape_cast %37 : vector<8x16x128xbf16> to vector<128x128xbf16>
      %c128 = arith.constant 128 : index
      %c0_35 = arith.constant 0 : index
      %39 = vector.load %arg2[%c128, %c0_35] : memref<1152x128xbf16, #tpu.memory_space<vmem>>, vector<128x128xbf16>
      %cst_36 = arith.constant dense<0.000000e+00> : vector<128x128xf32>
      %40 = tpu.matmul %38, %39, %cst_36 {dimension_numbers = #tpu.dot_dimension_numbers<[1], [0], [0], [1], [0, 0, 1, 1], [], []>} : vector<128x128xbf16>, vector<128x128xbf16>, vector<128x128xf32> -> vector<128x128xf32>
      %41 = arith.addf %36, %40 : vector<128x128xf32>
      %42 = vector.extract_strided_slice %31 {offsets = [0, 2, 0], sizes = [8, 16, 128], strides = [1, 1, 1]} : vector<8x18x128xbf16> to vector<8x16x128xbf16>
      %43 = vector.shape_cast %42 : vector<8x16x128xbf16> to vector<128x128xbf16>
      %c256 = arith.constant 256 : index
      %c0_37 = arith.constant 0 : index
      %44 = vector.load %arg2[%c256, %c0_37] : memref<1152x128xbf16, #tpu.memory_space<vmem>>, vector<128x128xbf16>
      %cst_38 = arith.constant dense<0.000000e+00> : vector<128x128xf32>
      %45 = tpu.matmul %43, %44, %cst_38 {dimension_numbers = #tpu.dot_dimension_numbers<[1], [0], [0], [1], [0, 0, 1, 1], [], []>} : vector<128x128xbf16>, vector<128x128xbf16>, vector<128x128xf32> -> vector<128x128xf32>
      %46 = arith.addf %41, %45 : vector<128x128xf32>
      %c1_i32_39 = arith.constant 1 : i32
      %47 = arith.addi %26, %c1_i32_39 : i32
      %c1_40 = arith.constant 1 : index
      %48 = arith.index_cast %47 : i32 to index
      %c0_41 = arith.constant 0 : index
      %c0_42 = arith.constant 0 : index
      %49 = vector.load %arg1[%c1_40, %48, %c0_41, %c0_42] : memref<2x18x18x128xbf16, #tpu.memory_space<vmem>>, vector<1x8x18x128xbf16>
      %50 = vector.shape_cast %49 : vector<1x8x18x128xbf16> to vector<8x18x128xbf16>
      %51 = vector.extract_strided_slice %50 {offsets = [0, 0, 0], sizes = [8, 16, 128], strides = [1, 1, 1]} : vector<8x18x128xbf16> to vector<8x16x128xbf16>
      %52 = vector.shape_cast %51 : vector<8x16x128xbf16> to vector<128x128xbf16>
      %c384 = arith.constant 384 : index
      %c0_43 = arith.constant 0 : index
      %53 = vector.load %arg2[%c384, %c0_43] : memref<1152x128xbf16, #tpu.memory_space<vmem>>, vector<128x128xbf16>
      %cst_44 = arith.constant dense<0.000000e+00> : vector<128x128xf32>
      %54 = tpu.matmul %52, %53, %cst_44 {dimension_numbers = #tpu.dot_dimension_numbers<[1], [0], [0], [1], [0, 0, 1, 1], [], []>} : vector<128x128xbf16>, vector<128x128xbf16>, vector<128x128xf32> -> vector<128x128xf32>
      %55 = arith.addf %46, %54 : vector<128x128xf32>
      %56 = vector.extract_strided_slice %50 {offsets = [0, 1, 0], sizes = [8, 16, 128], strides = [1, 1, 1]} : vector<8x18x128xbf16> to vector<8x16x128xbf16>
      %57 = vector.shape_cast %56 : vector<8x16x128xbf16> to vector<128x128xbf16>
      %c512 = arith.constant 512 : index
      %c0_45 = arith.constant 0 : index
      %58 = vector.load %arg2[%c512, %c0_45] : memref<1152x128xbf16, #tpu.memory_space<vmem>>, vector<128x128xbf16>
      %cst_46 = arith.constant dense<0.000000e+00> : vector<128x128xf32>
      %59 = tpu.matmul %57, %58, %cst_46 {dimension_numbers = #tpu.dot_dimension_numbers<[1], [0], [0], [1], [0, 0, 1, 1], [], []>} : vector<128x128xbf16>, vector<128x128xbf16>, vector<128x128xf32> -> vector<128x128xf32>
      %60 = arith.addf %55, %59 : vector<128x128xf32>
      %61 = vector.extract_strided_slice %50 {offsets = [0, 2, 0], sizes = [8, 16, 128], strides = [1, 1, 1]} : vector<8x18x128xbf16> to vector<8x16x128xbf16>
      %62 = vector.shape_cast %61 : vector<8x16x128xbf16> to vector<128x128xbf16>
      %c640 = arith.constant 640 : index
      %c0_47 = arith.constant 0 : index
      %63 = vector.load %arg2[%c640, %c0_47] : memref<1152x128xbf16, #tpu.memory_space<vmem>>, vector<128x128xbf16>
      %cst_48 = arith.constant dense<0.000000e+00> : vector<128x128xf32>
      %64 = tpu.matmul %62, %63, %cst_48 {dimension_numbers = #tpu.dot_dimension_numbers<[1], [0], [0], [1], [0, 0, 1, 1], [], []>} : vector<128x128xbf16>, vector<128x128xbf16>, vector<128x128xf32> -> vector<128x128xf32>
      %65 = arith.addf %60, %64 : vector<128x128xf32>
      %c2_i32_49 = arith.constant 2 : i32
      %66 = arith.addi %26, %c2_i32_49 : i32
      %c1_50 = arith.constant 1 : index
      %67 = arith.index_cast %66 : i32 to index
      %c0_51 = arith.constant 0 : index
      %c0_52 = arith.constant 0 : index
      %68 = vector.load %arg1[%c1_50, %67, %c0_51, %c0_52] : memref<2x18x18x128xbf16, #tpu.memory_space<vmem>>, vector<1x8x18x128xbf16>
      %69 = vector.shape_cast %68 : vector<1x8x18x128xbf16> to vector<8x18x128xbf16>
      %70 = vector.extract_strided_slice %69 {offsets = [0, 0, 0], sizes = [8, 16, 128], strides = [1, 1, 1]} : vector<8x18x128xbf16> to vector<8x16x128xbf16>
      %71 = vector.shape_cast %70 : vector<8x16x128xbf16> to vector<128x128xbf16>
      %c768 = arith.constant 768 : index
      %c0_53 = arith.constant 0 : index
      %72 = vector.load %arg2[%c768, %c0_53] : memref<1152x128xbf16, #tpu.memory_space<vmem>>, vector<128x128xbf16>
      %cst_54 = arith.constant dense<0.000000e+00> : vector<128x128xf32>
      %73 = tpu.matmul %71, %72, %cst_54 {dimension_numbers = #tpu.dot_dimension_numbers<[1], [0], [0], [1], [0, 0, 1, 1], [], []>} : vector<128x128xbf16>, vector<128x128xbf16>, vector<128x128xf32> -> vector<128x128xf32>
      %74 = arith.addf %65, %73 : vector<128x128xf32>
      %75 = vector.extract_strided_slice %69 {offsets = [0, 1, 0], sizes = [8, 16, 128], strides = [1, 1, 1]} : vector<8x18x128xbf16> to vector<8x16x128xbf16>
      %76 = vector.shape_cast %75 : vector<8x16x128xbf16> to vector<128x128xbf16>
      %c896 = arith.constant 896 : index
      %c0_55 = arith.constant 0 : index
      %77 = vector.load %arg2[%c896, %c0_55] : memref<1152x128xbf16, #tpu.memory_space<vmem>>, vector<128x128xbf16>
      %cst_56 = arith.constant dense<0.000000e+00> : vector<128x128xf32>
      %78 = tpu.matmul %76, %77, %cst_56 {dimension_numbers = #tpu.dot_dimension_numbers<[1], [0], [0], [1], [0, 0, 1, 1], [], []>} : vector<128x128xbf16>, vector<128x128xbf16>, vector<128x128xf32> -> vector<128x128xf32>
      %79 = arith.addf %74, %78 : vector<128x128xf32>
      %80 = vector.extract_strided_slice %69 {offsets = [0, 2, 0], sizes = [8, 16, 128], strides = [1, 1, 1]} : vector<8x18x128xbf16> to vector<8x16x128xbf16>
      %81 = vector.shape_cast %80 : vector<8x16x128xbf16> to vector<128x128xbf16>
      %c1024 = arith.constant 1024 : index
      %c0_57 = arith.constant 0 : index
      %82 = vector.load %arg2[%c1024, %c0_57] : memref<1152x128xbf16, #tpu.memory_space<vmem>>, vector<128x128xbf16>
      %cst_58 = arith.constant dense<0.000000e+00> : vector<128x128xf32>
      %83 = tpu.matmul %81, %82, %cst_58 {dimension_numbers = #tpu.dot_dimension_numbers<[1], [0], [0], [1], [0, 0, 1, 1], [], []>} : vector<128x128xbf16>, vector<128x128xbf16>, vector<128x128xf32> -> vector<128x128xf32>
      %84 = arith.addf %79, %83 : vector<128x128xf32>
      %85 = vector.shape_cast %84 : vector<128x128xf32> to vector<8x16x128xf32>
      %c1_59 = arith.constant 1 : index
      %86 = arith.index_cast %26 : i32 to index
      %c0_60 = arith.constant 0 : index
      %c0_61 = arith.constant 0 : index
      %87 = vector.load %arg7[%c1_59, %86, %c0_60, %c0_61] : memref<2x16x16x128xf32, #tpu.memory_space<vmem>>, vector<1x8x16x128xf32>
      %88 = vector.shape_cast %87 : vector<1x8x16x128xf32> to vector<8x16x128xf32>
      %89 = vector.shape_cast %85 : vector<8x16x128xf32> to vector<1x8x16x128xf32>
      tpu.vector_store %arg7[%c1_59, %86, %c0_60, %c0_61], %89 {strides = array<i32>} : memref<2x16x16x128xf32, #tpu.memory_space<vmem>>, vector<1x8x16x128xf32>,
      %c0_62 = arith.constant 0 : index
      %c0_63 = arith.constant 0 : index
      %90 = vector.load %arg8[%c0_62, %c0_63] : memref<1x128xf32, #tpu.memory_space<vmem>>, vector<1x128xf32>
      %cst_64 = arith.constant dense<0.000000e+00> : vector<128xf32>
      %91 = vector.multi_reduction <add>, %84, %cst_64 [0] : vector<128x128xf32> to vector<128xf32>
      %92 = vector.shape_cast %91 : vector<128xf32> to vector<1x128xf32>
      %93 = arith.addf %90, %92 : vector<1x128xf32>
      %c0_65 = arith.constant 0 : index
      %c0_66 = arith.constant 0 : index
      %94 = vector.load %arg8[%c0_65, %c0_66] : memref<1x128xf32, #tpu.memory_space<vmem>>, vector<1x128xf32>
      tpu.vector_store %arg8[%c0_65, %c0_66], %93 {strides = array<i32>} : memref<1x128xf32, #tpu.memory_space<vmem>>, vector<1x128xf32>,
      %c0_67 = arith.constant 0 : index
      %c0_68 = arith.constant 0 : index
      %95 = vector.load %arg9[%c0_67, %c0_68] : memref<1x128xf32, #tpu.memory_space<vmem>>, vector<1x128xf32>
      %96 = arith.mulf %84, %84 : vector<128x128xf32>
      %cst_69 = arith.constant dense<0.000000e+00> : vector<128xf32>
      %97 = vector.multi_reduction <add>, %96, %cst_69 [0] : vector<128x128xf32> to vector<128xf32>
      %98 = vector.shape_cast %97 : vector<128xf32> to vector<1x128xf32>
      %99 = arith.addf %95, %98 : vector<1x128xf32>
      %c0_70 = arith.constant 0 : index
      %c0_71 = arith.constant 0 : index
      %100 = vector.load %arg9[%c0_70, %c0_71] : memref<1x128xf32, #tpu.memory_space<vmem>>, vector<1x128xf32>
      tpu.vector_store %arg9[%c0_70, %c0_71], %99 {strides = array<i32>} : memref<1x128xf32, #tpu.memory_space<vmem>>, vector<1x128xf32>,
    }
    %c2_i32_8 = arith.constant 2 : i32
    %c0_9 = arith.constant 0 : index
    %c0_10 = arith.constant 0 : index
    %6 = vector.load %arg8[%c0_9, %c0_10] : memref<1x128xf32, #tpu.memory_space<vmem>>, vector<1x128xf32>
    %cst_11 = arith.constant 0.001953125 : f32
    %7 = vector.broadcast %cst_11 : f32 to vector<1x128xf32>
    %8 = arith.mulf %6, %7 : vector<1x128xf32>
    %c0_12 = arith.constant 0 : index
    %c0_13 = arith.constant 0 : index
    %9 = vector.load %arg9[%c0_12, %c0_13] : memref<1x128xf32, #tpu.memory_space<vmem>>, vector<1x128xf32>
    %cst_14 = arith.constant 0.001953125 : f32
    %10 = vector.broadcast %cst_14 : f32 to vector<1x128xf32>
    %11 = arith.mulf %9, %10 : vector<1x128xf32>
    %12 = arith.mulf %8, %8 : vector<1x128xf32>
    %13 = arith.subf %11, %12 : vector<1x128xf32>
    %c0_15 = arith.constant 0 : index
    %c0_16 = arith.constant 0 : index
    %14 = vector.load %arg3[%c0_15, %c0_16] : memref<1x128xf32, #tpu.memory_space<vmem>>, vector<1x128xf32>
    %cst_17 = arith.constant 9.99999974E-6 : f32
    %15 = vector.broadcast %cst_17 : f32 to vector<1x128xf32>
    %16 = arith.addf %13, %15 : vector<1x128xf32>
    %17 = math.rsqrt %16 : vector<1x128xf32>
    %18 = arith.mulf %14, %17 : vector<1x128xf32>
    %c0_18 = arith.constant 0 : index
    %c0_19 = arith.constant 0 : index
    %19 = vector.load %arg4[%c0_18, %c0_19] : memref<1x128xf32, #tpu.memory_space<vmem>>, vector<1x128xf32>
    %20 = arith.mulf %8, %18 : vector<1x128xf32>
    %21 = arith.subf %19, %20 : vector<1x128xf32>
    %22 = vector.shape_cast %18 : vector<1x128xf32> to vector<1x1x128xf32>
    %23 = vector.shape_cast %21 : vector<1x128xf32> to vector<1x1x128xf32>
    %c0_i32_20 = arith.constant 0 : i32
    %c2_i32_21 = arith.constant 2 : i32
    %24 = arith.addi %c0_i32_20, %c2_i32_21 : i32
    %c1_i32_22 = arith.constant 1 : i32
    scf.for %arg10 = %c0_i32_20 to %24 step %c1_i32_22  : i32 {
      %c8_i32 = arith.constant 8 : i32
      %26 = arith.muli %arg10, %c8_i32 : i32
      %c0_28 = arith.constant 0 : index
      %27 = arith.index_cast %26 : i32 to index
      %c0_29 = arith.constant 0 : index
      %c0_30 = arith.constant 0 : index
      %28 = vector.load %arg7[%c0_28, %27, %c0_29, %c0_30] : memref<2x16x16x128xf32, #tpu.memory_space<vmem>>, vector<1x8x16x128xf32>
      %29 = vector.shape_cast %28 : vector<1x8x16x128xf32> to vector<8x16x128xf32>
      %30 = vector.broadcast %22 : vector<1x1x128xf32> to vector<8x16x128xf32>
      %31 = arith.mulf %29, %30 : vector<8x16x128xf32>
      %32 = vector.broadcast %23 : vector<1x1x128xf32> to vector<8x16x128xf32>
      %33 = arith.addf %31, %32 : vector<8x16x128xf32>
      %c0_31 = arith.constant 0 : index
      %34 = arith.index_cast %26 : i32 to index
      %c0_32 = arith.constant 0 : index
      %c0_33 = arith.constant 0 : index
      %35 = vector.load %arg5[%c0_31, %34, %c0_32, %c0_33] : memref<2x16x16x128xbf16, #tpu.memory_space<vmem>>, vector<1x8x16x128xbf16>
      %36 = vector.shape_cast %35 : vector<1x8x16x128xbf16> to vector<8x16x128xbf16>
      %37 = arith.extf %36 : vector<8x16x128xbf16> to vector<8x16x128xf32>
      %38 = arith.addf %33, %37 : vector<8x16x128xf32>
      %cst_34 = arith.constant 0.000000e+00 : f32
      %39 = vector.broadcast %cst_34 : f32 to vector<8x16x128xf32>
      %40 = arith.maximumf %38, %39 : vector<8x16x128xf32>
      %c0_35 = arith.constant 0 : index
      %41 = arith.index_cast %26 : i32 to index
      %c0_36 = arith.constant 0 : index
      %c0_37 = arith.constant 0 : index
      %42 = vector.load %arg6[%c0_35, %41, %c0_36, %c0_37] : memref<2x16x16x128xf32, #tpu.memory_space<vmem>>, vector<1x8x16x128xf32>
      %43 = vector.shape_cast %42 : vector<1x8x16x128xf32> to vector<8x16x128xf32>
      %44 = vector.shape_cast %40 : vector<8x16x128xf32> to vector<1x8x16x128xf32>
      tpu.vector_store %arg6[%c0_35, %41, %c0_36, %c0_37], %44 {strides = array<i32>} : memref<2x16x16x128xf32, #tpu.memory_space<vmem>>, vector<1x8x16x128xf32>,
    }
    %c2_i32_23 = arith.constant 2 : i32
    %c0_i32_24 = arith.constant 0 : i32
    %c2_i32_25 = arith.constant 2 : i32
    %25 = arith.addi %c0_i32_24, %c2_i32_25 : i32
    %c1_i32_26 = arith.constant 1 : i32
    scf.for %arg10 = %c0_i32_24 to %25 step %c1_i32_26  : i32 {
      %c8_i32 = arith.constant 8 : i32
      %26 = arith.muli %arg10, %c8_i32 : i32
      %c1 = arith.constant 1 : index
      %27 = arith.index_cast %26 : i32 to index
      %c0_28 = arith.constant 0 : index
      %c0_29 = arith.constant 0 : index
      %28 = vector.load %arg7[%c1, %27, %c0_28, %c0_29] : memref<2x16x16x128xf32, #tpu.memory_space<vmem>>, vector<1x8x16x128xf32>
      %29 = vector.shape_cast %28 : vector<1x8x16x128xf32> to vector<8x16x128xf32>
      %30 = vector.broadcast %22 : vector<1x1x128xf32> to vector<8x16x128xf32>
      %31 = arith.mulf %29, %30 : vector<8x16x128xf32>
      %32 = vector.broadcast %23 : vector<1x1x128xf32> to vector<8x16x128xf32>
      %33 = arith.addf %31, %32 : vector<8x16x128xf32>
      %c1_30 = arith.constant 1 : index
      %34 = arith.index_cast %26 : i32 to index
      %c0_31 = arith.constant 0 : index
      %c0_32 = arith.constant 0 : index
      %35 = vector.load %arg5[%c1_30, %34, %c0_31, %c0_32] : memref<2x16x16x128xbf16, #tpu.memory_space<vmem>>, vector<1x8x16x128xbf16>
      %36 = vector.shape_cast %35 : vector<1x8x16x128xbf16> to vector<8x16x128xbf16>
      %37 = arith.extf %36 : vector<8x16x128xbf16> to vector<8x16x128xf32>
      %38 = arith.addf %33, %37 : vector<8x16x128xf32>
      %cst_33 = arith.constant 0.000000e+00 : f32
      %39 = vector.broadcast %cst_33 : f32 to vector<8x16x128xf32>
      %40 = arith.maximumf %38, %39 : vector<8x16x128xf32>
      %c1_34 = arith.constant 1 : index
      %41 = arith.index_cast %26 : i32 to index
      %c0_35 = arith.constant 0 : index
      %c0_36 = arith.constant 0 : index
      %42 = vector.load %arg6[%c1_34, %41, %c0_35, %c0_36] : memref<2x16x16x128xf32, #tpu.memory_space<vmem>>, vector<1x8x16x128xf32>
      %43 = vector.shape_cast %42 : vector<1x8x16x128xf32> to vector<8x16x128xf32>
      %44 = vector.shape_cast %40 : vector<8x16x128xf32> to vector<1x8x16x128xf32>
      tpu.vector_store %arg6[%c1_34, %41, %c0_35, %c0_36], %44 {strides = array<i32>} : memref<2x16x16x128xf32, #tpu.memory_space<vmem>>, vector<1x8x16x128xf32>,
    }
    %c2_i32_27 = arith.constant 2 : i32
    return
  }
  func.func @transform_0(%arg0: i32) -> (i32, i32, i32, i32) {
    %c0_i32 = arith.constant 0 : i32
    %c0_i32_0 = arith.constant 0 : i32
    %c0_i32_1 = arith.constant 0 : i32
    %c0_i32_2 = arith.constant 0 : i32
    %c0_i32_3 = arith.constant 0 : i32
    return %c0_i32, %c0_i32_0, %c0_i32_1, %c0_i32_2 : i32, i32, i32, i32
  }
  func.func @transform_1(%arg0: i32) -> (i32, i32) {
    %c0_i32 = arith.constant 0 : i32
    %c0_i32_0 = arith.constant 0 : i32
    return %c0_i32, %arg0 : i32, i32
  }
  func.func @transform_2(%arg0: i32) -> (i32, i32) {
    %c0_i32 = arith.constant 0 : i32
    %c0_i32_0 = arith.constant 0 : i32
    return %c0_i32, %arg0 : i32, i32
  }
  func.func @transform_3(%arg0: i32) -> (i32, i32) {
    %c0_i32 = arith.constant 0 : i32
    %c0_i32_0 = arith.constant 0 : i32
    return %c0_i32, %arg0 : i32, i32
  }
  func.func @transform_4(%arg0: i32) -> (i32, i32, i32, i32) {
    %c0_i32 = arith.constant 0 : i32
    %c0_i32_0 = arith.constant 0 : i32
    %c0_i32_1 = arith.constant 0 : i32
    %c0_i32_2 = arith.constant 0 : i32
    return %c0_i32, %c0_i32_0, %c0_i32_1, %arg0 : i32, i32, i32, i32
  }
  func.func @transform_5(%arg0: i32) -> (i32, i32, i32, i32) {
    %c0_i32 = arith.constant 0 : i32
    %c0_i32_0 = arith.constant 0 : i32
    %c0_i32_1 = arith.constant 0 : i32
    %c0_i32_2 = arith.constant 0 : i32
    return %c0_i32, %c0_i32_0, %c0_i32_1, %arg0 : i32, i32, i32, i32
  }
}

</mosaic_0001>

<llo_original>
// kernel: restnet_basic_block_forward.3
$region0: #{restnet_basic_block_forward.3}
  #allocation0 [shape = 'u32[]', space=smem, size = 0x4, offset = 0x4, fixed_abs, tag = 'smem constant byte address 0x4 - core index']
  #allocation1 [shape = 'u32[144,128]{1,0:T(1,128)}', space=vmem, size = 0x12000, scoped, tag = 'internal scratch']
  #allocation2 [shape = 'f32[2,16,16,128]{3,2,1,0:T(8,128)}', space=vmem, size = 0x40000, scoped, tag = 'scratch operand']
  #allocation3 [shape = 'f32[1,128]{1,0:T(1,128)}', space=vmem, size = 0x200, scoped, tag = 'scratch operand']
  #allocation4 [shape = 'f32[1,128]{1,0:T(1,128)}', space=vmem, size = 0x200, scoped, tag = 'scratch operand']
  %s0 = inlined_call_operand.vmem [shape: bf16[2,18,18,128], index: 0, kind: input, shape index: {}]
  %s1 = inlined_call_operand.vmem [shape: bf16[1152,128], index: 1, kind: input, shape index: {}]
  %s2 = inlined_call_operand.vmem [shape: f32[1,128], index: 2, kind: input, shape index: {}]
  %s3 = inlined_call_operand.vmem [shape: f32[1,128], index: 3, kind: input, shape index: {}]
  %s4 = inlined_call_operand.vmem [shape: bf16[2,16,16,128], index: 4, kind: input, shape index: {}]
  %s5 = inlined_call_operand.vmem [shape: f32[2,16,16,128], index: 5, kind: output, shape index: {}]
  %s6 = sld [smem:[#allocation0]]
  $region58: #{restnet_basic_block_forward.3} parent=0
    _
  %s8 = ssub.s32 1, %s6
  %s9 = scalar_select 0, %s8, %s6
  // Predicated region
  $region2: #{restnet_basic_block_forward.3} parent=0 // pred_check
    _
  $region3: #{restnet_basic_block_forward.3} parent=0 // pred_check_branch
    %11 = sbr.rel (0) target = $region5
  $region4: #{restnet_basic_block_forward.3} parent=0 // pred_region
    _
  $region5: #{restnet_basic_block_forward.3} parent=0 // pred_fallthru
    _
  // Predicated region
  $region6: #{restnet_basic_block_forward.3} parent=0 // pred_check
    _
  $region7: #{restnet_basic_block_forward.3} parent=0 // pred_check_branch
    %13 = sbr.rel (0) target = $region9
  $region8: #{restnet_basic_block_forward.3} parent=0 // pred_region
    _
  $region9: #{restnet_basic_block_forward.3} parent=0 // pred_fallthru
    _
  // Predicated region
  $region10: #{restnet_basic_block_forward.3} parent=0 // pred_check
    _
  $region11: #{restnet_basic_block_forward.3} parent=0 // pred_check_branch
    %15 = sbr.rel (0) target = $region13
  $region12: #{restnet_basic_block_forward.3} parent=0 // pred_region
    _
  $region13: #{restnet_basic_block_forward.3} parent=0 // pred_fallthru
    _
  // Predicated region
  $region14: #{restnet_basic_block_forward.3} parent=0 // pred_check
    _
  $region15: #{restnet_basic_block_forward.3} parent=0 // pred_check_branch
    %17 = sbr.rel (0) target = $region17
  $region16: #{restnet_basic_block_forward.3} parent=0 // pred_region
    _
  $region17: #{restnet_basic_block_forward.3} parent=0 // pred_fallthru
    _
  // Predicated region
  $region18: #{restnet_basic_block_forward.3} parent=0 // pred_check
    _
  $region19: #{restnet_basic_block_forward.3} parent=0 // pred_check_branch
    %19 = sbr.rel (0) target = $region21
  $region20: #{restnet_basic_block_forward.3} parent=0 // pred_region
    _
  $region21: #{restnet_basic_block_forward.3} parent=0 // pred_fallthru
    _
  %21 = vst [vmem:[#allocation3] sm:$0x1] 0.0
  %22 = vst [vmem:[#allocation4] sm:$0x1] 0.0
  loop: start=0, step=1, limit=2
  $region22: #{restnet_basic_block_forward.3} parent=0 // loop_pre_header
    _
  $region23: #{restnet_basic_block_forward.3} parent=0 // loop_header
    %s24 = sphi 0, %s28
    %p25 = scmp.ge.s32.totalorder %s24, 2
  $region24: #{restnet_basic_block_forward.3} parent=0 // loop_header_branch
    %27 = sbr.rel (%p25) target = $region28
  $region25: #{restnet_basic_block_forward.3} parent=0 // loop_body
    %s29 = smul.u32 %s24, 8
    %s30 = smul.u32 %s29, 3
    %s31 = smul.addr %s30, 4
    %s32 = scalar_lea.vmem %s0, %s31
    %v33 = vld [vmem:[%s32] sm:$0xf]
    %v34 = vld [vmem:[%s32 + $0x4] sm:$0xf]
    %v35 = vld [vmem:[%s32 + $0x8] sm:$0x1]
    %v36 = vld [vmem:[%s32 + $0xc] sm:$0xf]
    %v37 = vld [vmem:[%s32 + $0x10] sm:$0xf]
    %v38 = vld [vmem:[%s32 + $0x14] sm:$0x1]
    %v39 = vld [vmem:[%s32 + $0x18] sm:$0xf]
    %v40 = vld [vmem:[%s32 + $0x1c] sm:$0xf]
    %v41 = vld [vmem:[%s32 + $0x20] sm:$0x1]
    %v42 = vld [vmem:[%s32 + $0x24] sm:$0xf]
    %v43 = vld [vmem:[%s32 + $0x28] sm:$0xf]
    %v44 = vld [vmem:[%s32 + $0x2c] sm:$0x1]
    %v45 = vld [vmem:[%s32 + $0x30] sm:$0xf]
    %v46 = vld [vmem:[%s32 + $0x34] sm:$0xf]
    %v47 = vld [vmem:[%s32 + $0x38] sm:$0x1]
    %v48 = vld [vmem:[%s32 + $0x3c] sm:$0xf]
    %v49 = vld [vmem:[%s32 + $0x40] sm:$0xf]
    %v50 = vld [vmem:[%s32 + $0x44] sm:$0x1]
    %v51 = vld [vmem:[%s32 + $0x48] sm:$0xf]
    %v52 = vld [vmem:[%s32 + $0x4c] sm:$0xf]
    %v53 = vld [vmem:[%s32 + $0x50] sm:$0x1]
    %v54 = vld [vmem:[%s32 + $0x54] sm:$0xf]
    %v55 = vld [vmem:[%s32 + $0x58] sm:$0xf]
    %v56 = vld [vmem:[%s32 + $0x5c] sm:$0x1]
    %v57 = vld [vmem:[%s1] sm:$0xf]
    %v58 = vld [vmem:[%s1 + $0x4] sm:$0xf]
    %v59 = vld [vmem:[%s1 + $0x8] sm:$0xf]
    %v60 = vld [vmem:[%s1 + $0xc] sm:$0xf]
    %v61 = vld [vmem:[%s1 + $0x10] sm:$0xf]
    %v62 = vld [vmem:[%s1 + $0x14] sm:$0xf]
    %v63 = vld [vmem:[%s1 + $0x18] sm:$0xf]
    %v64 = vld [vmem:[%s1 + $0x1c] sm:$0xf]
    %v65 = vld [vmem:[%s1 + $0x20] sm:$0xf]
    %v66 = vld [vmem:[%s1 + $0x24] sm:$0xf]
    %v67 = vld [vmem:[%s1 + $0x28] sm:$0xf]
    %v68 = vld [vmem:[%s1 + $0x2c] sm:$0xf]
    %v69 = vld [vmem:[%s1 + $0x30] sm:$0xf]
    %v70 = vld [vmem:[%s1 + $0x34] sm:$0xf]
    %v71 = vld [vmem:[%s1 + $0x38] sm:$0xf]
    %v72 = vld [vmem:[%s1 + $0x3c] sm:$0xf]
    %vm73 = vsmask.f32 3328
    %vm74 = vsmask.f32 7440
    %vm75 = vmor %vm73, %vm74
    %v77 = vshrl.u32 %v33, 16
    %v79 = vrot.slane %v77, 4
    %v80 = vshll.u32 %v33, 16
    %v82 = vrot.slane %v80, 5
    %v83 = vor.u32 %v79, %v82
    %v84 = vrot.slane %v83, 4
    %v86 = vshll.u32 %v34, 16
    %v88 = vrot.slane %v86, 5
    %v89 = vsel %vm75, %v84, %v88
    %v90 = vshrl.u32 %v34, 16
    %v92 = vrot.slane %v90, 4
    %v93 = vor.u32 %v92, %v88
    %v94 = vrot.slane %v93, 4
    %v96 = vshll.u32 %v35, 16
    %v98 = vrot.slane %v96, 5
    %v99 = vsel %vm75, %v94, %v98
    %v101 = vshrl.u32 %v36, 16
    %v103 = vrot.slane %v101, 4
    %v104 = vshll.u32 %v36, 16
    %v106 = vrot.slane %v104, 5
    %v107 = vor.u32 %v103, %v106
    %v108 = vrot.slane %v107, 4
    %v110 = vshll.u32 %v37, 16
    %v112 = vrot.slane %v110, 5
    %v113 = vsel %vm75, %v108, %v112
    %v114 = vshrl.u32 %v37, 16
    %v116 = vrot.slane %v114, 4
    %v117 = vor.u32 %v116, %v112
    %v118 = vrot.slane %v117, 4
    %v120 = vshll.u32 %v38, 16
    %v122 = vrot.slane %v120, 5
    %v123 = vsel %vm75, %v118, %v122
    %v125 = vshrl.u32 %v39, 16
    %v127 = vrot.slane %v125, 4
    %v128 = vshll.u32 %v39, 16
    %v130 = vrot.slane %v128, 5
    %v131 = vor.u32 %v127, %v130
    %v132 = vrot.slane %v131, 4
    %v134 = vshll.u32 %v40, 16
    %v136 = vrot.slane %v134, 5
    %v137 = vsel %vm75, %v132, %v136
    %v138 = vshrl.u32 %v40, 16
    %v140 = vrot.slane %v138, 4
    %v141 = vor.u32 %v140, %v136
    %v142 = vrot.slane %v141, 4
    %v144 = vshll.u32 %v41, 16
    %v146 = vrot.slane %v144, 5
    %v147 = vsel %vm75, %v142, %v146
    %v149 = vshrl.u32 %v42, 16
    %v151 = vrot.slane %v149, 4
    %v152 = vshll.u32 %v42, 16
    %v154 = vrot.slane %v152, 5
    %v155 = vor.u32 %v151, %v154
    %v156 = vrot.slane %v155, 4
    %v158 = vshll.u32 %v43, 16
    %v160 = vrot.slane %v158, 5
    %v161 = vsel %vm75, %v156, %v160
    %v162 = vshrl.u32 %v43, 16
    %v164 = vrot.slane %v162, 4
    %v165 = vor.u32 %v164, %v160
    %v166 = vrot.slane %v165, 4
    %v168 = vshll.u32 %v44, 16
    %v170 = vrot.slane %v168, 5
    %v171 = vsel %vm75, %v166, %v170
    %v173 = vshrl.u32 %v45, 16
    %v175 = vrot.slane %v173, 4
    %v176 = vshll.u32 %v45, 16
    %v178 = vrot.slane %v176, 5
    %v179 = vor.u32 %v175, %v178
    %v180 = vrot.slane %v179, 4
    %v182 = vshll.u32 %v46, 16
    %v184 = vrot.slane %v182, 5
    %v185 = vsel %vm75, %v180, %v184
    %v186 = vshrl.u32 %v46, 16
    %v188 = vrot.slane %v186, 4
    %v189 = vor.u32 %v188, %v184
    %v190 = vrot.slane %v189, 4
    %v192 = vshll.u32 %v47, 16
    %v194 = vrot.slane %v192, 5
    %v195 = vsel %vm75, %v190, %v194
    %v197 = vshrl.u32 %v48, 16
    %v199 = vrot.slane %v197, 4
    %v200 = vshll.u32 %v48, 16
    %v202 = vrot.slane %v200, 5
    %v203 = vor.u32 %v199, %v202
    %v204 = vrot.slane %v203, 4
    %v206 = vshll.u32 %v49, 16
    %v208 = vrot.slane %v206, 5
    %v209 = vsel %vm75, %v204, %v208
    %v210 = vshrl.u32 %v49, 16
    %v212 = vrot.slane %v210, 4
    %v213 = vor.u32 %v212, %v208
    %v214 = vrot.slane %v213, 4
    %v216 = vshll.u32 %v50, 16
    %v218 = vrot.slane %v216, 5
    %v219 = vsel %vm75, %v214, %v218
    %v221 = vshrl.u32 %v51, 16
    %v223 = vrot.slane %v221, 4
    %v224 = vshll.u32 %v51, 16
    %v226 = vrot.slane %v224, 5
    %v227 = vor.u32 %v223, %v226
    %v228 = vrot.slane %v227, 4
    %v230 = vshll.u32 %v52, 16
    %v232 = vrot.slane %v230, 5
    %v233 = vsel %vm75, %v228, %v232
    %v234 = vshrl.u32 %v52, 16
    %v236 = vrot.slane %v234, 4
    %v237 = vor.u32 %v236, %v232
    %v238 = vrot.slane %v237, 4
    %v240 = vshll.u32 %v53, 16
    %v242 = vrot.slane %v240, 5
    %v243 = vsel %vm75, %v238, %v242
    %v245 = vshrl.u32 %v54, 16
    %v247 = vrot.slane %v245, 4
    %v248 = vshll.u32 %v54, 16
    %v250 = vrot.slane %v248, 5
    %v251 = vor.u32 %v247, %v250
    %v252 = vrot.slane %v251, 4
    %v254 = vshll.u32 %v55, 16
    %v256 = vrot.slane %v254, 5
    %v257 = vsel %vm75, %v252, %v256
    %v258 = vshrl.u32 %v55, 16
    %v260 = vrot.slane %v258, 4
    %v261 = vor.u32 %v260, %v256
    %v262 = vrot.slane %v261, 4
    %v264 = vshll.u32 %v56, 16
    %v266 = vrot.slane %v264, 5
    %v267 = vsel %vm75, %v262, %v266
    %v268 = vld [vmem:[%s1 + $0x40] sm:$0xf]
    %v269 = vld [vmem:[%s1 + $0x44] sm:$0xf]
    %v270 = vld [vmem:[%s1 + $0x48] sm:$0xf]
    %v271 = vld [vmem:[%s1 + $0x4c] sm:$0xf]
    %v272 = vld [vmem:[%s1 + $0x50] sm:$0xf]
    %v273 = vld [vmem:[%s1 + $0x54] sm:$0xf]
    %v274 = vld [vmem:[%s1 + $0x58] sm:$0xf]
    %v275 = vld [vmem:[%s1 + $0x5c] sm:$0xf]
    %v276 = vld [vmem:[%s1 + $0x60] sm:$0xf]
    %v277 = vld [vmem:[%s1 + $0x64] sm:$0xf]
    %v278 = vld [vmem:[%s1 + $0x68] sm:$0xf]
    %v279 = vld [vmem:[%s1 + $0x6c] sm:$0xf]
    %v280 = vld [vmem:[%s1 + $0x70] sm:$0xf]
    %v281 = vld [vmem:[%s1 + $0x74] sm:$0xf]
    %v282 = vld [vmem:[%s1 + $0x78] sm:$0xf]
    %v283 = vld [vmem:[%s1 + $0x7c] sm:$0xf]
    %v284 = vunpack.c.l.b16 %v89
    %v285 = vunpack.c.l.b16 %v99
    %v286 = vunpack.c.l.b16 %v113
    %v287 = vunpack.c.l.b16 %v123
    %v288 = vunpack.c.l.b16 %v137
    %v289 = vunpack.c.l.b16 %v147
    %v290 = vunpack.c.l.b16 %v161
    %v291 = vunpack.c.l.b16 %v171
    %v292 = vunpack.c.l.b16 %v185
    %v293 = vunpack.c.l.b16 %v195
    %v294 = vunpack.c.l.b16 %v209
    %v295 = vunpack.c.l.b16 %v219
    %v296 = vunpack.c.l.b16 %v233
    %v297 = vunpack.c.l.b16 %v243
    %v298 = vunpack.c.l.b16 %v257
    %v299 = vunpack.c.l.b16 %v267
    %v300 = vpack.c.b16 %v285, %v284
    %v301 = vpack.c.b16 %v287, %v286
    %v302 = vpack.c.b16 %v289, %v288
    %v303 = vpack.c.b16 %v291, %v290
    %v304 = vpack.c.b16 %v293, %v292
    %v305 = vpack.c.b16 %v295, %v294
    %v306 = vpack.c.b16 %v297, %v296
    %v307 = vpack.c.b16 %v299, %v298
    %v332 = vunpack.c.l.b16 %v268
    %v333 = vunpack.c.l.b16 %v269
    %v334 = vunpack.c.l.b16 %v270
    %v335 = vunpack.c.l.b16 %v271
    %v336 = vunpack.c.l.b16 %v272
    %v337 = vunpack.c.l.b16 %v273
    %v338 = vunpack.c.l.b16 %v274
    %v339 = vunpack.c.l.b16 %v275
    %v340 = vunpack.c.l.b16 %v276
    %v341 = vunpack.c.l.b16 %v277
    %v342 = vunpack.c.l.b16 %v278
    %v343 = vunpack.c.l.b16 %v279
    %v344 = vunpack.c.l.b16 %v280
    %v345 = vunpack.c.l.b16 %v281
    %v346 = vunpack.c.l.b16 %v282
    %v347 = vunpack.c.l.b16 %v283
    %v348 = vpack.c.b16 %v333, %v332
    %v349 = vpack.c.b16 %v335, %v334
    %v350 = vpack.c.b16 %v337, %v336
    %v351 = vpack.c.b16 %v339, %v338
    %v352 = vpack.c.b16 %v341, %v340
    %v353 = vpack.c.b16 %v343, %v342
    %v354 = vpack.c.b16 %v345, %v344
    %v355 = vpack.c.b16 %v347, %v346
    %364 = vmatprep.subr.bf16.mxu0 0
    %365 = vmatpush1.bf16.msra.mxu0 %v348
    %366 = vmatprep.subr.bf16.mxu0 0
    %367 = vmatpush1.bf16.msra.mxu0 %v349
    %368 = vmatprep.subr.bf16.mxu0 0
    %369 = vmatpush1.bf16.msra.mxu0 %v350
    %370 = vmatprep.subr.bf16.mxu0 0
    %371 = vmatpush1.bf16.msra.mxu0 %v351
    %372 = vmatprep.subr.bf16.mxu0 0
    %373 = vmatpush1.bf16.msra.mxu0 %v352
    %374 = vmatprep.subr.bf16.mxu0 0
    %375 = vmatpush1.bf16.msra.mxu0 %v353
    %376 = vmatprep.subr.bf16.mxu0 0
    %377 = vmatpush1.bf16.msra.mxu0 %v354
    %378 = vmatprep.subr.bf16.mxu0 0
    %379 = vmatpush1.bf16.msra.mxu0 %v355
    %380 = vmatprep.subr.bf16.mxu0 0
    %381 = vmatpush1.bf16.msra.mxu0 0
    %382 = vmatprep.subr.bf16.mxu0 0
    %383 = vmatpush1.bf16.msra.mxu0 0
    %384 = vmatprep.subr.bf16.mxu0 0
    %385 = vmatpush1.bf16.msra.mxu0 0
    %386 = vmatprep.subr.bf16.mxu0 0
    %387 = vmatpush1.bf16.msra.mxu0 0
    %388 = vmatprep.subr.bf16.mxu0 0
    %389 = vmatpush1.bf16.msra.mxu0 0
    %390 = vmatprep.subr.bf16.mxu0 0
    %391 = vmatpush1.bf16.msra.mxu0 0
    %392 = vmatprep.subr.bf16.mxu0 0
    %393 = vmatpush1.bf16.msra.mxu0 0
    %394 = vmatprep.subr.bf16.mxu0 0
    %395 = vmatpush1.bf16.msra.mxu0 0
    %396 = vmatprep.mubr.bf16.mxu0 0
    %397 = vmatmul.mubr.bf16.gmra.mrb[0].mxu0 %v300
    %v398 = vpop.f32.mrb[0].mxu0
    %v399 = vadd.f32 0.0, %v398
    %v400 = vpop.f32.mrb[0].mxu0
    %v401 = vpop.f32.mrb[0].mxu0
    %v402 = vadd.f32 0.0, %v401
    %v403 = vpop.f32.mrb[0].mxu0
    %404 = vmatprep.mubr.bf16.mxu0 0
    %405 = vmatmul.mubr.bf16.gmra.mrb[0].mxu0 %v301
    %v406 = vpop.f32.mrb[0].mxu0
    %v407 = vadd.f32 0.0, %v406
    %v408 = vpop.f32.mrb[0].mxu0
    %v409 = vpop.f32.mrb[0].mxu0
    %v410 = vadd.f32 0.0, %v409
    %v411 = vpop.f32.mrb[0].mxu0
    %412 = vmatprep.mubr.bf16.mxu0 0
    %413 = vmatmul.mubr.bf16.gmra.mrb[0].mxu0 %v302
    %v414 = vpop.f32.mrb[0].mxu0
    %v415 = vadd.f32 0.0, %v414
    %v416 = vpop.f32.mrb[0].mxu0
    %v417 = vpop.f32.mrb[0].mxu0
    %v418 = vadd.f32 0.0, %v417
    %v419 = vpop.f32.mrb[0].mxu0
    %420 = vmatprep.mubr.bf16.mxu0 0
    %421 = vmatmul.mubr.bf16.gmra.mrb[0].mxu0 %v303
    %v422 = vpop.f32.mrb[0].mxu0
    %v423 = vadd.f32 0.0, %v422
    %v424 = vpop.f32.mrb[0].mxu0
    %v425 = vpop.f32.mrb[0].mxu0
    %v426 = vadd.f32 0.0, %v425
    %v427 = vpop.f32.mrb[0].mxu0
    %428 = vmatprep.mubr.bf16.mxu0 0
    %429 = vmatmul.mubr.bf16.gmra.mrb[0].mxu0 %v304
    %v430 = vpop.f32.mrb[0].mxu0
    %v431 = vadd.f32 0.0, %v430
    %v432 = vpop.f32.mrb[0].mxu0
    %v433 = vpop.f32.mrb[0].mxu0
    %v434 = vadd.f32 0.0, %v433
    %v435 = vpop.f32.mrb[0].mxu0
    %436 = vmatprep.mubr.bf16.mxu0 0
    %437 = vmatmul.mubr.bf16.gmra.mrb[0].mxu0 %v305
    %v438 = vpop.f32.mrb[0].mxu0
    %v439 = vadd.f32 0.0, %v438
    %v440 = vpop.f32.mrb[0].mxu0
    %v441 = vpop.f32.mrb[0].mxu0
    %v442 = vadd.f32 0.0, %v441
    %v443 = vpop.f32.mrb[0].mxu0
    %444 = vmatprep.mubr.bf16.mxu0 0
    %445 = vmatmul.mubr.bf16.gmra.mrb[0].mxu0 %v306
    %v446 = vpop.f32.mrb[0].mxu0
    %v447 = vadd.f32 0.0, %v446
    %v448 = vpop.f32.mrb[0].mxu0
    %v449 = vpop.f32.mrb[0].mxu0
    %v450 = vadd.f32 0.0, %v449
    %v451 = vpop.f32.mrb[0].mxu0
    %452 = vmatprep.mubr.bf16.mxu0 0
    %453 = vmatmul.mubr.bf16.gmra.mrb[0].mxu0 %v307
    %v454 = vpop.f32.mrb[0].mxu0
    %v455 = vadd.f32 0.0, %v454
    %v456 = vpop.f32.mrb[0].mxu0
    %v457 = vpop.f32.mrb[0].mxu0
    %v458 = vadd.f32 0.0, %v457
    %v459 = vpop.f32.mrb[0].mxu0
    %460 = vdwg.mxu0
    %v477 = vunpack.c.l.b16 %v33
    %v478 = vunpack.c.l.b16 %v34
    %v479 = vunpack.c.l.b16 %v36
    %v480 = vunpack.c.l.b16 %v37
    %v481 = vunpack.c.l.b16 %v39
    %v482 = vunpack.c.l.b16 %v40
    %v483 = vunpack.c.l.b16 %v42
    %v484 = vunpack.c.l.b16 %v43
    %v485 = vunpack.c.l.b16 %v45
    %v486 = vunpack.c.l.b16 %v46
    %v487 = vunpack.c.l.b16 %v48
    %v488 = vunpack.c.l.b16 %v49
    %v489 = vunpack.c.l.b16 %v51
    %v490 = vunpack.c.l.b16 %v52
    %v491 = vunpack.c.l.b16 %v54
    %v492 = vunpack.c.l.b16 %v55
    %v493 = vpack.c.b16 %v478, %v477
    %v494 = vpack.c.b16 %v480, %v479
    %v495 = vpack.c.b16 %v482, %v481
    %v496 = vpack.c.b16 %v484, %v483
    %v497 = vpack.c.b16 %v486, %v485
    %v498 = vpack.c.b16 %v488, %v487
    %v499 = vpack.c.b16 %v490, %v489
    %v500 = vpack.c.b16 %v492, %v491
    %v525 = vunpack.c.l.b16 %v57
    %v526 = vunpack.c.l.b16 %v58
    %v527 = vunpack.c.l.b16 %v59
    %v528 = vunpack.c.l.b16 %v60
    %v529 = vunpack.c.l.b16 %v61
    %v530 = vunpack.c.l.b16 %v62
    %v531 = vunpack.c.l.b16 %v63
    %v532 = vunpack.c.l.b16 %v64
    %v533 = vunpack.c.l.b16 %v65
    %v534 = vunpack.c.l.b16 %v66
    %v535 = vunpack.c.l.b16 %v67
    %v536 = vunpack.c.l.b16 %v68
    %v537 = vunpack.c.l.b16 %v69
    %v538 = vunpack.c.l.b16 %v70
    %v539 = vunpack.c.l.b16 %v71
    %v540 = vunpack.c.l.b16 %v72
    %v541 = vpack.c.b16 %v526, %v525
    %v542 = vpack.c.b16 %v528, %v527
    %v543 = vpack.c.b16 %v530, %v529
    %v544 = vpack.c.b16 %v532, %v531
    %v545 = vpack.c.b16 %v534, %v533
    %v546 = vpack.c.b16 %v536, %v535
    %v547 = vpack.c.b16 %v538, %v537
    %v548 = vpack.c.b16 %v540, %v539
    %557 = vmatprep.subr.bf16.mxu0 0
    %558 = vmatpush1.bf16.msra.mxu0 %v541
    %559 = vmatprep.subr.bf16.mxu0 0
    %560 = vmatpush1.bf16.msra.mxu0 %v542
    %561 = vmatprep.subr.bf16.mxu0 0
    %562 = vmatpush1.bf16.msra.mxu0 %v543
    %563 = vmatprep.subr.bf16.mxu0 0
    %564 = vmatpush1.bf16.msra.mxu0 %v544
    %565 = vmatprep.subr.bf16.mxu0 0
    %566 = vmatpush1.bf16.msra.mxu0 %v545
    %567 = vmatprep.subr.bf16.mxu0 0
    %568 = vmatpush1.bf16.msra.mxu0 %v546
    %569 = vmatprep.subr.bf16.mxu0 0
    %570 = vmatpush1.bf16.msra.mxu0 %v547
    %571 = vmatprep.subr.bf16.mxu0 0
    %572 = vmatpush1.bf16.msra.mxu0 %v548
    %573 = vmatprep.subr.bf16.mxu0 0
    %574 = vmatpush1.bf16.msra.mxu0 0
    %575 = vmatprep.subr.bf16.mxu0 0
    %576 = vmatpush1.bf16.msra.mxu0 0
    %577 = vmatprep.subr.bf16.mxu0 0
    %578 = vmatpush1.bf16.msra.mxu0 0
    %579 = vmatprep.subr.bf16.mxu0 0
    %580 = vmatpush1.bf16.msra.mxu0 0
    %581 = vmatprep.subr.bf16.mxu0 0
    %582 = vmatpush1.bf16.msra.mxu0 0
    %583 = vmatprep.subr.bf16.mxu0 0
    %584 = vmatpush1.bf16.msra.mxu0 0
    %585 = vmatprep.subr.bf16.mxu0 0
    %586 = vmatpush1.bf16.msra.mxu0 0
    %587 = vmatprep.subr.bf16.mxu0 0
    %588 = vmatpush1.bf16.msra.mxu0 0
    %589 = vmatprep.mubr.bf16.mxu0 0
    %590 = vmatmul.mubr.bf16.gmra.mrb[0].mxu0 %v493
    %v591 = vpop.f32.mrb[0].mxu0
    %v592 = vadd.f32 %v399, %v591
    %v593 = vpop.f32.mrb[0].mxu0
    %v594 = vpop.f32.mrb[0].mxu0
    %v595 = vadd.f32 %v402, %v594
    %v596 = vpop.f32.mrb[0].mxu0
    %597 = vmatprep.mubr.bf16.mxu0 0
    %598 = vmatmul.mubr.bf16.gmra.mrb[0].mxu0 %v494
    %v599 = vpop.f32.mrb[0].mxu0
    %v600 = vadd.f32 %v407, %v599
    %v601 = vpop.f32.mrb[0].mxu0
    %v602 = vpop.f32.mrb[0].mxu0
    %v603 = vadd.f32 %v410, %v602
    %v604 = vpop.f32.mrb[0].mxu0
    %605 = vmatprep.mubr.bf16.mxu0 0
    %606 = vmatmul.mubr.bf16.gmra.mrb[0].mxu0 %v495
    %v607 = vpop.f32.mrb[0].mxu0
    %v608 = vadd.f32 %v415, %v607
    %v609 = vpop.f32.mrb[0].mxu0
    %v610 = vpop.f32.mrb[0].mxu0
    %v611 = vadd.f32 %v418, %v610
    %v612 = vpop.f32.mrb[0].mxu0
    %613 = vmatprep.mubr.bf16.mxu0 0
    %614 = vmatmul.mubr.bf16.gmra.mrb[0].mxu0 %v496
    %v615 = vpop.f32.mrb[0].mxu0
    %v616 = vadd.f32 %v423, %v615
    %v617 = vpop.f32.mrb[0].mxu0
    %v618 = vpop.f32.mrb[0].mxu0
    %v619 = vadd.f32 %v426, %v618
    %v620 = vpop.f32.mrb[0].mxu0
    %621 = vmatprep.mubr.bf16.mxu0 0
    %622 = vmatmul.mubr.bf16.gmra.mrb[0].mxu0 %v497
    %v623 = vpop.f32.mrb[0].mxu0
    %v624 = vadd.f32 %v431, %v623
    %v625 = vpop.f32.mrb[0].mxu0
    %v626 = vpop.f32.mrb[0].mxu0
    %v627 = vadd.f32 %v434, %v626
    %v628 = vpop.f32.mrb[0].mxu0
    %629 = vmatprep.mubr.bf16.mxu0 0
    %630 = vmatmul.mubr.bf16.gmra.mrb[0].mxu0 %v498
    %v631 = vpop.f32.mrb[0].mxu0
    %v632 = vadd.f32 %v439, %v631
    %v633 = vpop.f32.mrb[0].mxu0
    %v634 = vpop.f32.mrb[0].mxu0
    %v635 = vadd.f32 %v442, %v634
    %v636 = vpop.f32.mrb[0].mxu0
    %637 = vmatprep.mubr.bf16.mxu0 0
    %638 = vmatmul.mubr.bf16.gmra.mrb[0].mxu0 %v499
    %v639 = vpop.f32.mrb[0].mxu0
    %v640 = vadd.f32 %v447, %v639
    %v641 = vpop.f32.mrb[0].mxu0
    %v642 = vpop.f32.mrb[0].mxu0
    %v643 = vadd.f32 %v450, %v642
    %v644 = vpop.f32.mrb[0].mxu0
    %645 = vmatprep.mubr.bf16.mxu0 0
    %646 = vmatmul.mubr.bf16.gmra.mrb[0].mxu0 %v500
    %v647 = vpop.f32.mrb[0].mxu0
    %v648 = vadd.f32 %v455, %v647
    %v649 = vpop.f32.mrb[0].mxu0
    %v650 = vpop.f32.mrb[0].mxu0
    %v651 = vadd.f32 %v458, %v650
    %v652 = vpop.f32.mrb[0].mxu0
    %653 = vdwg.mxu0
    %vm662 = vcmask 1042432
    %vm663 = vcmask 1046532
    %vm664 = vmor %vm662, %vm663
    %v665 = vrot.slane %v33, 5
    %v666 = vrot.slane %v665, 4
    %v667 = vrot.slane %v34, 5
    %v668 = vsel %vm664, %v666, %v667
    %v669 = vrot.slane %v667, 4
    %v670 = vrot.slane %v35, 5
    %v671 = vsel %vm664, %v669, %v670
    %v672 = vrot.slane %v36, 5
    %v673 = vrot.slane %v672, 4
    %v674 = vrot.slane %v37, 5
    %v675 = vsel %vm664, %v673, %v674
    %v676 = vrot.slane %v674, 4
    %v677 = vrot.slane %v38, 5
    %v678 = vsel %vm664, %v676, %v677
    %v679 = vrot.slane %v39, 5
    %v680 = vrot.slane %v679, 4
    %v681 = vrot.slane %v40, 5
    %v682 = vsel %vm664, %v680, %v681
    %v683 = vrot.slane %v681, 4
    %v684 = vrot.slane %v41, 5
    %v685 = vsel %vm664, %v683, %v684
    %v686 = vrot.slane %v42, 5
    %v687 = vrot.slane %v686, 4
    %v688 = vrot.slane %v43, 5
    %v689 = vsel %vm664, %v687, %v688
    %v690 = vrot.slane %v688, 4
    %v691 = vrot.slane %v44, 5
    %v692 = vsel %vm664, %v690, %v691
    %v693 = vrot.slane %v45, 5
    %v694 = vrot.slane %v693, 4
    %v695 = vrot.slane %v46, 5
    %v696 = vsel %vm664, %v694, %v695
    %v697 = vrot.slane %v695, 4
    %v698 = vrot.slane %v47, 5
    %v699 = vsel %vm664, %v697, %v698
    %v700 = vrot.slane %v48, 5
    %v701 = vrot.slane %v700, 4
    %v702 = vrot.slane %v49, 5
    %v703 = vsel %vm664, %v701, %v702
    %v704 = vrot.slane %v702, 4
    %v705 = vrot.slane %v50, 5
    %v706 = vsel %vm664, %v704, %v705
    %v707 = vrot.slane %v51, 5
    %v708 = vrot.slane %v707, 4
    %v709 = vrot.slane %v52, 5
    %v710 = vsel %vm664, %v708, %v709
    %v711 = vrot.slane %v709, 4
    %v712 = vrot.slane %v53, 5
    %v713 = vsel %vm664, %v711, %v712
    %v714 = vrot.slane %v54, 5
    %v715 = vrot.slane %v714, 4
    %v716 = vrot.slane %v55, 5
    %v717 = vsel %vm664, %v715, %v716
    %v718 = vrot.slane %v716, 4
    %v719 = vrot.slane %v56, 5
    %v720 = vsel %vm664, %v718, %v719
    %v721 = vld [vmem:[%s1 + $0x80] sm:$0xf]
    %v722 = vld [vmem:[%s1 + $0x84] sm:$0xf]
    %v723 = vld [vmem:[%s1 + $0x88] sm:$0xf]
    %v724 = vld [vmem:[%s1 + $0x8c] sm:$0xf]
    %v725 = vld [vmem:[%s1 + $0x90] sm:$0xf]
    %v726 = vld [vmem:[%s1 + $0x94] sm:$0xf]
    %v727 = vld [vmem:[%s1 + $0x98] sm:$0xf]
    %v728 = vld [vmem:[%s1 + $0x9c] sm:$0xf]
    %v729 = vld [vmem:[%s1 + $0xa0] sm:$0xf]
    %v730 = vld [vmem:[%s1 + $0xa4] sm:$0xf]
    %v731 = vld [vmem:[%s1 + $0xa8] sm:$0xf]
    %v732 = vld [vmem:[%s1 + $0xac] sm:$0xf]
    %v733 = vld [vmem:[%s1 + $0xb0] sm:$0xf]
    %v734 = vld [vmem:[%s1 + $0xb4] sm:$0xf]
    %v735 = vld [vmem:[%s1 + $0xb8] sm:$0xf]
    %v736 = vld [vmem:[%s1 + $0xbc] sm:$0xf]
    %v737 = vunpack.c.l.b16 %v668
    %v738 = vunpack.c.l.b16 %v671
    %v739 = vunpack.c.l.b16 %v675
    %v740 = vunpack.c.l.b16 %v678
    %v741 = vunpack.c.l.b16 %v682
    %v742 = vunpack.c.l.b16 %v685
    %v743 = vunpack.c.l.b16 %v689
    %v744 = vunpack.c.l.b16 %v692
    %v745 = vunpack.c.l.b16 %v696
    %v746 = vunpack.c.l.b16 %v699
    %v747 = vunpack.c.l.b16 %v703
    %v748 = vunpack.c.l.b16 %v706
    %v749 = vunpack.c.l.b16 %v710
    %v750 = vunpack.c.l.b16 %v713
    %v751 = vunpack.c.l.b16 %v717
    %v752 = vunpack.c.l.b16 %v720
    %v753 = vpack.c.b16 %v738, %v737
    %v754 = vpack.c.b16 %v740, %v739
    %v755 = vpack.c.b16 %v742, %v741
    %v756 = vpack.c.b16 %v744, %v743
    %v757 = vpack.c.b16 %v746, %v745
    %v758 = vpack.c.b16 %v748, %v747
    %v759 = vpack.c.b16 %v750, %v749
    %v760 = vpack.c.b16 %v752, %v751
    %v785 = vunpack.c.l.b16 %v721
    %v786 = vunpack.c.l.b16 %v722
    %v787 = vunpack.c.l.b16 %v723
    %v788 = vunpack.c.l.b16 %v724
    %v789 = vunpack.c.l.b16 %v725
    %v790 = vunpack.c.l.b16 %v726
    %v791 = vunpack.c.l.b16 %v727
    %v792 = vunpack.c.l.b16 %v728
    %v793 = vunpack.c.l.b16 %v729
    %v794 = vunpack.c.l.b16 %v730
    %v795 = vunpack.c.l.b16 %v731
    %v796 = vunpack.c.l.b16 %v732
    %v797 = vunpack.c.l.b16 %v733
    %v798 = vunpack.c.l.b16 %v734
    %v799 = vunpack.c.l.b16 %v735
    %v800 = vunpack.c.l.b16 %v736
    %v801 = vpack.c.b16 %v786, %v785
    %v802 = vpack.c.b16 %v788, %v787
    %v803 = vpack.c.b16 %v790, %v789
    %v804 = vpack.c.b16 %v792, %v791
    %v805 = vpack.c.b16 %v794, %v793
    %v806 = vpack.c.b16 %v796, %v795
    %v807 = vpack.c.b16 %v798, %v797
    %v808 = vpack.c.b16 %v800, %v799
    %817 = vmatprep.subr.bf16.mxu0 0
    %818 = vmatpush1.bf16.msra.mxu0 %v801
    %819 = vmatprep.subr.bf16.mxu0 0
    %820 = vmatpush1.bf16.msra.mxu0 %v802
    %821 = vmatprep.subr.bf16.mxu0 0
    %822 = vmatpush1.bf16.msra.mxu0 %v803
    %823 = vmatprep.subr.bf16.mxu0 0
    %824 = vmatpush1.bf16.msra.mxu0 %v804
    %825 = vmatprep.subr.bf16.mxu0 0
    %826 = vmatpush1.bf16.msra.mxu0 %v805
    %827 = vmatprep.subr.bf16.mxu0 0
    %828 = vmatpush1.bf16.msra.mxu0 %v806
    %829 = vmatprep.subr.bf16.mxu0 0
    %830 = vmatpush1.bf16.msra.mxu0 %v807
    %831 = vmatprep.subr.bf16.mxu0 0
    %832 = vmatpush1.bf16.msra.mxu0 %v808
    %833 = vmatprep.subr.bf16.mxu0 0
    %834 = vmatpush1.bf16.msra.mxu0 0
    %835 = vmatprep.subr.bf16.mxu0 0
    %836 = vmatpush1.bf16.msra.mxu0 0
    %837 = vmatprep.subr.bf16.mxu0 0
    %838 = vmatpush1.bf16.msra.mxu0 0
    %839 = vmatprep.subr.bf16.mxu0 0
    %840 = vmatpush1.bf16.msra.mxu0 0
    %841 = vmatprep.subr.bf16.mxu0 0
    %842 = vmatpush1.bf16.msra.mxu0 0
    %843 = vmatprep.subr.bf16.mxu0 0
    %844 = vmatpush1.bf16.msra.mxu0 0
    %845 = vmatprep.subr.bf16.mxu0 0
    %846 = vmatpush1.bf16.msra.mxu0 0
    %847 = vmatprep.subr.bf16.mxu0 0
    %848 = vmatpush1.bf16.msra.mxu0 0
    %849 = vmatprep.mubr.bf16.mxu0 0
    %850 = vmatmul.mubr.bf16.gmra.mrb[0].mxu0 %v753
    %v851 = vpop.f32.mrb[0].mxu0
    %v852 = vadd.f32 0.0, %v851
    %v853 = vpop.f32.mrb[0].mxu0
    %v854 = vpop.f32.mrb[0].mxu0
    %v855 = vadd.f32 0.0, %v854
    %v856 = vpop.f32.mrb[0].mxu0
    %857 = vmatprep.mubr.bf16.mxu0 0
    %858 = vmatmul.mubr.bf16.gmra.mrb[0].mxu0 %v754
    %v859 = vpop.f32.mrb[0].mxu0
    %v860 = vadd.f32 0.0, %v859
    %v861 = vpop.f32.mrb[0].mxu0
    %v862 = vpop.f32.mrb[0].mxu0
    %v863 = vadd.f32 0.0, %v862
    %v864 = vpop.f32.mrb[0].mxu0
    %865 = vmatprep.mubr.bf16.mxu0 0
    %866 = vmatmul.mubr.bf16.gmra.mrb[0].mxu0 %v755
    %v867 = vpop.f32.mrb[0].mxu0
    %v868 = vadd.f32 0.0, %v867
    %v869 = vpop.f32.mrb[0].mxu0
    %v870 = vpop.f32.mrb[0].mxu0
    %v871 = vadd.f32 0.0, %v870
    %v872 = vpop.f32.mrb[0].mxu0
    %873 = vmatprep.mubr.bf16.mxu0 0
    %874 = vmatmul.mubr.bf16.gmra.mrb[0].mxu0 %v756
    %v875 = vpop.f32.mrb[0].mxu0
    %v876 = vadd.f32 0.0, %v875
    %v877 = vpop.f32.mrb[0].mxu0
    %v878 = vpop.f32.mrb[0].mxu0
    %v879 = vadd.f32 0.0, %v878
    %v880 = vpop.f32.mrb[0].mxu0
    %881 = vmatprep.mubr.bf16.mxu0 0
    %882 = vmatmul.mubr.bf16.gmra.mrb[0].mxu0 %v757
    %v883 = vpop.f32.mrb[0].mxu0
    %v884 = vadd.f32 0.0, %v883
    %v885 = vpop.f32.mrb[0].mxu0
    %v886 = vpop.f32.mrb[0].mxu0
    %v887 = vadd.f32 0.0, %v886
    %v888 = vpop.f32.mrb[0].mxu0
    %889 = vmatprep.mubr.bf16.mxu0 0
    %890 = vmatmul.mubr.bf16.gmra.mrb[0].mxu0 %v758
    %v891 = vpop.f32.mrb[0].mxu0
    %v892 = vadd.f32 0.0, %v891
    %v893 = vpop.f32.mrb[0].mxu0
    %v894 = vpop.f32.mrb[0].mxu0
    %v895 = vadd.f32 0.0, %v894
    %v896 = vpop.f32.mrb[0].mxu0
    %897 = vmatprep.mubr.bf16.mxu0 0
    %898 = vmatmul.mubr.bf16.gmra.mrb[0].mxu0 %v759
    %v899 = vpop.f32.mrb[0].mxu0
    %v900 = vadd.f32 0.0, %v899
    %v901 = vpop.f32.mrb[0].mxu0
    %v902 = vpop.f32.mrb[0].mxu0
    %v903 = vadd.f32 0.0, %v902
    %v904 = vpop.f32.mrb[0].mxu0
    %905 = vmatprep.mubr.bf16.mxu0 0
    %906 = vmatmul.mubr.bf16.gmra.mrb[0].mxu0 %v760
    %v907 = vpop.f32.mrb[0].mxu0
    %v908 = vadd.f32 0.0, %v907
    %v909 = vpop.f32.mrb[0].mxu0
    %v910 = vpop.f32.mrb[0].mxu0
    %v911 = vadd.f32 0.0, %v910
    %v912 = vpop.f32.mrb[0].mxu0
    %913 = vdwg.mxu0
    %v914 = vadd.f32 %v592, %v852
    %v915 = vadd.f32 %v595, %v855
    %v916 = vadd.f32 %v600, %v860
    %v917 = vadd.f32 %v603, %v863
    %v918 = vadd.f32 %v608, %v868
    %v919 = vadd.f32 %v611, %v871
    %v920 = vadd.f32 %v616, %v876
    %v921 = vadd.f32 %v619, %v879
    %v922 = vadd.f32 %v624, %v884
    %v923 = vadd.f32 %v627, %v887
    %v924 = vadd.f32 %v632, %v892
    %v925 = vadd.f32 %v635, %v895
    %v926 = vadd.f32 %v640, %v900
    %v927 = vadd.f32 %v643, %v903
    %v928 = vadd.f32 %v648, %v908
    %v929 = vadd.f32 %v651, %v911
    %s930 = sadd.s32 %s29, 1
    %s931 = smul.u32 %s930, 3
    %s932 = smul.addr %s931, 4
    %s933 = scalar_lea.vmem %s0, %s932
    %v934 = vld [vmem:[%s933] sm:$0xf]
    %v935 = vld [vmem:[%s933 + $0x4] sm:$0xf]
    %v936 = vld [vmem:[%s933 + $0x8] sm:$0x1]
    %v937 = vld [vmem:[%s933 + $0xc] sm:$0xf]
    %v938 = vld [vmem:[%s933 + $0x10] sm:$0xf]
    %v939 = vld [vmem:[%s933 + $0x14] sm:$0x1]
    %v940 = vld [vmem:[%s933 + $0x18] sm:$0xf]
    %v941 = vld [vmem:[%s933 + $0x1c] sm:$0xf]
    %v942 = vld [vmem:[%s933 + $0x20] sm:$0x1]
    %v943 = vld [vmem:[%s933 + $0x24] sm:$0xf]
    %v944 = vld [vmem:[%s933 + $0x28] sm:$0xf]
    %v945 = vld [vmem:[%s933 + $0x2c] sm:$0x1]
    %v946 = vld [vmem:[%s933 + $0x30] sm:$0xf]
    %v947 = vld [vmem:[%s933 + $0x34] sm:$0xf]
    %v948 = vld [vmem:[%s933 + $0x38] sm:$0x1]
    %v949 = vld [vmem:[%s933 + $0x3c] sm:$0xf]
    %v950 = vld [vmem:[%s933 + $0x40] sm:$0xf]
    %v951 = vld [vmem:[%s933 + $0x44] sm:$0x1]
    %v952 = vld [vmem:[%s933 + $0x48] sm:$0xf]
    %v953 = vld [vmem:[%s933 + $0x4c] sm:$0xf]
    %v954 = vld [vmem:[%s933 + $0x50] sm:$0x1]
    %v955 = vld [vmem:[%s933 + $0x54] sm:$0xf]
    %v956 = vld [vmem:[%s933 + $0x58] sm:$0xf]
    %v957 = vld [vmem:[%s933 + $0x5c] sm:$0x1]
    %v958 = vld [vmem:[%s1 + $0xc0] sm:$0xf]
    %v959 = vld [vmem:[%s1 + $0xc4] sm:$0xf]
    %v960 = vld [vmem:[%s1 + $0xc8] sm:$0xf]
    %v961 = vld [vmem:[%s1 + $0xcc] sm:$0xf]
    %v962 = vld [vmem:[%s1 + $0xd0] sm:$0xf]
    %v963 = vld [vmem:[%s1 + $0xd4] sm:$0xf]
    %v964 = vld [vmem:[%s1 + $0xd8] sm:$0xf]
    %v965 = vld [vmem:[%s1 + $0xdc] sm:$0xf]
    %v966 = vld [vmem:[%s1 + $0xe0] sm:$0xf]
    %v967 = vld [vmem:[%s1 + $0xe4] sm:$0xf]
    %v968 = vld [vmem:[%s1 + $0xe8] sm:$0xf]
    %v969 = vld [vmem:[%s1 + $0xec] sm:$0xf]
    %v970 = vld [vmem:[%s1 + $0xf0] sm:$0xf]
    %v971 = vld [vmem:[%s1 + $0xf4] sm:$0xf]
    %v972 = vld [vmem:[%s1 + $0xf8] sm:$0xf]
    %v973 = vld [vmem:[%s1 + $0xfc] sm:$0xf]
    %v990 = vunpack.c.l.b16 %v934
    %v991 = vunpack.c.l.b16 %v935
    %v992 = vunpack.c.l.b16 %v937
    %v993 = vunpack.c.l.b16 %v938
    %v994 = vunpack.c.l.b16 %v940
    %v995 = vunpack.c.l.b16 %v941
    %v996 = vunpack.c.l.b16 %v943
    %v997 = vunpack.c.l.b16 %v944
    %v998 = vunpack.c.l.b16 %v946
    %v999 = vunpack.c.l.b16 %v947
    %v1000 = vunpack.c.l.b16 %v949
    %v1001 = vunpack.c.l.b16 %v950
    %v1002 = vunpack.c.l.b16 %v952
    %v1003 = vunpack.c.l.b16 %v953
    %v1004 = vunpack.c.l.b16 %v955
    %v1005 = vunpack.c.l.b16 %v956
    %v1006 = vpack.c.b16 %v991, %v990
    %v1007 = vpack.c.b16 %v993, %v992
    %v1008 = vpack.c.b16 %v995, %v994
    %v1009 = vpack.c.b16 %v997, %v996
    %v1010 = vpack.c.b16 %v999, %v998
    %v1011 = vpack.c.b16 %v1001, %v1000
    %v1012 = vpack.c.b16 %v1003, %v1002
    %v1013 = vpack.c.b16 %v1005, %v1004
    %v1038 = vunpack.c.l.b16 %v958
    %v1039 = vunpack.c.l.b16 %v959
    %v1040 = vunpack.c.l.b16 %v960
    %v1041 = vunpack.c.l.b16 %v961
    %v1042 = vunpack.c.l.b16 %v962
    %v1043 = vunpack.c.l.b16 %v963
    %v1044 = vunpack.c.l.b16 %v964
    %v1045 = vunpack.c.l.b16 %v965
    %v1046 = vunpack.c.l.b16 %v966
    %v1047 = vunpack.c.l.b16 %v967
    %v1048 = vunpack.c.l.b16 %v968
    %v1049 = vunpack.c.l.b16 %v969
    %v1050 = vunpack.c.l.b16 %v970
    %v1051 = vunpack.c.l.b16 %v971
    %v1052 = vunpack.c.l.b16 %v972
    %v1053 = vunpack.c.l.b16 %v973
    %v1054 = vpack.c.b16 %v1039, %v1038
    %v1055 = vpack.c.b16 %v1041, %v1040
    %v1056 = vpack.c.b16 %v1043, %v1042
    %v1057 = vpack.c.b16 %v1045, %v1044
    %v1058 = vpack.c.b16 %v1047, %v1046
    %v1059 = vpack.c.b16 %v1049, %v1048
    %v1060 = vpack.c.b16 %v1051, %v1050
    %v1061 = vpack.c.b16 %v1053, %v1052
    %1070 = vmatprep.subr.bf16.mxu0 0
    %1071 = vmatpush1.bf16.msra.mxu0 %v1054
    %1072 = vmatprep.subr.bf16.mxu0 0
    %1073 = vmatpush1.bf16.msra.mxu0 %v1055
    %1074 = vmatprep.subr.bf16.mxu0 0
    %1075 = vmatpush1.bf16.msra.mxu0 %v1056
    %1076 = vmatprep.subr.bf16.mxu0 0
    %1077 = vmatpush1.bf16.msra.mxu0 %v1057
    %1078 = vmatprep.subr.bf16.mxu0 0
    %1079 = vmatpush1.bf16.msra.mxu0 %v1058
    %1080 = vmatprep.subr.bf16.mxu0 0
    %1081 = vmatpush1.bf16.msra.mxu0 %v1059
    %1082 = vmatprep.subr.bf16.mxu0 0
    %1083 = vmatpush1.bf16.msra.mxu0 %v1060
    %1084 = vmatprep.subr.bf16.mxu0 0
    %1085 = vmatpush1.bf16.msra.mxu0 %v1061
    %1086 = vmatprep.subr.bf16.mxu0 0
    %1087 = vmatpush1.bf16.msra.mxu0 0
    %1088 = vmatprep.subr.bf16.mxu0 0
    %1089 = vmatpush1.bf16.msra.mxu0 0
    %1090 = vmatprep.subr.bf16.mxu0 0
    %1091 = vmatpush1.bf16.msra.mxu0 0
    %1092 = vmatprep.subr.bf16.mxu0 0
    %1093 = vmatpush1.bf16.msra.mxu0 0
    %1094 = vmatprep.subr.bf16.mxu0 0
    %1095 = vmatpush1.bf16.msra.mxu0 0
    %1096 = vmatprep.subr.bf16.mxu0 0
    %1097 = vmatpush1.bf16.msra.mxu0 0
    %1098 = vmatprep.subr.bf16.mxu0 0
    %1099 = vmatpush1.bf16.msra.mxu0 0
    %1100 = vmatprep.subr.bf16.mxu0 0
    %1101 = vmatpush1.bf16.msra.mxu0 0
    %1102 = vmatprep.mubr.bf16.mxu0 0
    %1103 = vmatmul.mubr.bf16.gmra.mrb[0].mxu0 %v1006
    %v1104 = vpop.f32.mrb[0].mxu0
    %v1105 = vadd.f32 0.0, %v1104
    %v1106 = vpop.f32.mrb[0].mxu0
    %v1107 = vpop.f32.mrb[0].mxu0
    %v1108 = vadd.f32 0.0, %v1107
    %v1109 = vpop.f32.mrb[0].mxu0
    %1110 = vmatprep.mubr.bf16.mxu0 0
    %1111 = vmatmul.mubr.bf16.gmra.mrb[0].mxu0 %v1007
    %v1112 = vpop.f32.mrb[0].mxu0
    %v1113 = vadd.f32 0.0, %v1112
    %v1114 = vpop.f32.mrb[0].mxu0
    %v1115 = vpop.f32.mrb[0].mxu0
    %v1116 = vadd.f32 0.0, %v1115
    %v1117 = vpop.f32.mrb[0].mxu0
    %1118 = vmatprep.mubr.bf16.mxu0 0
    %1119 = vmatmul.mubr.bf16.gmra.mrb[0].mxu0 %v1008
    %v1120 = vpop.f32.mrb[0].mxu0
    %v1121 = vadd.f32 0.0, %v1120
    %v1122 = vpop.f32.mrb[0].mxu0
    %v1123 = vpop.f32.mrb[0].mxu0
    %v1124 = vadd.f32 0.0, %v1123
    %v1125 = vpop.f32.mrb[0].mxu0
    %1126 = vmatprep.mubr.bf16.mxu0 0
    %1127 = vmatmul.mubr.bf16.gmra.mrb[0].mxu0 %v1009
    %v1128 = vpop.f32.mrb[0].mxu0
    %v1129 = vadd.f32 0.0, %v1128
    %v1130 = vpop.f32.mrb[0].mxu0
    %v1131 = vpop.f32.mrb[0].mxu0
    %v1132 = vadd.f32 0.0, %v1131
    %v1133 = vpop.f32.mrb[0].mxu0
    %1134 = vmatprep.mubr.bf16.mxu0 0
    %1135 = vmatmul.mubr.bf16.gmra.mrb[0].mxu0 %v1010
    %v1136 = vpop.f32.mrb[0].mxu0
    %v1137 = vadd.f32 0.0, %v1136
    %v1138 = vpop.f32.mrb[0].mxu0
    %v1139 = vpop.f32.mrb[0].mxu0
    %v1140 = vadd.f32 0.0, %v1139
    %v1141 = vpop.f32.mrb[0].mxu0
    %1142 = vmatprep.mubr.bf16.mxu0 0
    %1143 = vmatmul.mubr.bf16.gmra.mrb[0].mxu0 %v1011
    %v1144 = vpop.f32.mrb[0].mxu0
    %v1145 = vadd.f32 0.0, %v1144
    %v1146 = vpop.f32.mrb[0].mxu0
    %v1147 = vpop.f32.mrb[0].mxu0
    %v1148 = vadd.f32 0.0, %v1147
    %v1149 = vpop.f32.mrb[0].mxu0
    %1150 = vmatprep.mubr.bf16.mxu0 0
    %1151 = vmatmul.mubr.bf16.gmra.mrb[0].mxu0 %v1012
    %v1152 = vpop.f32.mrb[0].mxu0
    %v1153 = vadd.f32 0.0, %v1152
    %v1154 = vpop.f32.mrb[0].mxu0
    %v1155 = vpop.f32.mrb[0].mxu0
    %v1156 = vadd.f32 0.0, %v1155
    %v1157 = vpop.f32.mrb[0].mxu0
    %1158 = vmatprep.mubr.bf16.mxu0 0
    %1159 = vmatmul.mubr.bf16.gmra.mrb[0].mxu0 %v1013
    %v1160 = vpop.f32.mrb[0].mxu0
    %v1161 = vadd.f32 0.0, %v1160
    %v1162 = vpop.f32.mrb[0].mxu0
    %v1163 = vpop.f32.mrb[0].mxu0
    %v1164 = vadd.f32 0.0, %v1163
    %v1165 = vpop.f32.mrb[0].mxu0
    %1166 = vdwg.mxu0
    %v1167 = vadd.f32 %v914, %v1105
    %v1168 = vadd.f32 %v915, %v1108
    %v1169 = vadd.f32 %v916, %v1113
    %v1170 = vadd.f32 %v917, %v1116
    %v1171 = vadd.f32 %v918, %v1121
    %v1172 = vadd.f32 %v919, %v1124
    %v1173 = vadd.f32 %v920, %v1129
    %v1174 = vadd.f32 %v921, %v1132
    %v1175 = vadd.f32 %v922, %v1137
    %v1176 = vadd.f32 %v923, %v1140
    %v1177 = vadd.f32 %v924, %v1145
    %v1178 = vadd.f32 %v925, %v1148
    %v1179 = vadd.f32 %v926, %v1153
    %v1180 = vadd.f32 %v927, %v1156
    %v1181 = vadd.f32 %v928, %v1161
    %v1182 = vadd.f32 %v929, %v1164
    %v1184 = vshrl.u32 %v934, 16
    %v1186 = vrot.slane %v1184, 4
    %v1187 = vshll.u32 %v934, 16
    %v1189 = vrot.slane %v1187, 5
    %v1190 = vor.u32 %v1186, %v1189
    %v1191 = vrot.slane %v1190, 4
    %v1193 = vshll.u32 %v935, 16
    %v1195 = vrot.slane %v1193, 5
    %v1196 = vsel %vm75, %v1191, %v1195
    %v1197 = vshrl.u32 %v935, 16
    %v1199 = vrot.slane %v1197, 4
    %v1200 = vor.u32 %v1199, %v1195
    %v1201 = vrot.slane %v1200, 4
    %v1203 = vshll.u32 %v936, 16
    %v1205 = vrot.slane %v1203, 5
    %v1206 = vsel %vm75, %v1201, %v1205
    %v1208 = vshrl.u32 %v937, 16
    %v1210 = vrot.slane %v1208, 4
    %v1211 = vshll.u32 %v937, 16
    %v1213 = vrot.slane %v1211, 5
    %v1214 = vor.u32 %v1210, %v1213
    %v1215 = vrot.slane %v1214, 4
    %v1217 = vshll.u32 %v938, 16
    %v1219 = vrot.slane %v1217, 5
    %v1220 = vsel %vm75, %v1215, %v1219
    %v1221 = vshrl.u32 %v938, 16
    %v1223 = vrot.slane %v1221, 4
    %v1224 = vor.u32 %v1223, %v1219
    %v1225 = vrot.slane %v1224, 4
    %v1227 = vshll.u32 %v939, 16
    %v1229 = vrot.slane %v1227, 5
    %v1230 = vsel %vm75, %v1225, %v1229
    %v1232 = vshrl.u32 %v940, 16
    %v1234 = vrot.slane %v1232, 4
    %v1235 = vshll.u32 %v940, 16
    %v1237 = vrot.slane %v1235, 5
    %v1238 = vor.u32 %v1234, %v1237
    %v1239 = vrot.slane %v1238, 4
    %v1241 = vshll.u32 %v941, 16
    %v1243 = vrot.slane %v1241, 5
    %v1244 = vsel %vm75, %v1239, %v1243
    %v1245 = vshrl.u32 %v941, 16
    %v1247 = vrot.slane %v1245, 4
    %v1248 = vor.u32 %v1247, %v1243
    %v1249 = vrot.slane %v1248, 4
    %v1251 = vshll.u32 %v942, 16
    %v1253 = vrot.slane %v1251, 5
    %v1254 = vsel %vm75, %v1249, %v1253
    %v1256 = vshrl.u32 %v943, 16
    %v1258 = vrot.slane %v1256, 4
    %v1259 = vshll.u32 %v943, 16
    %v1261 = vrot.slane %v1259, 5
    %v1262 = vor.u32 %v1258, %v1261
    %v1263 = vrot.slane %v1262, 4
    %v1265 = vshll.u32 %v944, 16
    %v1267 = vrot.slane %v1265, 5
    %v1268 = vsel %vm75, %v1263, %v1267
    %v1269 = vshrl.u32 %v944, 16
    %v1271 = vrot.slane %v1269, 4
    %v1272 = vor.u32 %v1271, %v1267
    %v1273 = vrot.slane %v1272, 4
    %v1275 = vshll.u32 %v945, 16
    %v1277 = vrot.slane %v1275, 5
    %v1278 = vsel %vm75, %v1273, %v1277
    %v1280 = vshrl.u32 %v946, 16
    %v1282 = vrot.slane %v1280, 4
    %v1283 = vshll.u32 %v946, 16
    %v1285 = vrot.slane %v1283, 5
    %v1286 = vor.u32 %v1282, %v1285
    %v1287 = vrot.slane %v1286, 4
    %v1289 = vshll.u32 %v947, 16
    %v1291 = vrot.slane %v1289, 5
    %v1292 = vsel %vm75, %v1287, %v1291
    %v1293 = vshrl.u32 %v947, 16
    %v1295 = vrot.slane %v1293, 4
    %v1296 = vor.u32 %v1295, %v1291
    %v1297 = vrot.slane %v1296, 4
    %v1299 = vshll.u32 %v948, 16
    %v1301 = vrot.slane %v1299, 5
    %v1302 = vsel %vm75, %v1297, %v1301
    %v1304 = vshrl.u32 %v949, 16
    %v1306 = vrot.slane %v1304, 4
    %v1307 = vshll.u32 %v949, 16
    %v1309 = vrot.slane %v1307, 5
    %v1310 = vor.u32 %v1306, %v1309
    %v1311 = vrot.slane %v1310, 4
    %v1313 = vshll.u32 %v950, 16
    %v1315 = vrot.slane %v1313, 5
    %v1316 = vsel %vm75, %v1311, %v1315
    %v1317 = vshrl.u32 %v950, 16
    %v1319 = vrot.slane %v1317, 4
    %v1320 = vor.u32 %v1319, %v1315
    %v1321 = vrot.slane %v1320, 4
    %v1323 = vshll.u32 %v951, 16
    %v1325 = vrot.slane %v1323, 5
    %v1326 = vsel %vm75, %v1321, %v1325
    %v1328 = vshrl.u32 %v952, 16
    %v1330 = vrot.slane %v1328, 4
    %v1331 = vshll.u32 %v952, 16
    %v1333 = vrot.slane %v1331, 5
    %v1334 = vor.u32 %v1330, %v1333
    %v1335 = vrot.slane %v1334, 4
    %v1337 = vshll.u32 %v953, 16
    %v1339 = vrot.slane %v1337, 5
    %v1340 = vsel %vm75, %v1335, %v1339
    %v1341 = vshrl.u32 %v953, 16
    %v1343 = vrot.slane %v1341, 4
    %v1344 = vor.u32 %v1343, %v1339
    %v1345 = vrot.slane %v1344, 4
    %v1347 = vshll.u32 %v954, 16
    %v1349 = vrot.slane %v1347, 5
    %v1350 = vsel %vm75, %v1345, %v1349
    %v1352 = vshrl.u32 %v955, 16
    %v1354 = vrot.slane %v1352, 4
    %v1355 = vshll.u32 %v955, 16
    %v1357 = vrot.slane %v1355, 5
    %v1358 = vor.u32 %v1354, %v1357
    %v1359 = vrot.slane %v1358, 4
    %v1361 = vshll.u32 %v956, 16
    %v1363 = vrot.slane %v1361, 5
    %v1364 = vsel %vm75, %v1359, %v1363
    %v1365 = vshrl.u32 %v956, 16
    %v1367 = vrot.slane %v1365, 4
    %v1368 = vor.u32 %v1367, %v1363
    %v1369 = vrot.slane %v1368, 4
    %v1371 = vshll.u32 %v957, 16
    %v1373 = vrot.slane %v1371, 5
    %v1374 = vsel %vm75, %v1369, %v1373
    %v1375 = vld [vmem:[%s1 + $0x100] sm:$0xf]
    %v1376 = vld [vmem:[%s1 + $0x104] sm:$0xf]
    %v1377 = vld [vmem:[%s1 + $0x108] sm:$0xf]
    %v1378 = vld [vmem:[%s1 + $0x10c] sm:$0xf]
    %v1379 = vld [vmem:[%s1 + $0x110] sm:$0xf]
    %v1380 = vld [vmem:[%s1 + $0x114] sm:$0xf]
    %v1381 = vld [vmem:[%s1 + $0x118] sm:$0xf]
    %v1382 = vld [vmem:[%s1 + $0x11c] sm:$0xf]
    %v1383 = vld [vmem:[%s1 + $0x120] sm:$0xf]
    %v1384 = vld [vmem:[%s1 + $0x124] sm:$0xf]
    %v1385 = vld [vmem:[%s1 + $0x128] sm:$0xf]
    %v1386 = vld [vmem:[%s1 + $0x12c] sm:$0xf]
    %v1387 = vld [vmem:[%s1 + $0x130] sm:$0xf]
    %v1388 = vld [vmem:[%s1 + $0x134] sm:$0xf]
    %v1389 = vld [vmem:[%s1 + $0x138] sm:$0xf]
    %v1390 = vld [vmem:[%s1 + $0x13c] sm:$0xf]
    %v1391 = vunpack.c.l.b16 %v1196
    %v1392 = vunpack.c.l.b16 %v1206
    %v1393 = vunpack.c.l.b16 %v1220
    %v1394 = vunpack.c.l.b16 %v1230
    %v1395 = vunpack.c.l.b16 %v1244
    %v1396 = vunpack.c.l.b16 %v1254
    %v1397 = vunpack.c.l.b16 %v1268
    %v1398 = vunpack.c.l.b16 %v1278
    %v1399 = vunpack.c.l.b16 %v1292
    %v1400 = vunpack.c.l.b16 %v1302
    %v1401 = vunpack.c.l.b16 %v1316
    %v1402 = vunpack.c.l.b16 %v1326
    %v1403 = vunpack.c.l.b16 %v1340
    %v1404 = vunpack.c.l.b16 %v1350
    %v1405 = vunpack.c.l.b16 %v1364
    %v1406 = vunpack.c.l.b16 %v1374
    %v1407 = vpack.c.b16 %v1392, %v1391
    %v1408 = vpack.c.b16 %v1394, %v1393
    %v1409 = vpack.c.b16 %v1396, %v1395
    %v1410 = vpack.c.b16 %v1398, %v1397
    %v1411 = vpack.c.b16 %v1400, %v1399
    %v1412 = vpack.c.b16 %v1402, %v1401
    %v1413 = vpack.c.b16 %v1404, %v1403
    %v1414 = vpack.c.b16 %v1406, %v1405
    %v1439 = vunpack.c.l.b16 %v1375
    %v1440 = vunpack.c.l.b16 %v1376
    %v1441 = vunpack.c.l.b16 %v1377
    %v1442 = vunpack.c.l.b16 %v1378
    %v1443 = vunpack.c.l.b16 %v1379
    %v1444 = vunpack.c.l.b16 %v1380
    %v1445 = vunpack.c.l.b16 %v1381
    %v1446 = vunpack.c.l.b16 %v1382
    %v1447 = vunpack.c.l.b16 %v1383
    %v1448 = vunpack.c.l.b16 %v1384
    %v1449 = vunpack.c.l.b16 %v1385
    %v1450 = vunpack.c.l.b16 %v1386
    %v1451 = vunpack.c.l.b16 %v1387
    %v1452 = vunpack.c.l.b16 %v1388
    %v1453 = vunpack.c.l.b16 %v1389
    %v1454 = vunpack.c.l.b16 %v1390
    %v1455 = vpack.c.b16 %v1440, %v1439
    %v1456 = vpack.c.b16 %v1442, %v1441
    %v1457 = vpack.c.b16 %v1444, %v1443
    %v1458 = vpack.c.b16 %v1446, %v1445
    %v1459 = vpack.c.b16 %v1448, %v1447
    %v1460 = vpack.c.b16 %v1450, %v1449
    %v1461 = vpack.c.b16 %v1452, %v1451
    %v1462 = vpack.c.b16 %v1454, %v1453
    %1471 = vmatprep.subr.bf16.mxu0 0
    %1472 = vmatpush1.bf16.msra.mxu0 %v1455
    %1473 = vmatprep.subr.bf16.mxu0 0
    %1474 = vmatpush1.bf16.msra.mxu0 %v1456
    %1475 = vmatprep.subr.bf16.mxu0 0
    %1476 = vmatpush1.bf16.msra.mxu0 %v1457
    %1477 = vmatprep.subr.bf16.mxu0 0
    %1478 = vmatpush1.bf16.msra.mxu0 %v1458
    %1479 = vmatprep.subr.bf16.mxu0 0
    %1480 = vmatpush1.bf16.msra.mxu0 %v1459
    %1481 = vmatprep.subr.bf16.mxu0 0
    %1482 = vmatpush1.bf16.msra.mxu0 %v1460
    %1483 = vmatprep.subr.bf16.mxu0 0
    %1484 = vmatpush1.bf16.msra.mxu0 %v1461
    %1485 = vmatprep.subr.bf16.mxu0 0
    %1486 = vmatpush1.bf16.msra.mxu0 %v1462
    %1487 = vmatprep.subr.bf16.mxu0 0
    %1488 = vmatpush1.bf16.msra.mxu0 0
    %1489 = vmatprep.subr.bf16.mxu0 0
    %1490 = vmatpush1.bf16.msra.mxu0 0
    %1491 = vmatprep.subr.bf16.mxu0 0
    %1492 = vmatpush1.bf16.msra.mxu0 0
    %1493 = vmatprep.subr.bf16.mxu0 0
    %1494 = vmatpush1.bf16.msra.mxu0 0
    %1495 = vmatprep.subr.bf16.mxu0 0
    %1496 = vmatpush1.bf16.msra.mxu0 0
    %1497 = vmatprep.subr.bf16.mxu0 0
    %1498 = vmatpush1.bf16.msra.mxu0 0
    %1499 = vmatprep.subr.bf16.mxu0 0
    %1500 = vmatpush1.bf16.msra.mxu0 0
    %1501 = vmatprep.subr.bf16.mxu0 0
    %1502 = vmatpush1.bf16.msra.mxu0 0
    %1503 = vmatprep.mubr.bf16.mxu0 0
    %1504 = vmatmul.mubr.bf16.gmra.mrb[0].mxu0 %v1407
    %v1505 = vpop.f32.mrb[0].mxu0
    %v1506 = vadd.f32 0.0, %v1505
    %v1507 = vpop.f32.mrb[0].mxu0
    %v1508 = vpop.f32.mrb[0].mxu0
    %v1509 = vadd.f32 0.0, %v1508
    %v1510 = vpop.f32.mrb[0].mxu0
    %1511 = vmatprep.mubr.bf16.mxu0 0
    %1512 = vmatmul.mubr.bf16.gmra.mrb[0].mxu0 %v1408
    %v1513 = vpop.f32.mrb[0].mxu0
    %v1514 = vadd.f32 0.0, %v1513
    %v1515 = vpop.f32.mrb[0].mxu0
    %v1516 = vpop.f32.mrb[0].mxu0
    %v1517 = vadd.f32 0.0, %v1516
    %v1518 = vpop.f32.mrb[0].mxu0
    %1519 = vmatprep.mubr.bf16.mxu0 0
    %1520 = vmatmul.mubr.bf16.gmra.mrb[0].mxu0 %v1409
    %v1521 = vpop.f32.mrb[0].mxu0
    %v1522 = vadd.f32 0.0, %v1521
    %v1523 = vpop.f32.mrb[0].mxu0
    %v1524 = vpop.f32.mrb[0].mxu0
    %v1525 = vadd.f32 0.0, %v1524
    %v1526 = vpop.f32.mrb[0].mxu0
    %1527 = vmatprep.mubr.bf16.mxu0 0
    %1528 = vmatmul.mubr.bf16.gmra.mrb[0].mxu0 %v1410
    %v1529 = vpop.f32.mrb[0].mxu0
    %v1530 = vadd.f32 0.0, %v1529
    %v1531 = vpop.f32.mrb[0].mxu0
    %v1532 = vpop.f32.mrb[0].mxu0
    %v1533 = vadd.f32 0.0, %v1532
    %v1534 = vpop.f32.mrb[0].mxu0
    %1535 = vmatprep.mubr.bf16.mxu0 0
    %1536 = vmatmul.mubr.bf16.gmra.mrb[0].mxu0 %v1411
    %v1537 = vpop.f32.mrb[0].mxu0
    %v1538 = vadd.f32 0.0, %v1537
    %v1539 = vpop.f32.mrb[0].mxu0
    %v1540 = vpop.f32.mrb[0].mxu0
    %v1541 = vadd.f32 0.0, %v1540
    %v1542 = vpop.f32.mrb[0].mxu0
    %1543 = vmatprep.mubr.bf16.mxu0 0
    %1544 = vmatmul.mubr.bf16.gmra.mrb[0].mxu0 %v1412
    %v1545 = vpop.f32.mrb[0].mxu0
    %v1546 = vadd.f32 0.0, %v1545
    %v1547 = vpop.f32.mrb[0].mxu0
    %v1548 = vpop.f32.mrb[0].mxu0
    %v1549 = vadd.f32 0.0, %v1548
    %v1550 = vpop.f32.mrb[0].mxu0
    %1551 = vmatprep.mubr.bf16.mxu0 0
    %1552 = vmatmul.mubr.bf16.gmra.mrb[0].mxu0 %v1413
    %v1553 = vpop.f32.mrb[0].mxu0
    %v1554 = vadd.f32 0.0, %v1553
    %v1555 = vpop.f32.mrb[0].mxu0
    %v1556 = vpop.f32.mrb[0].mxu0
    %v1557 = vadd.f32 0.0, %v1556
    %v1558 = vpop.f32.mrb[0].mxu0
    %1559 = vmatprep.mubr.bf16.mxu0 0
    %1560 = vmatmul.mubr.bf16.gmra.mrb[0].mxu0 %v1414
    %v1561 = vpop.f32.mrb[0].mxu0
    %v1562 = vadd.f32 0.0, %v1561
    %v1563 = vpop.f32.mrb[0].mxu0
    %v1564 = vpop.f32.mrb[0].mxu0
    %v1565 = vadd.f32 0.0, %v1564
    %v1566 = vpop.f32.mrb[0].mxu0
    %1567 = vdwg.mxu0
    %v1568 = vadd.f32 %v1167, %v1506
    %v1569 = vadd.f32 %v1168, %v1509
    %v1570 = vadd.f32 %v1169, %v1514
    %v1571 = vadd.f32 %v1170, %v1517
    %v1572 = vadd.f32 %v1171, %v1522
    %v1573 = vadd.f32 %v1172, %v1525
    %v1574 = vadd.f32 %v1173, %v1530
    %v1575 = vadd.f32 %v1174, %v1533
    %v1576 = vadd.f32 %v1175, %v1538
    %v1577 = vadd.f32 %v1176, %v1541
    %v1578 = vadd.f32 %v1177, %v1546
    %v1579 = vadd.f32 %v1178, %v1549
    %v1580 = vadd.f32 %v1179, %v1554
    %v1581 = vadd.f32 %v1180, %v1557
    %v1582 = vadd.f32 %v1181, %v1562
    %v1583 = vadd.f32 %v1182, %v1565
    %v1592 = vrot.slane %v934, 5
    %v1593 = vrot.slane %v1592, 4
    %v1594 = vrot.slane %v935, 5
    %v1595 = vsel %vm664, %v1593, %v1594
    %v1596 = vrot.slane %v1594, 4
    %v1597 = vrot.slane %v936, 5
    %v1598 = vsel %vm664, %v1596, %v1597
    %v1599 = vrot.slane %v937, 5
    %v1600 = vrot.slane %v1599, 4
    %v1601 = vrot.slane %v938, 5
    %v1602 = vsel %vm664, %v1600, %v1601
    %v1603 = vrot.slane %v1601, 4
    %v1604 = vrot.slane %v939, 5
    %v1605 = vsel %vm664, %v1603, %v1604
    %v1606 = vrot.slane %v940, 5
    %v1607 = vrot.slane %v1606, 4
    %v1608 = vrot.slane %v941, 5
    %v1609 = vsel %vm664, %v1607, %v1608
    %v1610 = vrot.slane %v1608, 4
    %v1611 = vrot.slane %v942, 5
    %v1612 = vsel %vm664, %v1610, %v1611
    %v1613 = vrot.slane %v943, 5
    %v1614 = vrot.slane %v1613, 4
    %v1615 = vrot.slane %v944, 5
    %v1616 = vsel %vm664, %v1614, %v1615
    %v1617 = vrot.slane %v1615, 4
    %v1618 = vrot.slane %v945, 5
    %v1619 = vsel %vm664, %v1617, %v1618
    %v1620 = vrot.slane %v946, 5
    %v1621 = vrot.slane %v1620, 4
    %v1622 = vrot.slane %v947, 5
    %v1623 = vsel %vm664, %v1621, %v1622
    %v1624 = vrot.slane %v1622, 4
    %v1625 = vrot.slane %v948, 5
    %v1626 = vsel %vm664, %v1624, %v1625
    %v1627 = vrot.slane %v949, 5
    %v1628 = vrot.slane %v1627, 4
    %v1629 = vrot.slane %v950, 5
    %v1630 = vsel %vm664, %v1628, %v1629
    %v1631 = vrot.slane %v1629, 4
    %v1632 = vrot.slane %v951, 5
    %v1633 = vsel %vm664, %v1631, %v1632
    %v1634 = vrot.slane %v952, 5
    %v1635 = vrot.slane %v1634, 4
    %v1636 = vrot.slane %v953, 5
    %v1637 = vsel %vm664, %v1635, %v1636
    %v1638 = vrot.slane %v1636, 4
    %v1639 = vrot.slane %v954, 5
    %v1640 = vsel %vm664, %v1638, %v1639
    %v1641 = vrot.slane %v955, 5
    %v1642 = vrot.slane %v1641, 4
    %v1643 = vrot.slane %v956, 5
    %v1644 = vsel %vm664, %v1642, %v1643
    %v1645 = vrot.slane %v1643, 4
    %v1646 = vrot.slane %v957, 5
    %v1647 = vsel %vm664, %v1645, %v1646
    %v1648 = vld [vmem:[%s1 + $0x140] sm:$0xf]
    %v1649 = vld [vmem:[%s1 + $0x144] sm:$0xf]
    %v1650 = vld [vmem:[%s1 + $0x148] sm:$0xf]
    %v1651 = vld [vmem:[%s1 + $0x14c] sm:$0xf]
    %v1652 = vld [vmem:[%s1 + $0x150] sm:$0xf]
    %v1653 = vld [vmem:[%s1 + $0x154] sm:$0xf]
    %v1654 = vld [vmem:[%s1 + $0x158] sm:$0xf]
    %v1655 = vld [vmem:[%s1 + $0x15c] sm:$0xf]
    %v1656 = vld [vmem:[%s1 + $0x160] sm:$0xf]
    %v1657 = vld [vmem:[%s1 + $0x164] sm:$0xf]
    %v1658 = vld [vmem:[%s1 + $0x168] sm:$0xf]
    %v1659 = vld [vmem:[%s1 + $0x16c] sm:$0xf]
    %v1660 = vld [vmem:[%s1 + $0x170] sm:$0xf]
    %v1661 = vld [vmem:[%s1 + $0x174] sm:$0xf]
    %v1662 = vld [vmem:[%s1 + $0x178] sm:$0xf]
    %v1663 = vld [vmem:[%s1 + $0x17c] sm:$0xf]
    %v1664 = vunpack.c.l.b16 %v1595
    %v1665 = vunpack.c.l.b16 %v1598
    %v1666 = vunpack.c.l.b16 %v1602
    %v1667 = vunpack.c.l.b16 %v1605
    %v1668 = vunpack.c.l.b16 %v1609
    %v1669 = vunpack.c.l.b16 %v1612
    %v1670 = vunpack.c.l.b16 %v1616
    %v1671 = vunpack.c.l.b16 %v1619
    %v1672 = vunpack.c.l.b16 %v1623
    %v1673 = vunpack.c.l.b16 %v1626
    %v1674 = vunpack.c.l.b16 %v1630
    %v1675 = vunpack.c.l.b16 %v1633
    %v1676 = vunpack.c.l.b16 %v1637
    %v1677 = vunpack.c.l.b16 %v1640
    %v1678 = vunpack.c.l.b16 %v1644
    %v1679 = vunpack.c.l.b16 %v1647
    %v1680 = vpack.c.b16 %v1665, %v1664
    %v1681 = vpack.c.b16 %v1667, %v1666
    %v1682 = vpack.c.b16 %v1669, %v1668
    %v1683 = vpack.c.b16 %v1671, %v1670
    %v1684 = vpack.c.b16 %v1673, %v1672
    %v1685 = vpack.c.b16 %v1675, %v1674
    %v1686 = vpack.c.b16 %v1677, %v1676
    %v1687 = vpack.c.b16 %v1679, %v1678
    %v1712 = vunpack.c.l.b16 %v1648
    %v1713 = vunpack.c.l.b16 %v1649
    %v1714 = vunpack.c.l.b16 %v1650
    %v1715 = vunpack.c.l.b16 %v1651
    %v1716 = vunpack.c.l.b16 %v1652
    %v1717 = vunpack.c.l.b16 %v1653
    %v1718 = vunpack.c.l.b16 %v1654
    %v1719 = vunpack.c.l.b16 %v1655
    %v1720 = vunpack.c.l.b16 %v1656
    %v1721 = vunpack.c.l.b16 %v1657
    %v1722 = vunpack.c.l.b16 %v1658
    %v1723 = vunpack.c.l.b16 %v1659
    %v1724 = vunpack.c.l.b16 %v1660
    %v1725 = vunpack.c.l.b16 %v1661
    %v1726 = vunpack.c.l.b16 %v1662
    %v1727 = vunpack.c.l.b16 %v1663
    %v1728 = vpack.c.b16 %v1713, %v1712
    %v1729 = vpack.c.b16 %v1715, %v1714
    %v1730 = vpack.c.b16 %v1717, %v1716
    %v1731 = vpack.c.b16 %v1719, %v1718
    %v1732 = vpack.c.b16 %v1721, %v1720
    %v1733 = vpack.c.b16 %v1723, %v1722
    %v1734 = vpack.c.b16 %v1725, %v1724
    %v1735 = vpack.c.b16 %v1727, %v1726
    %1744 = vmatprep.subr.bf16.mxu0 0
    %1745 = vmatpush1.bf16.msra.mxu0 %v1728
    %1746 = vmatprep.subr.bf16.mxu0 0
    %1747 = vmatpush1.bf16.msra.mxu0 %v1729
    %1748 = vmatprep.subr.bf16.mxu0 0
    %1749 = vmatpush1.bf16.msra.mxu0 %v1730
    %1750 = vmatprep.subr.bf16.mxu0 0
    %1751 = vmatpush1.bf16.msra.mxu0 %v1731
    %1752 = vmatprep.subr.bf16.mxu0 0
    %1753 = vmatpush1.bf16.msra.mxu0 %v1732
    %1754 = vmatprep.subr.bf16.mxu0 0
    %1755 = vmatpush1.bf16.msra.mxu0 %v1733
    %1756 = vmatprep.subr.bf16.mxu0 0
    %1757 = vmatpush1.bf16.msra.mxu0 %v1734
    %1758 = vmatprep.subr.bf16.mxu0 0
    %1759 = vmatpush1.bf16.msra.mxu0 %v1735
    %1760 = vmatprep.subr.bf16.mxu0 0
    %1761 = vmatpush1.bf16.msra.mxu0 0
    %1762 = vmatprep.subr.bf16.mxu0 0
    %1763 = vmatpush1.bf16.msra.mxu0 0
    %1764 = vmatprep.subr.bf16.mxu0 0
    %1765 = vmatpush1.bf16.msra.mxu0 0
    %1766 = vmatprep.subr.bf16.mxu0 0
    %1767 = vmatpush1.bf16.msra.mxu0 0
    %1768 = vmatprep.subr.bf16.mxu0 0
    %1769 = vmatpush1.bf16.msra.mxu0 0
    %1770 = vmatprep.subr.bf16.mxu0 0
    %1771 = vmatpush1.bf16.msra.mxu0 0
    %1772 = vmatprep.subr.bf16.mxu0 0
    %1773 = vmatpush1.bf16.msra.mxu0 0
    %1774 = vmatprep.subr.bf16.mxu0 0
    %1775 = vmatpush1.bf16.msra.mxu0 0
    %1776 = vmatprep.mubr.bf16.mxu0 0
    %1777 = vmatmul.mubr.bf16.gmra.mrb[0].mxu0 %v1680
    %v1778 = vpop.f32.mrb[0].mxu0
    %v1779 = vadd.f32 0.0, %v1778
    %v1780 = vpop.f32.mrb[0].mxu0
    %v1781 = vpop.f32.mrb[0].mxu0
    %v1782 = vadd.f32 0.0, %v1781
    %v1783 = vpop.f32.mrb[0].mxu0
    %1784 = vmatprep.mubr.bf16.mxu0 0
    %1785 = vmatmul.mubr.bf16.gmra.mrb[0].mxu0 %v1681
    %v1786 = vpop.f32.mrb[0].mxu0
    %v1787 = vadd.f32 0.0, %v1786
    %v1788 = vpop.f32.mrb[0].mxu0
    %v1789 = vpop.f32.mrb[0].mxu0
    %v1790 = vadd.f32 0.0, %v1789
    %v1791 = vpop.f32.mrb[0].mxu0
    %1792 = vmatprep.mubr.bf16.mxu0 0
    %1793 = vmatmul.mubr.bf16.gmra.mrb[0].mxu0 %v1682
    %v1794 = vpop.f32.mrb[0].mxu0
    %v1795 = vadd.f32 0.0, %v1794
    %v1796 = vpop.f32.mrb[0].mxu0
    %v1797 = vpop.f32.mrb[0].mxu0
    %v1798 = vadd.f32 0.0, %v1797
    %v1799 = vpop.f32.mrb[0].mxu0
    %1800 = vmatprep.mubr.bf16.mxu0 0
    %1801 = vmatmul.mubr.bf16.gmra.mrb[0].mxu0 %v1683
    %v1802 = vpop.f32.mrb[0].mxu0
    %v1803 = vadd.f32 0.0, %v1802
    %v1804 = vpop.f32.mrb[0].mxu0
    %v1805 = vpop.f32.mrb[0].mxu0
    %v1806 = vadd.f32 0.0, %v1805
    %v1807 = vpop.f32.mrb[0].mxu0
    %1808 = vmatprep.mubr.bf16.mxu0 0
    %1809 = vmatmul.mubr.bf16.gmra.mrb[0].mxu0 %v1684
    %v1810 = vpop.f32.mrb[0].mxu0
    %v1811 = vadd.f32 0.0, %v1810
    %v1812 = vpop.f32.mrb[0].mxu0
    %v1813 = vpop.f32.mrb[0].mxu0
    %v1814 = vadd.f32 0.0, %v1813
    %v1815 = vpop.f32.mrb[0].mxu0
    %1816 = vmatprep.mubr.bf16.mxu0 0
    %1817 = vmatmul.mubr.bf16.gmra.mrb[0].mxu0 %v1685
    %v1818 = vpop.f32.mrb[0].mxu0
    %v1819 = vadd.f32 0.0, %v1818
    %v1820 = vpop.f32.mrb[0].mxu0
    %v1821 = vpop.f32.mrb[0].mxu0
    %v1822 = vadd.f32 0.0, %v1821
    %v1823 = vpop.f32.mrb[0].mxu0
    %1824 = vmatprep.mubr.bf16.mxu0 0
    %1825 = vmatmul.mubr.bf16.gmra.mrb[0].mxu0 %v1686
    %v1826 = vpop.f32.mrb[0].mxu0
    %v1827 = vadd.f32 0.0, %v1826
    %v1828 = vpop.f32.mrb[0].mxu0
    %v1829 = vpop.f32.mrb[0].mxu0
    %v1830 = vadd.f32 0.0, %v1829
    %v1831 = vpop.f32.mrb[0].mxu0
    %1832 = vmatprep.mubr.bf16.mxu0 0
    %1833 = vmatmul.mubr.bf16.gmra.mrb[0].mxu0 %v1687
    %v1834 = vpop.f32.mrb[0].mxu0
    %v1835 = vadd.f32 0.0, %v1834
    %v1836 = vpop.f32.mrb[0].mxu0
    %v1837 = vpop.f32.mrb[0].mxu0
    %v1838 = vadd.f32 0.0, %v1837
    %v1839 = vpop.f32.mrb[0].mxu0
    %1840 = vdwg.mxu0
    %v1841 = vadd.f32 %v1568, %v1779
    %v1842 = vadd.f32 %v1569, %v1782
    %v1843 = vadd.f32 %v1570, %v1787
    %v1844 = vadd.f32 %v1571, %v1790
    %v1845 = vadd.f32 %v1572, %v1795
    %v1846 = vadd.f32 %v1573, %v1798
    %v1847 = vadd.f32 %v1574, %v1803
    %v1848 = vadd.f32 %v1575, %v1806
    %v1849 = vadd.f32 %v1576, %v1811
    %v1850 = vadd.f32 %v1577, %v1814
    %v1851 = vadd.f32 %v1578, %v1819
    %v1852 = vadd.f32 %v1579, %v1822
    %v1853 = vadd.f32 %v1580, %v1827
    %v1854 = vadd.f32 %v1581, %v1830
    %v1855 = vadd.f32 %v1582, %v1835
    %v1856 = vadd.f32 %v1583, %v1838
    %s1857 = sadd.s32 %s29, 2
    %s1858 = smul.u32 %s1857, 3
    %s1859 = smul.addr %s1858, 4
    %s1860 = scalar_lea.vmem %s0, %s1859
    %v1861 = vld [vmem:[%s1860] sm:$0xf]
    %v1862 = vld [vmem:[%s1860 + $0x4] sm:$0xf]
    %v1863 = vld [vmem:[%s1860 + $0x8] sm:$0x1]
    %v1864 = vld [vmem:[%s1860 + $0xc] sm:$0xf]
    %v1865 = vld [vmem:[%s1860 + $0x10] sm:$0xf]
    %v1866 = vld [vmem:[%s1860 + $0x14] sm:$0x1]
    %v1867 = vld [vmem:[%s1860 + $0x18] sm:$0xf]
    %v1868 = vld [vmem:[%s1860 + $0x1c] sm:$0xf]
    %v1869 = vld [vmem:[%s1860 + $0x20] sm:$0x1]
    %v1870 = vld [vmem:[%s1860 + $0x24] sm:$0xf]
    %v1871 = vld [vmem:[%s1860 + $0x28] sm:$0xf]
    %v1872 = vld [vmem:[%s1860 + $0x2c] sm:$0x1]
    %v1873 = vld [vmem:[%s1860 + $0x30] sm:$0xf]
    %v1874 = vld [vmem:[%s1860 + $0x34] sm:$0xf]
    %v1875 = vld [vmem:[%s1860 + $0x38] sm:$0x1]
    %v1876 = vld [vmem:[%s1860 + $0x3c] sm:$0xf]
    %v1877 = vld [vmem:[%s1860 + $0x40] sm:$0xf]
    %v1878 = vld [vmem:[%s1860 + $0x44] sm:$0x1]
    %v1879 = vld [vmem:[%s1860 + $0x48] sm:$0xf]
    %v1880 = vld [vmem:[%s1860 + $0x4c] sm:$0xf]
    %v1881 = vld [vmem:[%s1860 + $0x50] sm:$0x1]
    %v1882 = vld [vmem:[%s1860 + $0x54] sm:$0xf]
    %v1883 = vld [vmem:[%s1860 + $0x58] sm:$0xf]
    %v1884 = vld [vmem:[%s1860 + $0x5c] sm:$0x1]
    %v1885 = vld [vmem:[%s1 + $0x180] sm:$0xf]
    %v1886 = vld [vmem:[%s1 + $0x184] sm:$0xf]
    %v1887 = vld [vmem:[%s1 + $0x188] sm:$0xf]
    %v1888 = vld [vmem:[%s1 + $0x18c] sm:$0xf]
    %v1889 = vld [vmem:[%s1 + $0x190] sm:$0xf]
    %v1890 = vld [vmem:[%s1 + $0x194] sm:$0xf]
    %v1891 = vld [vmem:[%s1 + $0x198] sm:$0xf]
    %v1892 = vld [vmem:[%s1 + $0x19c] sm:$0xf]
    %v1893 = vld [vmem:[%s1 + $0x1a0] sm:$0xf]
    %v1894 = vld [vmem:[%s1 + $0x1a4] sm:$0xf]
    %v1895 = vld [vmem:[%s1 + $0x1a8] sm:$0xf]
    %v1896 = vld [vmem:[%s1 + $0x1ac] sm:$0xf]
    %v1897 = vld [vmem:[%s1 + $0x1b0] sm:$0xf]
    %v1898 = vld [vmem:[%s1 + $0x1b4] sm:$0xf]
    %v1899 = vld [vmem:[%s1 + $0x1b8] sm:$0xf]
    %v1900 = vld [vmem:[%s1 + $0x1bc] sm:$0xf]
    %v1917 = vunpack.c.l.b16 %v1861
    %v1918 = vunpack.c.l.b16 %v1862
    %v1919 = vunpack.c.l.b16 %v1864
    %v1920 = vunpack.c.l.b16 %v1865
    %v1921 = vunpack.c.l.b16 %v1867
    %v1922 = vunpack.c.l.b16 %v1868
    %v1923 = vunpack.c.l.b16 %v1870
    %v1924 = vunpack.c.l.b16 %v1871
    %v1925 = vunpack.c.l.b16 %v1873
    %v1926 = vunpack.c.l.b16 %v1874
    %v1927 = vunpack.c.l.b16 %v1876
    %v1928 = vunpack.c.l.b16 %v1877
    %v1929 = vunpack.c.l.b16 %v1879
    %v1930 = vunpack.c.l.b16 %v1880
    %v1931 = vunpack.c.l.b16 %v1882
    %v1932 = vunpack.c.l.b16 %v1883
    %v1933 = vpack.c.b16 %v1918, %v1917
    %v1934 = vpack.c.b16 %v1920, %v1919
    %v1935 = vpack.c.b16 %v1922, %v1921
    %v1936 = vpack.c.b16 %v1924, %v1923
    %v1937 = vpack.c.b16 %v1926, %v1925
    %v1938 = vpack.c.b16 %v1928, %v1927
    %v1939 = vpack.c.b16 %v1930, %v1929
    %v1940 = vpack.c.b16 %v1932, %v1931
    %v1965 = vunpack.c.l.b16 %v1885
    %v1966 = vunpack.c.l.b16 %v1886
    %v1967 = vunpack.c.l.b16 %v1887
    %v1968 = vunpack.c.l.b16 %v1888
    %v1969 = vunpack.c.l.b16 %v1889
    %v1970 = vunpack.c.l.b16 %v1890
    %v1971 = vunpack.c.l.b16 %v1891
    %v1972 = vunpack.c.l.b16 %v1892
    %v1973 = vunpack.c.l.b16 %v1893
    %v1974 = vunpack.c.l.b16 %v1894
    %v1975 = vunpack.c.l.b16 %v1895
    %v1976 = vunpack.c.l.b16 %v1896
    %v1977 = vunpack.c.l.b16 %v1897
    %v1978 = vunpack.c.l.b16 %v1898
    %v1979 = vunpack.c.l.b16 %v1899
    %v1980 = vunpack.c.l.b16 %v1900
    %v1981 = vpack.c.b16 %v1966, %v1965
    %v1982 = vpack.c.b16 %v1968, %v1967
    %v1983 = vpack.c.b16 %v1970, %v1969
    %v1984 = vpack.c.b16 %v1972, %v1971
    %v1985 = vpack.c.b16 %v1974, %v1973
    %v1986 = vpack.c.b16 %v1976, %v1975
    %v1987 = vpack.c.b16 %v1978, %v1977
    %v1988 = vpack.c.b16 %v1980, %v1979
    %1997 = vmatprep.subr.bf16.mxu0 0
    %1998 = vmatpush1.bf16.msra.mxu0 %v1981
    %1999 = vmatprep.subr.bf16.mxu0 0
    %2000 = vmatpush1.bf16.msra.mxu0 %v1982
    %2001 = vmatprep.subr.bf16.mxu0 0
    %2002 = vmatpush1.bf16.msra.mxu0 %v1983
    %2003 = vmatprep.subr.bf16.mxu0 0
    %2004 = vmatpush1.bf16.msra.mxu0 %v1984
    %2005 = vmatprep.subr.bf16.mxu0 0
    %2006 = vmatpush1.bf16.msra.mxu0 %v1985
    %2007 = vmatprep.subr.bf16.mxu0 0
    %2008 = vmatpush1.bf16.msra.mxu0 %v1986
    %2009 = vmatprep.subr.bf16.mxu0 0
    %2010 = vmatpush1.bf16.msra.mxu0 %v1987
    %2011 = vmatprep.subr.bf16.mxu0 0
    %2012 = vmatpush1.bf16.msra.mxu0 %v1988
    %2013 = vmatprep.subr.bf16.mxu0 0
    %2014 = vmatpush1.bf16.msra.mxu0 0
    %2015 = vmatprep.subr.bf16.mxu0 0
    %2016 = vmatpush1.bf16.msra.mxu0 0
    %2017 = vmatprep.subr.bf16.mxu0 0
    %2018 = vmatpush1.bf16.msra.mxu0 0
    %2019 = vmatprep.subr.bf16.mxu0 0
    %2020 = vmatpush1.bf16.msra.mxu0 0
    %2021 = vmatprep.subr.bf16.mxu0 0
    %2022 = vmatpush1.bf16.msra.mxu0 0
    %2023 = vmatprep.subr.bf16.mxu0 0
    %2024 = vmatpush1.bf16.msra.mxu0 0
    %2025 = vmatprep.subr.bf16.mxu0 0
    %2026 = vmatpush1.bf16.msra.mxu0 0
    %2027 = vmatprep.subr.bf16.mxu0 0
    %2028 = vmatpush1.bf16.msra.mxu0 0
    %2029 = vmatprep.mubr.bf16.mxu0 0
    %2030 = vmatmul.mubr.bf16.gmra.mrb[0].mxu0 %v1933
    %v2031 = vpop.f32.mrb[0].mxu0
    %v2032 = vadd.f32 0.0, %v2031
    %v2033 = vpop.f32.mrb[0].mxu0
    %v2034 = vpop.f32.mrb[0].mxu0
    %v2035 = vadd.f32 0.0, %v2034
    %v2036 = vpop.f32.mrb[0].mxu0
    %2037 = vmatprep.mubr.bf16.mxu0 0
    %2038 = vmatmul.mubr.bf16.gmra.mrb[0].mxu0 %v1934
    %v2039 = vpop.f32.mrb[0].mxu0
    %v2040 = vadd.f32 0.0, %v2039
    %v2041 = vpop.f32.mrb[0].mxu0
    %v2042 = vpop.f32.mrb[0].mxu0
    %v2043 = vadd.f32 0.0, %v2042
    %v2044 = vpop.f32.mrb[0].mxu0
    %2045 = vmatprep.mubr.bf16.mxu0 0
    %2046 = vmatmul.mubr.bf16.gmra.mrb[0].mxu0 %v1935
    %v2047 = vpop.f32.mrb[0].mxu0
    %v2048 = vadd.f32 0.0, %v2047
    %v2049 = vpop.f32.mrb[0].mxu0
    %v2050 = vpop.f32.mrb[0].mxu0
    %v2051 = vadd.f32 0.0, %v2050
    %v2052 = vpop.f32.mrb[0].mxu0
    %2053 = vmatprep.mubr.bf16.mxu0 0
    %2054 = vmatmul.mubr.bf16.gmra.mrb[0].mxu0 %v1936
    %v2055 = vpop.f32.mrb[0].mxu0
    %v2056 = vadd.f32 0.0, %v2055
    %v2057 = vpop.f32.mrb[0].mxu0
    %v2058 = vpop.f32.mrb[0].mxu0
    %v2059 = vadd.f32 0.0, %v2058
    %v2060 = vpop.f32.mrb[0].mxu0
    %2061 = vmatprep.mubr.bf16.mxu0 0
    %2062 = vmatmul.mubr.bf16.gmra.mrb[0].mxu0 %v1937
    %v2063 = vpop.f32.mrb[0].mxu0
    %v2064 = vadd.f32 0.0, %v2063
    %v2065 = vpop.f32.mrb[0].mxu0
    %v2066 = vpop.f32.mrb[0].mxu0
    %v2067 = vadd.f32 0.0, %v2066
    %v2068 = vpop.f32.mrb[0].mxu0
    %2069 = vmatprep.mubr.bf16.mxu0 0
    %2070 = vmatmul.mubr.bf16.gmra.mrb[0].mxu0 %v1938
    %v2071 = vpop.f32.mrb[0].mxu0
    %v2072 = vadd.f32 0.0, %v2071
    %v2073 = vpop.f32.mrb[0].mxu0
    %v2074 = vpop.f32.mrb[0].mxu0
    %v2075 = vadd.f32 0.0, %v2074
    %v2076 = vpop.f32.mrb[0].mxu0
    %2077 = vmatprep.mubr.bf16.mxu0 0
    %2078 = vmatmul.mubr.bf16.gmra.mrb[0].mxu0 %v1939
    %v2079 = vpop.f32.mrb[0].mxu0
    %v2080 = vadd.f32 0.0, %v2079
    %v2081 = vpop.f32.mrb[0].mxu0
    %v2082 = vpop.f32.mrb[0].mxu0
    %v2083 = vadd.f32 0.0, %v2082
    %v2084 = vpop.f32.mrb[0].mxu0
    %2085 = vmatprep.mubr.bf16.mxu0 0
    %2086 = vmatmul.mubr.bf16.gmra.mrb[0].mxu0 %v1940
    %v2087 = vpop.f32.mrb[0].mxu0
    %v2088 = vadd.f32 0.0, %v2087
    %v2089 = vpop.f32.mrb[0].mxu0
    %v2090 = vpop.f32.mrb[0].mxu0
    %v2091 = vadd.f32 0.0, %v2090
    %v2092 = vpop.f32.mrb[0].mxu0
    %2093 = vdwg.mxu0
    %v2094 = vadd.f32 %v1841, %v2032
    %v2095 = vadd.f32 %v1842, %v2035
    %v2096 = vadd.f32 %v1843, %v2040
    %v2097 = vadd.f32 %v1844, %v2043
    %v2098 = vadd.f32 %v1845, %v2048
    %v2099 = vadd.f32 %v1846, %v2051
    %v2100 = vadd.f32 %v1847, %v2056
    %v2101 = vadd.f32 %v1848, %v2059
    %v2102 = vadd.f32 %v1849, %v2064
    %v2103 = vadd.f32 %v1850, %v2067
    %v2104 = vadd.f32 %v1851, %v2072
    %v2105 = vadd.f32 %v1852, %v2075
    %v2106 = vadd.f32 %v1853, %v2080
    %v2107 = vadd.f32 %v1854, %v2083
    %v2108 = vadd.f32 %v1855, %v2088
    %v2109 = vadd.f32 %v1856, %v2091
    %v2111 = vshrl.u32 %v1861, 16
    %v2113 = vrot.slane %v2111, 4
    %v2114 = vshll.u32 %v1861, 16
    %v2116 = vrot.slane %v2114, 5
    %v2117 = vor.u32 %v2113, %v2116
    %v2118 = vrot.slane %v2117, 4
    %v2120 = vshll.u32 %v1862, 16
    %v2122 = vrot.slane %v2120, 5
    %v2123 = vsel %vm75, %v2118, %v2122
    %v2124 = vshrl.u32 %v1862, 16
    %v2126 = vrot.slane %v2124, 4
    %v2127 = vor.u32 %v2126, %v2122
    %v2128 = vrot.slane %v2127, 4
    %v2130 = vshll.u32 %v1863, 16
    %v2132 = vrot.slane %v2130, 5
    %v2133 = vsel %vm75, %v2128, %v2132
    %v2135 = vshrl.u32 %v1864, 16
    %v2137 = vrot.slane %v2135, 4
    %v2138 = vshll.u32 %v1864, 16
    %v2140 = vrot.slane %v2138, 5
    %v2141 = vor.u32 %v2137, %v2140
    %v2142 = vrot.slane %v2141, 4
    %v2144 = vshll.u32 %v1865, 16
    %v2146 = vrot.slane %v2144, 5
    %v2147 = vsel %vm75, %v2142, %v2146
    %v2148 = vshrl.u32 %v1865, 16
    %v2150 = vrot.slane %v2148, 4
    %v2151 = vor.u32 %v2150, %v2146
    %v2152 = vrot.slane %v2151, 4
    %v2154 = vshll.u32 %v1866, 16
    %v2156 = vrot.slane %v2154, 5
    %v2157 = vsel %vm75, %v2152, %v2156
    %v2159 = vshrl.u32 %v1867, 16
    %v2161 = vrot.slane %v2159, 4
    %v2162 = vshll.u32 %v1867, 16
    %v2164 = vrot.slane %v2162, 5
    %v2165 = vor.u32 %v2161, %v2164
    %v2166 = vrot.slane %v2165, 4
    %v2168 = vshll.u32 %v1868, 16
    %v2170 = vrot.slane %v2168, 5
    %v2171 = vsel %vm75, %v2166, %v2170
    %v2172 = vshrl.u32 %v1868, 16
    %v2174 = vrot.slane %v2172, 4
    %v2175 = vor.u32 %v2174, %v2170
    %v2176 = vrot.slane %v2175, 4
    %v2178 = vshll.u32 %v1869, 16
    %v2180 = vrot.slane %v2178, 5
    %v2181 = vsel %vm75, %v2176, %v2180
    %v2183 = vshrl.u32 %v1870, 16
    %v2185 = vrot.slane %v2183, 4
    %v2186 = vshll.u32 %v1870, 16
    %v2188 = vrot.slane %v2186, 5
    %v2189 = vor.u32 %v2185, %v2188
    %v2190 = vrot.slane %v2189, 4
    %v2192 = vshll.u32 %v1871, 16
    %v2194 = vrot.slane %v2192, 5
    %v2195 = vsel %vm75, %v2190, %v2194
    %v2196 = vshrl.u32 %v1871, 16
    %v2198 = vrot.slane %v2196, 4
    %v2199 = vor.u32 %v2198, %v2194
    %v2200 = vrot.slane %v2199, 4
    %v2202 = vshll.u32 %v1872, 16
    %v2204 = vrot.slane %v2202, 5
    %v2205 = vsel %vm75, %v2200, %v2204
    %v2207 = vshrl.u32 %v1873, 16
    %v2209 = vrot.slane %v2207, 4
    %v2210 = vshll.u32 %v1873, 16
    %v2212 = vrot.slane %v2210, 5
    %v2213 = vor.u32 %v2209, %v2212
    %v2214 = vrot.slane %v2213, 4
    %v2216 = vshll.u32 %v1874, 16
    %v2218 = vrot.slane %v2216, 5
    %v2219 = vsel %vm75, %v2214, %v2218
    %v2220 = vshrl.u32 %v1874, 16
    %v2222 = vrot.slane %v2220, 4
    %v2223 = vor.u32 %v2222, %v2218
    %v2224 = vrot.slane %v2223, 4
    %v2226 = vshll.u32 %v1875, 16
    %v2228 = vrot.slane %v2226, 5
    %v2229 = vsel %vm75, %v2224, %v2228
    %v2231 = vshrl.u32 %v1876, 16
    %v2233 = vrot.slane %v2231, 4
    %v2234 = vshll.u32 %v1876, 16
    %v2236 = vrot.slane %v2234, 5
    %v2237 = vor.u32 %v2233, %v2236
    %v2238 = vrot.slane %v2237, 4
    %v2240 = vshll.u32 %v1877, 16
    %v2242 = vrot.slane %v2240, 5
    %v2243 = vsel %vm75, %v2238, %v2242
    %v2244 = vshrl.u32 %v1877, 16
    %v2246 = vrot.slane %v2244, 4
    %v2247 = vor.u32 %v2246, %v2242
    %v2248 = vrot.slane %v2247, 4
    %v2250 = vshll.u32 %v1878, 16
    %v2252 = vrot.slane %v2250, 5
    %v2253 = vsel %vm75, %v2248, %v2252
    %v2255 = vshrl.u32 %v1879, 16
    %v2257 = vrot.slane %v2255, 4
    %v2258 = vshll.u32 %v1879, 16
    %v2260 = vrot.slane %v2258, 5
    %v2261 = vor.u32 %v2257, %v2260
    %v2262 = vrot.slane %v2261, 4
    %v2264 = vshll.u32 %v1880, 16
    %v2266 = vrot.slane %v2264, 5
    %v2267 = vsel %vm75, %v2262, %v2266
    %v2268 = vshrl.u32 %v1880, 16
    %v2270 = vrot.slane %v2268, 4
    %v2271 = vor.u32 %v2270, %v2266
    %v2272 = vrot.slane %v2271, 4
    %v2274 = vshll.u32 %v1881, 16
    %v2276 = vrot.slane %v2274, 5
    %v2277 = vsel %vm75, %v2272, %v2276
    %v2279 = vshrl.u32 %v1882, 16
    %v2281 = vrot.slane %v2279, 4
    %v2282 = vshll.u32 %v1882, 16
    %v2284 = vrot.slane %v2282, 5
    %v2285 = vor.u32 %v2281, %v2284
    %v2286 = vrot.slane %v2285, 4
    %v2288 = vshll.u32 %v1883, 16
    %v2290 = vrot.slane %v2288, 5
    %v2291 = vsel %vm75, %v2286, %v2290
    %v2292 = vshrl.u32 %v1883, 16
    %v2294 = vrot.slane %v2292, 4
    %v2295 = vor.u32 %v2294, %v2290
    %v2296 = vrot.slane %v2295, 4
    %v2298 = vshll.u32 %v1884, 16
    %v2300 = vrot.slane %v2298, 5
    %v2301 = vsel %vm75, %v2296, %v2300
    %v2302 = vld [vmem:[%s1 + $0x1c0] sm:$0xf]
    %v2303 = vld [vmem:[%s1 + $0x1c4] sm:$0xf]
    %v2304 = vld [vmem:[%s1 + $0x1c8] sm:$0xf]
    %v2305 = vld [vmem:[%s1 + $0x1cc] sm:$0xf]
    %v2306 = vld [vmem:[%s1 + $0x1d0] sm:$0xf]
    %v2307 = vld [vmem:[%s1 + $0x1d4] sm:$0xf]
    %v2308 = vld [vmem:[%s1 + $0x1d8] sm:$0xf]
    %v2309 = vld [vmem:[%s1 + $0x1dc] sm:$0xf]
    %v2310 = vld [vmem:[%s1 + $0x1e0] sm:$0xf]
    %v2311 = vld [vmem:[%s1 + $0x1e4] sm:$0xf]
    %v2312 = vld [vmem:[%s1 + $0x1e8] sm:$0xf]
    %v2313 = vld [vmem:[%s1 + $0x1ec] sm:$0xf]
    %v2314 = vld [vmem:[%s1 + $0x1f0] sm:$0xf]
    %v2315 = vld [vmem:[%s1 + $0x1f4] sm:$0xf]
    %v2316 = vld [vmem:[%s1 + $0x1f8] sm:$0xf]
    %v2317 = vld [vmem:[%s1 + $0x1fc] sm:$0xf]
    %v2318 = vunpack.c.l.b16 %v2123
    %v2319 = vunpack.c.l.b16 %v2133
    %v2320 = vunpack.c.l.b16 %v2147
    %v2321 = vunpack.c.l.b16 %v2157
    %v2322 = vunpack.c.l.b16 %v2171
    %v2323 = vunpack.c.l.b16 %v2181
    %v2324 = vunpack.c.l.b16 %v2195
    %v2325 = vunpack.c.l.b16 %v2205
    %v2326 = vunpack.c.l.b16 %v2219
    %v2327 = vunpack.c.l.b16 %v2229
    %v2328 = vunpack.c.l.b16 %v2243
    %v2329 = vunpack.c.l.b16 %v2253
    %v2330 = vunpack.c.l.b16 %v2267
    %v2331 = vunpack.c.l.b16 %v2277
    %v2332 = vunpack.c.l.b16 %v2291
    %v2333 = vunpack.c.l.b16 %v2301
    %v2334 = vpack.c.b16 %v2319, %v2318
    %v2335 = vpack.c.b16 %v2321, %v2320
    %v2336 = vpack.c.b16 %v2323, %v2322
    %v2337 = vpack.c.b16 %v2325, %v2324
    %v2338 = vpack.c.b16 %v2327, %v2326
    %v2339 = vpack.c.b16 %v2329, %v2328
    %v2340 = vpack.c.b16 %v2331, %v2330
    %v2341 = vpack.c.b16 %v2333, %v2332
    %v2366 = vunpack.c.l.b16 %v2302
    %v2367 = vunpack.c.l.b16 %v2303
    %v2368 = vunpack.c.l.b16 %v2304
    %v2369 = vunpack.c.l.b16 %v2305
    %v2370 = vunpack.c.l.b16 %v2306
    %v2371 = vunpack.c.l.b16 %v2307
    %v2372 = vunpack.c.l.b16 %v2308
    %v2373 = vunpack.c.l.b16 %v2309
    %v2374 = vunpack.c.l.b16 %v2310
    %v2375 = vunpack.c.l.b16 %v2311
    %v2376 = vunpack.c.l.b16 %v2312
    %v2377 = vunpack.c.l.b16 %v2313
    %v2378 = vunpack.c.l.b16 %v2314
    %v2379 = vunpack.c.l.b16 %v2315
    %v2380 = vunpack.c.l.b16 %v2316
    %v2381 = vunpack.c.l.b16 %v2317
    %v2382 = vpack.c.b16 %v2367, %v2366
    %v2383 = vpack.c.b16 %v2369, %v2368
    %v2384 = vpack.c.b16 %v2371, %v2370
    %v2385 = vpack.c.b16 %v2373, %v2372
    %v2386 = vpack.c.b16 %v2375, %v2374
    %v2387 = vpack.c.b16 %v2377, %v2376
    %v2388 = vpack.c.b16 %v2379, %v2378
    %v2389 = vpack.c.b16 %v2381, %v2380
    %2398 = vmatprep.subr.bf16.mxu0 0
    %2399 = vmatpush1.bf16.msra.mxu0 %v2382
    %2400 = vmatprep.subr.bf16.mxu0 0
    %2401 = vmatpush1.bf16.msra.mxu0 %v2383
    %2402 = vmatprep.subr.bf16.mxu0 0
    %2403 = vmatpush1.bf16.msra.mxu0 %v2384
    %2404 = vmatprep.subr.bf16.mxu0 0
    %2405 = vmatpush1.bf16.msra.mxu0 %v2385
    %2406 = vmatprep.subr.bf16.mxu0 0
    %2407 = vmatpush1.bf16.msra.mxu0 %v2386
    %2408 = vmatprep.subr.bf16.mxu0 0
    %2409 = vmatpush1.bf16.msra.mxu0 %v2387
    %2410 = vmatprep.subr.bf16.mxu0 0
    %2411 = vmatpush1.bf16.msra.mxu0 %v2388
    %2412 = vmatprep.subr.bf16.mxu0 0
    %2413 = vmatpush1.bf16.msra.mxu0 %v2389
    %2414 = vmatprep.subr.bf16.mxu0 0
    %2415 = vmatpush1.bf16.msra.mxu0 0
    %2416 = vmatprep.subr.bf16.mxu0 0
    %2417 = vmatpush1.bf16.msra.mxu0 0
    %2418 = vmatprep.subr.bf16.mxu0 0
    %2419 = vmatpush1.bf16.msra.mxu0 0
    %2420 = vmatprep.subr.bf16.mxu0 0
    %2421 = vmatpush1.bf16.msra.mxu0 0
    %2422 = vmatprep.subr.bf16.mxu0 0
    %2423 = vmatpush1.bf16.msra.mxu0 0
    %2424 = vmatprep.subr.bf16.mxu0 0
    %2425 = vmatpush1.bf16.msra.mxu0 0
    %2426 = vmatprep.subr.bf16.mxu0 0
    %2427 = vmatpush1.bf16.msra.mxu0 0
    %2428 = vmatprep.subr.bf16.mxu0 0
    %2429 = vmatpush1.bf16.msra.mxu0 0
    %2430 = vmatprep.mubr.bf16.mxu0 0
    %2431 = vmatmul.mubr.bf16.gmra.mrb[0].mxu0 %v2334
    %v2432 = vpop.f32.mrb[0].mxu0
    %v2433 = vadd.f32 0.0, %v2432
    %v2434 = vpop.f32.mrb[0].mxu0
    %v2435 = vpop.f32.mrb[0].mxu0
    %v2436 = vadd.f32 0.0, %v2435
    %v2437 = vpop.f32.mrb[0].mxu0
    %2438 = vmatprep.mubr.bf16.mxu0 0
    %2439 = vmatmul.mubr.bf16.gmra.mrb[0].mxu0 %v2335
    %v2440 = vpop.f32.mrb[0].mxu0
    %v2441 = vadd.f32 0.0, %v2440
    %v2442 = vpop.f32.mrb[0].mxu0
    %v2443 = vpop.f32.mrb[0].mxu0
    %v2444 = vadd.f32 0.0, %v2443
    %v2445 = vpop.f32.mrb[0].mxu0
    %2446 = vmatprep.mubr.bf16.mxu0 0
    %2447 = vmatmul.mubr.bf16.gmra.mrb[0].mxu0 %v2336
    %v2448 = vpop.f32.mrb[0].mxu0
    %v2449 = vadd.f32 0.0, %v2448
    %v2450 = vpop.f32.mrb[0].mxu0
    %v2451 = vpop.f32.mrb[0].mxu0
    %v2452 = vadd.f32 0.0, %v2451
    %v2453 = vpop.f32.mrb[0].mxu0
    %2454 = vmatprep.mubr.bf16.mxu0 0
    %2455 = vmatmul.mubr.bf16.gmra.mrb[0].mxu0 %v2337
    %v2456 = vpop.f32.mrb[0].mxu0
    %v2457 = vadd.f32 0.0, %v2456
    %v2458 = vpop.f32.mrb[0].mxu0
    %v2459 = vpop.f32.mrb[0].mxu0
    %v2460 = vadd.f32 0.0, %v2459
    %v2461 = vpop.f32.mrb[0].mxu0
    %2462 = vmatprep.mubr.bf16.mxu0 0
    %2463 = vmatmul.mubr.bf16.gmra.mrb[0].mxu0 %v2338
    %v2464 = vpop.f32.mrb[0].mxu0
    %v2465 = vadd.f32 0.0, %v2464
    %v2466 = vpop.f32.mrb[0].mxu0
    %v2467 = vpop.f32.mrb[0].mxu0
    %v2468 = vadd.f32 0.0, %v2467
    %v2469 = vpop.f32.mrb[0].mxu0
    %2470 = vmatprep.mubr.bf16.mxu0 0
    %2471 = vmatmul.mubr.bf16.gmra.mrb[0].mxu0 %v2339
    %v2472 = vpop.f32.mrb[0].mxu0
    %v2473 = vadd.f32 0.0, %v2472
    %v2474 = vpop.f32.mrb[0].mxu0
    %v2475 = vpop.f32.mrb[0].mxu0
    %v2476 = vadd.f32 0.0, %v2475
    %v2477 = vpop.f32.mrb[0].mxu0
    %2478 = vmatprep.mubr.bf16.mxu0 0
    %2479 = vmatmul.mubr.bf16.gmra.mrb[0].mxu0 %v2340
    %v2480 = vpop.f32.mrb[0].mxu0
    %v2481 = vadd.f32 0.0, %v2480
    %v2482 = vpop.f32.mrb[0].mxu0
    %v2483 = vpop.f32.mrb[0].mxu0
    %v2484 = vadd.f32 0.0, %v2483
    %v2485 = vpop.f32.mrb[0].mxu0
    %2486 = vmatprep.mubr.bf16.mxu0 0
    %2487 = vmatmul.mubr.bf16.gmra.mrb[0].mxu0 %v2341
    %v2488 = vpop.f32.mrb[0].mxu0
    %v2489 = vadd.f32 0.0, %v2488
    %v2490 = vpop.f32.mrb[0].mxu0
    %v2491 = vpop.f32.mrb[0].mxu0
    %v2492 = vadd.f32 0.0, %v2491
    %v2493 = vpop.f32.mrb[0].mxu0
    %2494 = vdwg.mxu0
    %v2495 = vadd.f32 %v2094, %v2433
    %v2496 = vadd.f32 %v2095, %v2436
    %v2497 = vadd.f32 %v2096, %v2441
    %v2498 = vadd.f32 %v2097, %v2444
    %v2499 = vadd.f32 %v2098, %v2449
    %v2500 = vadd.f32 %v2099, %v2452
    %v2501 = vadd.f32 %v2100, %v2457
    %v2502 = vadd.f32 %v2101, %v2460
    %v2503 = vadd.f32 %v2102, %v2465
    %v2504 = vadd.f32 %v2103, %v2468
    %v2505 = vadd.f32 %v2104, %v2473
    %v2506 = vadd.f32 %v2105, %v2476
    %v2507 = vadd.f32 %v2106, %v2481
    %v2508 = vadd.f32 %v2107, %v2484
    %v2509 = vadd.f32 %v2108, %v2489
    %v2510 = vadd.f32 %v2109, %v2492
    %v2519 = vrot.slane %v1861, 5
    %v2520 = vrot.slane %v2519, 4
    %v2521 = vrot.slane %v1862, 5
    %v2522 = vsel %vm664, %v2520, %v2521
    %v2523 = vrot.slane %v2521, 4
    %v2524 = vrot.slane %v1863, 5
    %v2525 = vsel %vm664, %v2523, %v2524
    %v2526 = vrot.slane %v1864, 5
    %v2527 = vrot.slane %v2526, 4
    %v2528 = vrot.slane %v1865, 5
    %v2529 = vsel %vm664, %v2527, %v2528
    %v2530 = vrot.slane %v2528, 4
    %v2531 = vrot.slane %v1866, 5
    %v2532 = vsel %vm664, %v2530, %v2531
    %v2533 = vrot.slane %v1867, 5
    %v2534 = vrot.slane %v2533, 4
    %v2535 = vrot.slane %v1868, 5
    %v2536 = vsel %vm664, %v2534, %v2535
    %v2537 = vrot.slane %v2535, 4
    %v2538 = vrot.slane %v1869, 5
    %v2539 = vsel %vm664, %v2537, %v2538
    %v2540 = vrot.slane %v1870, 5
    %v2541 = vrot.slane %v2540, 4
    %v2542 = vrot.slane %v1871, 5
    %v2543 = vsel %vm664, %v2541, %v2542
    %v2544 = vrot.slane %v2542, 4
    %v2545 = vrot.slane %v1872, 5
    %v2546 = vsel %vm664, %v2544, %v2545
    %v2547 = vrot.slane %v1873, 5
    %v2548 = vrot.slane %v2547, 4
    %v2549 = vrot.slane %v1874, 5
    %v2550 = vsel %vm664, %v2548, %v2549
    %v2551 = vrot.slane %v2549, 4
    %v2552 = vrot.slane %v1875, 5
    %v2553 = vsel %vm664, %v2551, %v2552
    %v2554 = vrot.slane %v1876, 5
    %v2555 = vrot.slane %v2554, 4
    %v2556 = vrot.slane %v1877, 5
    %v2557 = vsel %vm664, %v2555, %v2556
    %v2558 = vrot.slane %v2556, 4
    %v2559 = vrot.slane %v1878, 5
    %v2560 = vsel %vm664, %v2558, %v2559
    %v2561 = vrot.slane %v1879, 5
    %v2562 = vrot.slane %v2561, 4
    %v2563 = vrot.slane %v1880, 5
    %v2564 = vsel %vm664, %v2562, %v2563
    %v2565 = vrot.slane %v2563, 4
    %v2566 = vrot.slane %v1881, 5
    %v2567 = vsel %vm664, %v2565, %v2566
    %v2568 = vrot.slane %v1882, 5
    %v2569 = vrot.slane %v2568, 4
    %v2570 = vrot.slane %v1883, 5
    %v2571 = vsel %vm664, %v2569, %v2570
    %v2572 = vrot.slane %v2570, 4
    %v2573 = vrot.slane %v1884, 5
    %v2574 = vsel %vm664, %v2572, %v2573
    %v2575 = vld [vmem:[%s1 + $0x200] sm:$0xf]
    %v2576 = vld [vmem:[%s1 + $0x204] sm:$0xf]
    %v2577 = vld [vmem:[%s1 + $0x208] sm:$0xf]
    %v2578 = vld [vmem:[%s1 + $0x20c] sm:$0xf]
    %v2579 = vld [vmem:[%s1 + $0x210] sm:$0xf]
    %v2580 = vld [vmem:[%s1 + $0x214] sm:$0xf]
    %v2581 = vld [vmem:[%s1 + $0x218] sm:$0xf]
    %v2582 = vld [vmem:[%s1 + $0x21c] sm:$0xf]
    %v2583 = vld [vmem:[%s1 + $0x220] sm:$0xf]
    %v2584 = vld [vmem:[%s1 + $0x224] sm:$0xf]
    %v2585 = vld [vmem:[%s1 + $0x228] sm:$0xf]
    %v2586 = vld [vmem:[%s1 + $0x22c] sm:$0xf]
    %v2587 = vld [vmem:[%s1 + $0x230] sm:$0xf]
    %v2588 = vld [vmem:[%s1 + $0x234] sm:$0xf]
    %v2589 = vld [vmem:[%s1 + $0x238] sm:$0xf]
    %v2590 = vld [vmem:[%s1 + $0x23c] sm:$0xf]
    %v2591 = vunpack.c.l.b16 %v2522
    %v2592 = vunpack.c.l.b16 %v2525
    %v2593 = vunpack.c.l.b16 %v2529
    %v2594 = vunpack.c.l.b16 %v2532
    %v2595 = vunpack.c.l.b16 %v2536
    %v2596 = vunpack.c.l.b16 %v2539
    %v2597 = vunpack.c.l.b16 %v2543
    %v2598 = vunpack.c.l.b16 %v2546
    %v2599 = vunpack.c.l.b16 %v2550
    %v2600 = vunpack.c.l.b16 %v2553
    %v2601 = vunpack.c.l.b16 %v2557
    %v2602 = vunpack.c.l.b16 %v2560
    %v2603 = vunpack.c.l.b16 %v2564
    %v2604 = vunpack.c.l.b16 %v2567
    %v2605 = vunpack.c.l.b16 %v2571
    %v2606 = vunpack.c.l.b16 %v2574
    %v2607 = vpack.c.b16 %v2592, %v2591
    %v2608 = vpack.c.b16 %v2594, %v2593
    %v2609 = vpack.c.b16 %v2596, %v2595
    %v2610 = vpack.c.b16 %v2598, %v2597
    %v2611 = vpack.c.b16 %v2600, %v2599
    %v2612 = vpack.c.b16 %v2602, %v2601
    %v2613 = vpack.c.b16 %v2604, %v2603
    %v2614 = vpack.c.b16 %v2606, %v2605
    %v2639 = vunpack.c.l.b16 %v2575
    %v2640 = vunpack.c.l.b16 %v2576
    %v2641 = vunpack.c.l.b16 %v2577
    %v2642 = vunpack.c.l.b16 %v2578
    %v2643 = vunpack.c.l.b16 %v2579
    %v2644 = vunpack.c.l.b16 %v2580
    %v2645 = vunpack.c.l.b16 %v2581
    %v2646 = vunpack.c.l.b16 %v2582
    %v2647 = vunpack.c.l.b16 %v2583
    %v2648 = vunpack.c.l.b16 %v2584
    %v2649 = vunpack.c.l.b16 %v2585
    %v2650 = vunpack.c.l.b16 %v2586
    %v2651 = vunpack.c.l.b16 %v2587
    %v2652 = vunpack.c.l.b16 %v2588
    %v2653 = vunpack.c.l.b16 %v2589
    %v2654 = vunpack.c.l.b16 %v2590
    %v2655 = vpack.c.b16 %v2640, %v2639
    %v2656 = vpack.c.b16 %v2642, %v2641
    %v2657 = vpack.c.b16 %v2644, %v2643
    %v2658 = vpack.c.b16 %v2646, %v2645
    %v2659 = vpack.c.b16 %v2648, %v2647
    %v2660 = vpack.c.b16 %v2650, %v2649
    %v2661 = vpack.c.b16 %v2652, %v2651
    %v2662 = vpack.c.b16 %v2654, %v2653
    %2671 = vmatprep.subr.bf16.mxu0 0
    %2672 = vmatpush1.bf16.msra.mxu0 %v2655
    %2673 = vmatprep.subr.bf16.mxu0 0
    %2674 = vmatpush1.bf16.msra.mxu0 %v2656
    %2675 = vmatprep.subr.bf16.mxu0 0
    %2676 = vmatpush1.bf16.msra.mxu0 %v2657
    %2677 = vmatprep.subr.bf16.mxu0 0
    %2678 = vmatpush1.bf16.msra.mxu0 %v2658
    %2679 = vmatprep.subr.bf16.mxu0 0
    %2680 = vmatpush1.bf16.msra.mxu0 %v2659
    %2681 = vmatprep.subr.bf16.mxu0 0
    %2682 = vmatpush1.bf16.msra.mxu0 %v2660
    %2683 = vmatprep.subr.bf16.mxu0 0
    %2684 = vmatpush1.bf16.msra.mxu0 %v2661
    %2685 = vmatprep.subr.bf16.mxu0 0
    %2686 = vmatpush1.bf16.msra.mxu0 %v2662
    %2687 = vmatprep.subr.bf16.mxu0 0
    %2688 = vmatpush1.bf16.msra.mxu0 0
    %2689 = vmatprep.subr.bf16.mxu0 0
    %2690 = vmatpush1.bf16.msra.mxu0 0
    %2691 = vmatprep.subr.bf16.mxu0 0
    %2692 = vmatpush1.bf16.msra.mxu0 0
    %2693 = vmatprep.subr.bf16.mxu0 0
    %2694 = vmatpush1.bf16.msra.mxu0 0
    %2695 = vmatprep.subr.bf16.mxu0 0
    %2696 = vmatpush1.bf16.msra.mxu0 0
    %2697 = vmatprep.subr.bf16.mxu0 0
    %2698 = vmatpush1.bf16.msra.mxu0 0
    %2699 = vmatprep.subr.bf16.mxu0 0
    %2700 = vmatpush1.bf16.msra.mxu0 0
    %2701 = vmatprep.subr.bf16.mxu0 0
    %2702 = vmatpush1.bf16.msra.mxu0 0
    %2703 = vmatprep.mubr.bf16.mxu0 0
    %2704 = vmatmul.mubr.bf16.gmra.mrb[0].mxu0 %v2607
    %v2705 = vpop.f32.mrb[0].mxu0
    %v2706 = vadd.f32 0.0, %v2705
    %v2707 = vpop.f32.mrb[0].mxu0
    %v2708 = vpop.f32.mrb[0].mxu0
    %v2709 = vadd.f32 0.0, %v2708
    %v2710 = vpop.f32.mrb[0].mxu0
    %2711 = vmatprep.mubr.bf16.mxu0 0
    %2712 = vmatmul.mubr.bf16.gmra.mrb[0].mxu0 %v2608
    %v2713 = vpop.f32.mrb[0].mxu0
    %v2714 = vadd.f32 0.0, %v2713
    %v2715 = vpop.f32.mrb[0].mxu0
    %v2716 = vpop.f32.mrb[0].mxu0
    %v2717 = vadd.f32 0.0, %v2716
    %v2718 = vpop.f32.mrb[0].mxu0
    %2719 = vmatprep.mubr.bf16.mxu0 0
    %2720 = vmatmul.mubr.bf16.gmra.mrb[0].mxu0 %v2609
    %v2721 = vpop.f32.mrb[0].mxu0
    %v2722 = vadd.f32 0.0, %v2721
    %v2723 = vpop.f32.mrb[0].mxu0
    %v2724 = vpop.f32.mrb[0].mxu0
    %v2725 = vadd.f32 0.0, %v2724
    %v2726 = vpop.f32.mrb[0].mxu0
    %2727 = vmatprep.mubr.bf16.mxu0 0
    %2728 = vmatmul.mubr.bf16.gmra.mrb[0].mxu0 %v2610
    %v2729 = vpop.f32.mrb[0].mxu0
    %v2730 = vadd.f32 0.0, %v2729
    %v2731 = vpop.f32.mrb[0].mxu0
    %v2732 = vpop.f32.mrb[0].mxu0
    %v2733 = vadd.f32 0.0, %v2732
    %v2734 = vpop.f32.mrb[0].mxu0
    %2735 = vmatprep.mubr.bf16.mxu0 0
    %2736 = vmatmul.mubr.bf16.gmra.mrb[0].mxu0 %v2611
    %v2737 = vpop.f32.mrb[0].mxu0
    %v2738 = vadd.f32 0.0, %v2737
    %v2739 = vpop.f32.mrb[0].mxu0
    %v2740 = vpop.f32.mrb[0].mxu0
    %v2741 = vadd.f32 0.0, %v2740
    %v2742 = vpop.f32.mrb[0].mxu0
    %2743 = vmatprep.mubr.bf16.mxu0 0
    %2744 = vmatmul.mubr.bf16.gmra.mrb[0].mxu0 %v2612
    %v2745 = vpop.f32.mrb[0].mxu0
    %v2746 = vadd.f32 0.0, %v2745
    %v2747 = vpop.f32.mrb[0].mxu0
    %v2748 = vpop.f32.mrb[0].mxu0
    %v2749 = vadd.f32 0.0, %v2748
    %v2750 = vpop.f32.mrb[0].mxu0
    %2751 = vmatprep.mubr.bf16.mxu0 0
    %2752 = vmatmul.mubr.bf16.gmra.mrb[0].mxu0 %v2613
    %v2753 = vpop.f32.mrb[0].mxu0
    %v2754 = vadd.f32 0.0, %v2753
    %v2755 = vpop.f32.mrb[0].mxu0
    %v2756 = vpop.f32.mrb[0].mxu0
    %v2757 = vadd.f32 0.0, %v2756
    %v2758 = vpop.f32.mrb[0].mxu0
    %2759 = vmatprep.mubr.bf16.mxu0 0
    %2760 = vmatmul.mubr.bf16.gmra.mrb[0].mxu0 %v2614
    %v2761 = vpop.f32.mrb[0].mxu0
    %v2762 = vadd.f32 0.0, %v2761
    %v2763 = vpop.f32.mrb[0].mxu0
    %v2764 = vpop.f32.mrb[0].mxu0
    %v2765 = vadd.f32 0.0, %v2764
    %v2766 = vpop.f32.mrb[0].mxu0
    %2767 = vdwg.mxu0
    %v2768 = vadd.f32 %v2495, %v2706
    %v2769 = vadd.f32 %v2496, %v2709
    %v2770 = vadd.f32 %v2497, %v2714
    %v2771 = vadd.f32 %v2498, %v2717
    %v2772 = vadd.f32 %v2499, %v2722
    %v2773 = vadd.f32 %v2500, %v2725
    %v2774 = vadd.f32 %v2501, %v2730
    %v2775 = vadd.f32 %v2502, %v2733
    %v2776 = vadd.f32 %v2503, %v2738
    %v2777 = vadd.f32 %v2504, %v2741
    %v2778 = vadd.f32 %v2505, %v2746
    %v2779 = vadd.f32 %v2506, %v2749
    %v2780 = vadd.f32 %v2507, %v2754
    %v2781 = vadd.f32 %v2508, %v2757
    %v2782 = vadd.f32 %v2509, %v2762
    %v2783 = vadd.f32 %v2510, %v2765
    %s2784 = smul.u32 %s29, 16
    %s2785 = scalar_lea.vmem [#allocation2], %s2784
    %2786 = vst [vmem:[%s2785] sm:$0xff] %v2768
    %2787 = vst [vmem:[%s2785 + $0x8] sm:$0xff] %v2769
    %2788 = vst [vmem:[%s2785 + $0x10] sm:$0xff] %v2770
    %2789 = vst [vmem:[%s2785 + $0x18] sm:$0xff] %v2771
    %2790 = vst [vmem:[%s2785 + $0x20] sm:$0xff] %v2772
    %2791 = vst [vmem:[%s2785 + $0x28] sm:$0xff] %v2773
    %2792 = vst [vmem:[%s2785 + $0x30] sm:$0xff] %v2774
    %2793 = vst [vmem:[%s2785 + $0x38] sm:$0xff] %v2775
    %2794 = vst [vmem:[%s2785 + $0x40] sm:$0xff] %v2776
    %2795 = vst [vmem:[%s2785 + $0x48] sm:$0xff] %v2777
    %2796 = vst [vmem:[%s2785 + $0x50] sm:$0xff] %v2778
    %2797 = vst [vmem:[%s2785 + $0x58] sm:$0xff] %v2779
    %2798 = vst [vmem:[%s2785 + $0x60] sm:$0xff] %v2780
    %2799 = vst [vmem:[%s2785 + $0x68] sm:$0xff] %v2781
    %2800 = vst [vmem:[%s2785 + $0x70] sm:$0xff] %v2782
    %2801 = vst [vmem:[%s2785 + $0x78] sm:$0xff] %v2783
    %v2802 = vld [vmem:[#allocation3] sm:$0x1]
    %v2803 = vadd.f32 %v2768, %v2769
    %v2804 = vadd.f32 %v2803, %v2770
    %v2805 = vadd.f32 %v2804, %v2771
    %v2806 = vadd.f32 %v2805, %v2772
    %v2807 = vadd.f32 %v2806, %v2773
    %v2808 = vadd.f32 %v2807, %v2774
    %v2809 = vadd.f32 %v2808, %v2775
    %v2810 = vadd.f32 %v2809, %v2776
    %v2811 = vadd.f32 %v2810, %v2777
    %v2812 = vadd.f32 %v2811, %v2778
    %v2813 = vadd.f32 %v2812, %v2779
    %v2814 = vadd.f32 %v2813, %v2780
    %v2815 = vadd.f32 %v2814, %v2781
    %v2816 = vadd.f32 %v2815, %v2782
    %v2817 = vadd.f32 %v2816, %v2783
    %v2818 = vrot.slane %v2817, 4
    %v2819 = vadd.f32 %v2817, %v2818
    %v2820 = vrot.slane %v2819, 2
    %v2821 = vadd.f32 %v2819, %v2820
    %v2822 = vrot.slane %v2821, 1
    %v2823 = vadd.f32 %v2821, %v2822
    %v2824 = vadd.f32 %v2802, %v2823
    %2825 = vst [vmem:[#allocation3] sm:$0x1] %v2824
    %v2826 = vld [vmem:[#allocation4] sm:$0x1]
    %v2827 = vmul.f32 %v2768, %v2768
    %v2828 = vmul.f32 %v2769, %v2769
    %v2829 = vmul.f32 %v2770, %v2770
    %v2830 = vmul.f32 %v2771, %v2771
    %v2831 = vmul.f32 %v2772, %v2772
    %v2832 = vmul.f32 %v2773, %v2773
    %v2833 = vmul.f32 %v2774, %v2774
    %v2834 = vmul.f32 %v2775, %v2775
    %v2835 = vmul.f32 %v2776, %v2776
    %v2836 = vmul.f32 %v2777, %v2777
    %v2837 = vmul.f32 %v2778, %v2778
    %v2838 = vmul.f32 %v2779, %v2779
    %v2839 = vmul.f32 %v2780, %v2780
    %v2840 = vmul.f32 %v2781, %v2781
    %v2841 = vmul.f32 %v2782, %v2782
    %v2842 = vmul.f32 %v2783, %v2783
    %v2843 = vadd.f32 %v2827, %v2828
    %v2844 = vadd.f32 %v2843, %v2829
    %v2845 = vadd.f32 %v2844, %v2830
    %v2846 = vadd.f32 %v2845, %v2831
    %v2847 = vadd.f32 %v2846, %v2832
    %v2848 = vadd.f32 %v2847, %v2833
    %v2849 = vadd.f32 %v2848, %v2834
    %v2850 = vadd.f32 %v2849, %v2835
    %v2851 = vadd.f32 %v2850, %v2836
    %v2852 = vadd.f32 %v2851, %v2837
    %v2853 = vadd.f32 %v2852, %v2838
    %v2854 = vadd.f32 %v2853, %v2839
    %v2855 = vadd.f32 %v2854, %v2840
    %v2856 = vadd.f32 %v2855, %v2841
    %v2857 = vadd.f32 %v2856, %v2842
    %v2858 = vrot.slane %v2857, 4
    %v2859 = vadd.f32 %v2857, %v2858
    %v2860 = vrot.slane %v2859, 2
    %v2861 = vadd.f32 %v2859, %v2860
    %v2862 = vrot.slane %v2861, 1
    %v2863 = vadd.f32 %v2861, %v2862
    %v2864 = vadd.f32 %v2826, %v2863
    %2865 = vst [vmem:[#allocation4] sm:$0x1] %v2864
  $region26: #{restnet_basic_block_forward.3} parent=0 // loop_footer
    %s28 = sadd.s32 1, %s24
  $region27: #{restnet_basic_block_forward.3} parent=0 // loop_footer_branch
    %23 = sbr.rel target = $region23
  $region28: #{restnet_basic_block_forward.3} parent=0 // loop_exit
    _
  loop: start=0, step=1, limit=2
  $region29: #{restnet_basic_block_forward.3} parent=0 // loop_pre_header
    _
  $region30: #{restnet_basic_block_forward.3} parent=0 // loop_header
    %s2867 = sphi 0, %s2871
    %p2868 = scmp.ge.s32.totalorder %s2867, 2
  $region31: #{restnet_basic_block_forward.3} parent=0 // loop_header_branch
    %2870 = sbr.rel (%p2868) target = $region35
  $region32: #{restnet_basic_block_forward.3} parent=0 // loop_body
    %s2872 = smul.u32 %s2867, 8
    %s2873 = smul.u32 %s2872, 3
    %s2874 = sadd.s32 %s2873, 54
    %s2875 = smul.addr %s2874, 4
    %s2876 = scalar_lea.vmem %s0, %s2875
    %v2877 = vld [vmem:[%s2876] sm:$0xf]
    %v2878 = vld [vmem:[%s2876 + $0x4] sm:$0xf]
    %v2879 = vld [vmem:[%s2876 + $0x8] sm:$0x1]
    %v2880 = vld [vmem:[%s2876 + $0xc] sm:$0xf]
    %v2881 = vld [vmem:[%s2876 + $0x10] sm:$0xf]
    %v2882 = vld [vmem:[%s2876 + $0x14] sm:$0x1]
    %v2883 = vld [vmem:[%s2876 + $0x18] sm:$0xf]
    %v2884 = vld [vmem:[%s2876 + $0x1c] sm:$0xf]
    %v2885 = vld [vmem:[%s2876 + $0x20] sm:$0x1]
    %v2886 = vld [vmem:[%s2876 + $0x24] sm:$0xf]
    %v2887 = vld [vmem:[%s2876 + $0x28] sm:$0xf]
    %v2888 = vld [vmem:[%s2876 + $0x2c] sm:$0x1]
    %v2889 = vld [vmem:[%s2876 + $0x30] sm:$0xf]
    %v2890 = vld [vmem:[%s2876 + $0x34] sm:$0xf]
    %v2891 = vld [vmem:[%s2876 + $0x38] sm:$0x1]
    %v2892 = vld [vmem:[%s2876 + $0x3c] sm:$0xf]
    %v2893 = vld [vmem:[%s2876 + $0x40] sm:$0xf]
    %v2894 = vld [vmem:[%s2876 + $0x44] sm:$0x1]
    %v2895 = vld [vmem:[%s2876 + $0x48] sm:$0xf]
    %v2896 = vld [vmem:[%s2876 + $0x4c] sm:$0xf]
    %v2897 = vld [vmem:[%s2876 + $0x50] sm:$0x1]
    %v2898 = vld [vmem:[%s2876 + $0x54] sm:$0xf]
    %v2899 = vld [vmem:[%s2876 + $0x58] sm:$0xf]
    %v2900 = vld [vmem:[%s2876 + $0x5c] sm:$0x1]
    %v2901 = vld [vmem:[%s1] sm:$0xf]
    %v2902 = vld [vmem:[%s1 + $0x4] sm:$0xf]
    %v2903 = vld [vmem:[%s1 + $0x8] sm:$0xf]
    %v2904 = vld [vmem:[%s1 + $0xc] sm:$0xf]
    %v2905 = vld [vmem:[%s1 + $0x10] sm:$0xf]
    %v2906 = vld [vmem:[%s1 + $0x14] sm:$0xf]
    %v2907 = vld [vmem:[%s1 + $0x18] sm:$0xf]
    %v2908 = vld [vmem:[%s1 + $0x1c] sm:$0xf]
    %v2909 = vld [vmem:[%s1 + $0x20] sm:$0xf]
    %v2910 = vld [vmem:[%s1 + $0x24] sm:$0xf]
    %v2911 = vld [vmem:[%s1 + $0x28] sm:$0xf]
    %v2912 = vld [vmem:[%s1 + $0x2c] sm:$0xf]
    %v2913 = vld [vmem:[%s1 + $0x30] sm:$0xf]
    %v2914 = vld [vmem:[%s1 + $0x34] sm:$0xf]
    %v2915 = vld [vmem:[%s1 + $0x38] sm:$0xf]
    %v2916 = vld [vmem:[%s1 + $0x3c] sm:$0xf]
    %vm2917 = vsmask.f32 3328
    %vm2918 = vsmask.f32 7440
    %vm2919 = vmor %vm2917, %vm2918
    %v2921 = vshrl.u32 %v2877, 16
    %v2923 = vrot.slane %v2921, 4
    %v2924 = vshll.u32 %v2877, 16
    %v2926 = vrot.slane %v2924, 5
    %v2927 = vor.u32 %v2923, %v2926
    %v2928 = vrot.slane %v2927, 4
    %v2930 = vshll.u32 %v2878, 16
    %v2932 = vrot.slane %v2930, 5
    %v2933 = vsel %vm2919, %v2928, %v2932
    %v2934 = vshrl.u32 %v2878, 16
    %v2936 = vrot.slane %v2934, 4
    %v2937 = vor.u32 %v2936, %v2932
    %v2938 = vrot.slane %v2937, 4
    %v2940 = vshll.u32 %v2879, 16
    %v2942 = vrot.slane %v2940, 5
    %v2943 = vsel %vm2919, %v2938, %v2942
    %v2945 = vshrl.u32 %v2880, 16
    %v2947 = vrot.slane %v2945, 4
    %v2948 = vshll.u32 %v2880, 16
    %v2950 = vrot.slane %v2948, 5
    %v2951 = vor.u32 %v2947, %v2950
    %v2952 = vrot.slane %v2951, 4
    %v2954 = vshll.u32 %v2881, 16
    %v2956 = vrot.slane %v2954, 5
    %v2957 = vsel %vm2919, %v2952, %v2956
    %v2958 = vshrl.u32 %v2881, 16
    %v2960 = vrot.slane %v2958, 4
    %v2961 = vor.u32 %v2960, %v2956
    %v2962 = vrot.slane %v2961, 4
    %v2964 = vshll.u32 %v2882, 16
    %v2966 = vrot.slane %v2964, 5
    %v2967 = vsel %vm2919, %v2962, %v2966
    %v2969 = vshrl.u32 %v2883, 16
    %v2971 = vrot.slane %v2969, 4
    %v2972 = vshll.u32 %v2883, 16
    %v2974 = vrot.slane %v2972, 5
    %v2975 = vor.u32 %v2971, %v2974
    %v2976 = vrot.slane %v2975, 4
    %v2978 = vshll.u32 %v2884, 16
    %v2980 = vrot.slane %v2978, 5
    %v2981 = vsel %vm2919, %v2976, %v2980
    %v2982 = vshrl.u32 %v2884, 16
    %v2984 = vrot.slane %v2982, 4
    %v2985 = vor.u32 %v2984, %v2980
    %v2986 = vrot.slane %v2985, 4
    %v2988 = vshll.u32 %v2885, 16
    %v2990 = vrot.slane %v2988, 5
    %v2991 = vsel %vm2919, %v2986, %v2990
    %v2993 = vshrl.u32 %v2886, 16
    %v2995 = vrot.slane %v2993, 4
    %v2996 = vshll.u32 %v2886, 16
    %v2998 = vrot.slane %v2996, 5
    %v2999 = vor.u32 %v2995, %v2998
    %v3000 = vrot.slane %v2999, 4
    %v3002 = vshll.u32 %v2887, 16
    %v3004 = vrot.slane %v3002, 5
    %v3005 = vsel %vm2919, %v3000, %v3004
    %v3006 = vshrl.u32 %v2887, 16
    %v3008 = vrot.slane %v3006, 4
    %v3009 = vor.u32 %v3008, %v3004
    %v3010 = vrot.slane %v3009, 4
    %v3012 = vshll.u32 %v2888, 16
    %v3014 = vrot.slane %v3012, 5
    %v3015 = vsel %vm2919, %v3010, %v3014
    %v3017 = vshrl.u32 %v2889, 16
    %v3019 = vrot.slane %v3017, 4
    %v3020 = vshll.u32 %v2889, 16
    %v3022 = vrot.slane %v3020, 5
    %v3023 = vor.u32 %v3019, %v3022
    %v3024 = vrot.slane %v3023, 4
    %v3026 = vshll.u32 %v2890, 16
    %v3028 = vrot.slane %v3026, 5
    %v3029 = vsel %vm2919, %v3024, %v3028
    %v3030 = vshrl.u32 %v2890, 16
    %v3032 = vrot.slane %v3030, 4
    %v3033 = vor.u32 %v3032, %v3028
    %v3034 = vrot.slane %v3033, 4
    %v3036 = vshll.u32 %v2891, 16
    %v3038 = vrot.slane %v3036, 5
    %v3039 = vsel %vm2919, %v3034, %v3038
    %v3041 = vshrl.u32 %v2892, 16
    %v3043 = vrot.slane %v3041, 4
    %v3044 = vshll.u32 %v2892, 16
    %v3046 = vrot.slane %v3044, 5
    %v3047 = vor.u32 %v3043, %v3046
    %v3048 = vrot.slane %v3047, 4
    %v3050 = vshll.u32 %v2893, 16
    %v3052 = vrot.slane %v3050, 5
    %v3053 = vsel %vm2919, %v3048, %v3052
    %v3054 = vshrl.u32 %v2893, 16
    %v3056 = vrot.slane %v3054, 4
    %v3057 = vor.u32 %v3056, %v3052
    %v3058 = vrot.slane %v3057, 4
    %v3060 = vshll.u32 %v2894, 16
    %v3062 = vrot.slane %v3060, 5
    %v3063 = vsel %vm2919, %v3058, %v3062
    %v3065 = vshrl.u32 %v2895, 16
    %v3067 = vrot.slane %v3065, 4
    %v3068 = vshll.u32 %v2895, 16
    %v3070 = vrot.slane %v3068, 5
    %v3071 = vor.u32 %v3067, %v3070
    %v3072 = vrot.slane %v3071, 4
    %v3074 = vshll.u32 %v2896, 16
    %v3076 = vrot.slane %v3074, 5
    %v3077 = vsel %vm2919, %v3072, %v3076
    %v3078 = vshrl.u32 %v2896, 16
    %v3080 = vrot.slane %v3078, 4
    %v3081 = vor.u32 %v3080, %v3076
    %v3082 = vrot.slane %v3081, 4
    %v3084 = vshll.u32 %v2897, 16
    %v3086 = vrot.slane %v3084, 5
    %v3087 = vsel %vm2919, %v3082, %v3086
    %v3089 = vshrl.u32 %v2898, 16
    %v3091 = vrot.slane %v3089, 4
    %v3092 = vshll.u32 %v2898, 16
    %v3094 = vrot.slane %v3092, 5
    %v3095 = vor.u32 %v3091, %v3094
    %v3096 = vrot.slane %v3095, 4
    %v3098 = vshll.u32 %v2899, 16
    %v3100 = vrot.slane %v3098, 5
    %v3101 = vsel %vm2919, %v3096, %v3100
    %v3102 = vshrl.u32 %v2899, 16
    %v3104 = vrot.slane %v3102, 4
    %v3105 = vor.u32 %v3104, %v3100
    %v3106 = vrot.slane %v3105, 4
    %v3108 = vshll.u32 %v2900, 16
    %v3110 = vrot.slane %v3108, 5
    %v3111 = vsel %vm2919, %v3106, %v3110
    %v3112 = vld [vmem:[%s1 + $0x40] sm:$0xf]
    %v3113 = vld [vmem:[%s1 + $0x44] sm:$0xf]
    %v3114 = vld [vmem:[%s1 + $0x48] sm:$0xf]
    %v3115 = vld [vmem:[%s1 + $0x4c] sm:$0xf]
    %v3116 = vld [vmem:[%s1 + $0x50] sm:$0xf]
    %v3117 = vld [vmem:[%s1 + $0x54] sm:$0xf]
    %v3118 = vld [vmem:[%s1 + $0x58] sm:$0xf]
    %v3119 = vld [vmem:[%s1 + $0x5c] sm:$0xf]
    %v3120 = vld [vmem:[%s1 + $0x60] sm:$0xf]
    %v3121 = vld [vmem:[%s1 + $0x64] sm:$0xf]
    %v3122 = vld [vmem:[%s1 + $0x68] sm:$0xf]
    %v3123 = vld [vmem:[%s1 + $0x6c] sm:$0xf]
    %v3124 = vld [vmem:[%s1 + $0x70] sm:$0xf]
    %v3125 = vld [vmem:[%s1 + $0x74] sm:$0xf]
    %v3126 = vld [vmem:[%s1 + $0x78] sm:$0xf]
    %v3127 = vld [vmem:[%s1 + $0x7c] sm:$0xf]
    %v3128 = vunpack.c.l.b16 %v2933
    %v3129 = vunpack.c.l.b16 %v2943
    %v3130 = vunpack.c.l.b16 %v2957
    %v3131 = vunpack.c.l.b16 %v2967
    %v3132 = vunpack.c.l.b16 %v2981
    %v3133 = vunpack.c.l.b16 %v2991
    %v3134 = vunpack.c.l.b16 %v3005
    %v3135 = vunpack.c.l.b16 %v3015
    %v3136 = vunpack.c.l.b16 %v3029
    %v3137 = vunpack.c.l.b16 %v3039
    %v3138 = vunpack.c.l.b16 %v3053
    %v3139 = vunpack.c.l.b16 %v3063
    %v3140 = vunpack.c.l.b16 %v3077
    %v3141 = vunpack.c.l.b16 %v3087
    %v3142 = vunpack.c.l.b16 %v3101
    %v3143 = vunpack.c.l.b16 %v3111
    %v3144 = vpack.c.b16 %v3129, %v3128
    %v3145 = vpack.c.b16 %v3131, %v3130
    %v3146 = vpack.c.b16 %v3133, %v3132
    %v3147 = vpack.c.b16 %v3135, %v3134
    %v3148 = vpack.c.b16 %v3137, %v3136
    %v3149 = vpack.c.b16 %v3139, %v3138
    %v3150 = vpack.c.b16 %v3141, %v3140
    %v3151 = vpack.c.b16 %v3143, %v3142
    %v3176 = vunpack.c.l.b16 %v3112
    %v3177 = vunpack.c.l.b16 %v3113
    %v3178 = vunpack.c.l.b16 %v3114
    %v3179 = vunpack.c.l.b16 %v3115
    %v3180 = vunpack.c.l.b16 %v3116
    %v3181 = vunpack.c.l.b16 %v3117
    %v3182 = vunpack.c.l.b16 %v3118
    %v3183 = vunpack.c.l.b16 %v3119
    %v3184 = vunpack.c.l.b16 %v3120
    %v3185 = vunpack.c.l.b16 %v3121
    %v3186 = vunpack.c.l.b16 %v3122
    %v3187 = vunpack.c.l.b16 %v3123
    %v3188 = vunpack.c.l.b16 %v3124
    %v3189 = vunpack.c.l.b16 %v3125
    %v3190 = vunpack.c.l.b16 %v3126
    %v3191 = vunpack.c.l.b16 %v3127
    %v3192 = vpack.c.b16 %v3177, %v3176
    %v3193 = vpack.c.b16 %v3179, %v3178
    %v3194 = vpack.c.b16 %v3181, %v3180
    %v3195 = vpack.c.b16 %v3183, %v3182
    %v3196 = vpack.c.b16 %v3185, %v3184
    %v3197 = vpack.c.b16 %v3187, %v3186
    %v3198 = vpack.c.b16 %v3189, %v3188
    %v3199 = vpack.c.b16 %v3191, %v3190
    %3208 = vmatprep.subr.bf16.mxu0 0
    %3209 = vmatpush1.bf16.msra.mxu0 %v3192
    %3210 = vmatprep.subr.bf16.mxu0 0
    %3211 = vmatpush1.bf16.msra.mxu0 %v3193
    %3212 = vmatprep.subr.bf16.mxu0 0
    %3213 = vmatpush1.bf16.msra.mxu0 %v3194
    %3214 = vmatprep.subr.bf16.mxu0 0
    %3215 = vmatpush1.bf16.msra.mxu0 %v3195
    %3216 = vmatprep.subr.bf16.mxu0 0
    %3217 = vmatpush1.bf16.msra.mxu0 %v3196
    %3218 = vmatprep.subr.bf16.mxu0 0
    %3219 = vmatpush1.bf16.msra.mxu0 %v3197
    %3220 = vmatprep.subr.bf16.mxu0 0
    %3221 = vmatpush1.bf16.msra.mxu0 %v3198
    %3222 = vmatprep.subr.bf16.mxu0 0
    %3223 = vmatpush1.bf16.msra.mxu0 %v3199
    %3224 = vmatprep.subr.bf16.mxu0 0
    %3225 = vmatpush1.bf16.msra.mxu0 0
    %3226 = vmatprep.subr.bf16.mxu0 0
    %3227 = vmatpush1.bf16.msra.mxu0 0
    %3228 = vmatprep.subr.bf16.mxu0 0
    %3229 = vmatpush1.bf16.msra.mxu0 0
    %3230 = vmatprep.subr.bf16.mxu0 0
    %3231 = vmatpush1.bf16.msra.mxu0 0
    %3232 = vmatprep.subr.bf16.mxu0 0
    %3233 = vmatpush1.bf16.msra.mxu0 0
    %3234 = vmatprep.subr.bf16.mxu0 0
    %3235 = vmatpush1.bf16.msra.mxu0 0
    %3236 = vmatprep.subr.bf16.mxu0 0
    %3237 = vmatpush1.bf16.msra.mxu0 0
    %3238 = vmatprep.subr.bf16.mxu0 0
    %3239 = vmatpush1.bf16.msra.mxu0 0
    %3240 = vmatprep.mubr.bf16.mxu0 0
    %3241 = vmatmul.mubr.bf16.gmra.mrb[0].mxu0 %v3144
    %v3242 = vpop.f32.mrb[0].mxu0
    %v3243 = vadd.f32 0.0, %v3242
    %v3244 = vpop.f32.mrb[0].mxu0
    %v3245 = vpop.f32.mrb[0].mxu0
    %v3246 = vadd.f32 0.0, %v3245
    %v3247 = vpop.f32.mrb[0].mxu0
    %3248 = vmatprep.mubr.bf16.mxu0 0
    %3249 = vmatmul.mubr.bf16.gmra.mrb[0].mxu0 %v3145
    %v3250 = vpop.f32.mrb[0].mxu0
    %v3251 = vadd.f32 0.0, %v3250
    %v3252 = vpop.f32.mrb[0].mxu0
    %v3253 = vpop.f32.mrb[0].mxu0
    %v3254 = vadd.f32 0.0, %v3253
    %v3255 = vpop.f32.mrb[0].mxu0
    %3256 = vmatprep.mubr.bf16.mxu0 0
    %3257 = vmatmul.mubr.bf16.gmra.mrb[0].mxu0 %v3146
    %v3258 = vpop.f32.mrb[0].mxu0
    %v3259 = vadd.f32 0.0, %v3258
    %v3260 = vpop.f32.mrb[0].mxu0
    %v3261 = vpop.f32.mrb[0].mxu0
    %v3262 = vadd.f32 0.0, %v3261
    %v3263 = vpop.f32.mrb[0].mxu0
    %3264 = vmatprep.mubr.bf16.mxu0 0
    %3265 = vmatmul.mubr.bf16.gmra.mrb[0].mxu0 %v3147
    %v3266 = vpop.f32.mrb[0].mxu0
    %v3267 = vadd.f32 0.0, %v3266
    %v3268 = vpop.f32.mrb[0].mxu0
    %v3269 = vpop.f32.mrb[0].mxu0
    %v3270 = vadd.f32 0.0, %v3269
    %v3271 = vpop.f32.mrb[0].mxu0
    %3272 = vmatprep.mubr.bf16.mxu0 0
    %3273 = vmatmul.mubr.bf16.gmra.mrb[0].mxu0 %v3148
    %v3274 = vpop.f32.mrb[0].mxu0
    %v3275 = vadd.f32 0.0, %v3274
    %v3276 = vpop.f32.mrb[0].mxu0
    %v3277 = vpop.f32.mrb[0].mxu0
    %v3278 = vadd.f32 0.0, %v3277
    %v3279 = vpop.f32.mrb[0].mxu0
    %3280 = vmatprep.mubr.bf16.mxu0 0
    %3281 = vmatmul.mubr.bf16.gmra.mrb[0].mxu0 %v3149
    %v3282 = vpop.f32.mrb[0].mxu0
    %v3283 = vadd.f32 0.0, %v3282
    %v3284 = vpop.f32.mrb[0].mxu0
    %v3285 = vpop.f32.mrb[0].mxu0
    %v3286 = vadd.f32 0.0, %v3285
    %v3287 = vpop.f32.mrb[0].mxu0
    %3288 = vmatprep.mubr.bf16.mxu0 0
    %3289 = vmatmul.mubr.bf16.gmra.mrb[0].mxu0 %v3150
    %v3290 = vpop.f32.mrb[0].mxu0
    %v3291 = vadd.f32 0.0, %v3290
    %v3292 = vpop.f32.mrb[0].mxu0
    %v3293 = vpop.f32.mrb[0].mxu0
    %v3294 = vadd.f32 0.0, %v3293
    %v3295 = vpop.f32.mrb[0].mxu0
    %3296 = vmatprep.mubr.bf16.mxu0 0
    %3297 = vmatmul.mubr.bf16.gmra.mrb[0].mxu0 %v3151
    %v3298 = vpop.f32.mrb[0].mxu0
    %v3299 = vadd.f32 0.0, %v3298
    %v3300 = vpop.f32.mrb[0].mxu0
    %v3301 = vpop.f32.mrb[0].mxu0
    %v3302 = vadd.f32 0.0, %v3301
    %v3303 = vpop.f32.mrb[0].mxu0
    %3304 = vdwg.mxu0
    %v3321 = vunpack.c.l.b16 %v2877
    %v3322 = vunpack.c.l.b16 %v2878
    %v3323 = vunpack.c.l.b16 %v2880
    %v3324 = vunpack.c.l.b16 %v2881
    %v3325 = vunpack.c.l.b16 %v2883
    %v3326 = vunpack.c.l.b16 %v2884
    %v3327 = vunpack.c.l.b16 %v2886
    %v3328 = vunpack.c.l.b16 %v2887
    %v3329 = vunpack.c.l.b16 %v2889
    %v3330 = vunpack.c.l.b16 %v2890
    %v3331 = vunpack.c.l.b16 %v2892
    %v3332 = vunpack.c.l.b16 %v2893
    %v3333 = vunpack.c.l.b16 %v2895
    %v3334 = vunpack.c.l.b16 %v2896
    %v3335 = vunpack.c.l.b16 %v2898
    %v3336 = vunpack.c.l.b16 %v2899
    %v3337 = vpack.c.b16 %v3322, %v3321
    %v3338 = vpack.c.b16 %v3324, %v3323
    %v3339 = vpack.c.b16 %v3326, %v3325
    %v3340 = vpack.c.b16 %v3328, %v3327
    %v3341 = vpack.c.b16 %v3330, %v3329
    %v3342 = vpack.c.b16 %v3332, %v3331
    %v3343 = vpack.c.b16 %v3334, %v3333
    %v3344 = vpack.c.b16 %v3336, %v3335
    %v3369 = vunpack.c.l.b16 %v2901
    %v3370 = vunpack.c.l.b16 %v2902
    %v3371 = vunpack.c.l.b16 %v2903
    %v3372 = vunpack.c.l.b16 %v2904
    %v3373 = vunpack.c.l.b16 %v2905
    %v3374 = vunpack.c.l.b16 %v2906
    %v3375 = vunpack.c.l.b16 %v2907
    %v3376 = vunpack.c.l.b16 %v2908
    %v3377 = vunpack.c.l.b16 %v2909
    %v3378 = vunpack.c.l.b16 %v2910
    %v3379 = vunpack.c.l.b16 %v2911
    %v3380 = vunpack.c.l.b16 %v2912
    %v3381 = vunpack.c.l.b16 %v2913
    %v3382 = vunpack.c.l.b16 %v2914
    %v3383 = vunpack.c.l.b16 %v2915
    %v3384 = vunpack.c.l.b16 %v2916
    %v3385 = vpack.c.b16 %v3370, %v3369
    %v3386 = vpack.c.b16 %v3372, %v3371
    %v3387 = vpack.c.b16 %v3374, %v3373
    %v3388 = vpack.c.b16 %v3376, %v3375
    %v3389 = vpack.c.b16 %v3378, %v3377
    %v3390 = vpack.c.b16 %v3380, %v3379
    %v3391 = vpack.c.b16 %v3382, %v3381
    %v3392 = vpack.c.b16 %v3384, %v3383
    %3401 = vmatprep.subr.bf16.mxu0 0
    %3402 = vmatpush1.bf16.msra.mxu0 %v3385
    %3403 = vmatprep.subr.bf16.mxu0 0
    %3404 = vmatpush1.bf16.msra.mxu0 %v3386
    %3405 = vmatprep.subr.bf16.mxu0 0
    %3406 = vmatpush1.bf16.msra.mxu0 %v3387
    %3407 = vmatprep.subr.bf16.mxu0 0
    %3408 = vmatpush1.bf16.msra.mxu0 %v3388
    %3409 = vmatprep.subr.bf16.mxu0 0
    %3410 = vmatpush1.bf16.msra.mxu0 %v3389
    %3411 = vmatprep.subr.bf16.mxu0 0
    %3412 = vmatpush1.bf16.msra.mxu0 %v3390
    %3413 = vmatprep.subr.bf16.mxu0 0
    %3414 = vmatpush1.bf16.msra.mxu0 %v3391
    %3415 = vmatprep.subr.bf16.mxu0 0
    %3416 = vmatpush1.bf16.msra.mxu0 %v3392
    %3417 = vmatprep.subr.bf16.mxu0 0
    %3418 = vmatpush1.bf16.msra.mxu0 0
    %3419 = vmatprep.subr.bf16.mxu0 0
    %3420 = vmatpush1.bf16.msra.mxu0 0
    %3421 = vmatprep.subr.bf16.mxu0 0
    %3422 = vmatpush1.bf16.msra.mxu0 0
    %3423 = vmatprep.subr.bf16.mxu0 0
    %3424 = vmatpush1.bf16.msra.mxu0 0
    %3425 = vmatprep.subr.bf16.mxu0 0
    %3426 = vmatpush1.bf16.msra.mxu0 0
    %3427 = vmatprep.subr.bf16.mxu0 0
    %3428 = vmatpush1.bf16.msra.mxu0 0
    %3429 = vmatprep.subr.bf16.mxu0 0
    %3430 = vmatpush1.bf16.msra.mxu0 0
    %3431 = vmatprep.subr.bf16.mxu0 0
    %3432 = vmatpush1.bf16.msra.mxu0 0
    %3433 = vmatprep.mubr.bf16.mxu0 0
    %3434 = vmatmul.mubr.bf16.gmra.mrb[0].mxu0 %v3337
    %v3435 = vpop.f32.mrb[0].mxu0
    %v3436 = vadd.f32 %v3243, %v3435
    %v3437 = vpop.f32.mrb[0].mxu0
    %v3438 = vpop.f32.mrb[0].mxu0
    %v3439 = vadd.f32 %v3246, %v3438
    %v3440 = vpop.f32.mrb[0].mxu0
    %3441 = vmatprep.mubr.bf16.mxu0 0
    %3442 = vmatmul.mubr.bf16.gmra.mrb[0].mxu0 %v3338
    %v3443 = vpop.f32.mrb[0].mxu0
    %v3444 = vadd.f32 %v3251, %v3443
    %v3445 = vpop.f32.mrb[0].mxu0
    %v3446 = vpop.f32.mrb[0].mxu0
    %v3447 = vadd.f32 %v3254, %v3446
    %v3448 = vpop.f32.mrb[0].mxu0
    %3449 = vmatprep.mubr.bf16.mxu0 0
    %3450 = vmatmul.mubr.bf16.gmra.mrb[0].mxu0 %v3339
    %v3451 = vpop.f32.mrb[0].mxu0
    %v3452 = vadd.f32 %v3259, %v3451
    %v3453 = vpop.f32.mrb[0].mxu0
    %v3454 = vpop.f32.mrb[0].mxu0
    %v3455 = vadd.f32 %v3262, %v3454
    %v3456 = vpop.f32.mrb[0].mxu0
    %3457 = vmatprep.mubr.bf16.mxu0 0
    %3458 = vmatmul.mubr.bf16.gmra.mrb[0].mxu0 %v3340
    %v3459 = vpop.f32.mrb[0].mxu0
    %v3460 = vadd.f32 %v3267, %v3459
    %v3461 = vpop.f32.mrb[0].mxu0
    %v3462 = vpop.f32.mrb[0].mxu0
    %v3463 = vadd.f32 %v3270, %v3462
    %v3464 = vpop.f32.mrb[0].mxu0
    %3465 = vmatprep.mubr.bf16.mxu0 0
    %3466 = vmatmul.mubr.bf16.gmra.mrb[0].mxu0 %v3341
    %v3467 = vpop.f32.mrb[0].mxu0
    %v3468 = vadd.f32 %v3275, %v3467
    %v3469 = vpop.f32.mrb[0].mxu0
    %v3470 = vpop.f32.mrb[0].mxu0
    %v3471 = vadd.f32 %v3278, %v3470
    %v3472 = vpop.f32.mrb[0].mxu0
    %3473 = vmatprep.mubr.bf16.mxu0 0
    %3474 = vmatmul.mubr.bf16.gmra.mrb[0].mxu0 %v3342
    %v3475 = vpop.f32.mrb[0].mxu0
    %v3476 = vadd.f32 %v3283, %v3475
    %v3477 = vpop.f32.mrb[0].mxu0
    %v3478 = vpop.f32.mrb[0].mxu0
    %v3479 = vadd.f32 %v3286, %v3478
    %v3480 = vpop.f32.mrb[0].mxu0
    %3481 = vmatprep.mubr.bf16.mxu0 0
    %3482 = vmatmul.mubr.bf16.gmra.mrb[0].mxu0 %v3343
    %v3483 = vpop.f32.mrb[0].mxu0
    %v3484 = vadd.f32 %v3291, %v3483
    %v3485 = vpop.f32.mrb[0].mxu0
    %v3486 = vpop.f32.mrb[0].mxu0
    %v3487 = vadd.f32 %v3294, %v3486
    %v3488 = vpop.f32.mrb[0].mxu0
    %3489 = vmatprep.mubr.bf16.mxu0 0
    %3490 = vmatmul.mubr.bf16.gmra.mrb[0].mxu0 %v3344
    %v3491 = vpop.f32.mrb[0].mxu0
    %v3492 = vadd.f32 %v3299, %v3491
    %v3493 = vpop.f32.mrb[0].mxu0
    %v3494 = vpop.f32.mrb[0].mxu0
    %v3495 = vadd.f32 %v3302, %v3494
    %v3496 = vpop.f32.mrb[0].mxu0
    %3497 = vdwg.mxu0
    %vm3506 = vcmask 1042432
    %vm3507 = vcmask 1046532
    %vm3508 = vmor %vm3506, %vm3507
    %v3509 = vrot.slane %v2877, 5
    %v3510 = vrot.slane %v3509, 4
    %v3511 = vrot.slane %v2878, 5
    %v3512 = vsel %vm3508, %v3510, %v3511
    %v3513 = vrot.slane %v3511, 4
    %v3514 = vrot.slane %v2879, 5
    %v3515 = vsel %vm3508, %v3513, %v3514
    %v3516 = vrot.slane %v2880, 5
    %v3517 = vrot.slane %v3516, 4
    %v3518 = vrot.slane %v2881, 5
    %v3519 = vsel %vm3508, %v3517, %v3518
    %v3520 = vrot.slane %v3518, 4
    %v3521 = vrot.slane %v2882, 5
    %v3522 = vsel %vm3508, %v3520, %v3521
    %v3523 = vrot.slane %v2883, 5
    %v3524 = vrot.slane %v3523, 4
    %v3525 = vrot.slane %v2884, 5
    %v3526 = vsel %vm3508, %v3524, %v3525
    %v3527 = vrot.slane %v3525, 4
    %v3528 = vrot.slane %v2885, 5
    %v3529 = vsel %vm3508, %v3527, %v3528
    %v3530 = vrot.slane %v2886, 5
    %v3531 = vrot.slane %v3530, 4
    %v3532 = vrot.slane %v2887, 5
    %v3533 = vsel %vm3508, %v3531, %v3532
    %v3534 = vrot.slane %v3532, 4
    %v3535 = vrot.slane %v2888, 5
    %v3536 = vsel %vm3508, %v3534, %v3535
    %v3537 = vrot.slane %v2889, 5
    %v3538 = vrot.slane %v3537, 4
    %v3539 = vrot.slane %v2890, 5
    %v3540 = vsel %vm3508, %v3538, %v3539
    %v3541 = vrot.slane %v3539, 4
    %v3542 = vrot.slane %v2891, 5
    %v3543 = vsel %vm3508, %v3541, %v3542
    %v3544 = vrot.slane %v2892, 5
    %v3545 = vrot.slane %v3544, 4
    %v3546 = vrot.slane %v2893, 5
    %v3547 = vsel %vm3508, %v3545, %v3546
    %v3548 = vrot.slane %v3546, 4
    %v3549 = vrot.slane %v2894, 5
    %v3550 = vsel %vm3508, %v3548, %v3549
    %v3551 = vrot.slane %v2895, 5
    %v3552 = vrot.slane %v3551, 4
    %v3553 = vrot.slane %v2896, 5
    %v3554 = vsel %vm3508, %v3552, %v3553
    %v3555 = vrot.slane %v3553, 4
    %v3556 = vrot.slane %v2897, 5
    %v3557 = vsel %vm3508, %v3555, %v3556
    %v3558 = vrot.slane %v2898, 5
    %v3559 = vrot.slane %v3558, 4
    %v3560 = vrot.slane %v2899, 5
    %v3561 = vsel %vm3508, %v3559, %v3560
    %v3562 = vrot.slane %v3560, 4
    %v3563 = vrot.slane %v2900, 5
    %v3564 = vsel %vm3508, %v3562, %v3563
    %v3565 = vld [vmem:[%s1 + $0x80] sm:$0xf]
    %v3566 = vld [vmem:[%s1 + $0x84] sm:$0xf]
    %v3567 = vld [vmem:[%s1 + $0x88] sm:$0xf]
    %v3568 = vld [vmem:[%s1 + $0x8c] sm:$0xf]
    %v3569 = vld [vmem:[%s1 + $0x90] sm:$0xf]
    %v3570 = vld [vmem:[%s1 + $0x94] sm:$0xf]
    %v3571 = vld [vmem:[%s1 + $0x98] sm:$0xf]
    %v3572 = vld [vmem:[%s1 + $0x9c] sm:$0xf]
    %v3573 = vld [vmem:[%s1 + $0xa0] sm:$0xf]
    %v3574 = vld [vmem:[%s1 + $0xa4] sm:$0xf]
    %v3575 = vld [vmem:[%s1 + $0xa8] sm:$0xf]
    %v3576 = vld [vmem:[%s1 + $0xac] sm:$0xf]
    %v3577 = vld [vmem:[%s1 + $0xb0] sm:$0xf]
    %v3578 = vld [vmem:[%s1 + $0xb4] sm:$0xf]
    %v3579 = vld [vmem:[%s1 + $0xb8] sm:$0xf]
    %v3580 = vld [vmem:[%s1 + $0xbc] sm:$0xf]
    %v3581 = vunpack.c.l.b16 %v3512
    %v3582 = vunpack.c.l.b16 %v3515
    %v3583 = vunpack.c.l.b16 %v3519
    %v3584 = vunpack.c.l.b16 %v3522
    %v3585 = vunpack.c.l.b16 %v3526
    %v3586 = vunpack.c.l.b16 %v3529
    %v3587 = vunpack.c.l.b16 %v3533
    %v3588 = vunpack.c.l.b16 %v3536
    %v3589 = vunpack.c.l.b16 %v3540
    %v3590 = vunpack.c.l.b16 %v3543
    %v3591 = vunpack.c.l.b16 %v3547
    %v3592 = vunpack.c.l.b16 %v3550
    %v3593 = vunpack.c.l.b16 %v3554
    %v3594 = vunpack.c.l.b16 %v3557
    %v3595 = vunpack.c.l.b16 %v3561
    %v3596 = vunpack.c.l.b16 %v3564
    %v3597 = vpack.c.b16 %v3582, %v3581
    %v3598 = vpack.c.b16 %v3584, %v3583
    %v3599 = vpack.c.b16 %v3586, %v3585
    %v3600 = vpack.c.b16 %v3588, %v3587
    %v3601 = vpack.c.b16 %v3590, %v3589
    %v3602 = vpack.c.b16 %v3592, %v3591
    %v3603 = vpack.c.b16 %v3594, %v3593
    %v3604 = vpack.c.b16 %v3596, %v3595
    %v3629 = vunpack.c.l.b16 %v3565
    %v3630 = vunpack.c.l.b16 %v3566
    %v3631 = vunpack.c.l.b16 %v3567
    %v3632 = vunpack.c.l.b16 %v3568
    %v3633 = vunpack.c.l.b16 %v3569
    %v3634 = vunpack.c.l.b16 %v3570
    %v3635 = vunpack.c.l.b16 %v3571
    %v3636 = vunpack.c.l.b16 %v3572
    %v3637 = vunpack.c.l.b16 %v3573
    %v3638 = vunpack.c.l.b16 %v3574
    %v3639 = vunpack.c.l.b16 %v3575
    %v3640 = vunpack.c.l.b16 %v3576
    %v3641 = vunpack.c.l.b16 %v3577
    %v3642 = vunpack.c.l.b16 %v3578
    %v3643 = vunpack.c.l.b16 %v3579
    %v3644 = vunpack.c.l.b16 %v3580
    %v3645 = vpack.c.b16 %v3630, %v3629
    %v3646 = vpack.c.b16 %v3632, %v3631
    %v3647 = vpack.c.b16 %v3634, %v3633
    %v3648 = vpack.c.b16 %v3636, %v3635
    %v3649 = vpack.c.b16 %v3638, %v3637
    %v3650 = vpack.c.b16 %v3640, %v3639
    %v3651 = vpack.c.b16 %v3642, %v3641
    %v3652 = vpack.c.b16 %v3644, %v3643
    %3661 = vmatprep.subr.bf16.mxu0 0
    %3662 = vmatpush1.bf16.msra.mxu0 %v3645
    %3663 = vmatprep.subr.bf16.mxu0 0
    %3664 = vmatpush1.bf16.msra.mxu0 %v3646
    %3665 = vmatprep.subr.bf16.mxu0 0
    %3666 = vmatpush1.bf16.msra.mxu0 %v3647
    %3667 = vmatprep.subr.bf16.mxu0 0
    %3668 = vmatpush1.bf16.msra.mxu0 %v3648
    %3669 = vmatprep.subr.bf16.mxu0 0
    %3670 = vmatpush1.bf16.msra.mxu0 %v3649
    %3671 = vmatprep.subr.bf16.mxu0 0
    %3672 = vmatpush1.bf16.msra.mxu0 %v3650
    %3673 = vmatprep.subr.bf16.mxu0 0
    %3674 = vmatpush1.bf16.msra.mxu0 %v3651
    %3675 = vmatprep.subr.bf16.mxu0 0
    %3676 = vmatpush1.bf16.msra.mxu0 %v3652
    %3677 = vmatprep.subr.bf16.mxu0 0
    %3678 = vmatpush1.bf16.msra.mxu0 0
    %3679 = vmatprep.subr.bf16.mxu0 0
    %3680 = vmatpush1.bf16.msra.mxu0 0
    %3681 = vmatprep.subr.bf16.mxu0 0
    %3682 = vmatpush1.bf16.msra.mxu0 0
    %3683 = vmatprep.subr.bf16.mxu0 0
    %3684 = vmatpush1.bf16.msra.mxu0 0
    %3685 = vmatprep.subr.bf16.mxu0 0
    %3686 = vmatpush1.bf16.msra.mxu0 0
    %3687 = vmatprep.subr.bf16.mxu0 0
    %3688 = vmatpush1.bf16.msra.mxu0 0
    %3689 = vmatprep.subr.bf16.mxu0 0
    %3690 = vmatpush1.bf16.msra.mxu0 0
    %3691 = vmatprep.subr.bf16.mxu0 0
    %3692 = vmatpush1.bf16.msra.mxu0 0
    %3693 = vmatprep.mubr.bf16.mxu0 0
    %3694 = vmatmul.mubr.bf16.gmra.mrb[0].mxu0 %v3597
    %v3695 = vpop.f32.mrb[0].mxu0
    %v3696 = vadd.f32 0.0, %v3695
    %v3697 = vpop.f32.mrb[0].mxu0
    %v3698 = vpop.f32.mrb[0].mxu0
    %v3699 = vadd.f32 0.0, %v3698
    %v3700 = vpop.f32.mrb[0].mxu0
    %3701 = vmatprep.mubr.bf16.mxu0 0
    %3702 = vmatmul.mubr.bf16.gmra.mrb[0].mxu0 %v3598
    %v3703 = vpop.f32.mrb[0].mxu0
    %v3704 = vadd.f32 0.0, %v3703
    %v3705 = vpop.f32.mrb[0].mxu0
    %v3706 = vpop.f32.mrb[0].mxu0
    %v3707 = vadd.f32 0.0, %v3706
    %v3708 = vpop.f32.mrb[0].mxu0
    %3709 = vmatprep.mubr.bf16.mxu0 0
    %3710 = vmatmul.mubr.bf16.gmra.mrb[0].mxu0 %v3599
    %v3711 = vpop.f32.mrb[0].mxu0
    %v3712 = vadd.f32 0.0, %v3711
    %v3713 = vpop.f32.mrb[0].mxu0
    %v3714 = vpop.f32.mrb[0].mxu0
    %v3715 = vadd.f32 0.0, %v3714
    %v3716 = vpop.f32.mrb[0].mxu0
    %3717 = vmatprep.mubr.bf16.mxu0 0
    %3718 = vmatmul.mubr.bf16.gmra.mrb[0].mxu0 %v3600
    %v3719 = vpop.f32.mrb[0].mxu0
    %v3720 = vadd.f32 0.0, %v3719
    %v3721 = vpop.f32.mrb[0].mxu0
    %v3722 = vpop.f32.mrb[0].mxu0
    %v3723 = vadd.f32 0.0, %v3722
    %v3724 = vpop.f32.mrb[0].mxu0
    %3725 = vmatprep.mubr.bf16.mxu0 0
    %3726 = vmatmul.mubr.bf16.gmra.mrb[0].mxu0 %v3601
    %v3727 = vpop.f32.mrb[0].mxu0
    %v3728 = vadd.f32 0.0, %v3727
    %v3729 = vpop.f32.mrb[0].mxu0
    %v3730 = vpop.f32.mrb[0].mxu0
    %v3731 = vadd.f32 0.0, %v3730
    %v3732 = vpop.f32.mrb[0].mxu0
    %3733 = vmatprep.mubr.bf16.mxu0 0
    %3734 = vmatmul.mubr.bf16.gmra.mrb[0].mxu0 %v3602
    %v3735 = vpop.f32.mrb[0].mxu0
    %v3736 = vadd.f32 0.0, %v3735
    %v3737 = vpop.f32.mrb[0].mxu0
    %v3738 = vpop.f32.mrb[0].mxu0
    %v3739 = vadd.f32 0.0, %v3738
    %v3740 = vpop.f32.mrb[0].mxu0
    %3741 = vmatprep.mubr.bf16.mxu0 0
    %3742 = vmatmul.mubr.bf16.gmra.mrb[0].mxu0 %v3603
    %v3743 = vpop.f32.mrb[0].mxu0
    %v3744 = vadd.f32 0.0, %v3743
    %v3745 = vpop.f32.mrb[0].mxu0
    %v3746 = vpop.f32.mrb[0].mxu0
    %v3747 = vadd.f32 0.0, %v3746
    %v3748 = vpop.f32.mrb[0].mxu0
    %3749 = vmatprep.mubr.bf16.mxu0 0
    %3750 = vmatmul.mubr.bf16.gmra.mrb[0].mxu0 %v3604
    %v3751 = vpop.f32.mrb[0].mxu0
    %v3752 = vadd.f32 0.0, %v3751
    %v3753 = vpop.f32.mrb[0].mxu0
    %v3754 = vpop.f32.mrb[0].mxu0
    %v3755 = vadd.f32 0.0, %v3754
    %v3756 = vpop.f32.mrb[0].mxu0
    %3757 = vdwg.mxu0
    %v3758 = vadd.f32 %v3436, %v3696
    %v3759 = vadd.f32 %v3439, %v3699
    %v3760 = vadd.f32 %v3444, %v3704
    %v3761 = vadd.f32 %v3447, %v3707
    %v3762 = vadd.f32 %v3452, %v3712
    %v3763 = vadd.f32 %v3455, %v3715
    %v3764 = vadd.f32 %v3460, %v3720
    %v3765 = vadd.f32 %v3463, %v3723
    %v3766 = vadd.f32 %v3468, %v3728
    %v3767 = vadd.f32 %v3471, %v3731
    %v3768 = vadd.f32 %v3476, %v3736
    %v3769 = vadd.f32 %v3479, %v3739
    %v3770 = vadd.f32 %v3484, %v3744
    %v3771 = vadd.f32 %v3487, %v3747
    %v3772 = vadd.f32 %v3492, %v3752
    %v3773 = vadd.f32 %v3495, %v3755
    %s3774 = sadd.s32 %s2872, 1
    %s3775 = smul.u32 %s3774, 3
    %s3776 = sadd.s32 %s3775, 54
    %s3777 = smul.addr %s3776, 4
    %s3778 = scalar_lea.vmem %s0, %s3777
    %v3779 = vld [vmem:[%s3778] sm:$0xf]
    %v3780 = vld [vmem:[%s3778 + $0x4] sm:$0xf]
    %v3781 = vld [vmem:[%s3778 + $0x8] sm:$0x1]
    %v3782 = vld [vmem:[%s3778 + $0xc] sm:$0xf]
    %v3783 = vld [vmem:[%s3778 + $0x10] sm:$0xf]
    %v3784 = vld [vmem:[%s3778 + $0x14] sm:$0x1]
    %v3785 = vld [vmem:[%s3778 + $0x18] sm:$0xf]
    %v3786 = vld [vmem:[%s3778 + $0x1c] sm:$0xf]
    %v3787 = vld [vmem:[%s3778 + $0x20] sm:$0x1]
    %v3788 = vld [vmem:[%s3778 + $0x24] sm:$0xf]
    %v3789 = vld [vmem:[%s3778 + $0x28] sm:$0xf]
    %v3790 = vld [vmem:[%s3778 + $0x2c] sm:$0x1]
    %v3791 = vld [vmem:[%s3778 + $0x30] sm:$0xf]
    %v3792 = vld [vmem:[%s3778 + $0x34] sm:$0xf]
    %v3793 = vld [vmem:[%s3778 + $0x38] sm:$0x1]
    %v3794 = vld [vmem:[%s3778 + $0x3c] sm:$0xf]
    %v3795 = vld [vmem:[%s3778 + $0x40] sm:$0xf]
    %v3796 = vld [vmem:[%s3778 + $0x44] sm:$0x1]
    %v3797 = vld [vmem:[%s3778 + $0x48] sm:$0xf]
    %v3798 = vld [vmem:[%s3778 + $0x4c] sm:$0xf]
    %v3799 = vld [vmem:[%s3778 + $0x50] sm:$0x1]
    %v3800 = vld [vmem:[%s3778 + $0x54] sm:$0xf]
    %v3801 = vld [vmem:[%s3778 + $0x58] sm:$0xf]
    %v3802 = vld [vmem:[%s3778 + $0x5c] sm:$0x1]
    %v3803 = vld [vmem:[%s1 + $0xc0] sm:$0xf]
    %v3804 = vld [vmem:[%s1 + $0xc4] sm:$0xf]
    %v3805 = vld [vmem:[%s1 + $0xc8] sm:$0xf]
    %v3806 = vld [vmem:[%s1 + $0xcc] sm:$0xf]
    %v3807 = vld [vmem:[%s1 + $0xd0] sm:$0xf]
    %v3808 = vld [vmem:[%s1 + $0xd4] sm:$0xf]
    %v3809 = vld [vmem:[%s1 + $0xd8] sm:$0xf]
    %v3810 = vld [vmem:[%s1 + $0xdc] sm:$0xf]
    %v3811 = vld [vmem:[%s1 + $0xe0] sm:$0xf]
    %v3812 = vld [vmem:[%s1 + $0xe4] sm:$0xf]
    %v3813 = vld [vmem:[%s1 + $0xe8] sm:$0xf]
    %v3814 = vld [vmem:[%s1 + $0xec] sm:$0xf]
    %v3815 = vld [vmem:[%s1 + $0xf0] sm:$0xf]
    %v3816 = vld [vmem:[%s1 + $0xf4] sm:$0xf]
    %v3817 = vld [vmem:[%s1 + $0xf8] sm:$0xf]
    %v3818 = vld [vmem:[%s1 + $0xfc] sm:$0xf]
    %v3835 = vunpack.c.l.b16 %v3779
    %v3836 = vunpack.c.l.b16 %v3780
    %v3837 = vunpack.c.l.b16 %v3782
    %v3838 = vunpack.c.l.b16 %v3783
    %v3839 = vunpack.c.l.b16 %v3785
    %v3840 = vunpack.c.l.b16 %v3786
    %v3841 = vunpack.c.l.b16 %v3788
    %v3842 = vunpack.c.l.b16 %v3789
    %v3843 = vunpack.c.l.b16 %v3791
    %v3844 = vunpack.c.l.b16 %v3792
    %v3845 = vunpack.c.l.b16 %v3794
    %v3846 = vunpack.c.l.b16 %v3795
    %v3847 = vunpack.c.l.b16 %v3797
    %v3848 = vunpack.c.l.b16 %v3798
    %v3849 = vunpack.c.l.b16 %v3800
    %v3850 = vunpack.c.l.b16 %v3801
    %v3851 = vpack.c.b16 %v3836, %v3835
    %v3852 = vpack.c.b16 %v3838, %v3837
    %v3853 = vpack.c.b16 %v3840, %v3839
    %v3854 = vpack.c.b16 %v3842, %v3841
    %v3855 = vpack.c.b16 %v3844, %v3843
    %v3856 = vpack.c.b16 %v3846, %v3845
    %v3857 = vpack.c.b16 %v3848, %v3847
    %v3858 = vpack.c.b16 %v3850, %v3849
    %v3883 = vunpack.c.l.b16 %v3803
    %v3884 = vunpack.c.l.b16 %v3804
    %v3885 = vunpack.c.l.b16 %v3805
    %v3886 = vunpack.c.l.b16 %v3806
    %v3887 = vunpack.c.l.b16 %v3807
    %v3888 = vunpack.c.l.b16 %v3808
    %v3889 = vunpack.c.l.b16 %v3809
    %v3890 = vunpack.c.l.b16 %v3810
    %v3891 = vunpack.c.l.b16 %v3811
    %v3892 = vunpack.c.l.b16 %v3812
    %v3893 = vunpack.c.l.b16 %v3813
    %v3894 = vunpack.c.l.b16 %v3814
    %v3895 = vunpack.c.l.b16 %v3815
    %v3896 = vunpack.c.l.b16 %v3816
    %v3897 = vunpack.c.l.b16 %v3817
    %v3898 = vunpack.c.l.b16 %v3818
    %v3899 = vpack.c.b16 %v3884, %v3883
    %v3900 = vpack.c.b16 %v3886, %v3885
    %v3901 = vpack.c.b16 %v3888, %v3887
    %v3902 = vpack.c.b16 %v3890, %v3889
    %v3903 = vpack.c.b16 %v3892, %v3891
    %v3904 = vpack.c.b16 %v3894, %v3893
    %v3905 = vpack.c.b16 %v3896, %v3895
    %v3906 = vpack.c.b16 %v3898, %v3897
    %3915 = vmatprep.subr.bf16.mxu0 0
    %3916 = vmatpush1.bf16.msra.mxu0 %v3899
    %3917 = vmatprep.subr.bf16.mxu0 0
    %3918 = vmatpush1.bf16.msra.mxu0 %v3900
    %3919 = vmatprep.subr.bf16.mxu0 0
    %3920 = vmatpush1.bf16.msra.mxu0 %v3901
    %3921 = vmatprep.subr.bf16.mxu0 0
    %3922 = vmatpush1.bf16.msra.mxu0 %v3902
    %3923 = vmatprep.subr.bf16.mxu0 0
    %3924 = vmatpush1.bf16.msra.mxu0 %v3903
    %3925 = vmatprep.subr.bf16.mxu0 0
    %3926 = vmatpush1.bf16.msra.mxu0 %v3904
    %3927 = vmatprep.subr.bf16.mxu0 0
    %3928 = vmatpush1.bf16.msra.mxu0 %v3905
    %3929 = vmatprep.subr.bf16.mxu0 0
    %3930 = vmatpush1.bf16.msra.mxu0 %v3906
    %3931 = vmatprep.subr.bf16.mxu0 0
    %3932 = vmatpush1.bf16.msra.mxu0 0
    %3933 = vmatprep.subr.bf16.mxu0 0
    %3934 = vmatpush1.bf16.msra.mxu0 0
    %3935 = vmatprep.subr.bf16.mxu0 0
    %3936 = vmatpush1.bf16.msra.mxu0 0
    %3937 = vmatprep.subr.bf16.mxu0 0
    %3938 = vmatpush1.bf16.msra.mxu0 0
    %3939 = vmatprep.subr.bf16.mxu0 0
    %3940 = vmatpush1.bf16.msra.mxu0 0
    %3941 = vmatprep.subr.bf16.mxu0 0
    %3942 = vmatpush1.bf16.msra.mxu0 0
    %3943 = vmatprep.subr.bf16.mxu0 0
    %3944 = vmatpush1.bf16.msra.mxu0 0
    %3945 = vmatprep.subr.bf16.mxu0 0
    %3946 = vmatpush1.bf16.msra.mxu0 0
    %3947 = vmatprep.mubr.bf16.mxu0 0
    %3948 = vmatmul.mubr.bf16.gmra.mrb[0].mxu0 %v3851
    %v3949 = vpop.f32.mrb[0].mxu0
    %v3950 = vadd.f32 0.0, %v3949
    %v3951 = vpop.f32.mrb[0].mxu0
    %v3952 = vpop.f32.mrb[0].mxu0
    %v3953 = vadd.f32 0.0, %v3952
    %v3954 = vpop.f32.mrb[0].mxu0
    %3955 = vmatprep.mubr.bf16.mxu0 0
    %3956 = vmatmul.mubr.bf16.gmra.mrb[0].mxu0 %v3852
    %v3957 = vpop.f32.mrb[0].mxu0
    %v3958 = vadd.f32 0.0, %v3957
    %v3959 = vpop.f32.mrb[0].mxu0
    %v3960 = vpop.f32.mrb[0].mxu0
    %v3961 = vadd.f32 0.0, %v3960
    %v3962 = vpop.f32.mrb[0].mxu0
    %3963 = vmatprep.mubr.bf16.mxu0 0
    %3964 = vmatmul.mubr.bf16.gmra.mrb[0].mxu0 %v3853
    %v3965 = vpop.f32.mrb[0].mxu0
    %v3966 = vadd.f32 0.0, %v3965
    %v3967 = vpop.f32.mrb[0].mxu0
    %v3968 = vpop.f32.mrb[0].mxu0
    %v3969 = vadd.f32 0.0, %v3968
    %v3970 = vpop.f32.mrb[0].mxu0
    %3971 = vmatprep.mubr.bf16.mxu0 0
    %3972 = vmatmul.mubr.bf16.gmra.mrb[0].mxu0 %v3854
    %v3973 = vpop.f32.mrb[0].mxu0
    %v3974 = vadd.f32 0.0, %v3973
    %v3975 = vpop.f32.mrb[0].mxu0
    %v3976 = vpop.f32.mrb[0].mxu0
    %v3977 = vadd.f32 0.0, %v3976
    %v3978 = vpop.f32.mrb[0].mxu0
    %3979 = vmatprep.mubr.bf16.mxu0 0
    %3980 = vmatmul.mubr.bf16.gmra.mrb[0].mxu0 %v3855
    %v3981 = vpop.f32.mrb[0].mxu0
    %v3982 = vadd.f32 0.0, %v3981
    %v3983 = vpop.f32.mrb[0].mxu0
    %v3984 = vpop.f32.mrb[0].mxu0
    %v3985 = vadd.f32 0.0, %v3984
    %v3986 = vpop.f32.mrb[0].mxu0
    %3987 = vmatprep.mubr.bf16.mxu0 0
    %3988 = vmatmul.mubr.bf16.gmra.mrb[0].mxu0 %v3856
    %v3989 = vpop.f32.mrb[0].mxu0
    %v3990 = vadd.f32 0.0, %v3989
    %v3991 = vpop.f32.mrb[0].mxu0
    %v3992 = vpop.f32.mrb[0].mxu0
    %v3993 = vadd.f32 0.0, %v3992
    %v3994 = vpop.f32.mrb[0].mxu0
    %3995 = vmatprep.mubr.bf16.mxu0 0
    %3996 = vmatmul.mubr.bf16.gmra.mrb[0].mxu0 %v3857
    %v3997 = vpop.f32.mrb[0].mxu0
    %v3998 = vadd.f32 0.0, %v3997
    %v3999 = vpop.f32.mrb[0].mxu0
    %v4000 = vpop.f32.mrb[0].mxu0
    %v4001 = vadd.f32 0.0, %v4000
    %v4002 = vpop.f32.mrb[0].mxu0
    %4003 = vmatprep.mubr.bf16.mxu0 0
    %4004 = vmatmul.mubr.bf16.gmra.mrb[0].mxu0 %v3858
    %v4005 = vpop.f32.mrb[0].mxu0
    %v4006 = vadd.f32 0.0, %v4005
    %v4007 = vpop.f32.mrb[0].mxu0
    %v4008 = vpop.f32.mrb[0].mxu0
    %v4009 = vadd.f32 0.0, %v4008
    %v4010 = vpop.f32.mrb[0].mxu0
    %4011 = vdwg.mxu0
    %v4012 = vadd.f32 %v3758, %v3950
    %v4013 = vadd.f32 %v3759, %v3953
    %v4014 = vadd.f32 %v3760, %v3958
    %v4015 = vadd.f32 %v3761, %v3961
    %v4016 = vadd.f32 %v3762, %v3966
    %v4017 = vadd.f32 %v3763, %v3969
    %v4018 = vadd.f32 %v3764, %v3974
    %v4019 = vadd.f32 %v3765, %v3977
    %v4020 = vadd.f32 %v3766, %v3982
    %v4021 = vadd.f32 %v3767, %v3985
    %v4022 = vadd.f32 %v3768, %v3990
    %v4023 = vadd.f32 %v3769, %v3993
    %v4024 = vadd.f32 %v3770, %v3998
    %v4025 = vadd.f32 %v3771, %v4001
    %v4026 = vadd.f32 %v3772, %v4006
    %v4027 = vadd.f32 %v3773, %v4009
    %v4029 = vshrl.u32 %v3779, 16
    %v4031 = vrot.slane %v4029, 4
    %v4032 = vshll.u32 %v3779, 16
    %v4034 = vrot.slane %v4032, 5
    %v4035 = vor.u32 %v4031, %v4034
    %v4036 = vrot.slane %v4035, 4
    %v4038 = vshll.u32 %v3780, 16
    %v4040 = vrot.slane %v4038, 5
    %v4041 = vsel %vm2919, %v4036, %v4040
    %v4042 = vshrl.u32 %v3780, 16
    %v4044 = vrot.slane %v4042, 4
    %v4045 = vor.u32 %v4044, %v4040
    %v4046 = vrot.slane %v4045, 4
    %v4048 = vshll.u32 %v3781, 16
    %v4050 = vrot.slane %v4048, 5
    %v4051 = vsel %vm2919, %v4046, %v4050
    %v4053 = vshrl.u32 %v3782, 16
    %v4055 = vrot.slane %v4053, 4
    %v4056 = vshll.u32 %v3782, 16
    %v4058 = vrot.slane %v4056, 5
    %v4059 = vor.u32 %v4055, %v4058
    %v4060 = vrot.slane %v4059, 4
    %v4062 = vshll.u32 %v3783, 16
    %v4064 = vrot.slane %v4062, 5
    %v4065 = vsel %vm2919, %v4060, %v4064
    %v4066 = vshrl.u32 %v3783, 16
    %v4068 = vrot.slane %v4066, 4
    %v4069 = vor.u32 %v4068, %v4064
    %v4070 = vrot.slane %v4069, 4
    %v4072 = vshll.u32 %v3784, 16
    %v4074 = vrot.slane %v4072, 5
    %v4075 = vsel %vm2919, %v4070, %v4074
    %v4077 = vshrl.u32 %v3785, 16
    %v4079 = vrot.slane %v4077, 4
    %v4080 = vshll.u32 %v3785, 16
    %v4082 = vrot.slane %v4080, 5
    %v4083 = vor.u32 %v4079, %v4082
    %v4084 = vrot.slane %v4083, 4
    %v4086 = vshll.u32 %v3786, 16
    %v4088 = vrot.slane %v4086, 5
    %v4089 = vsel %vm2919, %v4084, %v4088
    %v4090 = vshrl.u32 %v3786, 16
    %v4092 = vrot.slane %v4090, 4
    %v4093 = vor.u32 %v4092, %v4088
    %v4094 = vrot.slane %v4093, 4
    %v4096 = vshll.u32 %v3787, 16
    %v4098 = vrot.slane %v4096, 5
    %v4099 = vsel %vm2919, %v4094, %v4098
    %v4101 = vshrl.u32 %v3788, 16
    %v4103 = vrot.slane %v4101, 4
    %v4104 = vshll.u32 %v3788, 16
    %v4106 = vrot.slane %v4104, 5
    %v4107 = vor.u32 %v4103, %v4106
    %v4108 = vrot.slane %v4107, 4
    %v4110 = vshll.u32 %v3789, 16
    %v4112 = vrot.slane %v4110, 5
    %v4113 = vsel %vm2919, %v4108, %v4112
    %v4114 = vshrl.u32 %v3789, 16
    %v4116 = vrot.slane %v4114, 4
    %v4117 = vor.u32 %v4116, %v4112
    %v4118 = vrot.slane %v4117, 4
    %v4120 = vshll.u32 %v3790, 16
    %v4122 = vrot.slane %v4120, 5
    %v4123 = vsel %vm2919, %v4118, %v4122
    %v4125 = vshrl.u32 %v3791, 16
    %v4127 = vrot.slane %v4125, 4
    %v4128 = vshll.u32 %v3791, 16
    %v4130 = vrot.slane %v4128, 5
    %v4131 = vor.u32 %v4127, %v4130
    %v4132 = vrot.slane %v4131, 4
    %v4134 = vshll.u32 %v3792, 16
    %v4136 = vrot.slane %v4134, 5
    %v4137 = vsel %vm2919, %v4132, %v4136
    %v4138 = vshrl.u32 %v3792, 16
    %v4140 = vrot.slane %v4138, 4
    %v4141 = vor.u32 %v4140, %v4136
    %v4142 = vrot.slane %v4141, 4
    %v4144 = vshll.u32 %v3793, 16
    %v4146 = vrot.slane %v4144, 5
    %v4147 = vsel %vm2919, %v4142, %v4146
    %v4149 = vshrl.u32 %v3794, 16
    %v4151 = vrot.slane %v4149, 4
    %v4152 = vshll.u32 %v3794, 16
    %v4154 = vrot.slane %v4152, 5
    %v4155 = vor.u32 %v4151, %v4154
    %v4156 = vrot.slane %v4155, 4
    %v4158 = vshll.u32 %v3795, 16
    %v4160 = vrot.slane %v4158, 5
    %v4161 = vsel %vm2919, %v4156, %v4160
    %v4162 = vshrl.u32 %v3795, 16
    %v4164 = vrot.slane %v4162, 4
    %v4165 = vor.u32 %v4164, %v4160
    %v4166 = vrot.slane %v4165, 4
    %v4168 = vshll.u32 %v3796, 16
    %v4170 = vrot.slane %v4168, 5
    %v4171 = vsel %vm2919, %v4166, %v4170
    %v4173 = vshrl.u32 %v3797, 16
    %v4175 = vrot.slane %v4173, 4
    %v4176 = vshll.u32 %v3797, 16
    %v4178 = vrot.slane %v4176, 5
    %v4179 = vor.u32 %v4175, %v4178
    %v4180 = vrot.slane %v4179, 4
    %v4182 = vshll.u32 %v3798, 16
    %v4184 = vrot.slane %v4182, 5
    %v4185 = vsel %vm2919, %v4180, %v4184
    %v4186 = vshrl.u32 %v3798, 16
    %v4188 = vrot.slane %v4186, 4
    %v4189 = vor.u32 %v4188, %v4184
    %v4190 = vrot.slane %v4189, 4
    %v4192 = vshll.u32 %v3799, 16
    %v4194 = vrot.slane %v4192, 5
    %v4195 = vsel %vm2919, %v4190, %v4194
    %v4197 = vshrl.u32 %v3800, 16
    %v4199 = vrot.slane %v4197, 4
    %v4200 = vshll.u32 %v3800, 16
    %v4202 = vrot.slane %v4200, 5
    %v4203 = vor.u32 %v4199, %v4202
    %v4204 = vrot.slane %v4203, 4
    %v4206 = vshll.u32 %v3801, 16
    %v4208 = vrot.slane %v4206, 5
    %v4209 = vsel %vm2919, %v4204, %v4208
    %v4210 = vshrl.u32 %v3801, 16
    %v4212 = vrot.slane %v4210, 4
    %v4213 = vor.u32 %v4212, %v4208
    %v4214 = vrot.slane %v4213, 4
    %v4216 = vshll.u32 %v3802, 16
    %v4218 = vrot.slane %v4216, 5
    %v4219 = vsel %vm2919, %v4214, %v4218
    %v4220 = vld [vmem:[%s1 + $0x100] sm:$0xf]
    %v4221 = vld [vmem:[%s1 + $0x104] sm:$0xf]
    %v4222 = vld [vmem:[%s1 + $0x108] sm:$0xf]
    %v4223 = vld [vmem:[%s1 + $0x10c] sm:$0xf]
    %v4224 = vld [vmem:[%s1 + $0x110] sm:$0xf]
    %v4225 = vld [vmem:[%s1 + $0x114] sm:$0xf]
    %v4226 = vld [vmem:[%s1 + $0x118] sm:$0xf]
    %v4227 = vld [vmem:[%s1 + $0x11c] sm:$0xf]
    %v4228 = vld [vmem:[%s1 + $0x120] sm:$0xf]
    %v4229 = vld [vmem:[%s1 + $0x124] sm:$0xf]
    %v4230 = vld [vmem:[%s1 + $0x128] sm:$0xf]
    %v4231 = vld [vmem:[%s1 + $0x12c] sm:$0xf]
    %v4232 = vld [vmem:[%s1 + $0x130] sm:$0xf]
    %v4233 = vld [vmem:[%s1 + $0x134] sm:$0xf]
    %v4234 = vld [vmem:[%s1 + $0x138] sm:$0xf]
    %v4235 = vld [vmem:[%s1 + $0x13c] sm:$0xf]
    %v4236 = vunpack.c.l.b16 %v4041
    %v4237 = vunpack.c.l.b16 %v4051
    %v4238 = vunpack.c.l.b16 %v4065
    %v4239 = vunpack.c.l.b16 %v4075
    %v4240 = vunpack.c.l.b16 %v4089
    %v4241 = vunpack.c.l.b16 %v4099
    %v4242 = vunpack.c.l.b16 %v4113
    %v4243 = vunpack.c.l.b16 %v4123
    %v4244 = vunpack.c.l.b16 %v4137
    %v4245 = vunpack.c.l.b16 %v4147
    %v4246 = vunpack.c.l.b16 %v4161
    %v4247 = vunpack.c.l.b16 %v4171
    %v4248 = vunpack.c.l.b16 %v4185
    %v4249 = vunpack.c.l.b16 %v4195
    %v4250 = vunpack.c.l.b16 %v4209
    %v4251 = vunpack.c.l.b16 %v4219
    %v4252 = vpack.c.b16 %v4237, %v4236
    %v4253 = vpack.c.b16 %v4239, %v4238
    %v4254 = vpack.c.b16 %v4241, %v4240
    %v4255 = vpack.c.b16 %v4243, %v4242
    %v4256 = vpack.c.b16 %v4245, %v4244
    %v4257 = vpack.c.b16 %v4247, %v4246
    %v4258 = vpack.c.b16 %v4249, %v4248
    %v4259 = vpack.c.b16 %v4251, %v4250
    %v4284 = vunpack.c.l.b16 %v4220
    %v4285 = vunpack.c.l.b16 %v4221
    %v4286 = vunpack.c.l.b16 %v4222
    %v4287 = vunpack.c.l.b16 %v4223
    %v4288 = vunpack.c.l.b16 %v4224
    %v4289 = vunpack.c.l.b16 %v4225
    %v4290 = vunpack.c.l.b16 %v4226
    %v4291 = vunpack.c.l.b16 %v4227
    %v4292 = vunpack.c.l.b16 %v4228
    %v4293 = vunpack.c.l.b16 %v4229
    %v4294 = vunpack.c.l.b16 %v4230
    %v4295 = vunpack.c.l.b16 %v4231
    %v4296 = vunpack.c.l.b16 %v4232
    %v4297 = vunpack.c.l.b16 %v4233
    %v4298 = vunpack.c.l.b16 %v4234
    %v4299 = vunpack.c.l.b16 %v4235
    %v4300 = vpack.c.b16 %v4285, %v4284
    %v4301 = vpack.c.b16 %v4287, %v4286
    %v4302 = vpack.c.b16 %v4289, %v4288
    %v4303 = vpack.c.b16 %v4291, %v4290
    %v4304 = vpack.c.b16 %v4293, %v4292
    %v4305 = vpack.c.b16 %v4295, %v4294
    %v4306 = vpack.c.b16 %v4297, %v4296
    %v4307 = vpack.c.b16 %v4299, %v4298
    %4316 = vmatprep.subr.bf16.mxu0 0
    %4317 = vmatpush1.bf16.msra.mxu0 %v4300
    %4318 = vmatprep.subr.bf16.mxu0 0
    %4319 = vmatpush1.bf16.msra.mxu0 %v4301
    %4320 = vmatprep.subr.bf16.mxu0 0
    %4321 = vmatpush1.bf16.msra.mxu0 %v4302
    %4322 = vmatprep.subr.bf16.mxu0 0
    %4323 = vmatpush1.bf16.msra.mxu0 %v4303
    %4324 = vmatprep.subr.bf16.mxu0 0
    %4325 = vmatpush1.bf16.msra.mxu0 %v4304
    %4326 = vmatprep.subr.bf16.mxu0 0
    %4327 = vmatpush1.bf16.msra.mxu0 %v4305
    %4328 = vmatprep.subr.bf16.mxu0 0
    %4329 = vmatpush1.bf16.msra.mxu0 %v4306
    %4330 = vmatprep.subr.bf16.mxu0 0
    %4331 = vmatpush1.bf16.msra.mxu0 %v4307
    %4332 = vmatprep.subr.bf16.mxu0 0
    %4333 = vmatpush1.bf16.msra.mxu0 0
    %4334 = vmatprep.subr.bf16.mxu0 0
    %4335 = vmatpush1.bf16.msra.mxu0 0
    %4336 = vmatprep.subr.bf16.mxu0 0
    %4337 = vmatpush1.bf16.msra.mxu0 0
    %4338 = vmatprep.subr.bf16.mxu0 0
    %4339 = vmatpush1.bf16.msra.mxu0 0
    %4340 = vmatprep.subr.bf16.mxu0 0
    %4341 = vmatpush1.bf16.msra.mxu0 0
    %4342 = vmatprep.subr.bf16.mxu0 0
    %4343 = vmatpush1.bf16.msra.mxu0 0
    %4344 = vmatprep.subr.bf16.mxu0 0
    %4345 = vmatpush1.bf16.msra.mxu0 0
    %4346 = vmatprep.subr.bf16.mxu0 0
    %4347 = vmatpush1.bf16.msra.mxu0 0
    %4348 = vmatprep.mubr.bf16.mxu0 0
    %4349 = vmatmul.mubr.bf16.gmra.mrb[0].mxu0 %v4252
    %v4350 = vpop.f32.mrb[0].mxu0
    %v4351 = vadd.f32 0.0, %v4350
    %v4352 = vpop.f32.mrb[0].mxu0
    %v4353 = vpop.f32.mrb[0].mxu0
    %v4354 = vadd.f32 0.0, %v4353
    %v4355 = vpop.f32.mrb[0].mxu0
    %4356 = vmatprep.mubr.bf16.mxu0 0
    %4357 = vmatmul.mubr.bf16.gmra.mrb[0].mxu0 %v4253
    %v4358 = vpop.f32.mrb[0].mxu0
    %v4359 = vadd.f32 0.0, %v4358
    %v4360 = vpop.f32.mrb[0].mxu0
    %v4361 = vpop.f32.mrb[0].mxu0
    %v4362 = vadd.f32 0.0, %v4361
    %v4363 = vpop.f32.mrb[0].mxu0
    %4364 = vmatprep.mubr.bf16.mxu0 0
    %4365 = vmatmul.mubr.bf16.gmra.mrb[0].mxu0 %v4254
    %v4366 = vpop.f32.mrb[0].mxu0
    %v4367 = vadd.f32 0.0, %v4366
    %v4368 = vpop.f32.mrb[0].mxu0
    %v4369 = vpop.f32.mrb[0].mxu0
    %v4370 = vadd.f32 0.0, %v4369
    %v4371 = vpop.f32.mrb[0].mxu0
    %4372 = vmatprep.mubr.bf16.mxu0 0
    %4373 = vmatmul.mubr.bf16.gmra.mrb[0].mxu0 %v4255
    %v4374 = vpop.f32.mrb[0].mxu0
    %v4375 = vadd.f32 0.0, %v4374
    %v4376 = vpop.f32.mrb[0].mxu0
    %v4377 = vpop.f32.mrb[0].mxu0
    %v4378 = vadd.f32 0.0, %v4377
    %v4379 = vpop.f32.mrb[0].mxu0
    %4380 = vmatprep.mubr.bf16.mxu0 0
    %4381 = vmatmul.mubr.bf16.gmra.mrb[0].mxu0 %v4256
    %v4382 = vpop.f32.mrb[0].mxu0
    %v4383 = vadd.f32 0.0, %v4382
    %v4384 = vpop.f32.mrb[0].mxu0
    %v4385 = vpop.f32.mrb[0].mxu0
    %v4386 = vadd.f32 0.0, %v4385
    %v4387 = vpop.f32.mrb[0].mxu0
    %4388 = vmatprep.mubr.bf16.mxu0 0
    %4389 = vmatmul.mubr.bf16.gmra.mrb[0].mxu0 %v4257
    %v4390 = vpop.f32.mrb[0].mxu0
    %v4391 = vadd.f32 0.0, %v4390
    %v4392 = vpop.f32.mrb[0].mxu0
    %v4393 = vpop.f32.mrb[0].mxu0
    %v4394 = vadd.f32 0.0, %v4393
    %v4395 = vpop.f32.mrb[0].mxu0
    %4396 = vmatprep.mubr.bf16.mxu0 0
    %4397 = vmatmul.mubr.bf16.gmra.mrb[0].mxu0 %v4258
    %v4398 = vpop.f32.mrb[0].mxu0
    %v4399 = vadd.f32 0.0, %v4398
    %v4400 = vpop.f32.mrb[0].mxu0
    %v4401 = vpop.f32.mrb[0].mxu0
    %v4402 = vadd.f32 0.0, %v4401
    %v4403 = vpop.f32.mrb[0].mxu0
    %4404 = vmatprep.mubr.bf16.mxu0 0
    %4405 = vmatmul.mubr.bf16.gmra.mrb[0].mxu0 %v4259
    %v4406 = vpop.f32.mrb[0].mxu0
    %v4407 = vadd.f32 0.0, %v4406
    %v4408 = vpop.f32.mrb[0].mxu0
    %v4409 = vpop.f32.mrb[0].mxu0
    %v4410 = vadd.f32 0.0, %v4409
    %v4411 = vpop.f32.mrb[0].mxu0
    %4412 = vdwg.mxu0
    %v4413 = vadd.f32 %v4012, %v4351
    %v4414 = vadd.f32 %v4013, %v4354
    %v4415 = vadd.f32 %v4014, %v4359
    %v4416 = vadd.f32 %v4015, %v4362
    %v4417 = vadd.f32 %v4016, %v4367
    %v4418 = vadd.f32 %v4017, %v4370
    %v4419 = vadd.f32 %v4018, %v4375
    %v4420 = vadd.f32 %v4019, %v4378
    %v4421 = vadd.f32 %v4020, %v4383
    %v4422 = vadd.f32 %v4021, %v4386
    %v4423 = vadd.f32 %v4022, %v4391
    %v4424 = vadd.f32 %v4023, %v4394
    %v4425 = vadd.f32 %v4024, %v4399
    %v4426 = vadd.f32 %v4025, %v4402
    %v4427 = vadd.f32 %v4026, %v4407
    %v4428 = vadd.f32 %v4027, %v4410
    %v4437 = vrot.slane %v3779, 5
    %v4438 = vrot.slane %v4437, 4
    %v4439 = vrot.slane %v3780, 5
    %v4440 = vsel %vm3508, %v4438, %v4439
    %v4441 = vrot.slane %v4439, 4
    %v4442 = vrot.slane %v3781, 5
    %v4443 = vsel %vm3508, %v4441, %v4442
    %v4444 = vrot.slane %v3782, 5
    %v4445 = vrot.slane %v4444, 4
    %v4446 = vrot.slane %v3783, 5
    %v4447 = vsel %vm3508, %v4445, %v4446
    %v4448 = vrot.slane %v4446, 4
    %v4449 = vrot.slane %v3784, 5
    %v4450 = vsel %vm3508, %v4448, %v4449
    %v4451 = vrot.slane %v3785, 5
    %v4452 = vrot.slane %v4451, 4
    %v4453 = vrot.slane %v3786, 5
    %v4454 = vsel %vm3508, %v4452, %v4453
    %v4455 = vrot.slane %v4453, 4
    %v4456 = vrot.slane %v3787, 5
    %v4457 = vsel %vm3508, %v4455, %v4456
    %v4458 = vrot.slane %v3788, 5
    %v4459 = vrot.slane %v4458, 4
    %v4460 = vrot.slane %v3789, 5
    %v4461 = vsel %vm3508, %v4459, %v4460
    %v4462 = vrot.slane %v4460, 4
    %v4463 = vrot.slane %v3790, 5
    %v4464 = vsel %vm3508, %v4462, %v4463
    %v4465 = vrot.slane %v3791, 5
    %v4466 = vrot.slane %v4465, 4
    %v4467 = vrot.slane %v3792, 5
    %v4468 = vsel %vm3508, %v4466, %v4467
    %v4469 = vrot.slane %v4467, 4
    %v4470 = vrot.slane %v3793, 5
    %v4471 = vsel %vm3508, %v4469, %v4470
    %v4472 = vrot.slane %v3794, 5
    %v4473 = vrot.slane %v4472, 4
    %v4474 = vrot.slane %v3795, 5
    %v4475 = vsel %vm3508, %v4473, %v4474
    %v4476 = vrot.slane %v4474, 4
    %v4477 = vrot.slane %v3796, 5
    %v4478 = vsel %vm3508, %v4476, %v4477
    %v4479 = vrot.slane %v3797, 5
    %v4480 = vrot.slane %v4479, 4
    %v4481 = vrot.slane %v3798, 5
    %v4482 = vsel %vm3508, %v4480, %v4481
    %v4483 = vrot.slane %v4481, 4
    %v4484 = vrot.slane %v3799, 5
    %v4485 = vsel %vm3508, %v4483, %v4484
    %v4486 = vrot.slane %v3800, 5
    %v4487 = vrot.slane %v4486, 4
    %v4488 = vrot.slane %v3801, 5
    %v4489 = vsel %vm3508, %v4487, %v4488
    %v4490 = vrot.slane %v4488, 4
    %v4491 = vrot.slane %v3802, 5
    %v4492 = vsel %vm3508, %v4490, %v4491
    %v4493 = vld [vmem:[%s1 + $0x140] sm:$0xf]
    %v4494 = vld [vmem:[%s1 + $0x144] sm:$0xf]
    %v4495 = vld [vmem:[%s1 + $0x148] sm:$0xf]
    %v4496 = vld [vmem:[%s1 + $0x14c] sm:$0xf]
    %v4497 = vld [vmem:[%s1 + $0x150] sm:$0xf]
    %v4498 = vld [vmem:[%s1 + $0x154] sm:$0xf]
    %v4499 = vld [vmem:[%s1 + $0x158] sm:$0xf]
    %v4500 = vld [vmem:[%s1 + $0x15c] sm:$0xf]
    %v4501 = vld [vmem:[%s1 + $0x160] sm:$0xf]
    %v4502 = vld [vmem:[%s1 + $0x164] sm:$0xf]
    %v4503 = vld [vmem:[%s1 + $0x168] sm:$0xf]
    %v4504 = vld [vmem:[%s1 + $0x16c] sm:$0xf]
    %v4505 = vld [vmem:[%s1 + $0x170] sm:$0xf]
    %v4506 = vld [vmem:[%s1 + $0x174] sm:$0xf]
    %v4507 = vld [vmem:[%s1 + $0x178] sm:$0xf]
    %v4508 = vld [vmem:[%s1 + $0x17c] sm:$0xf]
    %v4509 = vunpack.c.l.b16 %v4440
    %v4510 = vunpack.c.l.b16 %v4443
    %v4511 = vunpack.c.l.b16 %v4447
    %v4512 = vunpack.c.l.b16 %v4450
    %v4513 = vunpack.c.l.b16 %v4454
    %v4514 = vunpack.c.l.b16 %v4457
    %v4515 = vunpack.c.l.b16 %v4461
    %v4516 = vunpack.c.l.b16 %v4464
    %v4517 = vunpack.c.l.b16 %v4468
    %v4518 = vunpack.c.l.b16 %v4471
    %v4519 = vunpack.c.l.b16 %v4475
    %v4520 = vunpack.c.l.b16 %v4478
    %v4521 = vunpack.c.l.b16 %v4482
    %v4522 = vunpack.c.l.b16 %v4485
    %v4523 = vunpack.c.l.b16 %v4489
    %v4524 = vunpack.c.l.b16 %v4492
    %v4525 = vpack.c.b16 %v4510, %v4509
    %v4526 = vpack.c.b16 %v4512, %v4511
    %v4527 = vpack.c.b16 %v4514, %v4513
    %v4528 = vpack.c.b16 %v4516, %v4515
    %v4529 = vpack.c.b16 %v4518, %v4517
    %v4530 = vpack.c.b16 %v4520, %v4519
    %v4531 = vpack.c.b16 %v4522, %v4521
    %v4532 = vpack.c.b16 %v4524, %v4523
    %v4557 = vunpack.c.l.b16 %v4493
    %v4558 = vunpack.c.l.b16 %v4494
    %v4559 = vunpack.c.l.b16 %v4495
    %v4560 = vunpack.c.l.b16 %v4496
    %v4561 = vunpack.c.l.b16 %v4497
    %v4562 = vunpack.c.l.b16 %v4498
    %v4563 = vunpack.c.l.b16 %v4499
    %v4564 = vunpack.c.l.b16 %v4500
    %v4565 = vunpack.c.l.b16 %v4501
    %v4566 = vunpack.c.l.b16 %v4502
    %v4567 = vunpack.c.l.b16 %v4503
    %v4568 = vunpack.c.l.b16 %v4504
    %v4569 = vunpack.c.l.b16 %v4505
    %v4570 = vunpack.c.l.b16 %v4506
    %v4571 = vunpack.c.l.b16 %v4507
    %v4572 = vunpack.c.l.b16 %v4508
    %v4573 = vpack.c.b16 %v4558, %v4557
    %v4574 = vpack.c.b16 %v4560, %v4559
    %v4575 = vpack.c.b16 %v4562, %v4561
    %v4576 = vpack.c.b16 %v4564, %v4563
    %v4577 = vpack.c.b16 %v4566, %v4565
    %v4578 = vpack.c.b16 %v4568, %v4567
    %v4579 = vpack.c.b16 %v4570, %v4569
    %v4580 = vpack.c.b16 %v4572, %v4571
    %4589 = vmatprep.subr.bf16.mxu0 0
    %4590 = vmatpush1.bf16.msra.mxu0 %v4573
    %4591 = vmatprep.subr.bf16.mxu0 0
    %4592 = vmatpush1.bf16.msra.mxu0 %v4574
    %4593 = vmatprep.subr.bf16.mxu0 0
    %4594 = vmatpush1.bf16.msra.mxu0 %v4575
    %4595 = vmatprep.subr.bf16.mxu0 0
    %4596 = vmatpush1.bf16.msra.mxu0 %v4576
    %4597 = vmatprep.subr.bf16.mxu0 0
    %4598 = vmatpush1.bf16.msra.mxu0 %v4577
    %4599 = vmatprep.subr.bf16.mxu0 0
    %4600 = vmatpush1.bf16.msra.mxu0 %v4578
    %4601 = vmatprep.subr.bf16.mxu0 0
    %4602 = vmatpush1.bf16.msra.mxu0 %v4579
    %4603 = vmatprep.subr.bf16.mxu0 0
    %4604 = vmatpush1.bf16.msra.mxu0 %v4580
    %4605 = vmatprep.subr.bf16.mxu0 0
    %4606 = vmatpush1.bf16.msra.mxu0 0
    %4607 = vmatprep.subr.bf16.mxu0 0
    %4608 = vmatpush1.bf16.msra.mxu0 0
    %4609 = vmatprep.subr.bf16.mxu0 0
    %4610 = vmatpush1.bf16.msra.mxu0 0
    %4611 = vmatprep.subr.bf16.mxu0 0
    %4612 = vmatpush1.bf16.msra.mxu0 0
    %4613 = vmatprep.subr.bf16.mxu0 0
    %4614 = vmatpush1.bf16.msra.mxu0 0
    %4615 = vmatprep.subr.bf16.mxu0 0
    %4616 = vmatpush1.bf16.msra.mxu0 0
    %4617 = vmatprep.subr.bf16.mxu0 0
    %4618 = vmatpush1.bf16.msra.mxu0 0
    %4619 = vmatprep.subr.bf16.mxu0 0
    %4620 = vmatpush1.bf16.msra.mxu0 0
    %4621 = vmatprep.mubr.bf16.mxu0 0
    %4622 = vmatmul.mubr.bf16.gmra.mrb[0].mxu0 %v4525
    %v4623 = vpop.f32.mrb[0].mxu0
    %v4624 = vadd.f32 0.0, %v4623
    %v4625 = vpop.f32.mrb[0].mxu0
    %v4626 = vpop.f32.mrb[0].mxu0
    %v4627 = vadd.f32 0.0, %v4626
    %v4628 = vpop.f32.mrb[0].mxu0
    %4629 = vmatprep.mubr.bf16.mxu0 0
    %4630 = vmatmul.mubr.bf16.gmra.mrb[0].mxu0 %v4526
    %v4631 = vpop.f32.mrb[0].mxu0
    %v4632 = vadd.f32 0.0, %v4631
    %v4633 = vpop.f32.mrb[0].mxu0
    %v4634 = vpop.f32.mrb[0].mxu0
    %v4635 = vadd.f32 0.0, %v4634
    %v4636 = vpop.f32.mrb[0].mxu0
    %4637 = vmatprep.mubr.bf16.mxu0 0
    %4638 = vmatmul.mubr.bf16.gmra.mrb[0].mxu0 %v4527
    %v4639 = vpop.f32.mrb[0].mxu0
    %v4640 = vadd.f32 0.0, %v4639
    %v4641 = vpop.f32.mrb[0].mxu0
    %v4642 = vpop.f32.mrb[0].mxu0
    %v4643 = vadd.f32 0.0, %v4642
    %v4644 = vpop.f32.mrb[0].mxu0
    %4645 = vmatprep.mubr.bf16.mxu0 0
    %4646 = vmatmul.mubr.bf16.gmra.mrb[0].mxu0 %v4528
    %v4647 = vpop.f32.mrb[0].mxu0
    %v4648 = vadd.f32 0.0, %v4647
    %v4649 = vpop.f32.mrb[0].mxu0
    %v4650 = vpop.f32.mrb[0].mxu0
    %v4651 = vadd.f32 0.0, %v4650
    %v4652 = vpop.f32.mrb[0].mxu0
    %4653 = vmatprep.mubr.bf16.mxu0 0
    %4654 = vmatmul.mubr.bf16.gmra.mrb[0].mxu0 %v4529
    %v4655 = vpop.f32.mrb[0].mxu0
    %v4656 = vadd.f32 0.0, %v4655
    %v4657 = vpop.f32.mrb[0].mxu0
    %v4658 = vpop.f32.mrb[0].mxu0
    %v4659 = vadd.f32 0.0, %v4658
    %v4660 = vpop.f32.mrb[0].mxu0
    %4661 = vmatprep.mubr.bf16.mxu0 0
    %4662 = vmatmul.mubr.bf16.gmra.mrb[0].mxu0 %v4530
    %v4663 = vpop.f32.mrb[0].mxu0
    %v4664 = vadd.f32 0.0, %v4663
    %v4665 = vpop.f32.mrb[0].mxu0
    %v4666 = vpop.f32.mrb[0].mxu0
    %v4667 = vadd.f32 0.0, %v4666
    %v4668 = vpop.f32.mrb[0].mxu0
    %4669 = vmatprep.mubr.bf16.mxu0 0
    %4670 = vmatmul.mubr.bf16.gmra.mrb[0].mxu0 %v4531
    %v4671 = vpop.f32.mrb[0].mxu0
    %v4672 = vadd.f32 0.0, %v4671
    %v4673 = vpop.f32.mrb[0].mxu0
    %v4674 = vpop.f32.mrb[0].mxu0
    %v4675 = vadd.f32 0.0, %v4674
    %v4676 = vpop.f32.mrb[0].mxu0
    %4677 = vmatprep.mubr.bf16.mxu0 0
    %4678 = vmatmul.mubr.bf16.gmra.mrb[0].mxu0 %v4532
    %v4679 = vpop.f32.mrb[0].mxu0
    %v4680 = vadd.f32 0.0, %v4679
    %v4681 = vpop.f32.mrb[0].mxu0
    %v4682 = vpop.f32.mrb[0].mxu0
    %v4683 = vadd.f32 0.0, %v4682
    %v4684 = vpop.f32.mrb[0].mxu0
    %4685 = vdwg.mxu0
    %v4686 = vadd.f32 %v4413, %v4624
    %v4687 = vadd.f32 %v4414, %v4627
    %v4688 = vadd.f32 %v4415, %v4632
    %v4689 = vadd.f32 %v4416, %v4635
    %v4690 = vadd.f32 %v4417, %v4640
    %v4691 = vadd.f32 %v4418, %v4643
    %v4692 = vadd.f32 %v4419, %v4648
    %v4693 = vadd.f32 %v4420, %v4651
    %v4694 = vadd.f32 %v4421, %v4656
    %v4695 = vadd.f32 %v4422, %v4659
    %v4696 = vadd.f32 %v4423, %v4664
    %v4697 = vadd.f32 %v4424, %v4667
    %v4698 = vadd.f32 %v4425, %v4672
    %v4699 = vadd.f32 %v4426, %v4675
    %v4700 = vadd.f32 %v4427, %v4680
    %v4701 = vadd.f32 %v4428, %v4683
    %s4702 = sadd.s32 %s2872, 2
    %s4703 = smul.u32 %s4702, 3
    %s4704 = sadd.s32 %s4703, 54
    %s4705 = smul.addr %s4704, 4
    %s4706 = scalar_lea.vmem %s0, %s4705
    %v4707 = vld [vmem:[%s4706] sm:$0xf]
    %v4708 = vld [vmem:[%s4706 + $0x4] sm:$0xf]
    %v4709 = vld [vmem:[%s4706 + $0x8] sm:$0x1]
    %v4710 = vld [vmem:[%s4706 + $0xc] sm:$0xf]
    %v4711 = vld [vmem:[%s4706 + $0x10] sm:$0xf]
    %v4712 = vld [vmem:[%s4706 + $0x14] sm:$0x1]
    %v4713 = vld [vmem:[%s4706 + $0x18] sm:$0xf]
    %v4714 = vld [vmem:[%s4706 + $0x1c] sm:$0xf]
    %v4715 = vld [vmem:[%s4706 + $0x20] sm:$0x1]
    %v4716 = vld [vmem:[%s4706 + $0x24] sm:$0xf]
    %v4717 = vld [vmem:[%s4706 + $0x28] sm:$0xf]
    %v4718 = vld [vmem:[%s4706 + $0x2c] sm:$0x1]
    %v4719 = vld [vmem:[%s4706 + $0x30] sm:$0xf]
    %v4720 = vld [vmem:[%s4706 + $0x34] sm:$0xf]
    %v4721 = vld [vmem:[%s4706 + $0x38] sm:$0x1]
    %v4722 = vld [vmem:[%s4706 + $0x3c] sm:$0xf]
    %v4723 = vld [vmem:[%s4706 + $0x40] sm:$0xf]
    %v4724 = vld [vmem:[%s4706 + $0x44] sm:$0x1]
    %v4725 = vld [vmem:[%s4706 + $0x48] sm:$0xf]
    %v4726 = vld [vmem:[%s4706 + $0x4c] sm:$0xf]
    %v4727 = vld [vmem:[%s4706 + $0x50] sm:$0x1]
    %v4728 = vld [vmem:[%s4706 + $0x54] sm:$0xf]
    %v4729 = vld [vmem:[%s4706 + $0x58] sm:$0xf]
    %v4730 = vld [vmem:[%s4706 + $0x5c] sm:$0x1]
    %v4731 = vld [vmem:[%s1 + $0x180] sm:$0xf]
    %v4732 = vld [vmem:[%s1 + $0x184] sm:$0xf]
    %v4733 = vld [vmem:[%s1 + $0x188] sm:$0xf]
    %v4734 = vld [vmem:[%s1 + $0x18c] sm:$0xf]
    %v4735 = vld [vmem:[%s1 + $0x190] sm:$0xf]
    %v4736 = vld [vmem:[%s1 + $0x194] sm:$0xf]
    %v4737 = vld [vmem:[%s1 + $0x198] sm:$0xf]
    %v4738 = vld [vmem:[%s1 + $0x19c] sm:$0xf]
    %v4739 = vld [vmem:[%s1 + $0x1a0] sm:$0xf]
    %v4740 = vld [vmem:[%s1 + $0x1a4] sm:$0xf]
    %v4741 = vld [vmem:[%s1 + $0x1a8] sm:$0xf]
    %v4742 = vld [vmem:[%s1 + $0x1ac] sm:$0xf]
    %v4743 = vld [vmem:[%s1 + $0x1b0] sm:$0xf]
    %v4744 = vld [vmem:[%s1 + $0x1b4] sm:$0xf]
    %v4745 = vld [vmem:[%s1 + $0x1b8] sm:$0xf]
    %v4746 = vld [vmem:[%s1 + $0x1bc] sm:$0xf]
    %v4763 = vunpack.c.l.b16 %v4707
    %v4764 = vunpack.c.l.b16 %v4708
    %v4765 = vunpack.c.l.b16 %v4710
    %v4766 = vunpack.c.l.b16 %v4711
    %v4767 = vunpack.c.l.b16 %v4713
    %v4768 = vunpack.c.l.b16 %v4714
    %v4769 = vunpack.c.l.b16 %v4716
    %v4770 = vunpack.c.l.b16 %v4717
    %v4771 = vunpack.c.l.b16 %v4719
    %v4772 = vunpack.c.l.b16 %v4720
    %v4773 = vunpack.c.l.b16 %v4722
    %v4774 = vunpack.c.l.b16 %v4723
    %v4775 = vunpack.c.l.b16 %v4725
    %v4776 = vunpack.c.l.b16 %v4726
    %v4777 = vunpack.c.l.b16 %v4728
    %v4778 = vunpack.c.l.b16 %v4729
    %v4779 = vpack.c.b16 %v4764, %v4763
    %v4780 = vpack.c.b16 %v4766, %v4765
    %v4781 = vpack.c.b16 %v4768, %v4767
    %v4782 = vpack.c.b16 %v4770, %v4769
    %v4783 = vpack.c.b16 %v4772, %v4771
    %v4784 = vpack.c.b16 %v4774, %v4773
    %v4785 = vpack.c.b16 %v4776, %v4775
    %v4786 = vpack.c.b16 %v4778, %v4777
    %v4811 = vunpack.c.l.b16 %v4731
    %v4812 = vunpack.c.l.b16 %v4732
    %v4813 = vunpack.c.l.b16 %v4733
    %v4814 = vunpack.c.l.b16 %v4734
    %v4815 = vunpack.c.l.b16 %v4735
    %v4816 = vunpack.c.l.b16 %v4736
    %v4817 = vunpack.c.l.b16 %v4737
    %v4818 = vunpack.c.l.b16 %v4738
    %v4819 = vunpack.c.l.b16 %v4739
    %v4820 = vunpack.c.l.b16 %v4740
    %v4821 = vunpack.c.l.b16 %v4741
    %v4822 = vunpack.c.l.b16 %v4742
    %v4823 = vunpack.c.l.b16 %v4743
    %v4824 = vunpack.c.l.b16 %v4744
    %v4825 = vunpack.c.l.b16 %v4745
    %v4826 = vunpack.c.l.b16 %v4746
    %v4827 = vpack.c.b16 %v4812, %v4811
    %v4828 = vpack.c.b16 %v4814, %v4813
    %v4829 = vpack.c.b16 %v4816, %v4815
    %v4830 = vpack.c.b16 %v4818, %v4817
    %v4831 = vpack.c.b16 %v4820, %v4819
    %v4832 = vpack.c.b16 %v4822, %v4821
    %v4833 = vpack.c.b16 %v4824, %v4823
    %v4834 = vpack.c.b16 %v4826, %v4825
    %4843 = vmatprep.subr.bf16.mxu0 0
    %4844 = vmatpush1.bf16.msra.mxu0 %v4827
    %4845 = vmatprep.subr.bf16.mxu0 0
    %4846 = vmatpush1.bf16.msra.mxu0 %v4828
    %4847 = vmatprep.subr.bf16.mxu0 0
    %4848 = vmatpush1.bf16.msra.mxu0 %v4829
    %4849 = vmatprep.subr.bf16.mxu0 0
    %4850 = vmatpush1.bf16.msra.mxu0 %v4830
    %4851 = vmatprep.subr.bf16.mxu0 0
    %4852 = vmatpush1.bf16.msra.mxu0 %v4831
    %4853 = vmatprep.subr.bf16.mxu0 0
    %4854 = vmatpush1.bf16.msra.mxu0 %v4832
    %4855 = vmatprep.subr.bf16.mxu0 0
    %4856 = vmatpush1.bf16.msra.mxu0 %v4833
    %4857 = vmatprep.subr.bf16.mxu0 0
    %4858 = vmatpush1.bf16.msra.mxu0 %v4834
    %4859 = vmatprep.subr.bf16.mxu0 0
    %4860 = vmatpush1.bf16.msra.mxu0 0
    %4861 = vmatprep.subr.bf16.mxu0 0
    %4862 = vmatpush1.bf16.msra.mxu0 0
    %4863 = vmatprep.subr.bf16.mxu0 0
    %4864 = vmatpush1.bf16.msra.mxu0 0
    %4865 = vmatprep.subr.bf16.mxu0 0
    %4866 = vmatpush1.bf16.msra.mxu0 0
    %4867 = vmatprep.subr.bf16.mxu0 0
    %4868 = vmatpush1.bf16.msra.mxu0 0
    %4869 = vmatprep.subr.bf16.mxu0 0
    %4870 = vmatpush1.bf16.msra.mxu0 0
    %4871 = vmatprep.subr.bf16.mxu0 0
    %4872 = vmatpush1.bf16.msra.mxu0 0
    %4873 = vmatprep.subr.bf16.mxu0 0
    %4874 = vmatpush1.bf16.msra.mxu0 0
    %4875 = vmatprep.mubr.bf16.mxu0 0
    %4876 = vmatmul.mubr.bf16.gmra.mrb[0].mxu0 %v4779
    %v4877 = vpop.f32.mrb[0].mxu0
    %v4878 = vadd.f32 0.0, %v4877
    %v4879 = vpop.f32.mrb[0].mxu0
    %v4880 = vpop.f32.mrb[0].mxu0
    %v4881 = vadd.f32 0.0, %v4880
    %v4882 = vpop.f32.mrb[0].mxu0
    %4883 = vmatprep.mubr.bf16.mxu0 0
    %4884 = vmatmul.mubr.bf16.gmra.mrb[0].mxu0 %v4780
    %v4885 = vpop.f32.mrb[0].mxu0
    %v4886 = vadd.f32 0.0, %v4885
    %v4887 = vpop.f32.mrb[0].mxu0
    %v4888 = vpop.f32.mrb[0].mxu0
    %v4889 = vadd.f32 0.0, %v4888
    %v4890 = vpop.f32.mrb[0].mxu0
    %4891 = vmatprep.mubr.bf16.mxu0 0
    %4892 = vmatmul.mubr.bf16.gmra.mrb[0].mxu0 %v4781
    %v4893 = vpop.f32.mrb[0].mxu0
    %v4894 = vadd.f32 0.0, %v4893
    %v4895 = vpop.f32.mrb[0].mxu0
    %v4896 = vpop.f32.mrb[0].mxu0
    %v4897 = vadd.f32 0.0, %v4896
    %v4898 = vpop.f32.mrb[0].mxu0
    %4899 = vmatprep.mubr.bf16.mxu0 0
    %4900 = vmatmul.mubr.bf16.gmra.mrb[0].mxu0 %v4782
    %v4901 = vpop.f32.mrb[0].mxu0
    %v4902 = vadd.f32 0.0, %v4901
    %v4903 = vpop.f32.mrb[0].mxu0
    %v4904 = vpop.f32.mrb[0].mxu0
    %v4905 = vadd.f32 0.0, %v4904
    %v4906 = vpop.f32.mrb[0].mxu0
    %4907 = vmatprep.mubr.bf16.mxu0 0
    %4908 = vmatmul.mubr.bf16.gmra.mrb[0].mxu0 %v4783
    %v4909 = vpop.f32.mrb[0].mxu0
    %v4910 = vadd.f32 0.0, %v4909
    %v4911 = vpop.f32.mrb[0].mxu0
    %v4912 = vpop.f32.mrb[0].mxu0
    %v4913 = vadd.f32 0.0, %v4912
    %v4914 = vpop.f32.mrb[0].mxu0
    %4915 = vmatprep.mubr.bf16.mxu0 0
    %4916 = vmatmul.mubr.bf16.gmra.mrb[0].mxu0 %v4784
    %v4917 = vpop.f32.mrb[0].mxu0
    %v4918 = vadd.f32 0.0, %v4917
    %v4919 = vpop.f32.mrb[0].mxu0
    %v4920 = vpop.f32.mrb[0].mxu0
    %v4921 = vadd.f32 0.0, %v4920
    %v4922 = vpop.f32.mrb[0].mxu0
    %4923 = vmatprep.mubr.bf16.mxu0 0
    %4924 = vmatmul.mubr.bf16.gmra.mrb[0].mxu0 %v4785
    %v4925 = vpop.f32.mrb[0].mxu0
    %v4926 = vadd.f32 0.0, %v4925
    %v4927 = vpop.f32.mrb[0].mxu0
    %v4928 = vpop.f32.mrb[0].mxu0
    %v4929 = vadd.f32 0.0, %v4928
    %v4930 = vpop.f32.mrb[0].mxu0
    %4931 = vmatprep.mubr.bf16.mxu0 0
    %4932 = vmatmul.mubr.bf16.gmra.mrb[0].mxu0 %v4786
    %v4933 = vpop.f32.mrb[0].mxu0
    %v4934 = vadd.f32 0.0, %v4933
    %v4935 = vpop.f32.mrb[0].mxu0
    %v4936 = vpop.f32.mrb[0].mxu0
    %v4937 = vadd.f32 0.0, %v4936
    %v4938 = vpop.f32.mrb[0].mxu0
    %4939 = vdwg.mxu0
    %v4940 = vadd.f32 %v4686, %v4878
    %v4941 = vadd.f32 %v4687, %v4881
    %v4942 = vadd.f32 %v4688, %v4886
    %v4943 = vadd.f32 %v4689, %v4889
    %v4944 = vadd.f32 %v4690, %v4894
    %v4945 = vadd.f32 %v4691, %v4897
    %v4946 = vadd.f32 %v4692, %v4902
    %v4947 = vadd.f32 %v4693, %v4905
    %v4948 = vadd.f32 %v4694, %v4910
    %v4949 = vadd.f32 %v4695, %v4913
    %v4950 = vadd.f32 %v4696, %v4918
    %v4951 = vadd.f32 %v4697, %v4921
    %v4952 = vadd.f32 %v4698, %v4926
    %v4953 = vadd.f32 %v4699, %v4929
    %v4954 = vadd.f32 %v4700, %v4934
    %v4955 = vadd.f32 %v4701, %v4937
    %v4957 = vshrl.u32 %v4707, 16
    %v4959 = vrot.slane %v4957, 4
    %v4960 = vshll.u32 %v4707, 16
    %v4962 = vrot.slane %v4960, 5
    %v4963 = vor.u32 %v4959, %v4962
    %v4964 = vrot.slane %v4963, 4
    %v4966 = vshll.u32 %v4708, 16
    %v4968 = vrot.slane %v4966, 5
    %v4969 = vsel %vm2919, %v4964, %v4968
    %v4970 = vshrl.u32 %v4708, 16
    %v4972 = vrot.slane %v4970, 4
    %v4973 = vor.u32 %v4972, %v4968
    %v4974 = vrot.slane %v4973, 4
    %v4976 = vshll.u32 %v4709, 16
    %v4978 = vrot.slane %v4976, 5
    %v4979 = vsel %vm2919, %v4974, %v4978
    %v4981 = vshrl.u32 %v4710, 16
    %v4983 = vrot.slane %v4981, 4
    %v4984 = vshll.u32 %v4710, 16
    %v4986 = vrot.slane %v4984, 5
    %v4987 = vor.u32 %v4983, %v4986
    %v4988 = vrot.slane %v4987, 4
    %v4990 = vshll.u32 %v4711, 16
    %v4992 = vrot.slane %v4990, 5
    %v4993 = vsel %vm2919, %v4988, %v4992
    %v4994 = vshrl.u32 %v4711, 16
    %v4996 = vrot.slane %v4994, 4
    %v4997 = vor.u32 %v4996, %v4992
    %v4998 = vrot.slane %v4997, 4
    %v5000 = vshll.u32 %v4712, 16
    %v5002 = vrot.slane %v5000, 5
    %v5003 = vsel %vm2919, %v4998, %v5002
    %v5005 = vshrl.u32 %v4713, 16
    %v5007 = vrot.slane %v5005, 4
    %v5008 = vshll.u32 %v4713, 16
    %v5010 = vrot.slane %v5008, 5
    %v5011 = vor.u32 %v5007, %v5010
    %v5012 = vrot.slane %v5011, 4
    %v5014 = vshll.u32 %v4714, 16
    %v5016 = vrot.slane %v5014, 5
    %v5017 = vsel %vm2919, %v5012, %v5016
    %v5018 = vshrl.u32 %v4714, 16
    %v5020 = vrot.slane %v5018, 4
    %v5021 = vor.u32 %v5020, %v5016
    %v5022 = vrot.slane %v5021, 4
    %v5024 = vshll.u32 %v4715, 16
    %v5026 = vrot.slane %v5024, 5
    %v5027 = vsel %vm2919, %v5022, %v5026
    %v5029 = vshrl.u32 %v4716, 16
    %v5031 = vrot.slane %v5029, 4
    %v5032 = vshll.u32 %v4716, 16
    %v5034 = vrot.slane %v5032, 5
    %v5035 = vor.u32 %v5031, %v5034
    %v5036 = vrot.slane %v5035, 4
    %v5038 = vshll.u32 %v4717, 16
    %v5040 = vrot.slane %v5038, 5
    %v5041 = vsel %vm2919, %v5036, %v5040
    %v5042 = vshrl.u32 %v4717, 16
    %v5044 = vrot.slane %v5042, 4
    %v5045 = vor.u32 %v5044, %v5040
    %v5046 = vrot.slane %v5045, 4
    %v5048 = vshll.u32 %v4718, 16
    %v5050 = vrot.slane %v5048, 5
    %v5051 = vsel %vm2919, %v5046, %v5050
    %v5053 = vshrl.u32 %v4719, 16
    %v5055 = vrot.slane %v5053, 4
    %v5056 = vshll.u32 %v4719, 16
    %v5058 = vrot.slane %v5056, 5
    %v5059 = vor.u32 %v5055, %v5058
    %v5060 = vrot.slane %v5059, 4
    %v5062 = vshll.u32 %v4720, 16
    %v5064 = vrot.slane %v5062, 5
    %v5065 = vsel %vm2919, %v5060, %v5064
    %v5066 = vshrl.u32 %v4720, 16
    %v5068 = vrot.slane %v5066, 4
    %v5069 = vor.u32 %v5068, %v5064
    %v5070 = vrot.slane %v5069, 4
    %v5072 = vshll.u32 %v4721, 16
    %v5074 = vrot.slane %v5072, 5
    %v5075 = vsel %vm2919, %v5070, %v5074
    %v5077 = vshrl.u32 %v4722, 16
    %v5079 = vrot.slane %v5077, 4
    %v5080 = vshll.u32 %v4722, 16
    %v5082 = vrot.slane %v5080, 5
    %v5083 = vor.u32 %v5079, %v5082
    %v5084 = vrot.slane %v5083, 4
    %v5086 = vshll.u32 %v4723, 16
    %v5088 = vrot.slane %v5086, 5
    %v5089 = vsel %vm2919, %v5084, %v5088
    %v5090 = vshrl.u32 %v4723, 16
    %v5092 = vrot.slane %v5090, 4
    %v5093 = vor.u32 %v5092, %v5088
    %v5094 = vrot.slane %v5093, 4
    %v5096 = vshll.u32 %v4724, 16
    %v5098 = vrot.slane %v5096, 5
    %v5099 = vsel %vm2919, %v5094, %v5098
    %v5101 = vshrl.u32 %v4725, 16
    %v5103 = vrot.slane %v5101, 4
    %v5104 = vshll.u32 %v4725, 16
    %v5106 = vrot.slane %v5104, 5
    %v5107 = vor.u32 %v5103, %v5106
    %v5108 = vrot.slane %v5107, 4
    %v5110 = vshll.u32 %v4726, 16
    %v5112 = vrot.slane %v5110, 5
    %v5113 = vsel %vm2919, %v5108, %v5112
    %v5114 = vshrl.u32 %v4726, 16
    %v5116 = vrot.slane %v5114, 4
    %v5117 = vor.u32 %v5116, %v5112
    %v5118 = vrot.slane %v5117, 4
    %v5120 = vshll.u32 %v4727, 16
    %v5122 = vrot.slane %v5120, 5
    %v5123 = vsel %vm2919, %v5118, %v5122
    %v5125 = vshrl.u32 %v4728, 16
    %v5127 = vrot.slane %v5125, 4
    %v5128 = vshll.u32 %v4728, 16
    %v5130 = vrot.slane %v5128, 5
    %v5131 = vor.u32 %v5127, %v5130
    %v5132 = vrot.slane %v5131, 4
    %v5134 = vshll.u32 %v4729, 16
    %v5136 = vrot.slane %v5134, 5
    %v5137 = vsel %vm2919, %v5132, %v5136
    %v5138 = vshrl.u32 %v4729, 16
    %v5140 = vrot.slane %v5138, 4
    %v5141 = vor.u32 %v5140, %v5136
    %v5142 = vrot.slane %v5141, 4
    %v5144 = vshll.u32 %v4730, 16
    %v5146 = vrot.slane %v5144, 5
    %v5147 = vsel %vm2919, %v5142, %v5146
    %v5148 = vld [vmem:[%s1 + $0x1c0] sm:$0xf]
    %v5149 = vld [vmem:[%s1 + $0x1c4] sm:$0xf]
    %v5150 = vld [vmem:[%s1 + $0x1c8] sm:$0xf]
    %v5151 = vld [vmem:[%s1 + $0x1cc] sm:$0xf]
    %v5152 = vld [vmem:[%s1 + $0x1d0] sm:$0xf]
    %v5153 = vld [vmem:[%s1 + $0x1d4] sm:$0xf]
    %v5154 = vld [vmem:[%s1 + $0x1d8] sm:$0xf]
    %v5155 = vld [vmem:[%s1 + $0x1dc] sm:$0xf]
    %v5156 = vld [vmem:[%s1 + $0x1e0] sm:$0xf]
    %v5157 = vld [vmem:[%s1 + $0x1e4] sm:$0xf]
    %v5158 = vld [vmem:[%s1 + $0x1e8] sm:$0xf]
    %v5159 = vld [vmem:[%s1 + $0x1ec] sm:$0xf]
    %v5160 = vld [vmem:[%s1 + $0x1f0] sm:$0xf]
    %v5161 = vld [vmem:[%s1 + $0x1f4] sm:$0xf]
    %v5162 = vld [vmem:[%s1 + $0x1f8] sm:$0xf]
    %v5163 = vld [vmem:[%s1 + $0x1fc] sm:$0xf]
    %v5164 = vunpack.c.l.b16 %v4969
    %v5165 = vunpack.c.l.b16 %v4979
    %v5166 = vunpack.c.l.b16 %v4993
    %v5167 = vunpack.c.l.b16 %v5003
    %v5168 = vunpack.c.l.b16 %v5017
    %v5169 = vunpack.c.l.b16 %v5027
    %v5170 = vunpack.c.l.b16 %v5041
    %v5171 = vunpack.c.l.b16 %v5051
    %v5172 = vunpack.c.l.b16 %v5065
    %v5173 = vunpack.c.l.b16 %v5075
    %v5174 = vunpack.c.l.b16 %v5089
    %v5175 = vunpack.c.l.b16 %v5099
    %v5176 = vunpack.c.l.b16 %v5113
    %v5177 = vunpack.c.l.b16 %v5123
    %v5178 = vunpack.c.l.b16 %v5137
    %v5179 = vunpack.c.l.b16 %v5147
    %v5180 = vpack.c.b16 %v5165, %v5164
    %v5181 = vpack.c.b16 %v5167, %v5166
    %v5182 = vpack.c.b16 %v5169, %v5168
    %v5183 = vpack.c.b16 %v5171, %v5170
    %v5184 = vpack.c.b16 %v5173, %v5172
    %v5185 = vpack.c.b16 %v5175, %v5174
    %v5186 = vpack.c.b16 %v5177, %v5176
    %v5187 = vpack.c.b16 %v5179, %v5178
    %v5212 = vunpack.c.l.b16 %v5148
    %v5213 = vunpack.c.l.b16 %v5149
    %v5214 = vunpack.c.l.b16 %v5150
    %v5215 = vunpack.c.l.b16 %v5151
    %v5216 = vunpack.c.l.b16 %v5152
    %v5217 = vunpack.c.l.b16 %v5153
    %v5218 = vunpack.c.l.b16 %v5154
    %v5219 = vunpack.c.l.b16 %v5155
    %v5220 = vunpack.c.l.b16 %v5156
    %v5221 = vunpack.c.l.b16 %v5157
    %v5222 = vunpack.c.l.b16 %v5158
    %v5223 = vunpack.c.l.b16 %v5159
    %v5224 = vunpack.c.l.b16 %v5160
    %v5225 = vunpack.c.l.b16 %v5161
    %v5226 = vunpack.c.l.b16 %v5162
    %v5227 = vunpack.c.l.b16 %v5163
    %v5228 = vpack.c.b16 %v5213, %v5212
    %v5229 = vpack.c.b16 %v5215, %v5214
    %v5230 = vpack.c.b16 %v5217, %v5216
    %v5231 = vpack.c.b16 %v5219, %v5218
    %v5232 = vpack.c.b16 %v5221, %v5220
    %v5233 = vpack.c.b16 %v5223, %v5222
    %v5234 = vpack.c.b16 %v5225, %v5224
    %v5235 = vpack.c.b16 %v5227, %v5226
    %5244 = vmatprep.subr.bf16.mxu0 0
    %5245 = vmatpush1.bf16.msra.mxu0 %v5228
    %5246 = vmatprep.subr.bf16.mxu0 0
    %5247 = vmatpush1.bf16.msra.mxu0 %v5229
    %5248 = vmatprep.subr.bf16.mxu0 0
    %5249 = vmatpush1.bf16.msra.mxu0 %v5230
    %5250 = vmatprep.subr.bf16.mxu0 0
    %5251 = vmatpush1.bf16.msra.mxu0 %v5231
    %5252 = vmatprep.subr.bf16.mxu0 0
    %5253 = vmatpush1.bf16.msra.mxu0 %v5232
    %5254 = vmatprep.subr.bf16.mxu0 0
    %5255 = vmatpush1.bf16.msra.mxu0 %v5233
    %5256 = vmatprep.subr.bf16.mxu0 0
    %5257 = vmatpush1.bf16.msra.mxu0 %v5234
    %5258 = vmatprep.subr.bf16.mxu0 0
    %5259 = vmatpush1.bf16.msra.mxu0 %v5235
    %5260 = vmatprep.subr.bf16.mxu0 0
    %5261 = vmatpush1.bf16.msra.mxu0 0
    %5262 = vmatprep.subr.bf16.mxu0 0
    %5263 = vmatpush1.bf16.msra.mxu0 0
    %5264 = vmatprep.subr.bf16.mxu0 0
    %5265 = vmatpush1.bf16.msra.mxu0 0
    %5266 = vmatprep.subr.bf16.mxu0 0
    %5267 = vmatpush1.bf16.msra.mxu0 0
    %5268 = vmatprep.subr.bf16.mxu0 0
    %5269 = vmatpush1.bf16.msra.mxu0 0
    %5270 = vmatprep.subr.bf16.mxu0 0
    %5271 = vmatpush1.bf16.msra.mxu0 0
    %5272 = vmatprep.subr.bf16.mxu0 0
    %5273 = vmatpush1.bf16.msra.mxu0 0
    %5274 = vmatprep.subr.bf16.mxu0 0
    %5275 = vmatpush1.bf16.msra.mxu0 0
    %5276 = vmatprep.mubr.bf16.mxu0 0
    %5277 = vmatmul.mubr.bf16.gmra.mrb[0].mxu0 %v5180
    %v5278 = vpop.f32.mrb[0].mxu0
    %v5279 = vadd.f32 0.0, %v5278
    %v5280 = vpop.f32.mrb[0].mxu0
    %v5281 = vpop.f32.mrb[0].mxu0
    %v5282 = vadd.f32 0.0, %v5281
    %v5283 = vpop.f32.mrb[0].mxu0
    %5284 = vmatprep.mubr.bf16.mxu0 0
    %5285 = vmatmul.mubr.bf16.gmra.mrb[0].mxu0 %v5181
    %v5286 = vpop.f32.mrb[0].mxu0
    %v5287 = vadd.f32 0.0, %v5286
    %v5288 = vpop.f32.mrb[0].mxu0
    %v5289 = vpop.f32.mrb[0].mxu0
    %v5290 = vadd.f32 0.0, %v5289
    %v5291 = vpop.f32.mrb[0].mxu0
    %5292 = vmatprep.mubr.bf16.mxu0 0
    %5293 = vmatmul.mubr.bf16.gmra.mrb[0].mxu0 %v5182
    %v5294 = vpop.f32.mrb[0].mxu0
    %v5295 = vadd.f32 0.0, %v5294
    %v5296 = vpop.f32.mrb[0].mxu0
    %v5297 = vpop.f32.mrb[0].mxu0
    %v5298 = vadd.f32 0.0, %v5297
    %v5299 = vpop.f32.mrb[0].mxu0
    %5300 = vmatprep.mubr.bf16.mxu0 0
    %5301 = vmatmul.mubr.bf16.gmra.mrb[0].mxu0 %v5183
    %v5302 = vpop.f32.mrb[0].mxu0
    %v5303 = vadd.f32 0.0, %v5302
    %v5304 = vpop.f32.mrb[0].mxu0
    %v5305 = vpop.f32.mrb[0].mxu0
    %v5306 = vadd.f32 0.0, %v5305
    %v5307 = vpop.f32.mrb[0].mxu0
    %5308 = vmatprep.mubr.bf16.mxu0 0
    %5309 = vmatmul.mubr.bf16.gmra.mrb[0].mxu0 %v5184
    %v5310 = vpop.f32.mrb[0].mxu0
    %v5311 = vadd.f32 0.0, %v5310
    %v5312 = vpop.f32.mrb[0].mxu0
    %v5313 = vpop.f32.mrb[0].mxu0
    %v5314 = vadd.f32 0.0, %v5313
    %v5315 = vpop.f32.mrb[0].mxu0
    %5316 = vmatprep.mubr.bf16.mxu0 0
    %5317 = vmatmul.mubr.bf16.gmra.mrb[0].mxu0 %v5185
    %v5318 = vpop.f32.mrb[0].mxu0
    %v5319 = vadd.f32 0.0, %v5318
    %v5320 = vpop.f32.mrb[0].mxu0
    %v5321 = vpop.f32.mrb[0].mxu0
    %v5322 = vadd.f32 0.0, %v5321
    %v5323 = vpop.f32.mrb[0].mxu0
    %5324 = vmatprep.mubr.bf16.mxu0 0
    %5325 = vmatmul.mubr.bf16.gmra.mrb[0].mxu0 %v5186
    %v5326 = vpop.f32.mrb[0].mxu0
    %v5327 = vadd.f32 0.0, %v5326
    %v5328 = vpop.f32.mrb[0].mxu0
    %v5329 = vpop.f32.mrb[0].mxu0
    %v5330 = vadd.f32 0.0, %v5329
    %v5331 = vpop.f32.mrb[0].mxu0
    %5332 = vmatprep.mubr.bf16.mxu0 0
    %5333 = vmatmul.mubr.bf16.gmra.mrb[0].mxu0 %v5187
    %v5334 = vpop.f32.mrb[0].mxu0
    %v5335 = vadd.f32 0.0, %v5334
    %v5336 = vpop.f32.mrb[0].mxu0
    %v5337 = vpop.f32.mrb[0].mxu0
    %v5338 = vadd.f32 0.0, %v5337
    %v5339 = vpop.f32.mrb[0].mxu0
    %5340 = vdwg.mxu0
    %v5341 = vadd.f32 %v4940, %v5279
    %v5342 = vadd.f32 %v4941, %v5282
    %v5343 = vadd.f32 %v4942, %v5287
    %v5344 = vadd.f32 %v4943, %v5290
    %v5345 = vadd.f32 %v4944, %v5295
    %v5346 = vadd.f32 %v4945, %v5298
    %v5347 = vadd.f32 %v4946, %v5303
    %v5348 = vadd.f32 %v4947, %v5306
    %v5349 = vadd.f32 %v4948, %v5311
    %v5350 = vadd.f32 %v4949, %v5314
    %v5351 = vadd.f32 %v4950, %v5319
    %v5352 = vadd.f32 %v4951, %v5322
    %v5353 = vadd.f32 %v4952, %v5327
    %v5354 = vadd.f32 %v4953, %v5330
    %v5355 = vadd.f32 %v4954, %v5335
    %v5356 = vadd.f32 %v4955, %v5338
    %v5365 = vrot.slane %v4707, 5
    %v5366 = vrot.slane %v5365, 4
    %v5367 = vrot.slane %v4708, 5
    %v5368 = vsel %vm3508, %v5366, %v5367
    %v5369 = vrot.slane %v5367, 4
    %v5370 = vrot.slane %v4709, 5
    %v5371 = vsel %vm3508, %v5369, %v5370
    %v5372 = vrot.slane %v4710, 5
    %v5373 = vrot.slane %v5372, 4
    %v5374 = vrot.slane %v4711, 5
    %v5375 = vsel %vm3508, %v5373, %v5374
    %v5376 = vrot.slane %v5374, 4
    %v5377 = vrot.slane %v4712, 5
    %v5378 = vsel %vm3508, %v5376, %v5377
    %v5379 = vrot.slane %v4713, 5
    %v5380 = vrot.slane %v5379, 4
    %v5381 = vrot.slane %v4714, 5
    %v5382 = vsel %vm3508, %v5380, %v5381
    %v5383 = vrot.slane %v5381, 4
    %v5384 = vrot.slane %v4715, 5
    %v5385 = vsel %vm3508, %v5383, %v5384
    %v5386 = vrot.slane %v4716, 5
    %v5387 = vrot.slane %v5386, 4
    %v5388 = vrot.slane %v4717, 5
    %v5389 = vsel %vm3508, %v5387, %v5388
    %v5390 = vrot.slane %v5388, 4
    %v5391 = vrot.slane %v4718, 5
    %v5392 = vsel %vm3508, %v5390, %v5391
    %v5393 = vrot.slane %v4719, 5
    %v5394 = vrot.slane %v5393, 4
    %v5395 = vrot.slane %v4720, 5
    %v5396 = vsel %vm3508, %v5394, %v5395
    %v5397 = vrot.slane %v5395, 4
    %v5398 = vrot.slane %v4721, 5
    %v5399 = vsel %vm3508, %v5397, %v5398
    %v5400 = vrot.slane %v4722, 5
    %v5401 = vrot.slane %v5400, 4
    %v5402 = vrot.slane %v4723, 5
    %v5403 = vsel %vm3508, %v5401, %v5402
    %v5404 = vrot.slane %v5402, 4
    %v5405 = vrot.slane %v4724, 5
    %v5406 = vsel %vm3508, %v5404, %v5405
    %v5407 = vrot.slane %v4725, 5
    %v5408 = vrot.slane %v5407, 4
    %v5409 = vrot.slane %v4726, 5
    %v5410 = vsel %vm3508, %v5408, %v5409
    %v5411 = vrot.slane %v5409, 4
    %v5412 = vrot.slane %v4727, 5
    %v5413 = vsel %vm3508, %v5411, %v5412
    %v5414 = vrot.slane %v4728, 5
    %v5415 = vrot.slane %v5414, 4
    %v5416 = vrot.slane %v4729, 5
    %v5417 = vsel %vm3508, %v5415, %v5416
    %v5418 = vrot.slane %v5416, 4
    %v5419 = vrot.slane %v4730, 5
    %v5420 = vsel %vm3508, %v5418, %v5419
    %v5421 = vld [vmem:[%s1 + $0x200] sm:$0xf]
    %v5422 = vld [vmem:[%s1 + $0x204] sm:$0xf]
    %v5423 = vld [vmem:[%s1 + $0x208] sm:$0xf]
    %v5424 = vld [vmem:[%s1 + $0x20c] sm:$0xf]
    %v5425 = vld [vmem:[%s1 + $0x210] sm:$0xf]
    %v5426 = vld [vmem:[%s1 + $0x214] sm:$0xf]
    %v5427 = vld [vmem:[%s1 + $0x218] sm:$0xf]
    %v5428 = vld [vmem:[%s1 + $0x21c] sm:$0xf]
    %v5429 = vld [vmem:[%s1 + $0x220] sm:$0xf]
    %v5430 = vld [vmem:[%s1 + $0x224] sm:$0xf]
    %v5431 = vld [vmem:[%s1 + $0x228] sm:$0xf]
    %v5432 = vld [vmem:[%s1 + $0x22c] sm:$0xf]
    %v5433 = vld [vmem:[%s1 + $0x230] sm:$0xf]
    %v5434 = vld [vmem:[%s1 + $0x234] sm:$0xf]
    %v5435 = vld [vmem:[%s1 + $0x238] sm:$0xf]
    %v5436 = vld [vmem:[%s1 + $0x23c] sm:$0xf]
    %v5437 = vunpack.c.l.b16 %v5368
    %v5438 = vunpack.c.l.b16 %v5371
    %v5439 = vunpack.c.l.b16 %v5375
    %v5440 = vunpack.c.l.b16 %v5378
    %v5441 = vunpack.c.l.b16 %v5382
    %v5442 = vunpack.c.l.b16 %v5385
    %v5443 = vunpack.c.l.b16 %v5389
    %v5444 = vunpack.c.l.b16 %v5392
    %v5445 = vunpack.c.l.b16 %v5396
    %v5446 = vunpack.c.l.b16 %v5399
    %v5447 = vunpack.c.l.b16 %v5403
    %v5448 = vunpack.c.l.b16 %v5406
    %v5449 = vunpack.c.l.b16 %v5410
    %v5450 = vunpack.c.l.b16 %v5413
    %v5451 = vunpack.c.l.b16 %v5417
    %v5452 = vunpack.c.l.b16 %v5420
    %v5453 = vpack.c.b16 %v5438, %v5437
    %v5454 = vpack.c.b16 %v5440, %v5439
    %v5455 = vpack.c.b16 %v5442, %v5441
    %v5456 = vpack.c.b16 %v5444, %v5443
    %v5457 = vpack.c.b16 %v5446, %v5445
    %v5458 = vpack.c.b16 %v5448, %v5447
    %v5459 = vpack.c.b16 %v5450, %v5449
    %v5460 = vpack.c.b16 %v5452, %v5451
    %v5485 = vunpack.c.l.b16 %v5421
    %v5486 = vunpack.c.l.b16 %v5422
    %v5487 = vunpack.c.l.b16 %v5423
    %v5488 = vunpack.c.l.b16 %v5424
    %v5489 = vunpack.c.l.b16 %v5425
    %v5490 = vunpack.c.l.b16 %v5426
    %v5491 = vunpack.c.l.b16 %v5427
    %v5492 = vunpack.c.l.b16 %v5428
    %v5493 = vunpack.c.l.b16 %v5429
    %v5494 = vunpack.c.l.b16 %v5430
    %v5495 = vunpack.c.l.b16 %v5431
    %v5496 = vunpack.c.l.b16 %v5432
    %v5497 = vunpack.c.l.b16 %v5433
    %v5498 = vunpack.c.l.b16 %v5434
    %v5499 = vunpack.c.l.b16 %v5435
    %v5500 = vunpack.c.l.b16 %v5436
    %v5501 = vpack.c.b16 %v5486, %v5485
    %v5502 = vpack.c.b16 %v5488, %v5487
    %v5503 = vpack.c.b16 %v5490, %v5489
    %v5504 = vpack.c.b16 %v5492, %v5491
    %v5505 = vpack.c.b16 %v5494, %v5493
    %v5506 = vpack.c.b16 %v5496, %v5495
    %v5507 = vpack.c.b16 %v5498, %v5497
    %v5508 = vpack.c.b16 %v5500, %v5499
    %5517 = vmatprep.subr.bf16.mxu0 0
    %5518 = vmatpush1.bf16.msra.mxu0 %v5501
    %5519 = vmatprep.subr.bf16.mxu0 0
    %5520 = vmatpush1.bf16.msra.mxu0 %v5502
    %5521 = vmatprep.subr.bf16.mxu0 0
    %5522 = vmatpush1.bf16.msra.mxu0 %v5503
    %5523 = vmatprep.subr.bf16.mxu0 0
    %5524 = vmatpush1.bf16.msra.mxu0 %v5504
    %5525 = vmatprep.subr.bf16.mxu0 0
    %5526 = vmatpush1.bf16.msra.mxu0 %v5505
    %5527 = vmatprep.subr.bf16.mxu0 0
    %5528 = vmatpush1.bf16.msra.mxu0 %v5506
    %5529 = vmatprep.subr.bf16.mxu0 0
    %5530 = vmatpush1.bf16.msra.mxu0 %v5507
    %5531 = vmatprep.subr.bf16.mxu0 0
    %5532 = vmatpush1.bf16.msra.mxu0 %v5508
    %5533 = vmatprep.subr.bf16.mxu0 0
    %5534 = vmatpush1.bf16.msra.mxu0 0
    %5535 = vmatprep.subr.bf16.mxu0 0
    %5536 = vmatpush1.bf16.msra.mxu0 0
    %5537 = vmatprep.subr.bf16.mxu0 0
    %5538 = vmatpush1.bf16.msra.mxu0 0
    %5539 = vmatprep.subr.bf16.mxu0 0
    %5540 = vmatpush1.bf16.msra.mxu0 0
    %5541 = vmatprep.subr.bf16.mxu0 0
    %5542 = vmatpush1.bf16.msra.mxu0 0
    %5543 = vmatprep.subr.bf16.mxu0 0
    %5544 = vmatpush1.bf16.msra.mxu0 0
    %5545 = vmatprep.subr.bf16.mxu0 0
    %5546 = vmatpush1.bf16.msra.mxu0 0
    %5547 = vmatprep.subr.bf16.mxu0 0
    %5548 = vmatpush1.bf16.msra.mxu0 0
    %5549 = vmatprep.mubr.bf16.mxu0 0
    %5550 = vmatmul.mubr.bf16.gmra.mrb[0].mxu0 %v5453
    %v5551 = vpop.f32.mrb[0].mxu0
    %v5552 = vadd.f32 0.0, %v5551
    %v5553 = vpop.f32.mrb[0].mxu0
    %v5554 = vpop.f32.mrb[0].mxu0
    %v5555 = vadd.f32 0.0, %v5554
    %v5556 = vpop.f32.mrb[0].mxu0
    %5557 = vmatprep.mubr.bf16.mxu0 0
    %5558 = vmatmul.mubr.bf16.gmra.mrb[0].mxu0 %v5454
    %v5559 = vpop.f32.mrb[0].mxu0
    %v5560 = vadd.f32 0.0, %v5559
    %v5561 = vpop.f32.mrb[0].mxu0
    %v5562 = vpop.f32.mrb[0].mxu0
    %v5563 = vadd.f32 0.0, %v5562
    %v5564 = vpop.f32.mrb[0].mxu0
    %5565 = vmatprep.mubr.bf16.mxu0 0
    %5566 = vmatmul.mubr.bf16.gmra.mrb[0].mxu0 %v5455
    %v5567 = vpop.f32.mrb[0].mxu0
    %v5568 = vadd.f32 0.0, %v5567
    %v5569 = vpop.f32.mrb[0].mxu0
    %v5570 = vpop.f32.mrb[0].mxu0
    %v5571 = vadd.f32 0.0, %v5570
    %v5572 = vpop.f32.mrb[0].mxu0
    %5573 = vmatprep.mubr.bf16.mxu0 0
    %5574 = vmatmul.mubr.bf16.gmra.mrb[0].mxu0 %v5456
    %v5575 = vpop.f32.mrb[0].mxu0
    %v5576 = vadd.f32 0.0, %v5575
    %v5577 = vpop.f32.mrb[0].mxu0
    %v5578 = vpop.f32.mrb[0].mxu0
    %v5579 = vadd.f32 0.0, %v5578
    %v5580 = vpop.f32.mrb[0].mxu0
    %5581 = vmatprep.mubr.bf16.mxu0 0
    %5582 = vmatmul.mubr.bf16.gmra.mrb[0].mxu0 %v5457
    %v5583 = vpop.f32.mrb[0].mxu0
    %v5584 = vadd.f32 0.0, %v5583
    %v5585 = vpop.f32.mrb[0].mxu0
    %v5586 = vpop.f32.mrb[0].mxu0
    %v5587 = vadd.f32 0.0, %v5586
    %v5588 = vpop.f32.mrb[0].mxu0
    %5589 = vmatprep.mubr.bf16.mxu0 0
    %5590 = vmatmul.mubr.bf16.gmra.mrb[0].mxu0 %v5458
    %v5591 = vpop.f32.mrb[0].mxu0
    %v5592 = vadd.f32 0.0, %v5591
    %v5593 = vpop.f32.mrb[0].mxu0
    %v5594 = vpop.f32.mrb[0].mxu0
    %v5595 = vadd.f32 0.0, %v5594
    %v5596 = vpop.f32.mrb[0].mxu0
    %5597 = vmatprep.mubr.bf16.mxu0 0
    %5598 = vmatmul.mubr.bf16.gmra.mrb[0].mxu0 %v5459
    %v5599 = vpop.f32.mrb[0].mxu0
    %v5600 = vadd.f32 0.0, %v5599
    %v5601 = vpop.f32.mrb[0].mxu0
    %v5602 = vpop.f32.mrb[0].mxu0
    %v5603 = vadd.f32 0.0, %v5602
    %v5604 = vpop.f32.mrb[0].mxu0
    %5605 = vmatprep.mubr.bf16.mxu0 0
    %5606 = vmatmul.mubr.bf16.gmra.mrb[0].mxu0 %v5460
    %v5607 = vpop.f32.mrb[0].mxu0
    %v5608 = vadd.f32 0.0, %v5607
    %v5609 = vpop.f32.mrb[0].mxu0
    %v5610 = vpop.f32.mrb[0].mxu0
    %v5611 = vadd.f32 0.0, %v5610
    %v5612 = vpop.f32.mrb[0].mxu0
    %5613 = vdwg.mxu0
    %v5614 = vadd.f32 %v5341, %v5552
    %v5615 = vadd.f32 %v5342, %v5555
    %v5616 = vadd.f32 %v5343, %v5560
    %v5617 = vadd.f32 %v5344, %v5563
    %v5618 = vadd.f32 %v5345, %v5568
    %v5619 = vadd.f32 %v5346, %v5571
    %v5620 = vadd.f32 %v5347, %v5576
    %v5621 = vadd.f32 %v5348, %v5579
    %v5622 = vadd.f32 %v5349, %v5584
    %v5623 = vadd.f32 %v5350, %v5587
    %v5624 = vadd.f32 %v5351, %v5592
    %v5625 = vadd.f32 %v5352, %v5595
    %v5626 = vadd.f32 %v5353, %v5600
    %v5627 = vadd.f32 %v5354, %v5603
    %v5628 = vadd.f32 %v5355, %v5608
    %v5629 = vadd.f32 %v5356, %v5611
    %s5630 = smul.u32 %s2872, 16
    %s5631 = sadd.s32 %s5630, 256
    %s5632 = scalar_lea.vmem [#allocation2], %s5631
    %5633 = vst [vmem:[%s5632] sm:$0xff] %v5614
    %5634 = vst [vmem:[%s5632 + $0x8] sm:$0xff] %v5615
    %5635 = vst [vmem:[%s5632 + $0x10] sm:$0xff] %v5616
    %5636 = vst [vmem:[%s5632 + $0x18] sm:$0xff] %v5617
    %5637 = vst [vmem:[%s5632 + $0x20] sm:$0xff] %v5618
    %5638 = vst [vmem:[%s5632 + $0x28] sm:$0xff] %v5619
    %5639 = vst [vmem:[%s5632 + $0x30] sm:$0xff] %v5620
    %5640 = vst [vmem:[%s5632 + $0x38] sm:$0xff] %v5621
    %5641 = vst [vmem:[%s5632 + $0x40] sm:$0xff] %v5622
    %5642 = vst [vmem:[%s5632 + $0x48] sm:$0xff] %v5623
    %5643 = vst [vmem:[%s5632 + $0x50] sm:$0xff] %v5624
    %5644 = vst [vmem:[%s5632 + $0x58] sm:$0xff] %v5625
    %5645 = vst [vmem:[%s5632 + $0x60] sm:$0xff] %v5626
    %5646 = vst [vmem:[%s5632 + $0x68] sm:$0xff] %v5627
    %5647 = vst [vmem:[%s5632 + $0x70] sm:$0xff] %v5628
    %5648 = vst [vmem:[%s5632 + $0x78] sm:$0xff] %v5629
    %v5649 = vld [vmem:[#allocation3] sm:$0x1]
    %v5650 = vadd.f32 %v5614, %v5615
    %v5651 = vadd.f32 %v5650, %v5616
    %v5652 = vadd.f32 %v5651, %v5617
    %v5653 = vadd.f32 %v5652, %v5618
    %v5654 = vadd.f32 %v5653, %v5619
    %v5655 = vadd.f32 %v5654, %v5620
    %v5656 = vadd.f32 %v5655, %v5621
    %v5657 = vadd.f32 %v5656, %v5622
    %v5658 = vadd.f32 %v5657, %v5623
    %v5659 = vadd.f32 %v5658, %v5624
    %v5660 = vadd.f32 %v5659, %v5625
    %v5661 = vadd.f32 %v5660, %v5626
    %v5662 = vadd.f32 %v5661, %v5627
    %v5663 = vadd.f32 %v5662, %v5628
    %v5664 = vadd.f32 %v5663, %v5629
    %v5665 = vrot.slane %v5664, 4
    %v5666 = vadd.f32 %v5664, %v5665
    %v5667 = vrot.slane %v5666, 2
    %v5668 = vadd.f32 %v5666, %v5667
    %v5669 = vrot.slane %v5668, 1
    %v5670 = vadd.f32 %v5668, %v5669
    %v5671 = vadd.f32 %v5649, %v5670
    %5672 = vst [vmem:[#allocation3] sm:$0x1] %v5671
    %v5673 = vld [vmem:[#allocation4] sm:$0x1]
    %v5674 = vmul.f32 %v5614, %v5614
    %v5675 = vmul.f32 %v5615, %v5615
    %v5676 = vmul.f32 %v5616, %v5616
    %v5677 = vmul.f32 %v5617, %v5617
    %v5678 = vmul.f32 %v5618, %v5618
    %v5679 = vmul.f32 %v5619, %v5619
    %v5680 = vmul.f32 %v5620, %v5620
    %v5681 = vmul.f32 %v5621, %v5621
    %v5682 = vmul.f32 %v5622, %v5622
    %v5683 = vmul.f32 %v5623, %v5623
    %v5684 = vmul.f32 %v5624, %v5624
    %v5685 = vmul.f32 %v5625, %v5625
    %v5686 = vmul.f32 %v5626, %v5626
    %v5687 = vmul.f32 %v5627, %v5627
    %v5688 = vmul.f32 %v5628, %v5628
    %v5689 = vmul.f32 %v5629, %v5629
    %v5690 = vadd.f32 %v5674, %v5675
    %v5691 = vadd.f32 %v5690, %v5676
    %v5692 = vadd.f32 %v5691, %v5677
    %v5693 = vadd.f32 %v5692, %v5678
    %v5694 = vadd.f32 %v5693, %v5679
    %v5695 = vadd.f32 %v5694, %v5680
    %v5696 = vadd.f32 %v5695, %v5681
    %v5697 = vadd.f32 %v5696, %v5682
    %v5698 = vadd.f32 %v5697, %v5683
    %v5699 = vadd.f32 %v5698, %v5684
    %v5700 = vadd.f32 %v5699, %v5685
    %v5701 = vadd.f32 %v5700, %v5686
    %v5702 = vadd.f32 %v5701, %v5687
    %v5703 = vadd.f32 %v5702, %v5688
    %v5704 = vadd.f32 %v5703, %v5689
    %v5705 = vrot.slane %v5704, 4
    %v5706 = vadd.f32 %v5704, %v5705
    %v5707 = vrot.slane %v5706, 2
    %v5708 = vadd.f32 %v5706, %v5707
    %v5709 = vrot.slane %v5708, 1
    %v5710 = vadd.f32 %v5708, %v5709
    %v5711 = vadd.f32 %v5673, %v5710
    %5712 = vst [vmem:[#allocation4] sm:$0x1] %v5711
  $region33: #{restnet_basic_block_forward.3} parent=0 // loop_footer
    %s2871 = sadd.s32 1, %s2867
  $region34: #{restnet_basic_block_forward.3} parent=0 // loop_footer_branch
    %2866 = sbr.rel target = $region30
  $region35: #{restnet_basic_block_forward.3} parent=0 // loop_exit
    _
  %v5713 = vld [vmem:[#allocation3] sm:$0x1]
  %v5714 = vmul.f32 %v5713, 0.001953125
  %v5715 = vld [vmem:[#allocation4] sm:$0x1]
  %v5716 = vmul.f32 %v5715, 0.001953125
  %v5717 = vmul.f32 %v5714, %v5714
  %v5718 = vsub.f32 %v5716, %v5717
  %v5719 = vld [vmem:[%s2] sm:$0x1]
  %v5720 = vadd.f32 %v5718, 1e-05
  %v5721 = vrsqrt.pop %v5720
  %v5722 = vmul.f32 %v5719, %v5721
  %v5723 = vld [vmem:[%s3] sm:$0x1]
  %v5724 = vmul.f32 %v5714, %v5722
  %v5725 = vsub.f32 %v5723, %v5724
  loop: start=0, step=1, limit=2
  $region36: #{restnet_basic_block_forward.3} parent=0 // loop_pre_header
    _
  $region37: #{restnet_basic_block_forward.3} parent=0 // loop_header
    %s5727 = sphi 0, %s5731
    %p5728 = scmp.ge.s32.totalorder %s5727, 2
  $region38: #{restnet_basic_block_forward.3} parent=0 // loop_header_branch
    %5730 = sbr.rel (%p5728) target = $region42
  $region39: #{restnet_basic_block_forward.3} parent=0 // loop_body
    %s5732 = smul.u32 %s5727, 8
    %s5733 = smul.u32 %s5732, 16
    %s5734 = scalar_lea.vmem [#allocation2], %s5733
    %v5735 = vld [vmem:[%s5734] sm:$0xff]
    %v5736 = vld [vmem:[%s5734 + $0x8] sm:$0xff]
    %v5737 = vld [vmem:[%s5734 + $0x10] sm:$0xff]
    %v5738 = vld [vmem:[%s5734 + $0x18] sm:$0xff]
    %v5739 = vld [vmem:[%s5734 + $0x20] sm:$0xff]
    %v5740 = vld [vmem:[%s5734 + $0x28] sm:$0xff]
    %v5741 = vld [vmem:[%s5734 + $0x30] sm:$0xff]
    %v5742 = vld [vmem:[%s5734 + $0x38] sm:$0xff]
    %v5743 = vld [vmem:[%s5734 + $0x40] sm:$0xff]
    %v5744 = vld [vmem:[%s5734 + $0x48] sm:$0xff]
    %v5745 = vld [vmem:[%s5734 + $0x50] sm:$0xff]
    %v5746 = vld [vmem:[%s5734 + $0x58] sm:$0xff]
    %v5747 = vld [vmem:[%s5734 + $0x60] sm:$0xff]
    %v5748 = vld [vmem:[%s5734 + $0x68] sm:$0xff]
    %v5749 = vld [vmem:[%s5734 + $0x70] sm:$0xff]
    %v5750 = vld [vmem:[%s5734 + $0x78] sm:$0xff]
    %v5752 = vlaneseq
    %v5753 = vshrl.u32 %v5752, 7
    %v5754 = vsub.s32 0, %v5753
    %v5755 = vrot.slane %v5722, %v5754
    %v5757 = vmul.f32 %v5735, %v5755
    %v5758 = vmul.f32 %v5736, %v5755
    %v5759 = vmul.f32 %v5737, %v5755
    %v5760 = vmul.f32 %v5738, %v5755
    %v5761 = vmul.f32 %v5739, %v5755
    %v5762 = vmul.f32 %v5740, %v5755
    %v5763 = vmul.f32 %v5741, %v5755
    %v5764 = vmul.f32 %v5742, %v5755
    %v5765 = vmul.f32 %v5743, %v5755
    %v5766 = vmul.f32 %v5744, %v5755
    %v5767 = vmul.f32 %v5745, %v5755
    %v5768 = vmul.f32 %v5746, %v5755
    %v5769 = vmul.f32 %v5747, %v5755
    %v5770 = vmul.f32 %v5748, %v5755
    %v5771 = vmul.f32 %v5749, %v5755
    %v5772 = vmul.f32 %v5750, %v5755
    %v5774 = vlaneseq
    %v5775 = vshrl.u32 %v5774, 7
    %v5776 = vsub.s32 0, %v5775
    %v5777 = vrot.slane %v5725, %v5776
    %v5779 = vadd.f32 %v5757, %v5777
    %v5780 = vadd.f32 %v5758, %v5777
    %v5781 = vadd.f32 %v5759, %v5777
    %v5782 = vadd.f32 %v5760, %v5777
    %v5783 = vadd.f32 %v5761, %v5777
    %v5784 = vadd.f32 %v5762, %v5777
    %v5785 = vadd.f32 %v5763, %v5777
    %v5786 = vadd.f32 %v5764, %v5777
    %v5787 = vadd.f32 %v5765, %v5777
    %v5788 = vadd.f32 %v5766, %v5777
    %v5789 = vadd.f32 %v5767, %v5777
    %v5790 = vadd.f32 %v5768, %v5777
    %v5791 = vadd.f32 %v5769, %v5777
    %v5792 = vadd.f32 %v5770, %v5777
    %v5793 = vadd.f32 %v5771, %v5777
    %v5794 = vadd.f32 %v5772, %v5777
    %s5795 = smul.u32 %s5732, 2
    %s5796 = smul.addr %s5795, 4
    %s5797 = scalar_lea.vmem %s4, %s5796
    %v5798 = vld [vmem:[%s5797] sm:$0xf]
    %v5799 = vld [vmem:[%s5797 + $0x4] sm:$0xf]
    %v5800 = vld [vmem:[%s5797 + $0x8] sm:$0xf]
    %v5801 = vld [vmem:[%s5797 + $0xc] sm:$0xf]
    %v5802 = vld [vmem:[%s5797 + $0x10] sm:$0xf]
    %v5803 = vld [vmem:[%s5797 + $0x14] sm:$0xf]
    %v5804 = vld [vmem:[%s5797 + $0x18] sm:$0xf]
    %v5805 = vld [vmem:[%s5797 + $0x1c] sm:$0xf]
    %v5806 = vld [vmem:[%s5797 + $0x20] sm:$0xf]
    %v5807 = vld [vmem:[%s5797 + $0x24] sm:$0xf]
    %v5808 = vld [vmem:[%s5797 + $0x28] sm:$0xf]
    %v5809 = vld [vmem:[%s5797 + $0x2c] sm:$0xf]
    %v5810 = vld [vmem:[%s5797 + $0x30] sm:$0xf]
    %v5811 = vld [vmem:[%s5797 + $0x34] sm:$0xf]
    %v5812 = vld [vmem:[%s5797 + $0x38] sm:$0xf]
    %v5813 = vld [vmem:[%s5797 + $0x3c] sm:$0xf]
    %v5814 = vunpack.c.l.bf16 %v5798
    %v5815 = vunpack.c.l.bf16 %v5799
    %v5816 = vunpack.c.l.bf16 %v5800
    %v5817 = vunpack.c.l.bf16 %v5801
    %v5818 = vunpack.c.l.bf16 %v5802
    %v5819 = vunpack.c.l.bf16 %v5803
    %v5820 = vunpack.c.l.bf16 %v5804
    %v5821 = vunpack.c.l.bf16 %v5805
    %v5822 = vunpack.c.l.bf16 %v5806
    %v5823 = vunpack.c.l.bf16 %v5807
    %v5824 = vunpack.c.l.bf16 %v5808
    %v5825 = vunpack.c.l.bf16 %v5809
    %v5826 = vunpack.c.l.bf16 %v5810
    %v5827 = vunpack.c.l.bf16 %v5811
    %v5828 = vunpack.c.l.bf16 %v5812
    %v5829 = vunpack.c.l.bf16 %v5813
    %v5830 = vadd.f32 %v5779, %v5814
    %v5831 = vadd.f32 %v5780, %v5815
    %v5832 = vadd.f32 %v5781, %v5816
    %v5833 = vadd.f32 %v5782, %v5817
    %v5834 = vadd.f32 %v5783, %v5818
    %v5835 = vadd.f32 %v5784, %v5819
    %v5836 = vadd.f32 %v5785, %v5820
    %v5837 = vadd.f32 %v5786, %v5821
    %v5838 = vadd.f32 %v5787, %v5822
    %v5839 = vadd.f32 %v5788, %v5823
    %v5840 = vadd.f32 %v5789, %v5824
    %v5841 = vadd.f32 %v5790, %v5825
    %v5842 = vadd.f32 %v5791, %v5826
    %v5843 = vadd.f32 %v5792, %v5827
    %v5844 = vadd.f32 %v5793, %v5828
    %v5845 = vadd.f32 %v5794, %v5829
    %v5846 = vmax.f32 %v5830, 0.0
    %v5847 = vmax.f32 %v5831, 0.0
    %v5848 = vmax.f32 %v5832, 0.0
    %v5849 = vmax.f32 %v5833, 0.0
    %v5850 = vmax.f32 %v5834, 0.0
    %v5851 = vmax.f32 %v5835, 0.0
    %v5852 = vmax.f32 %v5836, 0.0
    %v5853 = vmax.f32 %v5837, 0.0
    %v5854 = vmax.f32 %v5838, 0.0
    %v5855 = vmax.f32 %v5839, 0.0
    %v5856 = vmax.f32 %v5840, 0.0
    %v5857 = vmax.f32 %v5841, 0.0
    %v5858 = vmax.f32 %v5842, 0.0
    %v5859 = vmax.f32 %v5843, 0.0
    %v5860 = vmax.f32 %v5844, 0.0
    %v5861 = vmax.f32 %v5845, 0.0
    %s5862 = scalar_lea.vmem %s5, %s5733
    %5863 = vst [vmem:[%s5862] sm:$0xff] %v5846
    %5864 = vst [vmem:[%s5862 + $0x8] sm:$0xff] %v5847
    %5865 = vst [vmem:[%s5862 + $0x10] sm:$0xff] %v5848
    %5866 = vst [vmem:[%s5862 + $0x18] sm:$0xff] %v5849
    %5867 = vst [vmem:[%s5862 + $0x20] sm:$0xff] %v5850
    %5868 = vst [vmem:[%s5862 + $0x28] sm:$0xff] %v5851
    %5869 = vst [vmem:[%s5862 + $0x30] sm:$0xff] %v5852
    %5870 = vst [vmem:[%s5862 + $0x38] sm:$0xff] %v5853
    %5871 = vst [vmem:[%s5862 + $0x40] sm:$0xff] %v5854
    %5872 = vst [vmem:[%s5862 + $0x48] sm:$0xff] %v5855
    %5873 = vst [vmem:[%s5862 + $0x50] sm:$0xff] %v5856
    %5874 = vst [vmem:[%s5862 + $0x58] sm:$0xff] %v5857
    %5875 = vst [vmem:[%s5862 + $0x60] sm:$0xff] %v5858
    %5876 = vst [vmem:[%s5862 + $0x68] sm:$0xff] %v5859
    %5877 = vst [vmem:[%s5862 + $0x70] sm:$0xff] %v5860
    %5878 = vst [vmem:[%s5862 + $0x78] sm:$0xff] %v5861
  $region40: #{restnet_basic_block_forward.3} parent=0 // loop_footer
    %s5731 = sadd.s32 1, %s5727
  $region41: #{restnet_basic_block_forward.3} parent=0 // loop_footer_branch
    %5726 = sbr.rel target = $region37
  $region42: #{restnet_basic_block_forward.3} parent=0 // loop_exit
    _
  loop: start=0, step=1, limit=2
  $region43: #{restnet_basic_block_forward.3} parent=0 // loop_pre_header
    _
  $region44: #{restnet_basic_block_forward.3} parent=0 // loop_header
    %s5880 = sphi 0, %s5884
    %p5881 = scmp.ge.s32.totalorder %s5880, 2
  $region45: #{restnet_basic_block_forward.3} parent=0 // loop_header_branch
    %5883 = sbr.rel (%p5881) target = $region49
  $region46: #{restnet_basic_block_forward.3} parent=0 // loop_body
    %s5885 = smul.u32 %s5880, 8
    %s5886 = smul.u32 %s5885, 16
    %s5887 = sadd.s32 %s5886, 256
    %s5888 = scalar_lea.vmem [#allocation2], %s5887
    %v5889 = vld [vmem:[%s5888] sm:$0xff]
    %v5890 = vld [vmem:[%s5888 + $0x8] sm:$0xff]
    %v5891 = vld [vmem:[%s5888 + $0x10] sm:$0xff]
    %v5892 = vld [vmem:[%s5888 + $0x18] sm:$0xff]
    %v5893 = vld [vmem:[%s5888 + $0x20] sm:$0xff]
    %v5894 = vld [vmem:[%s5888 + $0x28] sm:$0xff]
    %v5895 = vld [vmem:[%s5888 + $0x30] sm:$0xff]
    %v5896 = vld [vmem:[%s5888 + $0x38] sm:$0xff]
    %v5897 = vld [vmem:[%s5888 + $0x40] sm:$0xff]
    %v5898 = vld [vmem:[%s5888 + $0x48] sm:$0xff]
    %v5899 = vld [vmem:[%s5888 + $0x50] sm:$0xff]
    %v5900 = vld [vmem:[%s5888 + $0x58] sm:$0xff]
    %v5901 = vld [vmem:[%s5888 + $0x60] sm:$0xff]
    %v5902 = vld [vmem:[%s5888 + $0x68] sm:$0xff]
    %v5903 = vld [vmem:[%s5888 + $0x70] sm:$0xff]
    %v5904 = vld [vmem:[%s5888 + $0x78] sm:$0xff]
    %v5906 = vlaneseq
    %v5907 = vshrl.u32 %v5906, 7
    %v5908 = vsub.s32 0, %v5907
    %v5909 = vrot.slane %v5722, %v5908
    %v5911 = vmul.f32 %v5889, %v5909
    %v5912 = vmul.f32 %v5890, %v5909
    %v5913 = vmul.f32 %v5891, %v5909
    %v5914 = vmul.f32 %v5892, %v5909
    %v5915 = vmul.f32 %v5893, %v5909
    %v5916 = vmul.f32 %v5894, %v5909
    %v5917 = vmul.f32 %v5895, %v5909
    %v5918 = vmul.f32 %v5896, %v5909
    %v5919 = vmul.f32 %v5897, %v5909
    %v5920 = vmul.f32 %v5898, %v5909
    %v5921 = vmul.f32 %v5899, %v5909
    %v5922 = vmul.f32 %v5900, %v5909
    %v5923 = vmul.f32 %v5901, %v5909
    %v5924 = vmul.f32 %v5902, %v5909
    %v5925 = vmul.f32 %v5903, %v5909
    %v5926 = vmul.f32 %v5904, %v5909
    %v5928 = vlaneseq
    %v5929 = vshrl.u32 %v5928, 7
    %v5930 = vsub.s32 0, %v5929
    %v5931 = vrot.slane %v5725, %v5930
    %v5933 = vadd.f32 %v5911, %v5931
    %v5934 = vadd.f32 %v5912, %v5931
    %v5935 = vadd.f32 %v5913, %v5931
    %v5936 = vadd.f32 %v5914, %v5931
    %v5937 = vadd.f32 %v5915, %v5931
    %v5938 = vadd.f32 %v5916, %v5931
    %v5939 = vadd.f32 %v5917, %v5931
    %v5940 = vadd.f32 %v5918, %v5931
    %v5941 = vadd.f32 %v5919, %v5931
    %v5942 = vadd.f32 %v5920, %v5931
    %v5943 = vadd.f32 %v5921, %v5931
    %v5944 = vadd.f32 %v5922, %v5931
    %v5945 = vadd.f32 %v5923, %v5931
    %v5946 = vadd.f32 %v5924, %v5931
    %v5947 = vadd.f32 %v5925, %v5931
    %v5948 = vadd.f32 %v5926, %v5931
    %s5949 = smul.u32 %s5885, 2
    %s5950 = sadd.s32 %s5949, 32
    %s5951 = smul.addr %s5950, 4
    %s5952 = scalar_lea.vmem %s4, %s5951
    %v5953 = vld [vmem:[%s5952] sm:$0xf]
    %v5954 = vld [vmem:[%s5952 + $0x4] sm:$0xf]
    %v5955 = vld [vmem:[%s5952 + $0x8] sm:$0xf]
    %v5956 = vld [vmem:[%s5952 + $0xc] sm:$0xf]
    %v5957 = vld [vmem:[%s5952 + $0x10] sm:$0xf]
    %v5958 = vld [vmem:[%s5952 + $0x14] sm:$0xf]
    %v5959 = vld [vmem:[%s5952 + $0x18] sm:$0xf]
    %v5960 = vld [vmem:[%s5952 + $0x1c] sm:$0xf]
    %v5961 = vld [vmem:[%s5952 + $0x20] sm:$0xf]
    %v5962 = vld [vmem:[%s5952 + $0x24] sm:$0xf]
    %v5963 = vld [vmem:[%s5952 + $0x28] sm:$0xf]
    %v5964 = vld [vmem:[%s5952 + $0x2c] sm:$0xf]
    %v5965 = vld [vmem:[%s5952 + $0x30] sm:$0xf]
    %v5966 = vld [vmem:[%s5952 + $0x34] sm:$0xf]
    %v5967 = vld [vmem:[%s5952 + $0x38] sm:$0xf]
    %v5968 = vld [vmem:[%s5952 + $0x3c] sm:$0xf]
    %v5969 = vunpack.c.l.bf16 %v5953
    %v5970 = vunpack.c.l.bf16 %v5954
    %v5971 = vunpack.c.l.bf16 %v5955
    %v5972 = vunpack.c.l.bf16 %v5956
    %v5973 = vunpack.c.l.bf16 %v5957
    %v5974 = vunpack.c.l.bf16 %v5958
    %v5975 = vunpack.c.l.bf16 %v5959
    %v5976 = vunpack.c.l.bf16 %v5960
    %v5977 = vunpack.c.l.bf16 %v5961
    %v5978 = vunpack.c.l.bf16 %v5962
    %v5979 = vunpack.c.l.bf16 %v5963
    %v5980 = vunpack.c.l.bf16 %v5964
    %v5981 = vunpack.c.l.bf16 %v5965
    %v5982 = vunpack.c.l.bf16 %v5966
    %v5983 = vunpack.c.l.bf16 %v5967
    %v5984 = vunpack.c.l.bf16 %v5968
    %v5985 = vadd.f32 %v5933, %v5969
    %v5986 = vadd.f32 %v5934, %v5970
    %v5987 = vadd.f32 %v5935, %v5971
    %v5988 = vadd.f32 %v5936, %v5972
    %v5989 = vadd.f32 %v5937, %v5973
    %v5990 = vadd.f32 %v5938, %v5974
    %v5991 = vadd.f32 %v5939, %v5975
    %v5992 = vadd.f32 %v5940, %v5976
    %v5993 = vadd.f32 %v5941, %v5977
    %v5994 = vadd.f32 %v5942, %v5978
    %v5995 = vadd.f32 %v5943, %v5979
    %v5996 = vadd.f32 %v5944, %v5980
    %v5997 = vadd.f32 %v5945, %v5981
    %v5998 = vadd.f32 %v5946, %v5982
    %v5999 = vadd.f32 %v5947, %v5983
    %v6000 = vadd.f32 %v5948, %v5984
    %v6001 = vmax.f32 %v5985, 0.0
    %v6002 = vmax.f32 %v5986, 0.0
    %v6003 = vmax.f32 %v5987, 0.0
    %v6004 = vmax.f32 %v5988, 0.0
    %v6005 = vmax.f32 %v5989, 0.0
    %v6006 = vmax.f32 %v5990, 0.0
    %v6007 = vmax.f32 %v5991, 0.0
    %v6008 = vmax.f32 %v5992, 0.0
    %v6009 = vmax.f32 %v5993, 0.0
    %v6010 = vmax.f32 %v5994, 0.0
    %v6011 = vmax.f32 %v5995, 0.0
    %v6012 = vmax.f32 %v5996, 0.0
    %v6013 = vmax.f32 %v5997, 0.0
    %v6014 = vmax.f32 %v5998, 0.0
    %v6015 = vmax.f32 %v5999, 0.0
    %v6016 = vmax.f32 %v6000, 0.0
    %s6017 = scalar_lea.vmem %s5, %s5887
    %6018 = vst [vmem:[%s6017] sm:$0xff] %v6001
    %6019 = vst [vmem:[%s6017 + $0x8] sm:$0xff] %v6002
    %6020 = vst [vmem:[%s6017 + $0x10] sm:$0xff] %v6003
    %6021 = vst [vmem:[%s6017 + $0x18] sm:$0xff] %v6004
    %6022 = vst [vmem:[%s6017 + $0x20] sm:$0xff] %v6005
    %6023 = vst [vmem:[%s6017 + $0x28] sm:$0xff] %v6006
    %6024 = vst [vmem:[%s6017 + $0x30] sm:$0xff] %v6007
    %6025 = vst [vmem:[%s6017 + $0x38] sm:$0xff] %v6008
    %6026 = vst [vmem:[%s6017 + $0x40] sm:$0xff] %v6009
    %6027 = vst [vmem:[%s6017 + $0x48] sm:$0xff] %v6010
    %6028 = vst [vmem:[%s6017 + $0x50] sm:$0xff] %v6011
    %6029 = vst [vmem:[%s6017 + $0x58] sm:$0xff] %v6012
    %6030 = vst [vmem:[%s6017 + $0x60] sm:$0xff] %v6013
    %6031 = vst [vmem:[%s6017 + $0x68] sm:$0xff] %v6014
    %6032 = vst [vmem:[%s6017 + $0x70] sm:$0xff] %v6015
    %6033 = vst [vmem:[%s6017 + $0x78] sm:$0xff] %v6016
  $region47: #{restnet_basic_block_forward.3} parent=0 // loop_footer
    %s5884 = sadd.s32 1, %s5880
  $region48: #{restnet_basic_block_forward.3} parent=0 // loop_footer_branch
    %5879 = sbr.rel target = $region44
  $region49: #{restnet_basic_block_forward.3} parent=0 // loop_exit
    _
  // Predicated region
  $region50: #{restnet_basic_block_forward.3} parent=0 // pred_check
    _
  $region51: #{restnet_basic_block_forward.3} parent=0 // pred_check_branch
    %6035 = sbr.rel (0) target = $region53
  $region52: #{restnet_basic_block_forward.3} parent=0 // pred_region
    _
  $region53: #{restnet_basic_block_forward.3} parent=0 // pred_fallthru
    _
  // Predicated region
  $region54: #{restnet_basic_block_forward.3} parent=0 // pred_check
    _
  $region55: #{restnet_basic_block_forward.3} parent=0 // pred_check_branch
    %6037 = sbr.rel (0) target = $region57
  $region56: #{restnet_basic_block_forward.3} parent=0 // pred_region
    _
  $region57: #{restnet_basic_block_forward.3} parent=0 // pred_fallthru
    _

// kernel: restnet_basic_block_forward.2
$region0: #{restnet_basic_block_forward.2}
  #allocation0 [shape = 'u32[]', space=smem, size = 0x4, offset = 0x4, fixed_abs, tag = 'smem constant byte address 0x4 - core index']
  #allocation1 [shape = 'u32[144,128]{1,0:T(1,128)}', space=vmem, size = 0x12000, scoped, tag = 'internal scratch']
  #allocation2 [shape = 'f32[2,16,16,128]{3,2,1,0:T(8,128)}', space=vmem, size = 0x40000, scoped, tag = 'scratch operand']
  #allocation3 [shape = 'f32[1,128]{1,0:T(1,128)}', space=vmem, size = 0x200, scoped, tag = 'scratch operand']
  #allocation4 [shape = 'f32[1,128]{1,0:T(1,128)}', space=vmem, size = 0x200, scoped, tag = 'scratch operand']
  %s0 = inlined_call_operand.vmem [shape: bf16[2,18,18,128], index: 0, kind: input, shape index: {}]
  %s1 = inlined_call_operand.vmem [shape: bf16[1152,128], index: 1, kind: input, shape index: {}]
  %s2 = inlined_call_operand.vmem [shape: f32[1,128], index: 2, kind: input, shape index: {}]
  %s3 = inlined_call_operand.vmem [shape: f32[1,128], index: 3, kind: input, shape index: {}]
  %s4 = inlined_call_operand.vmem [shape: bf16[2,16,16,128], index: 4, kind: output, shape index: {}]
  %s5 = sld [smem:[#allocation0]]
  $region54: #{restnet_basic_block_forward.2} parent=0
    _
  %s7 = ssub.s32 1, %s5
  %s8 = scalar_select 0, %s7, %s5
  // Predicated region
  $region2: #{restnet_basic_block_forward.2} parent=0 // pred_check
    _
  $region3: #{restnet_basic_block_forward.2} parent=0 // pred_check_branch
    %10 = sbr.rel (0) target = $region5
  $region4: #{restnet_basic_block_forward.2} parent=0 // pred_region
    _
  $region5: #{restnet_basic_block_forward.2} parent=0 // pred_fallthru
    _
  // Predicated region
  $region6: #{restnet_basic_block_forward.2} parent=0 // pred_check
    _
  $region7: #{restnet_basic_block_forward.2} parent=0 // pred_check_branch
    %12 = sbr.rel (0) target = $region9
  $region8: #{restnet_basic_block_forward.2} parent=0 // pred_region
    _
  $region9: #{restnet_basic_block_forward.2} parent=0 // pred_fallthru
    _
  // Predicated region
  $region10: #{restnet_basic_block_forward.2} parent=0 // pred_check
    _
  $region11: #{restnet_basic_block_forward.2} parent=0 // pred_check_branch
    %14 = sbr.rel (0) target = $region13
  $region12: #{restnet_basic_block_forward.2} parent=0 // pred_region
    _
  $region13: #{restnet_basic_block_forward.2} parent=0 // pred_fallthru
    _
  // Predicated region
  $region14: #{restnet_basic_block_forward.2} parent=0 // pred_check
    _
  $region15: #{restnet_basic_block_forward.2} parent=0 // pred_check_branch
    %16 = sbr.rel (0) target = $region17
  $region16: #{restnet_basic_block_forward.2} parent=0 // pred_region
    _
  $region17: #{restnet_basic_block_forward.2} parent=0 // pred_fallthru
    _
  %18 = vst [vmem:[#allocation3] sm:$0x1] 0.0
  %19 = vst [vmem:[#allocation4] sm:$0x1] 0.0
  loop: start=0, step=1, limit=2
  $region18: #{restnet_basic_block_forward.2} parent=0 // loop_pre_header
    _
  $region19: #{restnet_basic_block_forward.2} parent=0 // loop_header
    %s21 = sphi 0, %s25
    %p22 = scmp.ge.s32.totalorder %s21, 2
  $region20: #{restnet_basic_block_forward.2} parent=0 // loop_header_branch
    %24 = sbr.rel (%p22) target = $region24
  $region21: #{restnet_basic_block_forward.2} parent=0 // loop_body
    %s26 = smul.u32 %s21, 8
    %s27 = smul.u32 %s26, 3
    %s28 = smul.addr %s27, 4
    %s29 = scalar_lea.vmem %s0, %s28
    %v30 = vld [vmem:[%s29] sm:$0xf]
    %v31 = vld [vmem:[%s29 + $0x4] sm:$0xf]
    %v32 = vld [vmem:[%s29 + $0x8] sm:$0x1]
    %v33 = vld [vmem:[%s29 + $0xc] sm:$0xf]
    %v34 = vld [vmem:[%s29 + $0x10] sm:$0xf]
    %v35 = vld [vmem:[%s29 + $0x14] sm:$0x1]
    %v36 = vld [vmem:[%s29 + $0x18] sm:$0xf]
    %v37 = vld [vmem:[%s29 + $0x1c] sm:$0xf]
    %v38 = vld [vmem:[%s29 + $0x20] sm:$0x1]
    %v39 = vld [vmem:[%s29 + $0x24] sm:$0xf]
    %v40 = vld [vmem:[%s29 + $0x28] sm:$0xf]
    %v41 = vld [vmem:[%s29 + $0x2c] sm:$0x1]
    %v42 = vld [vmem:[%s29 + $0x30] sm:$0xf]
    %v43 = vld [vmem:[%s29 + $0x34] sm:$0xf]
    %v44 = vld [vmem:[%s29 + $0x38] sm:$0x1]
    %v45 = vld [vmem:[%s29 + $0x3c] sm:$0xf]
    %v46 = vld [vmem:[%s29 + $0x40] sm:$0xf]
    %v47 = vld [vmem:[%s29 + $0x44] sm:$0x1]
    %v48 = vld [vmem:[%s29 + $0x48] sm:$0xf]
    %v49 = vld [vmem:[%s29 + $0x4c] sm:$0xf]
    %v50 = vld [vmem:[%s29 + $0x50] sm:$0x1]
    %v51 = vld [vmem:[%s29 + $0x54] sm:$0xf]
    %v52 = vld [vmem:[%s29 + $0x58] sm:$0xf]
    %v53 = vld [vmem:[%s29 + $0x5c] sm:$0x1]
    %v54 = vld [vmem:[%s1] sm:$0xf]
    %v55 = vld [vmem:[%s1 + $0x4] sm:$0xf]
    %v56 = vld [vmem:[%s1 + $0x8] sm:$0xf]
    %v57 = vld [vmem:[%s1 + $0xc] sm:$0xf]
    %v58 = vld [vmem:[%s1 + $0x10] sm:$0xf]
    %v59 = vld [vmem:[%s1 + $0x14] sm:$0xf]
    %v60 = vld [vmem:[%s1 + $0x18] sm:$0xf]
    %v61 = vld [vmem:[%s1 + $0x1c] sm:$0xf]
    %v62 = vld [vmem:[%s1 + $0x20] sm:$0xf]
    %v63 = vld [vmem:[%s1 + $0x24] sm:$0xf]
    %v64 = vld [vmem:[%s1 + $0x28] sm:$0xf]
    %v65 = vld [vmem:[%s1 + $0x2c] sm:$0xf]
    %v66 = vld [vmem:[%s1 + $0x30] sm:$0xf]
    %v67 = vld [vmem:[%s1 + $0x34] sm:$0xf]
    %v68 = vld [vmem:[%s1 + $0x38] sm:$0xf]
    %v69 = vld [vmem:[%s1 + $0x3c] sm:$0xf]
    %vm70 = vsmask.f32 3328
    %vm71 = vsmask.f32 7440
    %vm72 = vmor %vm70, %vm71
    %v74 = vshrl.u32 %v30, 16
    %v76 = vrot.slane %v74, 4
    %v77 = vshll.u32 %v30, 16
    %v79 = vrot.slane %v77, 5
    %v80 = vor.u32 %v76, %v79
    %v81 = vrot.slane %v80, 4
    %v83 = vshll.u32 %v31, 16
    %v85 = vrot.slane %v83, 5
    %v86 = vsel %vm72, %v81, %v85
    %v87 = vshrl.u32 %v31, 16
    %v89 = vrot.slane %v87, 4
    %v90 = vor.u32 %v89, %v85
    %v91 = vrot.slane %v90, 4
    %v93 = vshll.u32 %v32, 16
    %v95 = vrot.slane %v93, 5
    %v96 = vsel %vm72, %v91, %v95
    %v98 = vshrl.u32 %v33, 16
    %v100 = vrot.slane %v98, 4
    %v101 = vshll.u32 %v33, 16
    %v103 = vrot.slane %v101, 5
    %v104 = vor.u32 %v100, %v103
    %v105 = vrot.slane %v104, 4
    %v107 = vshll.u32 %v34, 16
    %v109 = vrot.slane %v107, 5
    %v110 = vsel %vm72, %v105, %v109
    %v111 = vshrl.u32 %v34, 16
    %v113 = vrot.slane %v111, 4
    %v114 = vor.u32 %v113, %v109
    %v115 = vrot.slane %v114, 4
    %v117 = vshll.u32 %v35, 16
    %v119 = vrot.slane %v117, 5
    %v120 = vsel %vm72, %v115, %v119
    %v122 = vshrl.u32 %v36, 16
    %v124 = vrot.slane %v122, 4
    %v125 = vshll.u32 %v36, 16
    %v127 = vrot.slane %v125, 5
    %v128 = vor.u32 %v124, %v127
    %v129 = vrot.slane %v128, 4
    %v131 = vshll.u32 %v37, 16
    %v133 = vrot.slane %v131, 5
    %v134 = vsel %vm72, %v129, %v133
    %v135 = vshrl.u32 %v37, 16
    %v137 = vrot.slane %v135, 4
    %v138 = vor.u32 %v137, %v133
    %v139 = vrot.slane %v138, 4
    %v141 = vshll.u32 %v38, 16
    %v143 = vrot.slane %v141, 5
    %v144 = vsel %vm72, %v139, %v143
    %v146 = vshrl.u32 %v39, 16
    %v148 = vrot.slane %v146, 4
    %v149 = vshll.u32 %v39, 16
    %v151 = vrot.slane %v149, 5
    %v152 = vor.u32 %v148, %v151
    %v153 = vrot.slane %v152, 4
    %v155 = vshll.u32 %v40, 16
    %v157 = vrot.slane %v155, 5
    %v158 = vsel %vm72, %v153, %v157
    %v159 = vshrl.u32 %v40, 16
    %v161 = vrot.slane %v159, 4
    %v162 = vor.u32 %v161, %v157
    %v163 = vrot.slane %v162, 4
    %v165 = vshll.u32 %v41, 16
    %v167 = vrot.slane %v165, 5
    %v168 = vsel %vm72, %v163, %v167
    %v170 = vshrl.u32 %v42, 16
    %v172 = vrot.slane %v170, 4
    %v173 = vshll.u32 %v42, 16
    %v175 = vrot.slane %v173, 5
    %v176 = vor.u32 %v172, %v175
    %v177 = vrot.slane %v176, 4
    %v179 = vshll.u32 %v43, 16
    %v181 = vrot.slane %v179, 5
    %v182 = vsel %vm72, %v177, %v181
    %v183 = vshrl.u32 %v43, 16
    %v185 = vrot.slane %v183, 4
    %v186 = vor.u32 %v185, %v181
    %v187 = vrot.slane %v186, 4
    %v189 = vshll.u32 %v44, 16
    %v191 = vrot.slane %v189, 5
    %v192 = vsel %vm72, %v187, %v191
    %v194 = vshrl.u32 %v45, 16
    %v196 = vrot.slane %v194, 4
    %v197 = vshll.u32 %v45, 16
    %v199 = vrot.slane %v197, 5
    %v200 = vor.u32 %v196, %v199
    %v201 = vrot.slane %v200, 4
    %v203 = vshll.u32 %v46, 16
    %v205 = vrot.slane %v203, 5
    %v206 = vsel %vm72, %v201, %v205
    %v207 = vshrl.u32 %v46, 16
    %v209 = vrot.slane %v207, 4
    %v210 = vor.u32 %v209, %v205
    %v211 = vrot.slane %v210, 4
    %v213 = vshll.u32 %v47, 16
    %v215 = vrot.slane %v213, 5
    %v216 = vsel %vm72, %v211, %v215
    %v218 = vshrl.u32 %v48, 16
    %v220 = vrot.slane %v218, 4
    %v221 = vshll.u32 %v48, 16
    %v223 = vrot.slane %v221, 5
    %v224 = vor.u32 %v220, %v223
    %v225 = vrot.slane %v224, 4
    %v227 = vshll.u32 %v49, 16
    %v229 = vrot.slane %v227, 5
    %v230 = vsel %vm72, %v225, %v229
    %v231 = vshrl.u32 %v49, 16
    %v233 = vrot.slane %v231, 4
    %v234 = vor.u32 %v233, %v229
    %v235 = vrot.slane %v234, 4
    %v237 = vshll.u32 %v50, 16
    %v239 = vrot.slane %v237, 5
    %v240 = vsel %vm72, %v235, %v239
    %v242 = vshrl.u32 %v51, 16
    %v244 = vrot.slane %v242, 4
    %v245 = vshll.u32 %v51, 16
    %v247 = vrot.slane %v245, 5
    %v248 = vor.u32 %v244, %v247
    %v249 = vrot.slane %v248, 4
    %v251 = vshll.u32 %v52, 16
    %v253 = vrot.slane %v251, 5
    %v254 = vsel %vm72, %v249, %v253
    %v255 = vshrl.u32 %v52, 16
    %v257 = vrot.slane %v255, 4
    %v258 = vor.u32 %v257, %v253
    %v259 = vrot.slane %v258, 4
    %v261 = vshll.u32 %v53, 16
    %v263 = vrot.slane %v261, 5
    %v264 = vsel %vm72, %v259, %v263
    %v265 = vld [vmem:[%s1 + $0x40] sm:$0xf]
    %v266 = vld [vmem:[%s1 + $0x44] sm:$0xf]
    %v267 = vld [vmem:[%s1 + $0x48] sm:$0xf]
    %v268 = vld [vmem:[%s1 + $0x4c] sm:$0xf]
    %v269 = vld [vmem:[%s1 + $0x50] sm:$0xf]
    %v270 = vld [vmem:[%s1 + $0x54] sm:$0xf]
    %v271 = vld [vmem:[%s1 + $0x58] sm:$0xf]
    %v272 = vld [vmem:[%s1 + $0x5c] sm:$0xf]
    %v273 = vld [vmem:[%s1 + $0x60] sm:$0xf]
    %v274 = vld [vmem:[%s1 + $0x64] sm:$0xf]
    %v275 = vld [vmem:[%s1 + $0x68] sm:$0xf]
    %v276 = vld [vmem:[%s1 + $0x6c] sm:$0xf]
    %v277 = vld [vmem:[%s1 + $0x70] sm:$0xf]
    %v278 = vld [vmem:[%s1 + $0x74] sm:$0xf]
    %v279 = vld [vmem:[%s1 + $0x78] sm:$0xf]
    %v280 = vld [vmem:[%s1 + $0x7c] sm:$0xf]
    %v281 = vunpack.c.l.b16 %v86
    %v282 = vunpack.c.l.b16 %v96
    %v283 = vunpack.c.l.b16 %v110
    %v284 = vunpack.c.l.b16 %v120
    %v285 = vunpack.c.l.b16 %v134
    %v286 = vunpack.c.l.b16 %v144
    %v287 = vunpack.c.l.b16 %v158
    %v288 = vunpack.c.l.b16 %v168
    %v289 = vunpack.c.l.b16 %v182
    %v290 = vunpack.c.l.b16 %v192
    %v291 = vunpack.c.l.b16 %v206
    %v292 = vunpack.c.l.b16 %v216
    %v293 = vunpack.c.l.b16 %v230
    %v294 = vunpack.c.l.b16 %v240
    %v295 = vunpack.c.l.b16 %v254
    %v296 = vunpack.c.l.b16 %v264
    %v297 = vpack.c.b16 %v282, %v281
    %v298 = vpack.c.b16 %v284, %v283
    %v299 = vpack.c.b16 %v286, %v285
    %v300 = vpack.c.b16 %v288, %v287
    %v301 = vpack.c.b16 %v290, %v289
    %v302 = vpack.c.b16 %v292, %v291
    %v303 = vpack.c.b16 %v294, %v293
    %v304 = vpack.c.b16 %v296, %v295
    %v329 = vunpack.c.l.b16 %v265
    %v330 = vunpack.c.l.b16 %v266
    %v331 = vunpack.c.l.b16 %v267
    %v332 = vunpack.c.l.b16 %v268
    %v333 = vunpack.c.l.b16 %v269
    %v334 = vunpack.c.l.b16 %v270
    %v335 = vunpack.c.l.b16 %v271
    %v336 = vunpack.c.l.b16 %v272
    %v337 = vunpack.c.l.b16 %v273
    %v338 = vunpack.c.l.b16 %v274
    %v339 = vunpack.c.l.b16 %v275
    %v340 = vunpack.c.l.b16 %v276
    %v341 = vunpack.c.l.b16 %v277
    %v342 = vunpack.c.l.b16 %v278
    %v343 = vunpack.c.l.b16 %v279
    %v344 = vunpack.c.l.b16 %v280
    %v345 = vpack.c.b16 %v330, %v329
    %v346 = vpack.c.b16 %v332, %v331
    %v347 = vpack.c.b16 %v334, %v333
    %v348 = vpack.c.b16 %v336, %v335
    %v349 = vpack.c.b16 %v338, %v337
    %v350 = vpack.c.b16 %v340, %v339
    %v351 = vpack.c.b16 %v342, %v341
    %v352 = vpack.c.b16 %v344, %v343
    %361 = vmatprep.subr.bf16.mxu0 0
    %362 = vmatpush1.bf16.msra.mxu0 %v345
    %363 = vmatprep.subr.bf16.mxu0 0
    %364 = vmatpush1.bf16.msra.mxu0 %v346
    %365 = vmatprep.subr.bf16.mxu0 0
    %366 = vmatpush1.bf16.msra.mxu0 %v347
    %367 = vmatprep.subr.bf16.mxu0 0
    %368 = vmatpush1.bf16.msra.mxu0 %v348
    %369 = vmatprep.subr.bf16.mxu0 0
    %370 = vmatpush1.bf16.msra.mxu0 %v349
    %371 = vmatprep.subr.bf16.mxu0 0
    %372 = vmatpush1.bf16.msra.mxu0 %v350
    %373 = vmatprep.subr.bf16.mxu0 0
    %374 = vmatpush1.bf16.msra.mxu0 %v351
    %375 = vmatprep.subr.bf16.mxu0 0
    %376 = vmatpush1.bf16.msra.mxu0 %v352
    %377 = vmatprep.subr.bf16.mxu0 0
    %378 = vmatpush1.bf16.msra.mxu0 0
    %379 = vmatprep.subr.bf16.mxu0 0
    %380 = vmatpush1.bf16.msra.mxu0 0
    %381 = vmatprep.subr.bf16.mxu0 0
    %382 = vmatpush1.bf16.msra.mxu0 0
    %383 = vmatprep.subr.bf16.mxu0 0
    %384 = vmatpush1.bf16.msra.mxu0 0
    %385 = vmatprep.subr.bf16.mxu0 0
    %386 = vmatpush1.bf16.msra.mxu0 0
    %387 = vmatprep.subr.bf16.mxu0 0
    %388 = vmatpush1.bf16.msra.mxu0 0
    %389 = vmatprep.subr.bf16.mxu0 0
    %390 = vmatpush1.bf16.msra.mxu0 0
    %391 = vmatprep.subr.bf16.mxu0 0
    %392 = vmatpush1.bf16.msra.mxu0 0
    %393 = vmatprep.mubr.bf16.mxu0 0
    %394 = vmatmul.mubr.bf16.gmra.mrb[0].mxu0 %v297
    %v395 = vpop.f32.mrb[0].mxu0
    %v396 = vadd.f32 0.0, %v395
    %v397 = vpop.f32.mrb[0].mxu0
    %v398 = vpop.f32.mrb[0].mxu0
    %v399 = vadd.f32 0.0, %v398
    %v400 = vpop.f32.mrb[0].mxu0
    %401 = vmatprep.mubr.bf16.mxu0 0
    %402 = vmatmul.mubr.bf16.gmra.mrb[0].mxu0 %v298
    %v403 = vpop.f32.mrb[0].mxu0
    %v404 = vadd.f32 0.0, %v403
    %v405 = vpop.f32.mrb[0].mxu0
    %v406 = vpop.f32.mrb[0].mxu0
    %v407 = vadd.f32 0.0, %v406
    %v408 = vpop.f32.mrb[0].mxu0
    %409 = vmatprep.mubr.bf16.mxu0 0
    %410 = vmatmul.mubr.bf16.gmra.mrb[0].mxu0 %v299
    %v411 = vpop.f32.mrb[0].mxu0
    %v412 = vadd.f32 0.0, %v411
    %v413 = vpop.f32.mrb[0].mxu0
    %v414 = vpop.f32.mrb[0].mxu0
    %v415 = vadd.f32 0.0, %v414
    %v416 = vpop.f32.mrb[0].mxu0
    %417 = vmatprep.mubr.bf16.mxu0 0
    %418 = vmatmul.mubr.bf16.gmra.mrb[0].mxu0 %v300
    %v419 = vpop.f32.mrb[0].mxu0
    %v420 = vadd.f32 0.0, %v419
    %v421 = vpop.f32.mrb[0].mxu0
    %v422 = vpop.f32.mrb[0].mxu0
    %v423 = vadd.f32 0.0, %v422
    %v424 = vpop.f32.mrb[0].mxu0
    %425 = vmatprep.mubr.bf16.mxu0 0
    %426 = vmatmul.mubr.bf16.gmra.mrb[0].mxu0 %v301
    %v427 = vpop.f32.mrb[0].mxu0
    %v428 = vadd.f32 0.0, %v427
    %v429 = vpop.f32.mrb[0].mxu0
    %v430 = vpop.f32.mrb[0].mxu0
    %v431 = vadd.f32 0.0, %v430
    %v432 = vpop.f32.mrb[0].mxu0
    %433 = vmatprep.mubr.bf16.mxu0 0
    %434 = vmatmul.mubr.bf16.gmra.mrb[0].mxu0 %v302
    %v435 = vpop.f32.mrb[0].mxu0
    %v436 = vadd.f32 0.0, %v435
    %v437 = vpop.f32.mrb[0].mxu0
    %v438 = vpop.f32.mrb[0].mxu0
    %v439 = vadd.f32 0.0, %v438
    %v440 = vpop.f32.mrb[0].mxu0
    %441 = vmatprep.mubr.bf16.mxu0 0
    %442 = vmatmul.mubr.bf16.gmra.mrb[0].mxu0 %v303
    %v443 = vpop.f32.mrb[0].mxu0
    %v444 = vadd.f32 0.0, %v443
    %v445 = vpop.f32.mrb[0].mxu0
    %v446 = vpop.f32.mrb[0].mxu0
    %v447 = vadd.f32 0.0, %v446
    %v448 = vpop.f32.mrb[0].mxu0
    %449 = vmatprep.mubr.bf16.mxu0 0
    %450 = vmatmul.mubr.bf16.gmra.mrb[0].mxu0 %v304
    %v451 = vpop.f32.mrb[0].mxu0
    %v452 = vadd.f32 0.0, %v451
    %v453 = vpop.f32.mrb[0].mxu0
    %v454 = vpop.f32.mrb[0].mxu0
    %v455 = vadd.f32 0.0, %v454
    %v456 = vpop.f32.mrb[0].mxu0
    %457 = vdwg.mxu0
    %v474 = vunpack.c.l.b16 %v30
    %v475 = vunpack.c.l.b16 %v31
    %v476 = vunpack.c.l.b16 %v33
    %v477 = vunpack.c.l.b16 %v34
    %v478 = vunpack.c.l.b16 %v36
    %v479 = vunpack.c.l.b16 %v37
    %v480 = vunpack.c.l.b16 %v39
    %v481 = vunpack.c.l.b16 %v40
    %v482 = vunpack.c.l.b16 %v42
    %v483 = vunpack.c.l.b16 %v43
    %v484 = vunpack.c.l.b16 %v45
    %v485 = vunpack.c.l.b16 %v46
    %v486 = vunpack.c.l.b16 %v48
    %v487 = vunpack.c.l.b16 %v49
    %v488 = vunpack.c.l.b16 %v51
    %v489 = vunpack.c.l.b16 %v52
    %v490 = vpack.c.b16 %v475, %v474
    %v491 = vpack.c.b16 %v477, %v476
    %v492 = vpack.c.b16 %v479, %v478
    %v493 = vpack.c.b16 %v481, %v480
    %v494 = vpack.c.b16 %v483, %v482
    %v495 = vpack.c.b16 %v485, %v484
    %v496 = vpack.c.b16 %v487, %v486
    %v497 = vpack.c.b16 %v489, %v488
    %v522 = vunpack.c.l.b16 %v54
    %v523 = vunpack.c.l.b16 %v55
    %v524 = vunpack.c.l.b16 %v56
    %v525 = vunpack.c.l.b16 %v57
    %v526 = vunpack.c.l.b16 %v58
    %v527 = vunpack.c.l.b16 %v59
    %v528 = vunpack.c.l.b16 %v60
    %v529 = vunpack.c.l.b16 %v61
    %v530 = vunpack.c.l.b16 %v62
    %v531 = vunpack.c.l.b16 %v63
    %v532 = vunpack.c.l.b16 %v64
    %v533 = vunpack.c.l.b16 %v65
    %v534 = vunpack.c.l.b16 %v66
    %v535 = vunpack.c.l.b16 %v67
    %v536 = vunpack.c.l.b16 %v68
    %v537 = vunpack.c.l.b16 %v69
    %v538 = vpack.c.b16 %v523, %v522
    %v539 = vpack.c.b16 %v525, %v524
    %v540 = vpack.c.b16 %v527, %v526
    %v541 = vpack.c.b16 %v529, %v528
    %v542 = vpack.c.b16 %v531, %v530
    %v543 = vpack.c.b16 %v533, %v532
    %v544 = vpack.c.b16 %v535, %v534
    %v545 = vpack.c.b16 %v537, %v536
    %554 = vmatprep.subr.bf16.mxu0 0
    %555 = vmatpush1.bf16.msra.mxu0 %v538
    %556 = vmatprep.subr.bf16.mxu0 0
    %557 = vmatpush1.bf16.msra.mxu0 %v539
    %558 = vmatprep.subr.bf16.mxu0 0
    %559 = vmatpush1.bf16.msra.mxu0 %v540
    %560 = vmatprep.subr.bf16.mxu0 0
    %561 = vmatpush1.bf16.msra.mxu0 %v541
    %562 = vmatprep.subr.bf16.mxu0 0
    %563 = vmatpush1.bf16.msra.mxu0 %v542
    %564 = vmatprep.subr.bf16.mxu0 0
    %565 = vmatpush1.bf16.msra.mxu0 %v543
    %566 = vmatprep.subr.bf16.mxu0 0
    %567 = vmatpush1.bf16.msra.mxu0 %v544
    %568 = vmatprep.subr.bf16.mxu0 0
    %569 = vmatpush1.bf16.msra.mxu0 %v545
    %570 = vmatprep.subr.bf16.mxu0 0
    %571 = vmatpush1.bf16.msra.mxu0 0
    %572 = vmatprep.subr.bf16.mxu0 0
    %573 = vmatpush1.bf16.msra.mxu0 0
    %574 = vmatprep.subr.bf16.mxu0 0
    %575 = vmatpush1.bf16.msra.mxu0 0
    %576 = vmatprep.subr.bf16.mxu0 0
    %577 = vmatpush1.bf16.msra.mxu0 0
    %578 = vmatprep.subr.bf16.mxu0 0
    %579 = vmatpush1.bf16.msra.mxu0 0
    %580 = vmatprep.subr.bf16.mxu0 0
    %581 = vmatpush1.bf16.msra.mxu0 0
    %582 = vmatprep.subr.bf16.mxu0 0
    %583 = vmatpush1.bf16.msra.mxu0 0
    %584 = vmatprep.subr.bf16.mxu0 0
    %585 = vmatpush1.bf16.msra.mxu0 0
    %586 = vmatprep.mubr.bf16.mxu0 0
    %587 = vmatmul.mubr.bf16.gmra.mrb[0].mxu0 %v490
    %v588 = vpop.f32.mrb[0].mxu0
    %v589 = vadd.f32 %v396, %v588
    %v590 = vpop.f32.mrb[0].mxu0
    %v591 = vpop.f32.mrb[0].mxu0
    %v592 = vadd.f32 %v399, %v591
    %v593 = vpop.f32.mrb[0].mxu0
    %594 = vmatprep.mubr.bf16.mxu0 0
    %595 = vmatmul.mubr.bf16.gmra.mrb[0].mxu0 %v491
    %v596 = vpop.f32.mrb[0].mxu0
    %v597 = vadd.f32 %v404, %v596
    %v598 = vpop.f32.mrb[0].mxu0
    %v599 = vpop.f32.mrb[0].mxu0
    %v600 = vadd.f32 %v407, %v599
    %v601 = vpop.f32.mrb[0].mxu0
    %602 = vmatprep.mubr.bf16.mxu0 0
    %603 = vmatmul.mubr.bf16.gmra.mrb[0].mxu0 %v492
    %v604 = vpop.f32.mrb[0].mxu0
    %v605 = vadd.f32 %v412, %v604
    %v606 = vpop.f32.mrb[0].mxu0
    %v607 = vpop.f32.mrb[0].mxu0
    %v608 = vadd.f32 %v415, %v607
    %v609 = vpop.f32.mrb[0].mxu0
    %610 = vmatprep.mubr.bf16.mxu0 0
    %611 = vmatmul.mubr.bf16.gmra.mrb[0].mxu0 %v493
    %v612 = vpop.f32.mrb[0].mxu0
    %v613 = vadd.f32 %v420, %v612
    %v614 = vpop.f32.mrb[0].mxu0
    %v615 = vpop.f32.mrb[0].mxu0
    %v616 = vadd.f32 %v423, %v615
    %v617 = vpop.f32.mrb[0].mxu0
    %618 = vmatprep.mubr.bf16.mxu0 0
    %619 = vmatmul.mubr.bf16.gmra.mrb[0].mxu0 %v494
    %v620 = vpop.f32.mrb[0].mxu0
    %v621 = vadd.f32 %v428, %v620
    %v622 = vpop.f32.mrb[0].mxu0
    %v623 = vpop.f32.mrb[0].mxu0
    %v624 = vadd.f32 %v431, %v623
    %v625 = vpop.f32.mrb[0].mxu0
    %626 = vmatprep.mubr.bf16.mxu0 0
    %627 = vmatmul.mubr.bf16.gmra.mrb[0].mxu0 %v495
    %v628 = vpop.f32.mrb[0].mxu0
    %v629 = vadd.f32 %v436, %v628
    %v630 = vpop.f32.mrb[0].mxu0
    %v631 = vpop.f32.mrb[0].mxu0
    %v632 = vadd.f32 %v439, %v631
    %v633 = vpop.f32.mrb[0].mxu0
    %634 = vmatprep.mubr.bf16.mxu0 0
    %635 = vmatmul.mubr.bf16.gmra.mrb[0].mxu0 %v496
    %v636 = vpop.f32.mrb[0].mxu0
    %v637 = vadd.f32 %v444, %v636
    %v638 = vpop.f32.mrb[0].mxu0
    %v639 = vpop.f32.mrb[0].mxu0
    %v640 = vadd.f32 %v447, %v639
    %v641 = vpop.f32.mrb[0].mxu0
    %642 = vmatprep.mubr.bf16.mxu0 0
    %643 = vmatmul.mubr.bf16.gmra.mrb[0].mxu0 %v497
    %v644 = vpop.f32.mrb[0].mxu0
    %v645 = vadd.f32 %v452, %v644
    %v646 = vpop.f32.mrb[0].mxu0
    %v647 = vpop.f32.mrb[0].mxu0
    %v648 = vadd.f32 %v455, %v647
    %v649 = vpop.f32.mrb[0].mxu0
    %650 = vdwg.mxu0
    %vm659 = vcmask 1042432
    %vm660 = vcmask 1046532
    %vm661 = vmor %vm659, %vm660
    %v662 = vrot.slane %v30, 5
    %v663 = vrot.slane %v662, 4
    %v664 = vrot.slane %v31, 5
    %v665 = vsel %vm661, %v663, %v664
    %v666 = vrot.slane %v664, 4
    %v667 = vrot.slane %v32, 5
    %v668 = vsel %vm661, %v666, %v667
    %v669 = vrot.slane %v33, 5
    %v670 = vrot.slane %v669, 4
    %v671 = vrot.slane %v34, 5
    %v672 = vsel %vm661, %v670, %v671
    %v673 = vrot.slane %v671, 4
    %v674 = vrot.slane %v35, 5
    %v675 = vsel %vm661, %v673, %v674
    %v676 = vrot.slane %v36, 5
    %v677 = vrot.slane %v676, 4
    %v678 = vrot.slane %v37, 5
    %v679 = vsel %vm661, %v677, %v678
    %v680 = vrot.slane %v678, 4
    %v681 = vrot.slane %v38, 5
    %v682 = vsel %vm661, %v680, %v681
    %v683 = vrot.slane %v39, 5
    %v684 = vrot.slane %v683, 4
    %v685 = vrot.slane %v40, 5
    %v686 = vsel %vm661, %v684, %v685
    %v687 = vrot.slane %v685, 4
    %v688 = vrot.slane %v41, 5
    %v689 = vsel %vm661, %v687, %v688
    %v690 = vrot.slane %v42, 5
    %v691 = vrot.slane %v690, 4
    %v692 = vrot.slane %v43, 5
    %v693 = vsel %vm661, %v691, %v692
    %v694 = vrot.slane %v692, 4
    %v695 = vrot.slane %v44, 5
    %v696 = vsel %vm661, %v694, %v695
    %v697 = vrot.slane %v45, 5
    %v698 = vrot.slane %v697, 4
    %v699 = vrot.slane %v46, 5
    %v700 = vsel %vm661, %v698, %v699
    %v701 = vrot.slane %v699, 4
    %v702 = vrot.slane %v47, 5
    %v703 = vsel %vm661, %v701, %v702
    %v704 = vrot.slane %v48, 5
    %v705 = vrot.slane %v704, 4
    %v706 = vrot.slane %v49, 5
    %v707 = vsel %vm661, %v705, %v706
    %v708 = vrot.slane %v706, 4
    %v709 = vrot.slane %v50, 5
    %v710 = vsel %vm661, %v708, %v709
    %v711 = vrot.slane %v51, 5
    %v712 = vrot.slane %v711, 4
    %v713 = vrot.slane %v52, 5
    %v714 = vsel %vm661, %v712, %v713
    %v715 = vrot.slane %v713, 4
    %v716 = vrot.slane %v53, 5
    %v717 = vsel %vm661, %v715, %v716
    %v718 = vld [vmem:[%s1 + $0x80] sm:$0xf]
    %v719 = vld [vmem:[%s1 + $0x84] sm:$0xf]
    %v720 = vld [vmem:[%s1 + $0x88] sm:$0xf]
    %v721 = vld [vmem:[%s1 + $0x8c] sm:$0xf]
    %v722 = vld [vmem:[%s1 + $0x90] sm:$0xf]
    %v723 = vld [vmem:[%s1 + $0x94] sm:$0xf]
    %v724 = vld [vmem:[%s1 + $0x98] sm:$0xf]
    %v725 = vld [vmem:[%s1 + $0x9c] sm:$0xf]
    %v726 = vld [vmem:[%s1 + $0xa0] sm:$0xf]
    %v727 = vld [vmem:[%s1 + $0xa4] sm:$0xf]
    %v728 = vld [vmem:[%s1 + $0xa8] sm:$0xf]
    %v729 = vld [vmem:[%s1 + $0xac] sm:$0xf]
    %v730 = vld [vmem:[%s1 + $0xb0] sm:$0xf]
    %v731 = vld [vmem:[%s1 + $0xb4] sm:$0xf]
    %v732 = vld [vmem:[%s1 + $0xb8] sm:$0xf]
    %v733 = vld [vmem:[%s1 + $0xbc] sm:$0xf]
    %v734 = vunpack.c.l.b16 %v665
    %v735 = vunpack.c.l.b16 %v668
    %v736 = vunpack.c.l.b16 %v672
    %v737 = vunpack.c.l.b16 %v675
    %v738 = vunpack.c.l.b16 %v679
    %v739 = vunpack.c.l.b16 %v682
    %v740 = vunpack.c.l.b16 %v686
    %v741 = vunpack.c.l.b16 %v689
    %v742 = vunpack.c.l.b16 %v693
    %v743 = vunpack.c.l.b16 %v696
    %v744 = vunpack.c.l.b16 %v700
    %v745 = vunpack.c.l.b16 %v703
    %v746 = vunpack.c.l.b16 %v707
    %v747 = vunpack.c.l.b16 %v710
    %v748 = vunpack.c.l.b16 %v714
    %v749 = vunpack.c.l.b16 %v717
    %v750 = vpack.c.b16 %v735, %v734
    %v751 = vpack.c.b16 %v737, %v736
    %v752 = vpack.c.b16 %v739, %v738
    %v753 = vpack.c.b16 %v741, %v740
    %v754 = vpack.c.b16 %v743, %v742
    %v755 = vpack.c.b16 %v745, %v744
    %v756 = vpack.c.b16 %v747, %v746
    %v757 = vpack.c.b16 %v749, %v748
    %v782 = vunpack.c.l.b16 %v718
    %v783 = vunpack.c.l.b16 %v719
    %v784 = vunpack.c.l.b16 %v720
    %v785 = vunpack.c.l.b16 %v721
    %v786 = vunpack.c.l.b16 %v722
    %v787 = vunpack.c.l.b16 %v723
    %v788 = vunpack.c.l.b16 %v724
    %v789 = vunpack.c.l.b16 %v725
    %v790 = vunpack.c.l.b16 %v726
    %v791 = vunpack.c.l.b16 %v727
    %v792 = vunpack.c.l.b16 %v728
    %v793 = vunpack.c.l.b16 %v729
    %v794 = vunpack.c.l.b16 %v730
    %v795 = vunpack.c.l.b16 %v731
    %v796 = vunpack.c.l.b16 %v732
    %v797 = vunpack.c.l.b16 %v733
    %v798 = vpack.c.b16 %v783, %v782
    %v799 = vpack.c.b16 %v785, %v784
    %v800 = vpack.c.b16 %v787, %v786
    %v801 = vpack.c.b16 %v789, %v788
    %v802 = vpack.c.b16 %v791, %v790
    %v803 = vpack.c.b16 %v793, %v792
    %v804 = vpack.c.b16 %v795, %v794
    %v805 = vpack.c.b16 %v797, %v796
    %814 = vmatprep.subr.bf16.mxu0 0
    %815 = vmatpush1.bf16.msra.mxu0 %v798
    %816 = vmatprep.subr.bf16.mxu0 0
    %817 = vmatpush1.bf16.msra.mxu0 %v799
    %818 = vmatprep.subr.bf16.mxu0 0
    %819 = vmatpush1.bf16.msra.mxu0 %v800
    %820 = vmatprep.subr.bf16.mxu0 0
    %821 = vmatpush1.bf16.msra.mxu0 %v801
    %822 = vmatprep.subr.bf16.mxu0 0
    %823 = vmatpush1.bf16.msra.mxu0 %v802
    %824 = vmatprep.subr.bf16.mxu0 0
    %825 = vmatpush1.bf16.msra.mxu0 %v803
    %826 = vmatprep.subr.bf16.mxu0 0
    %827 = vmatpush1.bf16.msra.mxu0 %v804
    %828 = vmatprep.subr.bf16.mxu0 0
    %829 = vmatpush1.bf16.msra.mxu0 %v805
    %830 = vmatprep.subr.bf16.mxu0 0
    %831 = vmatpush1.bf16.msra.mxu0 0
    %832 = vmatprep.subr.bf16.mxu0 0
    %833 = vmatpush1.bf16.msra.mxu0 0
    %834 = vmatprep.subr.bf16.mxu0 0
    %835 = vmatpush1.bf16.msra.mxu0 0
    %836 = vmatprep.subr.bf16.mxu0 0
    %837 = vmatpush1.bf16.msra.mxu0 0
    %838 = vmatprep.subr.bf16.mxu0 0
    %839 = vmatpush1.bf16.msra.mxu0 0
    %840 = vmatprep.subr.bf16.mxu0 0
    %841 = vmatpush1.bf16.msra.mxu0 0
    %842 = vmatprep.subr.bf16.mxu0 0
    %843 = vmatpush1.bf16.msra.mxu0 0
    %844 = vmatprep.subr.bf16.mxu0 0
    %845 = vmatpush1.bf16.msra.mxu0 0
    %846 = vmatprep.mubr.bf16.mxu0 0
    %847 = vmatmul.mubr.bf16.gmra.mrb[0].mxu0 %v750
    %v848 = vpop.f32.mrb[0].mxu0
    %v849 = vadd.f32 0.0, %v848
    %v850 = vpop.f32.mrb[0].mxu0
    %v851 = vpop.f32.mrb[0].mxu0
    %v852 = vadd.f32 0.0, %v851
    %v853 = vpop.f32.mrb[0].mxu0
    %854 = vmatprep.mubr.bf16.mxu0 0
    %855 = vmatmul.mubr.bf16.gmra.mrb[0].mxu0 %v751
    %v856 = vpop.f32.mrb[0].mxu0
    %v857 = vadd.f32 0.0, %v856
    %v858 = vpop.f32.mrb[0].mxu0
    %v859 = vpop.f32.mrb[0].mxu0
    %v860 = vadd.f32 0.0, %v859
    %v861 = vpop.f32.mrb[0].mxu0
    %862 = vmatprep.mubr.bf16.mxu0 0
    %863 = vmatmul.mubr.bf16.gmra.mrb[0].mxu0 %v752
    %v864 = vpop.f32.mrb[0].mxu0
    %v865 = vadd.f32 0.0, %v864
    %v866 = vpop.f32.mrb[0].mxu0
    %v867 = vpop.f32.mrb[0].mxu0
    %v868 = vadd.f32 0.0, %v867
    %v869 = vpop.f32.mrb[0].mxu0
    %870 = vmatprep.mubr.bf16.mxu0 0
    %871 = vmatmul.mubr.bf16.gmra.mrb[0].mxu0 %v753
    %v872 = vpop.f32.mrb[0].mxu0
    %v873 = vadd.f32 0.0, %v872
    %v874 = vpop.f32.mrb[0].mxu0
    %v875 = vpop.f32.mrb[0].mxu0
    %v876 = vadd.f32 0.0, %v875
    %v877 = vpop.f32.mrb[0].mxu0
    %878 = vmatprep.mubr.bf16.mxu0 0
    %879 = vmatmul.mubr.bf16.gmra.mrb[0].mxu0 %v754
    %v880 = vpop.f32.mrb[0].mxu0
    %v881 = vadd.f32 0.0, %v880
    %v882 = vpop.f32.mrb[0].mxu0
    %v883 = vpop.f32.mrb[0].mxu0
    %v884 = vadd.f32 0.0, %v883
    %v885 = vpop.f32.mrb[0].mxu0
    %886 = vmatprep.mubr.bf16.mxu0 0
    %887 = vmatmul.mubr.bf16.gmra.mrb[0].mxu0 %v755
    %v888 = vpop.f32.mrb[0].mxu0
    %v889 = vadd.f32 0.0, %v888
    %v890 = vpop.f32.mrb[0].mxu0
    %v891 = vpop.f32.mrb[0].mxu0
    %v892 = vadd.f32 0.0, %v891
    %v893 = vpop.f32.mrb[0].mxu0
    %894 = vmatprep.mubr.bf16.mxu0 0
    %895 = vmatmul.mubr.bf16.gmra.mrb[0].mxu0 %v756
    %v896 = vpop.f32.mrb[0].mxu0
    %v897 = vadd.f32 0.0, %v896
    %v898 = vpop.f32.mrb[0].mxu0
    %v899 = vpop.f32.mrb[0].mxu0
    %v900 = vadd.f32 0.0, %v899
    %v901 = vpop.f32.mrb[0].mxu0
    %902 = vmatprep.mubr.bf16.mxu0 0
    %903 = vmatmul.mubr.bf16.gmra.mrb[0].mxu0 %v757
    %v904 = vpop.f32.mrb[0].mxu0
    %v905 = vadd.f32 0.0, %v904
    %v906 = vpop.f32.mrb[0].mxu0
    %v907 = vpop.f32.mrb[0].mxu0
    %v908 = vadd.f32 0.0, %v907
    %v909 = vpop.f32.mrb[0].mxu0
    %910 = vdwg.mxu0
    %v911 = vadd.f32 %v589, %v849
    %v912 = vadd.f32 %v592, %v852
    %v913 = vadd.f32 %v597, %v857
    %v914 = vadd.f32 %v600, %v860
    %v915 = vadd.f32 %v605, %v865
    %v916 = vadd.f32 %v608, %v868
    %v917 = vadd.f32 %v613, %v873
    %v918 = vadd.f32 %v616, %v876
    %v919 = vadd.f32 %v621, %v881
    %v920 = vadd.f32 %v624, %v884
    %v921 = vadd.f32 %v629, %v889
    %v922 = vadd.f32 %v632, %v892
    %v923 = vadd.f32 %v637, %v897
    %v924 = vadd.f32 %v640, %v900
    %v925 = vadd.f32 %v645, %v905
    %v926 = vadd.f32 %v648, %v908
    %s927 = sadd.s32 %s26, 1
    %s928 = smul.u32 %s927, 3
    %s929 = smul.addr %s928, 4
    %s930 = scalar_lea.vmem %s0, %s929
    %v931 = vld [vmem:[%s930] sm:$0xf]
    %v932 = vld [vmem:[%s930 + $0x4] sm:$0xf]
    %v933 = vld [vmem:[%s930 + $0x8] sm:$0x1]
    %v934 = vld [vmem:[%s930 + $0xc] sm:$0xf]
    %v935 = vld [vmem:[%s930 + $0x10] sm:$0xf]
    %v936 = vld [vmem:[%s930 + $0x14] sm:$0x1]
    %v937 = vld [vmem:[%s930 + $0x18] sm:$0xf]
    %v938 = vld [vmem:[%s930 + $0x1c] sm:$0xf]
    %v939 = vld [vmem:[%s930 + $0x20] sm:$0x1]
    %v940 = vld [vmem:[%s930 + $0x24] sm:$0xf]
    %v941 = vld [vmem:[%s930 + $0x28] sm:$0xf]
    %v942 = vld [vmem:[%s930 + $0x2c] sm:$0x1]
    %v943 = vld [vmem:[%s930 + $0x30] sm:$0xf]
    %v944 = vld [vmem:[%s930 + $0x34] sm:$0xf]
    %v945 = vld [vmem:[%s930 + $0x38] sm:$0x1]
    %v946 = vld [vmem:[%s930 + $0x3c] sm:$0xf]
    %v947 = vld [vmem:[%s930 + $0x40] sm:$0xf]
    %v948 = vld [vmem:[%s930 + $0x44] sm:$0x1]
    %v949 = vld [vmem:[%s930 + $0x48] sm:$0xf]
    %v950 = vld [vmem:[%s930 + $0x4c] sm:$0xf]
    %v951 = vld [vmem:[%s930 + $0x50] sm:$0x1]
    %v952 = vld [vmem:[%s930 + $0x54] sm:$0xf]
    %v953 = vld [vmem:[%s930 + $0x58] sm:$0xf]
    %v954 = vld [vmem:[%s930 + $0x5c] sm:$0x1]
    %v955 = vld [vmem:[%s1 + $0xc0] sm:$0xf]
    %v956 = vld [vmem:[%s1 + $0xc4] sm:$0xf]
    %v957 = vld [vmem:[%s1 + $0xc8] sm:$0xf]
    %v958 = vld [vmem:[%s1 + $0xcc] sm:$0xf]
    %v959 = vld [vmem:[%s1 + $0xd0] sm:$0xf]
    %v960 = vld [vmem:[%s1 + $0xd4] sm:$0xf]
    %v961 = vld [vmem:[%s1 + $0xd8] sm:$0xf]
    %v962 = vld [vmem:[%s1 + $0xdc] sm:$0xf]
    %v963 = vld [vmem:[%s1 + $0xe0] sm:$0xf]
    %v964 = vld [vmem:[%s1 + $0xe4] sm:$0xf]
    %v965 = vld [vmem:[%s1 + $0xe8] sm:$0xf]
    %v966 = vld [vmem:[%s1 + $0xec] sm:$0xf]
    %v967 = vld [vmem:[%s1 + $0xf0] sm:$0xf]
    %v968 = vld [vmem:[%s1 + $0xf4] sm:$0xf]
    %v969 = vld [vmem:[%s1 + $0xf8] sm:$0xf]
    %v970 = vld [vmem:[%s1 + $0xfc] sm:$0xf]
    %v987 = vunpack.c.l.b16 %v931
    %v988 = vunpack.c.l.b16 %v932
    %v989 = vunpack.c.l.b16 %v934
    %v990 = vunpack.c.l.b16 %v935
    %v991 = vunpack.c.l.b16 %v937
    %v992 = vunpack.c.l.b16 %v938
    %v993 = vunpack.c.l.b16 %v940
    %v994 = vunpack.c.l.b16 %v941
    %v995 = vunpack.c.l.b16 %v943
    %v996 = vunpack.c.l.b16 %v944
    %v997 = vunpack.c.l.b16 %v946
    %v998 = vunpack.c.l.b16 %v947
    %v999 = vunpack.c.l.b16 %v949
    %v1000 = vunpack.c.l.b16 %v950
    %v1001 = vunpack.c.l.b16 %v952
    %v1002 = vunpack.c.l.b16 %v953
    %v1003 = vpack.c.b16 %v988, %v987
    %v1004 = vpack.c.b16 %v990, %v989
    %v1005 = vpack.c.b16 %v992, %v991
    %v1006 = vpack.c.b16 %v994, %v993
    %v1007 = vpack.c.b16 %v996, %v995
    %v1008 = vpack.c.b16 %v998, %v997
    %v1009 = vpack.c.b16 %v1000, %v999
    %v1010 = vpack.c.b16 %v1002, %v1001
    %v1035 = vunpack.c.l.b16 %v955
    %v1036 = vunpack.c.l.b16 %v956
    %v1037 = vunpack.c.l.b16 %v957
    %v1038 = vunpack.c.l.b16 %v958
    %v1039 = vunpack.c.l.b16 %v959
    %v1040 = vunpack.c.l.b16 %v960
    %v1041 = vunpack.c.l.b16 %v961
    %v1042 = vunpack.c.l.b16 %v962
    %v1043 = vunpack.c.l.b16 %v963
    %v1044 = vunpack.c.l.b16 %v964
    %v1045 = vunpack.c.l.b16 %v965
    %v1046 = vunpack.c.l.b16 %v966
    %v1047 = vunpack.c.l.b16 %v967
    %v1048 = vunpack.c.l.b16 %v968
    %v1049 = vunpack.c.l.b16 %v969
    %v1050 = vunpack.c.l.b16 %v970
    %v1051 = vpack.c.b16 %v1036, %v1035
    %v1052 = vpack.c.b16 %v1038, %v1037
    %v1053 = vpack.c.b16 %v1040, %v1039
    %v1054 = vpack.c.b16 %v1042, %v1041
    %v1055 = vpack.c.b16 %v1044, %v1043
    %v1056 = vpack.c.b16 %v1046, %v1045
    %v1057 = vpack.c.b16 %v1048, %v1047
    %v1058 = vpack.c.b16 %v1050, %v1049
    %1067 = vmatprep.subr.bf16.mxu0 0
    %1068 = vmatpush1.bf16.msra.mxu0 %v1051
    %1069 = vmatprep.subr.bf16.mxu0 0
    %1070 = vmatpush1.bf16.msra.mxu0 %v1052
    %1071 = vmatprep.subr.bf16.mxu0 0
    %1072 = vmatpush1.bf16.msra.mxu0 %v1053
    %1073 = vmatprep.subr.bf16.mxu0 0
    %1074 = vmatpush1.bf16.msra.mxu0 %v1054
    %1075 = vmatprep.subr.bf16.mxu0 0
    %1076 = vmatpush1.bf16.msra.mxu0 %v1055
    %1077 = vmatprep.subr.bf16.mxu0 0
    %1078 = vmatpush1.bf16.msra.mxu0 %v1056
    %1079 = vmatprep.subr.bf16.mxu0 0
    %1080 = vmatpush1.bf16.msra.mxu0 %v1057
    %1081 = vmatprep.subr.bf16.mxu0 0
    %1082 = vmatpush1.bf16.msra.mxu0 %v1058
    %1083 = vmatprep.subr.bf16.mxu0 0
    %1084 = vmatpush1.bf16.msra.mxu0 0
    %1085 = vmatprep.subr.bf16.mxu0 0
    %1086 = vmatpush1.bf16.msra.mxu0 0
    %1087 = vmatprep.subr.bf16.mxu0 0
    %1088 = vmatpush1.bf16.msra.mxu0 0
    %1089 = vmatprep.subr.bf16.mxu0 0
    %1090 = vmatpush1.bf16.msra.mxu0 0
    %1091 = vmatprep.subr.bf16.mxu0 0
    %1092 = vmatpush1.bf16.msra.mxu0 0
    %1093 = vmatprep.subr.bf16.mxu0 0
    %1094 = vmatpush1.bf16.msra.mxu0 0
    %1095 = vmatprep.subr.bf16.mxu0 0
    %1096 = vmatpush1.bf16.msra.mxu0 0
    %1097 = vmatprep.subr.bf16.mxu0 0
    %1098 = vmatpush1.bf16.msra.mxu0 0
    %1099 = vmatprep.mubr.bf16.mxu0 0
    %1100 = vmatmul.mubr.bf16.gmra.mrb[0].mxu0 %v1003
    %v1101 = vpop.f32.mrb[0].mxu0
    %v1102 = vadd.f32 0.0, %v1101
    %v1103 = vpop.f32.mrb[0].mxu0
    %v1104 = vpop.f32.mrb[0].mxu0
    %v1105 = vadd.f32 0.0, %v1104
    %v1106 = vpop.f32.mrb[0].mxu0
    %1107 = vmatprep.mubr.bf16.mxu0 0
    %1108 = vmatmul.mubr.bf16.gmra.mrb[0].mxu0 %v1004
    %v1109 = vpop.f32.mrb[0].mxu0
    %v1110 = vadd.f32 0.0, %v1109
    %v1111 = vpop.f32.mrb[0].mxu0
    %v1112 = vpop.f32.mrb[0].mxu0
    %v1113 = vadd.f32 0.0, %v1112
    %v1114 = vpop.f32.mrb[0].mxu0
    %1115 = vmatprep.mubr.bf16.mxu0 0
    %1116 = vmatmul.mubr.bf16.gmra.mrb[0].mxu0 %v1005
    %v1117 = vpop.f32.mrb[0].mxu0
    %v1118 = vadd.f32 0.0, %v1117
    %v1119 = vpop.f32.mrb[0].mxu0
    %v1120 = vpop.f32.mrb[0].mxu0
    %v1121 = vadd.f32 0.0, %v1120
    %v1122 = vpop.f32.mrb[0].mxu0
    %1123 = vmatprep.mubr.bf16.mxu0 0
    %1124 = vmatmul.mubr.bf16.gmra.mrb[0].mxu0 %v1006
    %v1125 = vpop.f32.mrb[0].mxu0
    %v1126 = vadd.f32 0.0, %v1125
    %v1127 = vpop.f32.mrb[0].mxu0
    %v1128 = vpop.f32.mrb[0].mxu0
    %v1129 = vadd.f32 0.0, %v1128
    %v1130 = vpop.f32.mrb[0].mxu0
    %1131 = vmatprep.mubr.bf16.mxu0 0
    %1132 = vmatmul.mubr.bf16.gmra.mrb[0].mxu0 %v1007
    %v1133 = vpop.f32.mrb[0].mxu0
    %v1134 = vadd.f32 0.0, %v1133
    %v1135 = vpop.f32.mrb[0].mxu0
    %v1136 = vpop.f32.mrb[0].mxu0
    %v1137 = vadd.f32 0.0, %v1136
    %v1138 = vpop.f32.mrb[0].mxu0
    %1139 = vmatprep.mubr.bf16.mxu0 0
    %1140 = vmatmul.mubr.bf16.gmra.mrb[0].mxu0 %v1008
    %v1141 = vpop.f32.mrb[0].mxu0
    %v1142 = vadd.f32 0.0, %v1141
    %v1143 = vpop.f32.mrb[0].mxu0
    %v1144 = vpop.f32.mrb[0].mxu0
    %v1145 = vadd.f32 0.0, %v1144
    %v1146 = vpop.f32.mrb[0].mxu0
    %1147 = vmatprep.mubr.bf16.mxu0 0
    %1148 = vmatmul.mubr.bf16.gmra.mrb[0].mxu0 %v1009
    %v1149 = vpop.f32.mrb[0].mxu0
    %v1150 = vadd.f32 0.0, %v1149
    %v1151 = vpop.f32.mrb[0].mxu0
    %v1152 = vpop.f32.mrb[0].mxu0
    %v1153 = vadd.f32 0.0, %v1152
    %v1154 = vpop.f32.mrb[0].mxu0
    %1155 = vmatprep.mubr.bf16.mxu0 0
    %1156 = vmatmul.mubr.bf16.gmra.mrb[0].mxu0 %v1010
    %v1157 = vpop.f32.mrb[0].mxu0
    %v1158 = vadd.f32 0.0, %v1157
    %v1159 = vpop.f32.mrb[0].mxu0
    %v1160 = vpop.f32.mrb[0].mxu0
    %v1161 = vadd.f32 0.0, %v1160
    %v1162 = vpop.f32.mrb[0].mxu0
    %1163 = vdwg.mxu0
    %v1164 = vadd.f32 %v911, %v1102
    %v1165 = vadd.f32 %v912, %v1105
    %v1166 = vadd.f32 %v913, %v1110
    %v1167 = vadd.f32 %v914, %v1113
    %v1168 = vadd.f32 %v915, %v1118
    %v1169 = vadd.f32 %v916, %v1121
    %v1170 = vadd.f32 %v917, %v1126
    %v1171 = vadd.f32 %v918, %v1129
    %v1172 = vadd.f32 %v919, %v1134
    %v1173 = vadd.f32 %v920, %v1137
    %v1174 = vadd.f32 %v921, %v1142
    %v1175 = vadd.f32 %v922, %v1145
    %v1176 = vadd.f32 %v923, %v1150
    %v1177 = vadd.f32 %v924, %v1153
    %v1178 = vadd.f32 %v925, %v1158
    %v1179 = vadd.f32 %v926, %v1161
    %v1181 = vshrl.u32 %v931, 16
    %v1183 = vrot.slane %v1181, 4
    %v1184 = vshll.u32 %v931, 16
    %v1186 = vrot.slane %v1184, 5
    %v1187 = vor.u32 %v1183, %v1186
    %v1188 = vrot.slane %v1187, 4
    %v1190 = vshll.u32 %v932, 16
    %v1192 = vrot.slane %v1190, 5
    %v1193 = vsel %vm72, %v1188, %v1192
    %v1194 = vshrl.u32 %v932, 16
    %v1196 = vrot.slane %v1194, 4
    %v1197 = vor.u32 %v1196, %v1192
    %v1198 = vrot.slane %v1197, 4
    %v1200 = vshll.u32 %v933, 16
    %v1202 = vrot.slane %v1200, 5
    %v1203 = vsel %vm72, %v1198, %v1202
    %v1205 = vshrl.u32 %v934, 16
    %v1207 = vrot.slane %v1205, 4
    %v1208 = vshll.u32 %v934, 16
    %v1210 = vrot.slane %v1208, 5
    %v1211 = vor.u32 %v1207, %v1210
    %v1212 = vrot.slane %v1211, 4
    %v1214 = vshll.u32 %v935, 16
    %v1216 = vrot.slane %v1214, 5
    %v1217 = vsel %vm72, %v1212, %v1216
    %v1218 = vshrl.u32 %v935, 16
    %v1220 = vrot.slane %v1218, 4
    %v1221 = vor.u32 %v1220, %v1216
    %v1222 = vrot.slane %v1221, 4
    %v1224 = vshll.u32 %v936, 16
    %v1226 = vrot.slane %v1224, 5
    %v1227 = vsel %vm72, %v1222, %v1226
    %v1229 = vshrl.u32 %v937, 16
    %v1231 = vrot.slane %v1229, 4
    %v1232 = vshll.u32 %v937, 16
    %v1234 = vrot.slane %v1232, 5
    %v1235 = vor.u32 %v1231, %v1234
    %v1236 = vrot.slane %v1235, 4
    %v1238 = vshll.u32 %v938, 16
    %v1240 = vrot.slane %v1238, 5
    %v1241 = vsel %vm72, %v1236, %v1240
    %v1242 = vshrl.u32 %v938, 16
    %v1244 = vrot.slane %v1242, 4
    %v1245 = vor.u32 %v1244, %v1240
    %v1246 = vrot.slane %v1245, 4
    %v1248 = vshll.u32 %v939, 16
    %v1250 = vrot.slane %v1248, 5
    %v1251 = vsel %vm72, %v1246, %v1250
    %v1253 = vshrl.u32 %v940, 16
    %v1255 = vrot.slane %v1253, 4
    %v1256 = vshll.u32 %v940, 16
    %v1258 = vrot.slane %v1256, 5
    %v1259 = vor.u32 %v1255, %v1258
    %v1260 = vrot.slane %v1259, 4
    %v1262 = vshll.u32 %v941, 16
    %v1264 = vrot.slane %v1262, 5
    %v1265 = vsel %vm72, %v1260, %v1264
    %v1266 = vshrl.u32 %v941, 16
    %v1268 = vrot.slane %v1266, 4
    %v1269 = vor.u32 %v1268, %v1264
    %v1270 = vrot.slane %v1269, 4
    %v1272 = vshll.u32 %v942, 16
    %v1274 = vrot.slane %v1272, 5
    %v1275 = vsel %vm72, %v1270, %v1274
    %v1277 = vshrl.u32 %v943, 16
    %v1279 = vrot.slane %v1277, 4
    %v1280 = vshll.u32 %v943, 16
    %v1282 = vrot.slane %v1280, 5
    %v1283 = vor.u32 %v1279, %v1282
    %v1284 = vrot.slane %v1283, 4
    %v1286 = vshll.u32 %v944, 16
    %v1288 = vrot.slane %v1286, 5
    %v1289 = vsel %vm72, %v1284, %v1288
    %v1290 = vshrl.u32 %v944, 16
    %v1292 = vrot.slane %v1290, 4
    %v1293 = vor.u32 %v1292, %v1288
    %v1294 = vrot.slane %v1293, 4
    %v1296 = vshll.u32 %v945, 16
    %v1298 = vrot.slane %v1296, 5
    %v1299 = vsel %vm72, %v1294, %v1298
    %v1301 = vshrl.u32 %v946, 16
    %v1303 = vrot.slane %v1301, 4
    %v1304 = vshll.u32 %v946, 16
    %v1306 = vrot.slane %v1304, 5
    %v1307 = vor.u32 %v1303, %v1306
    %v1308 = vrot.slane %v1307, 4
    %v1310 = vshll.u32 %v947, 16
    %v1312 = vrot.slane %v1310, 5
    %v1313 = vsel %vm72, %v1308, %v1312
    %v1314 = vshrl.u32 %v947, 16
    %v1316 = vrot.slane %v1314, 4
    %v1317 = vor.u32 %v1316, %v1312
    %v1318 = vrot.slane %v1317, 4
    %v1320 = vshll.u32 %v948, 16
    %v1322 = vrot.slane %v1320, 5
    %v1323 = vsel %vm72, %v1318, %v1322
    %v1325 = vshrl.u32 %v949, 16
    %v1327 = vrot.slane %v1325, 4
    %v1328 = vshll.u32 %v949, 16
    %v1330 = vrot.slane %v1328, 5
    %v1331 = vor.u32 %v1327, %v1330
    %v1332 = vrot.slane %v1331, 4
    %v1334 = vshll.u32 %v950, 16
    %v1336 = vrot.slane %v1334, 5
    %v1337 = vsel %vm72, %v1332, %v1336
    %v1338 = vshrl.u32 %v950, 16
    %v1340 = vrot.slane %v1338, 4
    %v1341 = vor.u32 %v1340, %v1336
    %v1342 = vrot.slane %v1341, 4
    %v1344 = vshll.u32 %v951, 16
    %v1346 = vrot.slane %v1344, 5
    %v1347 = vsel %vm72, %v1342, %v1346
    %v1349 = vshrl.u32 %v952, 16
    %v1351 = vrot.slane %v1349, 4
    %v1352 = vshll.u32 %v952, 16
    %v1354 = vrot.slane %v1352, 5
    %v1355 = vor.u32 %v1351, %v1354
    %v1356 = vrot.slane %v1355, 4
    %v1358 = vshll.u32 %v953, 16
    %v1360 = vrot.slane %v1358, 5
    %v1361 = vsel %vm72, %v1356, %v1360
    %v1362 = vshrl.u32 %v953, 16
    %v1364 = vrot.slane %v1362, 4
    %v1365 = vor.u32 %v1364, %v1360
    %v1366 = vrot.slane %v1365, 4
    %v1368 = vshll.u32 %v954, 16
    %v1370 = vrot.slane %v1368, 5
    %v1371 = vsel %vm72, %v1366, %v1370
    %v1372 = vld [vmem:[%s1 + $0x100] sm:$0xf]
    %v1373 = vld [vmem:[%s1 + $0x104] sm:$0xf]
    %v1374 = vld [vmem:[%s1 + $0x108] sm:$0xf]
    %v1375 = vld [vmem:[%s1 + $0x10c] sm:$0xf]
    %v1376 = vld [vmem:[%s1 + $0x110] sm:$0xf]
    %v1377 = vld [vmem:[%s1 + $0x114] sm:$0xf]
    %v1378 = vld [vmem:[%s1 + $0x118] sm:$0xf]
    %v1379 = vld [vmem:[%s1 + $0x11c] sm:$0xf]
    %v1380 = vld [vmem:[%s1 + $0x120] sm:$0xf]
    %v1381 = vld [vmem:[%s1 + $0x124] sm:$0xf]
    %v1382 = vld [vmem:[%s1 + $0x128] sm:$0xf]
    %v1383 = vld [vmem:[%s1 + $0x12c] sm:$0xf]
    %v1384 = vld [vmem:[%s1 + $0x130] sm:$0xf]
    %v1385 = vld [vmem:[%s1 + $0x134] sm:$0xf]
    %v1386 = vld [vmem:[%s1 + $0x138] sm:$0xf]
    %v1387 = vld [vmem:[%s1 + $0x13c] sm:$0xf]
    %v1388 = vunpack.c.l.b16 %v1193
    %v1389 = vunpack.c.l.b16 %v1203
    %v1390 = vunpack.c.l.b16 %v1217
    %v1391 = vunpack.c.l.b16 %v1227
    %v1392 = vunpack.c.l.b16 %v1241
    %v1393 = vunpack.c.l.b16 %v1251
    %v1394 = vunpack.c.l.b16 %v1265
    %v1395 = vunpack.c.l.b16 %v1275
    %v1396 = vunpack.c.l.b16 %v1289
    %v1397 = vunpack.c.l.b16 %v1299
    %v1398 = vunpack.c.l.b16 %v1313
    %v1399 = vunpack.c.l.b16 %v1323
    %v1400 = vunpack.c.l.b16 %v1337
    %v1401 = vunpack.c.l.b16 %v1347
    %v1402 = vunpack.c.l.b16 %v1361
    %v1403 = vunpack.c.l.b16 %v1371
    %v1404 = vpack.c.b16 %v1389, %v1388
    %v1405 = vpack.c.b16 %v1391, %v1390
    %v1406 = vpack.c.b16 %v1393, %v1392
    %v1407 = vpack.c.b16 %v1395, %v1394
    %v1408 = vpack.c.b16 %v1397, %v1396
    %v1409 = vpack.c.b16 %v1399, %v1398
    %v1410 = vpack.c.b16 %v1401, %v1400
    %v1411 = vpack.c.b16 %v1403, %v1402
    %v1436 = vunpack.c.l.b16 %v1372
    %v1437 = vunpack.c.l.b16 %v1373
    %v1438 = vunpack.c.l.b16 %v1374
    %v1439 = vunpack.c.l.b16 %v1375
    %v1440 = vunpack.c.l.b16 %v1376
    %v1441 = vunpack.c.l.b16 %v1377
    %v1442 = vunpack.c.l.b16 %v1378
    %v1443 = vunpack.c.l.b16 %v1379
    %v1444 = vunpack.c.l.b16 %v1380
    %v1445 = vunpack.c.l.b16 %v1381
    %v1446 = vunpack.c.l.b16 %v1382
    %v1447 = vunpack.c.l.b16 %v1383
    %v1448 = vunpack.c.l.b16 %v1384
    %v1449 = vunpack.c.l.b16 %v1385
    %v1450 = vunpack.c.l.b16 %v1386
    %v1451 = vunpack.c.l.b16 %v1387
    %v1452 = vpack.c.b16 %v1437, %v1436
    %v1453 = vpack.c.b16 %v1439, %v1438
    %v1454 = vpack.c.b16 %v1441, %v1440
    %v1455 = vpack.c.b16 %v1443, %v1442
    %v1456 = vpack.c.b16 %v1445, %v1444
    %v1457 = vpack.c.b16 %v1447, %v1446
    %v1458 = vpack.c.b16 %v1449, %v1448
    %v1459 = vpack.c.b16 %v1451, %v1450
    %1468 = vmatprep.subr.bf16.mxu0 0
    %1469 = vmatpush1.bf16.msra.mxu0 %v1452
    %1470 = vmatprep.subr.bf16.mxu0 0
    %1471 = vmatpush1.bf16.msra.mxu0 %v1453
    %1472 = vmatprep.subr.bf16.mxu0 0
    %1473 = vmatpush1.bf16.msra.mxu0 %v1454
    %1474 = vmatprep.subr.bf16.mxu0 0
    %1475 = vmatpush1.bf16.msra.mxu0 %v1455
    %1476 = vmatprep.subr.bf16.mxu0 0
    %1477 = vmatpush1.bf16.msra.mxu0 %v1456
    %1478 = vmatprep.subr.bf16.mxu0 0
    %1479 = vmatpush1.bf16.msra.mxu0 %v1457
    %1480 = vmatprep.subr.bf16.mxu0 0
    %1481 = vmatpush1.bf16.msra.mxu0 %v1458
    %1482 = vmatprep.subr.bf16.mxu0 0
    %1483 = vmatpush1.bf16.msra.mxu0 %v1459
    %1484 = vmatprep.subr.bf16.mxu0 0
    %1485 = vmatpush1.bf16.msra.mxu0 0
    %1486 = vmatprep.subr.bf16.mxu0 0
    %1487 = vmatpush1.bf16.msra.mxu0 0
    %1488 = vmatprep.subr.bf16.mxu0 0
    %1489 = vmatpush1.bf16.msra.mxu0 0
    %1490 = vmatprep.subr.bf16.mxu0 0
    %1491 = vmatpush1.bf16.msra.mxu0 0
    %1492 = vmatprep.subr.bf16.mxu0 0
    %1493 = vmatpush1.bf16.msra.mxu0 0
    %1494 = vmatprep.subr.bf16.mxu0 0
    %1495 = vmatpush1.bf16.msra.mxu0 0
    %1496 = vmatprep.subr.bf16.mxu0 0
    %1497 = vmatpush1.bf16.msra.mxu0 0
    %1498 = vmatprep.subr.bf16.mxu0 0
    %1499 = vmatpush1.bf16.msra.mxu0 0
    %1500 = vmatprep.mubr.bf16.mxu0 0
    %1501 = vmatmul.mubr.bf16.gmra.mrb[0].mxu0 %v1404
    %v1502 = vpop.f32.mrb[0].mxu0
    %v1503 = vadd.f32 0.0, %v1502
    %v1504 = vpop.f32.mrb[0].mxu0
    %v1505 = vpop.f32.mrb[0].mxu0
    %v1506 = vadd.f32 0.0, %v1505
    %v1507 = vpop.f32.mrb[0].mxu0
    %1508 = vmatprep.mubr.bf16.mxu0 0
    %1509 = vmatmul.mubr.bf16.gmra.mrb[0].mxu0 %v1405
    %v1510 = vpop.f32.mrb[0].mxu0
    %v1511 = vadd.f32 0.0, %v1510
    %v1512 = vpop.f32.mrb[0].mxu0
    %v1513 = vpop.f32.mrb[0].mxu0
    %v1514 = vadd.f32 0.0, %v1513
    %v1515 = vpop.f32.mrb[0].mxu0
    %1516 = vmatprep.mubr.bf16.mxu0 0
    %1517 = vmatmul.mubr.bf16.gmra.mrb[0].mxu0 %v1406
    %v1518 = vpop.f32.mrb[0].mxu0
    %v1519 = vadd.f32 0.0, %v1518
    %v1520 = vpop.f32.mrb[0].mxu0
    %v1521 = vpop.f32.mrb[0].mxu0
    %v1522 = vadd.f32 0.0, %v1521
    %v1523 = vpop.f32.mrb[0].mxu0
    %1524 = vmatprep.mubr.bf16.mxu0 0
    %1525 = vmatmul.mubr.bf16.gmra.mrb[0].mxu0 %v1407
    %v1526 = vpop.f32.mrb[0].mxu0
    %v1527 = vadd.f32 0.0, %v1526
    %v1528 = vpop.f32.mrb[0].mxu0
    %v1529 = vpop.f32.mrb[0].mxu0
    %v1530 = vadd.f32 0.0, %v1529
    %v1531 = vpop.f32.mrb[0].mxu0
    %1532 = vmatprep.mubr.bf16.mxu0 0
    %1533 = vmatmul.mubr.bf16.gmra.mrb[0].mxu0 %v1408
    %v1534 = vpop.f32.mrb[0].mxu0
    %v1535 = vadd.f32 0.0, %v1534
    %v1536 = vpop.f32.mrb[0].mxu0
    %v1537 = vpop.f32.mrb[0].mxu0
    %v1538 = vadd.f32 0.0, %v1537
    %v1539 = vpop.f32.mrb[0].mxu0
    %1540 = vmatprep.mubr.bf16.mxu0 0
    %1541 = vmatmul.mubr.bf16.gmra.mrb[0].mxu0 %v1409
    %v1542 = vpop.f32.mrb[0].mxu0
    %v1543 = vadd.f32 0.0, %v1542
    %v1544 = vpop.f32.mrb[0].mxu0
    %v1545 = vpop.f32.mrb[0].mxu0
    %v1546 = vadd.f32 0.0, %v1545
    %v1547 = vpop.f32.mrb[0].mxu0
    %1548 = vmatprep.mubr.bf16.mxu0 0
    %1549 = vmatmul.mubr.bf16.gmra.mrb[0].mxu0 %v1410
    %v1550 = vpop.f32.mrb[0].mxu0
    %v1551 = vadd.f32 0.0, %v1550
    %v1552 = vpop.f32.mrb[0].mxu0
    %v1553 = vpop.f32.mrb[0].mxu0
    %v1554 = vadd.f32 0.0, %v1553
    %v1555 = vpop.f32.mrb[0].mxu0
    %1556 = vmatprep.mubr.bf16.mxu0 0
    %1557 = vmatmul.mubr.bf16.gmra.mrb[0].mxu0 %v1411
    %v1558 = vpop.f32.mrb[0].mxu0
    %v1559 = vadd.f32 0.0, %v1558
    %v1560 = vpop.f32.mrb[0].mxu0
    %v1561 = vpop.f32.mrb[0].mxu0
    %v1562 = vadd.f32 0.0, %v1561
    %v1563 = vpop.f32.mrb[0].mxu0
    %1564 = vdwg.mxu0
    %v1565 = vadd.f32 %v1164, %v1503
    %v1566 = vadd.f32 %v1165, %v1506
    %v1567 = vadd.f32 %v1166, %v1511
    %v1568 = vadd.f32 %v1167, %v1514
    %v1569 = vadd.f32 %v1168, %v1519
    %v1570 = vadd.f32 %v1169, %v1522
    %v1571 = vadd.f32 %v1170, %v1527
    %v1572 = vadd.f32 %v1171, %v1530
    %v1573 = vadd.f32 %v1172, %v1535
    %v1574 = vadd.f32 %v1173, %v1538
    %v1575 = vadd.f32 %v1174, %v1543
    %v1576 = vadd.f32 %v1175, %v1546
    %v1577 = vadd.f32 %v1176, %v1551
    %v1578 = vadd.f32 %v1177, %v1554
    %v1579 = vadd.f32 %v1178, %v1559
    %v1580 = vadd.f32 %v1179, %v1562
    %v1589 = vrot.slane %v931, 5
    %v1590 = vrot.slane %v1589, 4
    %v1591 = vrot.slane %v932, 5
    %v1592 = vsel %vm661, %v1590, %v1591
    %v1593 = vrot.slane %v1591, 4
    %v1594 = vrot.slane %v933, 5
    %v1595 = vsel %vm661, %v1593, %v1594
    %v1596 = vrot.slane %v934, 5
    %v1597 = vrot.slane %v1596, 4
    %v1598 = vrot.slane %v935, 5
    %v1599 = vsel %vm661, %v1597, %v1598
    %v1600 = vrot.slane %v1598, 4
    %v1601 = vrot.slane %v936, 5
    %v1602 = vsel %vm661, %v1600, %v1601
    %v1603 = vrot.slane %v937, 5
    %v1604 = vrot.slane %v1603, 4
    %v1605 = vrot.slane %v938, 5
    %v1606 = vsel %vm661, %v1604, %v1605
    %v1607 = vrot.slane %v1605, 4
    %v1608 = vrot.slane %v939, 5
    %v1609 = vsel %vm661, %v1607, %v1608
    %v1610 = vrot.slane %v940, 5
    %v1611 = vrot.slane %v1610, 4
    %v1612 = vrot.slane %v941, 5
    %v1613 = vsel %vm661, %v1611, %v1612
    %v1614 = vrot.slane %v1612, 4
    %v1615 = vrot.slane %v942, 5
    %v1616 = vsel %vm661, %v1614, %v1615
    %v1617 = vrot.slane %v943, 5
    %v1618 = vrot.slane %v1617, 4
    %v1619 = vrot.slane %v944, 5
    %v1620 = vsel %vm661, %v1618, %v1619
    %v1621 = vrot.slane %v1619, 4
    %v1622 = vrot.slane %v945, 5
    %v1623 = vsel %vm661, %v1621, %v1622
    %v1624 = vrot.slane %v946, 5
    %v1625 = vrot.slane %v1624, 4
    %v1626 = vrot.slane %v947, 5
    %v1627 = vsel %vm661, %v1625, %v1626
    %v1628 = vrot.slane %v1626, 4
    %v1629 = vrot.slane %v948, 5
    %v1630 = vsel %vm661, %v1628, %v1629
    %v1631 = vrot.slane %v949, 5
    %v1632 = vrot.slane %v1631, 4
    %v1633 = vrot.slane %v950, 5
    %v1634 = vsel %vm661, %v1632, %v1633
    %v1635 = vrot.slane %v1633, 4
    %v1636 = vrot.slane %v951, 5
    %v1637 = vsel %vm661, %v1635, %v1636
    %v1638 = vrot.slane %v952, 5
    %v1639 = vrot.slane %v1638, 4
    %v1640 = vrot.slane %v953, 5
    %v1641 = vsel %vm661, %v1639, %v1640
    %v1642 = vrot.slane %v1640, 4
    %v1643 = vrot.slane %v954, 5
    %v1644 = vsel %vm661, %v1642, %v1643
    %v1645 = vld [vmem:[%s1 + $0x140] sm:$0xf]
    %v1646 = vld [vmem:[%s1 + $0x144] sm:$0xf]
    %v1647 = vld [vmem:[%s1 + $0x148] sm:$0xf]
    %v1648 = vld [vmem:[%s1 + $0x14c] sm:$0xf]
    %v1649 = vld [vmem:[%s1 + $0x150] sm:$0xf]
    %v1650 = vld [vmem:[%s1 + $0x154] sm:$0xf]
    %v1651 = vld [vmem:[%s1 + $0x158] sm:$0xf]
    %v1652 = vld [vmem:[%s1 + $0x15c] sm:$0xf]
    %v1653 = vld [vmem:[%s1 + $0x160] sm:$0xf]
    %v1654 = vld [vmem:[%s1 + $0x164] sm:$0xf]
    %v1655 = vld [vmem:[%s1 + $0x168] sm:$0xf]
    %v1656 = vld [vmem:[%s1 + $0x16c] sm:$0xf]
    %v1657 = vld [vmem:[%s1 + $0x170] sm:$0xf]
    %v1658 = vld [vmem:[%s1 + $0x174] sm:$0xf]
    %v1659 = vld [vmem:[%s1 + $0x178] sm:$0xf]
    %v1660 = vld [vmem:[%s1 + $0x17c] sm:$0xf]
    %v1661 = vunpack.c.l.b16 %v1592
    %v1662 = vunpack.c.l.b16 %v1595
    %v1663 = vunpack.c.l.b16 %v1599
    %v1664 = vunpack.c.l.b16 %v1602
    %v1665 = vunpack.c.l.b16 %v1606
    %v1666 = vunpack.c.l.b16 %v1609
    %v1667 = vunpack.c.l.b16 %v1613
    %v1668 = vunpack.c.l.b16 %v1616
    %v1669 = vunpack.c.l.b16 %v1620
    %v1670 = vunpack.c.l.b16 %v1623
    %v1671 = vunpack.c.l.b16 %v1627
    %v1672 = vunpack.c.l.b16 %v1630
    %v1673 = vunpack.c.l.b16 %v1634
    %v1674 = vunpack.c.l.b16 %v1637
    %v1675 = vunpack.c.l.b16 %v1641
    %v1676 = vunpack.c.l.b16 %v1644
    %v1677 = vpack.c.b16 %v1662, %v1661
    %v1678 = vpack.c.b16 %v1664, %v1663
    %v1679 = vpack.c.b16 %v1666, %v1665
    %v1680 = vpack.c.b16 %v1668, %v1667
    %v1681 = vpack.c.b16 %v1670, %v1669
    %v1682 = vpack.c.b16 %v1672, %v1671
    %v1683 = vpack.c.b16 %v1674, %v1673
    %v1684 = vpack.c.b16 %v1676, %v1675
    %v1709 = vunpack.c.l.b16 %v1645
    %v1710 = vunpack.c.l.b16 %v1646
    %v1711 = vunpack.c.l.b16 %v1647
    %v1712 = vunpack.c.l.b16 %v1648
    %v1713 = vunpack.c.l.b16 %v1649
    %v1714 = vunpack.c.l.b16 %v1650
    %v1715 = vunpack.c.l.b16 %v1651
    %v1716 = vunpack.c.l.b16 %v1652
    %v1717 = vunpack.c.l.b16 %v1653
    %v1718 = vunpack.c.l.b16 %v1654
    %v1719 = vunpack.c.l.b16 %v1655
    %v1720 = vunpack.c.l.b16 %v1656
    %v1721 = vunpack.c.l.b16 %v1657
    %v1722 = vunpack.c.l.b16 %v1658
    %v1723 = vunpack.c.l.b16 %v1659
    %v1724 = vunpack.c.l.b16 %v1660
    %v1725 = vpack.c.b16 %v1710, %v1709
    %v1726 = vpack.c.b16 %v1712, %v1711
    %v1727 = vpack.c.b16 %v1714, %v1713
    %v1728 = vpack.c.b16 %v1716, %v1715
    %v1729 = vpack.c.b16 %v1718, %v1717
    %v1730 = vpack.c.b16 %v1720, %v1719
    %v1731 = vpack.c.b16 %v1722, %v1721
    %v1732 = vpack.c.b16 %v1724, %v1723
    %1741 = vmatprep.subr.bf16.mxu0 0
    %1742 = vmatpush1.bf16.msra.mxu0 %v1725
    %1743 = vmatprep.subr.bf16.mxu0 0
    %1744 = vmatpush1.bf16.msra.mxu0 %v1726
    %1745 = vmatprep.subr.bf16.mxu0 0
    %1746 = vmatpush1.bf16.msra.mxu0 %v1727
    %1747 = vmatprep.subr.bf16.mxu0 0
    %1748 = vmatpush1.bf16.msra.mxu0 %v1728
    %1749 = vmatprep.subr.bf16.mxu0 0
    %1750 = vmatpush1.bf16.msra.mxu0 %v1729
    %1751 = vmatprep.subr.bf16.mxu0 0
    %1752 = vmatpush1.bf16.msra.mxu0 %v1730
    %1753 = vmatprep.subr.bf16.mxu0 0
    %1754 = vmatpush1.bf16.msra.mxu0 %v1731
    %1755 = vmatprep.subr.bf16.mxu0 0
    %1756 = vmatpush1.bf16.msra.mxu0 %v1732
    %1757 = vmatprep.subr.bf16.mxu0 0
    %1758 = vmatpush1.bf16.msra.mxu0 0
    %1759 = vmatprep.subr.bf16.mxu0 0
    %1760 = vmatpush1.bf16.msra.mxu0 0
    %1761 = vmatprep.subr.bf16.mxu0 0
    %1762 = vmatpush1.bf16.msra.mxu0 0
    %1763 = vmatprep.subr.bf16.mxu0 0
    %1764 = vmatpush1.bf16.msra.mxu0 0
    %1765 = vmatprep.subr.bf16.mxu0 0
    %1766 = vmatpush1.bf16.msra.mxu0 0
    %1767 = vmatprep.subr.bf16.mxu0 0
    %1768 = vmatpush1.bf16.msra.mxu0 0
    %1769 = vmatprep.subr.bf16.mxu0 0
    %1770 = vmatpush1.bf16.msra.mxu0 0
    %1771 = vmatprep.subr.bf16.mxu0 0
    %1772 = vmatpush1.bf16.msra.mxu0 0
    %1773 = vmatprep.mubr.bf16.mxu0 0
    %1774 = vmatmul.mubr.bf16.gmra.mrb[0].mxu0 %v1677
    %v1775 = vpop.f32.mrb[0].mxu0
    %v1776 = vadd.f32 0.0, %v1775
    %v1777 = vpop.f32.mrb[0].mxu0
    %v1778 = vpop.f32.mrb[0].mxu0
    %v1779 = vadd.f32 0.0, %v1778
    %v1780 = vpop.f32.mrb[0].mxu0
    %1781 = vmatprep.mubr.bf16.mxu0 0
    %1782 = vmatmul.mubr.bf16.gmra.mrb[0].mxu0 %v1678
    %v1783 = vpop.f32.mrb[0].mxu0
    %v1784 = vadd.f32 0.0, %v1783
    %v1785 = vpop.f32.mrb[0].mxu0
    %v1786 = vpop.f32.mrb[0].mxu0
    %v1787 = vadd.f32 0.0, %v1786
    %v1788 = vpop.f32.mrb[0].mxu0
    %1789 = vmatprep.mubr.bf16.mxu0 0
    %1790 = vmatmul.mubr.bf16.gmra.mrb[0].mxu0 %v1679
    %v1791 = vpop.f32.mrb[0].mxu0
    %v1792 = vadd.f32 0.0, %v1791
    %v1793 = vpop.f32.mrb[0].mxu0
    %v1794 = vpop.f32.mrb[0].mxu0
    %v1795 = vadd.f32 0.0, %v1794
    %v1796 = vpop.f32.mrb[0].mxu0
    %1797 = vmatprep.mubr.bf16.mxu0 0
    %1798 = vmatmul.mubr.bf16.gmra.mrb[0].mxu0 %v1680
    %v1799 = vpop.f32.mrb[0].mxu0
    %v1800 = vadd.f32 0.0, %v1799
    %v1801 = vpop.f32.mrb[0].mxu0
    %v1802 = vpop.f32.mrb[0].mxu0
    %v1803 = vadd.f32 0.0, %v1802
    %v1804 = vpop.f32.mrb[0].mxu0
    %1805 = vmatprep.mubr.bf16.mxu0 0
    %1806 = vmatmul.mubr.bf16.gmra.mrb[0].mxu0 %v1681
    %v1807 = vpop.f32.mrb[0].mxu0
    %v1808 = vadd.f32 0.0, %v1807
    %v1809 = vpop.f32.mrb[0].mxu0
    %v1810 = vpop.f32.mrb[0].mxu0
    %v1811 = vadd.f32 0.0, %v1810
    %v1812 = vpop.f32.mrb[0].mxu0
    %1813 = vmatprep.mubr.bf16.mxu0 0
    %1814 = vmatmul.mubr.bf16.gmra.mrb[0].mxu0 %v1682
    %v1815 = vpop.f32.mrb[0].mxu0
    %v1816 = vadd.f32 0.0, %v1815
    %v1817 = vpop.f32.mrb[0].mxu0
    %v1818 = vpop.f32.mrb[0].mxu0
    %v1819 = vadd.f32 0.0, %v1818
    %v1820 = vpop.f32.mrb[0].mxu0
    %1821 = vmatprep.mubr.bf16.mxu0 0
    %1822 = vmatmul.mubr.bf16.gmra.mrb[0].mxu0 %v1683
    %v1823 = vpop.f32.mrb[0].mxu0
    %v1824 = vadd.f32 0.0, %v1823
    %v1825 = vpop.f32.mrb[0].mxu0
    %v1826 = vpop.f32.mrb[0].mxu0
    %v1827 = vadd.f32 0.0, %v1826
    %v1828 = vpop.f32.mrb[0].mxu0
    %1829 = vmatprep.mubr.bf16.mxu0 0
    %1830 = vmatmul.mubr.bf16.gmra.mrb[0].mxu0 %v1684
    %v1831 = vpop.f32.mrb[0].mxu0
    %v1832 = vadd.f32 0.0, %v1831
    %v1833 = vpop.f32.mrb[0].mxu0
    %v1834 = vpop.f32.mrb[0].mxu0
    %v1835 = vadd.f32 0.0, %v1834
    %v1836 = vpop.f32.mrb[0].mxu0
    %1837 = vdwg.mxu0
    %v1838 = vadd.f32 %v1565, %v1776
    %v1839 = vadd.f32 %v1566, %v1779
    %v1840 = vadd.f32 %v1567, %v1784
    %v1841 = vadd.f32 %v1568, %v1787
    %v1842 = vadd.f32 %v1569, %v1792
    %v1843 = vadd.f32 %v1570, %v1795
    %v1844 = vadd.f32 %v1571, %v1800
    %v1845 = vadd.f32 %v1572, %v1803
    %v1846 = vadd.f32 %v1573, %v1808
    %v1847 = vadd.f32 %v1574, %v1811
    %v1848 = vadd.f32 %v1575, %v1816
    %v1849 = vadd.f32 %v1576, %v1819
    %v1850 = vadd.f32 %v1577, %v1824
    %v1851 = vadd.f32 %v1578, %v1827
    %v1852 = vadd.f32 %v1579, %v1832
    %v1853 = vadd.f32 %v1580, %v1835
    %s1854 = sadd.s32 %s26, 2
    %s1855 = smul.u32 %s1854, 3
    %s1856 = smul.addr %s1855, 4
    %s1857 = scalar_lea.vmem %s0, %s1856
    %v1858 = vld [vmem:[%s1857] sm:$0xf]
    %v1859 = vld [vmem:[%s1857 + $0x4] sm:$0xf]
    %v1860 = vld [vmem:[%s1857 + $0x8] sm:$0x1]
    %v1861 = vld [vmem:[%s1857 + $0xc] sm:$0xf]
    %v1862 = vld [vmem:[%s1857 + $0x10] sm:$0xf]
    %v1863 = vld [vmem:[%s1857 + $0x14] sm:$0x1]
    %v1864 = vld [vmem:[%s1857 + $0x18] sm:$0xf]
    %v1865 = vld [vmem:[%s1857 + $0x1c] sm:$0xf]
    %v1866 = vld [vmem:[%s1857 + $0x20] sm:$0x1]
    %v1867 = vld [vmem:[%s1857 + $0x24] sm:$0xf]
    %v1868 = vld [vmem:[%s1857 + $0x28] sm:$0xf]
    %v1869 = vld [vmem:[%s1857 + $0x2c] sm:$0x1]
    %v1870 = vld [vmem:[%s1857 + $0x30] sm:$0xf]
    %v1871 = vld [vmem:[%s1857 + $0x34] sm:$0xf]
    %v1872 = vld [vmem:[%s1857 + $0x38] sm:$0x1]
    %v1873 = vld [vmem:[%s1857 + $0x3c] sm:$0xf]
    %v1874 = vld [vmem:[%s1857 + $0x40] sm:$0xf]
    %v1875 = vld [vmem:[%s1857 + $0x44] sm:$0x1]
    %v1876 = vld [vmem:[%s1857 + $0x48] sm:$0xf]
    %v1877 = vld [vmem:[%s1857 + $0x4c] sm:$0xf]
    %v1878 = vld [vmem:[%s1857 + $0x50] sm:$0x1]
    %v1879 = vld [vmem:[%s1857 + $0x54] sm:$0xf]
    %v1880 = vld [vmem:[%s1857 + $0x58] sm:$0xf]
    %v1881 = vld [vmem:[%s1857 + $0x5c] sm:$0x1]
    %v1882 = vld [vmem:[%s1 + $0x180] sm:$0xf]
    %v1883 = vld [vmem:[%s1 + $0x184] sm:$0xf]
    %v1884 = vld [vmem:[%s1 + $0x188] sm:$0xf]
    %v1885 = vld [vmem:[%s1 + $0x18c] sm:$0xf]
    %v1886 = vld [vmem:[%s1 + $0x190] sm:$0xf]
    %v1887 = vld [vmem:[%s1 + $0x194] sm:$0xf]
    %v1888 = vld [vmem:[%s1 + $0x198] sm:$0xf]
    %v1889 = vld [vmem:[%s1 + $0x19c] sm:$0xf]
    %v1890 = vld [vmem:[%s1 + $0x1a0] sm:$0xf]
    %v1891 = vld [vmem:[%s1 + $0x1a4] sm:$0xf]
    %v1892 = vld [vmem:[%s1 + $0x1a8] sm:$0xf]
    %v1893 = vld [vmem:[%s1 + $0x1ac] sm:$0xf]
    %v1894 = vld [vmem:[%s1 + $0x1b0] sm:$0xf]
    %v1895 = vld [vmem:[%s1 + $0x1b4] sm:$0xf]
    %v1896 = vld [vmem:[%s1 + $0x1b8] sm:$0xf]
    %v1897 = vld [vmem:[%s1 + $0x1bc] sm:$0xf]
    %v1914 = vunpack.c.l.b16 %v1858
    %v1915 = vunpack.c.l.b16 %v1859
    %v1916 = vunpack.c.l.b16 %v1861
    %v1917 = vunpack.c.l.b16 %v1862
    %v1918 = vunpack.c.l.b16 %v1864
    %v1919 = vunpack.c.l.b16 %v1865
    %v1920 = vunpack.c.l.b16 %v1867
    %v1921 = vunpack.c.l.b16 %v1868
    %v1922 = vunpack.c.l.b16 %v1870
    %v1923 = vunpack.c.l.b16 %v1871
    %v1924 = vunpack.c.l.b16 %v1873
    %v1925 = vunpack.c.l.b16 %v1874
    %v1926 = vunpack.c.l.b16 %v1876
    %v1927 = vunpack.c.l.b16 %v1877
    %v1928 = vunpack.c.l.b16 %v1879
    %v1929 = vunpack.c.l.b16 %v1880
    %v1930 = vpack.c.b16 %v1915, %v1914
    %v1931 = vpack.c.b16 %v1917, %v1916
    %v1932 = vpack.c.b16 %v1919, %v1918
    %v1933 = vpack.c.b16 %v1921, %v1920
    %v1934 = vpack.c.b16 %v1923, %v1922
    %v1935 = vpack.c.b16 %v1925, %v1924
    %v1936 = vpack.c.b16 %v1927, %v1926
    %v1937 = vpack.c.b16 %v1929, %v1928
    %v1962 = vunpack.c.l.b16 %v1882
    %v1963 = vunpack.c.l.b16 %v1883
    %v1964 = vunpack.c.l.b16 %v1884
    %v1965 = vunpack.c.l.b16 %v1885
    %v1966 = vunpack.c.l.b16 %v1886
    %v1967 = vunpack.c.l.b16 %v1887
    %v1968 = vunpack.c.l.b16 %v1888
    %v1969 = vunpack.c.l.b16 %v1889
    %v1970 = vunpack.c.l.b16 %v1890
    %v1971 = vunpack.c.l.b16 %v1891
    %v1972 = vunpack.c.l.b16 %v1892
    %v1973 = vunpack.c.l.b16 %v1893
    %v1974 = vunpack.c.l.b16 %v1894
    %v1975 = vunpack.c.l.b16 %v1895
    %v1976 = vunpack.c.l.b16 %v1896
    %v1977 = vunpack.c.l.b16 %v1897
    %v1978 = vpack.c.b16 %v1963, %v1962
    %v1979 = vpack.c.b16 %v1965, %v1964
    %v1980 = vpack.c.b16 %v1967, %v1966
    %v1981 = vpack.c.b16 %v1969, %v1968
    %v1982 = vpack.c.b16 %v1971, %v1970
    %v1983 = vpack.c.b16 %v1973, %v1972
    %v1984 = vpack.c.b16 %v1975, %v1974
    %v1985 = vpack.c.b16 %v1977, %v1976
    %1994 = vmatprep.subr.bf16.mxu0 0
    %1995 = vmatpush1.bf16.msra.mxu0 %v1978
    %1996 = vmatprep.subr.bf16.mxu0 0
    %1997 = vmatpush1.bf16.msra.mxu0 %v1979
    %1998 = vmatprep.subr.bf16.mxu0 0
    %1999 = vmatpush1.bf16.msra.mxu0 %v1980
    %2000 = vmatprep.subr.bf16.mxu0 0
    %2001 = vmatpush1.bf16.msra.mxu0 %v1981
    %2002 = vmatprep.subr.bf16.mxu0 0
    %2003 = vmatpush1.bf16.msra.mxu0 %v1982
    %2004 = vmatprep.subr.bf16.mxu0 0
    %2005 = vmatpush1.bf16.msra.mxu0 %v1983
    %2006 = vmatprep.subr.bf16.mxu0 0
    %2007 = vmatpush1.bf16.msra.mxu0 %v1984
    %2008 = vmatprep.subr.bf16.mxu0 0
    %2009 = vmatpush1.bf16.msra.mxu0 %v1985
    %2010 = vmatprep.subr.bf16.mxu0 0
    %2011 = vmatpush1.bf16.msra.mxu0 0
    %2012 = vmatprep.subr.bf16.mxu0 0
    %2013 = vmatpush1.bf16.msra.mxu0 0
    %2014 = vmatprep.subr.bf16.mxu0 0
    %2015 = vmatpush1.bf16.msra.mxu0 0
    %2016 = vmatprep.subr.bf16.mxu0 0
    %2017 = vmatpush1.bf16.msra.mxu0 0
    %2018 = vmatprep.subr.bf16.mxu0 0
    %2019 = vmatpush1.bf16.msra.mxu0 0
    %2020 = vmatprep.subr.bf16.mxu0 0
    %2021 = vmatpush1.bf16.msra.mxu0 0
    %2022 = vmatprep.subr.bf16.mxu0 0
    %2023 = vmatpush1.bf16.msra.mxu0 0
    %2024 = vmatprep.subr.bf16.mxu0 0
    %2025 = vmatpush1.bf16.msra.mxu0 0
    %2026 = vmatprep.mubr.bf16.mxu0 0
    %2027 = vmatmul.mubr.bf16.gmra.mrb[0].mxu0 %v1930
    %v2028 = vpop.f32.mrb[0].mxu0
    %v2029 = vadd.f32 0.0, %v2028
    %v2030 = vpop.f32.mrb[0].mxu0
    %v2031 = vpop.f32.mrb[0].mxu0
    %v2032 = vadd.f32 0.0, %v2031
    %v2033 = vpop.f32.mrb[0].mxu0
    %2034 = vmatprep.mubr.bf16.mxu0 0
    %2035 = vmatmul.mubr.bf16.gmra.mrb[0].mxu0 %v1931
    %v2036 = vpop.f32.mrb[0].mxu0
    %v2037 = vadd.f32 0.0, %v2036
    %v2038 = vpop.f32.mrb[0].mxu0
    %v2039 = vpop.f32.mrb[0].mxu0
    %v2040 = vadd.f32 0.0, %v2039
    %v2041 = vpop.f32.mrb[0].mxu0
    %2042 = vmatprep.mubr.bf16.mxu0 0
    %2043 = vmatmul.mubr.bf16.gmra.mrb[0].mxu0 %v1932
    %v2044 = vpop.f32.mrb[0].mxu0
    %v2045 = vadd.f32 0.0, %v2044
    %v2046 = vpop.f32.mrb[0].mxu0
    %v2047 = vpop.f32.mrb[0].mxu0
    %v2048 = vadd.f32 0.0, %v2047
    %v2049 = vpop.f32.mrb[0].mxu0
    %2050 = vmatprep.mubr.bf16.mxu0 0
    %2051 = vmatmul.mubr.bf16.gmra.mrb[0].mxu0 %v1933
    %v2052 = vpop.f32.mrb[0].mxu0
    %v2053 = vadd.f32 0.0, %v2052
    %v2054 = vpop.f32.mrb[0].mxu0
    %v2055 = vpop.f32.mrb[0].mxu0
    %v2056 = vadd.f32 0.0, %v2055
    %v2057 = vpop.f32.mrb[0].mxu0
    %2058 = vmatprep.mubr.bf16.mxu0 0
    %2059 = vmatmul.mubr.bf16.gmra.mrb[0].mxu0 %v1934
    %v2060 = vpop.f32.mrb[0].mxu0
    %v2061 = vadd.f32 0.0, %v2060
    %v2062 = vpop.f32.mrb[0].mxu0
    %v2063 = vpop.f32.mrb[0].mxu0
    %v2064 = vadd.f32 0.0, %v2063
    %v2065 = vpop.f32.mrb[0].mxu0
    %2066 = vmatprep.mubr.bf16.mxu0 0
    %2067 = vmatmul.mubr.bf16.gmra.mrb[0].mxu0 %v1935
    %v2068 = vpop.f32.mrb[0].mxu0
    %v2069 = vadd.f32 0.0, %v2068
    %v2070 = vpop.f32.mrb[0].mxu0
    %v2071 = vpop.f32.mrb[0].mxu0
    %v2072 = vadd.f32 0.0, %v2071
    %v2073 = vpop.f32.mrb[0].mxu0
    %2074 = vmatprep.mubr.bf16.mxu0 0
    %2075 = vmatmul.mubr.bf16.gmra.mrb[0].mxu0 %v1936
    %v2076 = vpop.f32.mrb[0].mxu0
    %v2077 = vadd.f32 0.0, %v2076
    %v2078 = vpop.f32.mrb[0].mxu0
    %v2079 = vpop.f32.mrb[0].mxu0
    %v2080 = vadd.f32 0.0, %v2079
    %v2081 = vpop.f32.mrb[0].mxu0
    %2082 = vmatprep.mubr.bf16.mxu0 0
    %2083 = vmatmul.mubr.bf16.gmra.mrb[0].mxu0 %v1937
    %v2084 = vpop.f32.mrb[0].mxu0
    %v2085 = vadd.f32 0.0, %v2084
    %v2086 = vpop.f32.mrb[0].mxu0
    %v2087 = vpop.f32.mrb[0].mxu0
    %v2088 = vadd.f32 0.0, %v2087
    %v2089 = vpop.f32.mrb[0].mxu0
    %2090 = vdwg.mxu0
    %v2091 = vadd.f32 %v1838, %v2029
    %v2092 = vadd.f32 %v1839, %v2032
    %v2093 = vadd.f32 %v1840, %v2037
    %v2094 = vadd.f32 %v1841, %v2040
    %v2095 = vadd.f32 %v1842, %v2045
    %v2096 = vadd.f32 %v1843, %v2048
    %v2097 = vadd.f32 %v1844, %v2053
    %v2098 = vadd.f32 %v1845, %v2056
    %v2099 = vadd.f32 %v1846, %v2061
    %v2100 = vadd.f32 %v1847, %v2064
    %v2101 = vadd.f32 %v1848, %v2069
    %v2102 = vadd.f32 %v1849, %v2072
    %v2103 = vadd.f32 %v1850, %v2077
    %v2104 = vadd.f32 %v1851, %v2080
    %v2105 = vadd.f32 %v1852, %v2085
    %v2106 = vadd.f32 %v1853, %v2088
    %v2108 = vshrl.u32 %v1858, 16
    %v2110 = vrot.slane %v2108, 4
    %v2111 = vshll.u32 %v1858, 16
    %v2113 = vrot.slane %v2111, 5
    %v2114 = vor.u32 %v2110, %v2113
    %v2115 = vrot.slane %v2114, 4
    %v2117 = vshll.u32 %v1859, 16
    %v2119 = vrot.slane %v2117, 5
    %v2120 = vsel %vm72, %v2115, %v2119
    %v2121 = vshrl.u32 %v1859, 16
    %v2123 = vrot.slane %v2121, 4
    %v2124 = vor.u32 %v2123, %v2119
    %v2125 = vrot.slane %v2124, 4
    %v2127 = vshll.u32 %v1860, 16
    %v2129 = vrot.slane %v2127, 5
    %v2130 = vsel %vm72, %v2125, %v2129
    %v2132 = vshrl.u32 %v1861, 16
    %v2134 = vrot.slane %v2132, 4
    %v2135 = vshll.u32 %v1861, 16
    %v2137 = vrot.slane %v2135, 5
    %v2138 = vor.u32 %v2134, %v2137
    %v2139 = vrot.slane %v2138, 4
    %v2141 = vshll.u32 %v1862, 16
    %v2143 = vrot.slane %v2141, 5
    %v2144 = vsel %vm72, %v2139, %v2143
    %v2145 = vshrl.u32 %v1862, 16
    %v2147 = vrot.slane %v2145, 4
    %v2148 = vor.u32 %v2147, %v2143
    %v2149 = vrot.slane %v2148, 4
    %v2151 = vshll.u32 %v1863, 16
    %v2153 = vrot.slane %v2151, 5
    %v2154 = vsel %vm72, %v2149, %v2153
    %v2156 = vshrl.u32 %v1864, 16
    %v2158 = vrot.slane %v2156, 4
    %v2159 = vshll.u32 %v1864, 16
    %v2161 = vrot.slane %v2159, 5
    %v2162 = vor.u32 %v2158, %v2161
    %v2163 = vrot.slane %v2162, 4
    %v2165 = vshll.u32 %v1865, 16
    %v2167 = vrot.slane %v2165, 5
    %v2168 = vsel %vm72, %v2163, %v2167
    %v2169 = vshrl.u32 %v1865, 16
    %v2171 = vrot.slane %v2169, 4
    %v2172 = vor.u32 %v2171, %v2167
    %v2173 = vrot.slane %v2172, 4
    %v2175 = vshll.u32 %v1866, 16
    %v2177 = vrot.slane %v2175, 5
    %v2178 = vsel %vm72, %v2173, %v2177
    %v2180 = vshrl.u32 %v1867, 16
    %v2182 = vrot.slane %v2180, 4
    %v2183 = vshll.u32 %v1867, 16
    %v2185 = vrot.slane %v2183, 5
    %v2186 = vor.u32 %v2182, %v2185
    %v2187 = vrot.slane %v2186, 4
    %v2189 = vshll.u32 %v1868, 16
    %v2191 = vrot.slane %v2189, 5
    %v2192 = vsel %vm72, %v2187, %v2191
    %v2193 = vshrl.u32 %v1868, 16
    %v2195 = vrot.slane %v2193, 4
    %v2196 = vor.u32 %v2195, %v2191
    %v2197 = vrot.slane %v2196, 4
    %v2199 = vshll.u32 %v1869, 16
    %v2201 = vrot.slane %v2199, 5
    %v2202 = vsel %vm72, %v2197, %v2201
    %v2204 = vshrl.u32 %v1870, 16
    %v2206 = vrot.slane %v2204, 4
    %v2207 = vshll.u32 %v1870, 16
    %v2209 = vrot.slane %v2207, 5
    %v2210 = vor.u32 %v2206, %v2209
    %v2211 = vrot.slane %v2210, 4
    %v2213 = vshll.u32 %v1871, 16
    %v2215 = vrot.slane %v2213, 5
    %v2216 = vsel %vm72, %v2211, %v2215
    %v2217 = vshrl.u32 %v1871, 16
    %v2219 = vrot.slane %v2217, 4
    %v2220 = vor.u32 %v2219, %v2215
    %v2221 = vrot.slane %v2220, 4
    %v2223 = vshll.u32 %v1872, 16
    %v2225 = vrot.slane %v2223, 5
    %v2226 = vsel %vm72, %v2221, %v2225
    %v2228 = vshrl.u32 %v1873, 16
    %v2230 = vrot.slane %v2228, 4
    %v2231 = vshll.u32 %v1873, 16
    %v2233 = vrot.slane %v2231, 5
    %v2234 = vor.u32 %v2230, %v2233
    %v2235 = vrot.slane %v2234, 4
    %v2237 = vshll.u32 %v1874, 16
    %v2239 = vrot.slane %v2237, 5
    %v2240 = vsel %vm72, %v2235, %v2239
    %v2241 = vshrl.u32 %v1874, 16
    %v2243 = vrot.slane %v2241, 4
    %v2244 = vor.u32 %v2243, %v2239
    %v2245 = vrot.slane %v2244, 4
    %v2247 = vshll.u32 %v1875, 16
    %v2249 = vrot.slane %v2247, 5
    %v2250 = vsel %vm72, %v2245, %v2249
    %v2252 = vshrl.u32 %v1876, 16
    %v2254 = vrot.slane %v2252, 4
    %v2255 = vshll.u32 %v1876, 16
    %v2257 = vrot.slane %v2255, 5
    %v2258 = vor.u32 %v2254, %v2257
    %v2259 = vrot.slane %v2258, 4
    %v2261 = vshll.u32 %v1877, 16
    %v2263 = vrot.slane %v2261, 5
    %v2264 = vsel %vm72, %v2259, %v2263
    %v2265 = vshrl.u32 %v1877, 16
    %v2267 = vrot.slane %v2265, 4
    %v2268 = vor.u32 %v2267, %v2263
    %v2269 = vrot.slane %v2268, 4
    %v2271 = vshll.u32 %v1878, 16
    %v2273 = vrot.slane %v2271, 5
    %v2274 = vsel %vm72, %v2269, %v2273
    %v2276 = vshrl.u32 %v1879, 16
    %v2278 = vrot.slane %v2276, 4
    %v2279 = vshll.u32 %v1879, 16
    %v2281 = vrot.slane %v2279, 5
    %v2282 = vor.u32 %v2278, %v2281
    %v2283 = vrot.slane %v2282, 4
    %v2285 = vshll.u32 %v1880, 16
    %v2287 = vrot.slane %v2285, 5
    %v2288 = vsel %vm72, %v2283, %v2287
    %v2289 = vshrl.u32 %v1880, 16
    %v2291 = vrot.slane %v2289, 4
    %v2292 = vor.u32 %v2291, %v2287
    %v2293 = vrot.slane %v2292, 4
    %v2295 = vshll.u32 %v1881, 16
    %v2297 = vrot.slane %v2295, 5
    %v2298 = vsel %vm72, %v2293, %v2297
    %v2299 = vld [vmem:[%s1 + $0x1c0] sm:$0xf]
    %v2300 = vld [vmem:[%s1 + $0x1c4] sm:$0xf]
    %v2301 = vld [vmem:[%s1 + $0x1c8] sm:$0xf]
    %v2302 = vld [vmem:[%s1 + $0x1cc] sm:$0xf]
    %v2303 = vld [vmem:[%s1 + $0x1d0] sm:$0xf]
    %v2304 = vld [vmem:[%s1 + $0x1d4] sm:$0xf]
    %v2305 = vld [vmem:[%s1 + $0x1d8] sm:$0xf]
    %v2306 = vld [vmem:[%s1 + $0x1dc] sm:$0xf]
    %v2307 = vld [vmem:[%s1 + $0x1e0] sm:$0xf]
    %v2308 = vld [vmem:[%s1 + $0x1e4] sm:$0xf]
    %v2309 = vld [vmem:[%s1 + $0x1e8] sm:$0xf]
    %v2310 = vld [vmem:[%s1 + $0x1ec] sm:$0xf]
    %v2311 = vld [vmem:[%s1 + $0x1f0] sm:$0xf]
    %v2312 = vld [vmem:[%s1 + $0x1f4] sm:$0xf]
    %v2313 = vld [vmem:[%s1 + $0x1f8] sm:$0xf]
    %v2314 = vld [vmem:[%s1 + $0x1fc] sm:$0xf]
    %v2315 = vunpack.c.l.b16 %v2120
    %v2316 = vunpack.c.l.b16 %v2130
    %v2317 = vunpack.c.l.b16 %v2144
    %v2318 = vunpack.c.l.b16 %v2154
    %v2319 = vunpack.c.l.b16 %v2168
    %v2320 = vunpack.c.l.b16 %v2178
    %v2321 = vunpack.c.l.b16 %v2192
    %v2322 = vunpack.c.l.b16 %v2202
    %v2323 = vunpack.c.l.b16 %v2216
    %v2324 = vunpack.c.l.b16 %v2226
    %v2325 = vunpack.c.l.b16 %v2240
    %v2326 = vunpack.c.l.b16 %v2250
    %v2327 = vunpack.c.l.b16 %v2264
    %v2328 = vunpack.c.l.b16 %v2274
    %v2329 = vunpack.c.l.b16 %v2288
    %v2330 = vunpack.c.l.b16 %v2298
    %v2331 = vpack.c.b16 %v2316, %v2315
    %v2332 = vpack.c.b16 %v2318, %v2317
    %v2333 = vpack.c.b16 %v2320, %v2319
    %v2334 = vpack.c.b16 %v2322, %v2321
    %v2335 = vpack.c.b16 %v2324, %v2323
    %v2336 = vpack.c.b16 %v2326, %v2325
    %v2337 = vpack.c.b16 %v2328, %v2327
    %v2338 = vpack.c.b16 %v2330, %v2329
    %v2363 = vunpack.c.l.b16 %v2299
    %v2364 = vunpack.c.l.b16 %v2300
    %v2365 = vunpack.c.l.b16 %v2301
    %v2366 = vunpack.c.l.b16 %v2302
    %v2367 = vunpack.c.l.b16 %v2303
    %v2368 = vunpack.c.l.b16 %v2304
    %v2369 = vunpack.c.l.b16 %v2305
    %v2370 = vunpack.c.l.b16 %v2306
    %v2371 = vunpack.c.l.b16 %v2307
    %v2372 = vunpack.c.l.b16 %v2308
    %v2373 = vunpack.c.l.b16 %v2309
    %v2374 = vunpack.c.l.b16 %v2310
    %v2375 = vunpack.c.l.b16 %v2311
    %v2376 = vunpack.c.l.b16 %v2312
    %v2377 = vunpack.c.l.b16 %v2313
    %v2378 = vunpack.c.l.b16 %v2314
    %v2379 = vpack.c.b16 %v2364, %v2363
    %v2380 = vpack.c.b16 %v2366, %v2365
    %v2381 = vpack.c.b16 %v2368, %v2367
    %v2382 = vpack.c.b16 %v2370, %v2369
    %v2383 = vpack.c.b16 %v2372, %v2371
    %v2384 = vpack.c.b16 %v2374, %v2373
    %v2385 = vpack.c.b16 %v2376, %v2375
    %v2386 = vpack.c.b16 %v2378, %v2377
    %2395 = vmatprep.subr.bf16.mxu0 0
    %2396 = vmatpush1.bf16.msra.mxu0 %v2379
    %2397 = vmatprep.subr.bf16.mxu0 0
    %2398 = vmatpush1.bf16.msra.mxu0 %v2380
    %2399 = vmatprep.subr.bf16.mxu0 0
    %2400 = vmatpush1.bf16.msra.mxu0 %v2381
    %2401 = vmatprep.subr.bf16.mxu0 0
    %2402 = vmatpush1.bf16.msra.mxu0 %v2382
    %2403 = vmatprep.subr.bf16.mxu0 0
    %2404 = vmatpush1.bf16.msra.mxu0 %v2383
    %2405 = vmatprep.subr.bf16.mxu0 0
    %2406 = vmatpush1.bf16.msra.mxu0 %v2384
    %2407 = vmatprep.subr.bf16.mxu0 0
    %2408 = vmatpush1.bf16.msra.mxu0 %v2385
    %2409 = vmatprep.subr.bf16.mxu0 0
    %2410 = vmatpush1.bf16.msra.mxu0 %v2386
    %2411 = vmatprep.subr.bf16.mxu0 0
    %2412 = vmatpush1.bf16.msra.mxu0 0
    %2413 = vmatprep.subr.bf16.mxu0 0
    %2414 = vmatpush1.bf16.msra.mxu0 0
    %2415 = vmatprep.subr.bf16.mxu0 0
    %2416 = vmatpush1.bf16.msra.mxu0 0
    %2417 = vmatprep.subr.bf16.mxu0 0
    %2418 = vmatpush1.bf16.msra.mxu0 0
    %2419 = vmatprep.subr.bf16.mxu0 0
    %2420 = vmatpush1.bf16.msra.mxu0 0
    %2421 = vmatprep.subr.bf16.mxu0 0
    %2422 = vmatpush1.bf16.msra.mxu0 0
    %2423 = vmatprep.subr.bf16.mxu0 0
    %2424 = vmatpush1.bf16.msra.mxu0 0
    %2425 = vmatprep.subr.bf16.mxu0 0
    %2426 = vmatpush1.bf16.msra.mxu0 0
    %2427 = vmatprep.mubr.bf16.mxu0 0
    %2428 = vmatmul.mubr.bf16.gmra.mrb[0].mxu0 %v2331
    %v2429 = vpop.f32.mrb[0].mxu0
    %v2430 = vadd.f32 0.0, %v2429
    %v2431 = vpop.f32.mrb[0].mxu0
    %v2432 = vpop.f32.mrb[0].mxu0
    %v2433 = vadd.f32 0.0, %v2432
    %v2434 = vpop.f32.mrb[0].mxu0
    %2435 = vmatprep.mubr.bf16.mxu0 0
    %2436 = vmatmul.mubr.bf16.gmra.mrb[0].mxu0 %v2332
    %v2437 = vpop.f32.mrb[0].mxu0
    %v2438 = vadd.f32 0.0, %v2437
    %v2439 = vpop.f32.mrb[0].mxu0
    %v2440 = vpop.f32.mrb[0].mxu0
    %v2441 = vadd.f32 0.0, %v2440
    %v2442 = vpop.f32.mrb[0].mxu0
    %2443 = vmatprep.mubr.bf16.mxu0 0
    %2444 = vmatmul.mubr.bf16.gmra.mrb[0].mxu0 %v2333
    %v2445 = vpop.f32.mrb[0].mxu0
    %v2446 = vadd.f32 0.0, %v2445
    %v2447 = vpop.f32.mrb[0].mxu0
    %v2448 = vpop.f32.mrb[0].mxu0
    %v2449 = vadd.f32 0.0, %v2448
    %v2450 = vpop.f32.mrb[0].mxu0
    %2451 = vmatprep.mubr.bf16.mxu0 0
    %2452 = vmatmul.mubr.bf16.gmra.mrb[0].mxu0 %v2334
    %v2453 = vpop.f32.mrb[0].mxu0
    %v2454 = vadd.f32 0.0, %v2453
    %v2455 = vpop.f32.mrb[0].mxu0
    %v2456 = vpop.f32.mrb[0].mxu0
    %v2457 = vadd.f32 0.0, %v2456
    %v2458 = vpop.f32.mrb[0].mxu0
    %2459 = vmatprep.mubr.bf16.mxu0 0
    %2460 = vmatmul.mubr.bf16.gmra.mrb[0].mxu0 %v2335
    %v2461 = vpop.f32.mrb[0].mxu0
    %v2462 = vadd.f32 0.0, %v2461
    %v2463 = vpop.f32.mrb[0].mxu0
    %v2464 = vpop.f32.mrb[0].mxu0
    %v2465 = vadd.f32 0.0, %v2464
    %v2466 = vpop.f32.mrb[0].mxu0
    %2467 = vmatprep.mubr.bf16.mxu0 0
    %2468 = vmatmul.mubr.bf16.gmra.mrb[0].mxu0 %v2336
    %v2469 = vpop.f32.mrb[0].mxu0
    %v2470 = vadd.f32 0.0, %v2469
    %v2471 = vpop.f32.mrb[0].mxu0
    %v2472 = vpop.f32.mrb[0].mxu0
    %v2473 = vadd.f32 0.0, %v2472
    %v2474 = vpop.f32.mrb[0].mxu0
    %2475 = vmatprep.mubr.bf16.mxu0 0
    %2476 = vmatmul.mubr.bf16.gmra.mrb[0].mxu0 %v2337
    %v2477 = vpop.f32.mrb[0].mxu0
    %v2478 = vadd.f32 0.0, %v2477
    %v2479 = vpop.f32.mrb[0].mxu0
    %v2480 = vpop.f32.mrb[0].mxu0
    %v2481 = vadd.f32 0.0, %v2480
    %v2482 = vpop.f32.mrb[0].mxu0
    %2483 = vmatprep.mubr.bf16.mxu0 0
    %2484 = vmatmul.mubr.bf16.gmra.mrb[0].mxu0 %v2338
    %v2485 = vpop.f32.mrb[0].mxu0
    %v2486 = vadd.f32 0.0, %v2485
    %v2487 = vpop.f32.mrb[0].mxu0
    %v2488 = vpop.f32.mrb[0].mxu0
    %v2489 = vadd.f32 0.0, %v2488
    %v2490 = vpop.f32.mrb[0].mxu0
    %2491 = vdwg.mxu0
    %v2492 = vadd.f32 %v2091, %v2430
    %v2493 = vadd.f32 %v2092, %v2433
    %v2494 = vadd.f32 %v2093, %v2438
    %v2495 = vadd.f32 %v2094, %v2441
    %v2496 = vadd.f32 %v2095, %v2446
    %v2497 = vadd.f32 %v2096, %v2449
    %v2498 = vadd.f32 %v2097, %v2454
    %v2499 = vadd.f32 %v2098, %v2457
    %v2500 = vadd.f32 %v2099, %v2462
    %v2501 = vadd.f32 %v2100, %v2465
    %v2502 = vadd.f32 %v2101, %v2470
    %v2503 = vadd.f32 %v2102, %v2473
    %v2504 = vadd.f32 %v2103, %v2478
    %v2505 = vadd.f32 %v2104, %v2481
    %v2506 = vadd.f32 %v2105, %v2486
    %v2507 = vadd.f32 %v2106, %v2489
    %v2516 = vrot.slane %v1858, 5
    %v2517 = vrot.slane %v2516, 4
    %v2518 = vrot.slane %v1859, 5
    %v2519 = vsel %vm661, %v2517, %v2518
    %v2520 = vrot.slane %v2518, 4
    %v2521 = vrot.slane %v1860, 5
    %v2522 = vsel %vm661, %v2520, %v2521
    %v2523 = vrot.slane %v1861, 5
    %v2524 = vrot.slane %v2523, 4
    %v2525 = vrot.slane %v1862, 5
    %v2526 = vsel %vm661, %v2524, %v2525
    %v2527 = vrot.slane %v2525, 4
    %v2528 = vrot.slane %v1863, 5
    %v2529 = vsel %vm661, %v2527, %v2528
    %v2530 = vrot.slane %v1864, 5
    %v2531 = vrot.slane %v2530, 4
    %v2532 = vrot.slane %v1865, 5
    %v2533 = vsel %vm661, %v2531, %v2532
    %v2534 = vrot.slane %v2532, 4
    %v2535 = vrot.slane %v1866, 5
    %v2536 = vsel %vm661, %v2534, %v2535
    %v2537 = vrot.slane %v1867, 5
    %v2538 = vrot.slane %v2537, 4
    %v2539 = vrot.slane %v1868, 5
    %v2540 = vsel %vm661, %v2538, %v2539
    %v2541 = vrot.slane %v2539, 4
    %v2542 = vrot.slane %v1869, 5
    %v2543 = vsel %vm661, %v2541, %v2542
    %v2544 = vrot.slane %v1870, 5
    %v2545 = vrot.slane %v2544, 4
    %v2546 = vrot.slane %v1871, 5
    %v2547 = vsel %vm661, %v2545, %v2546
    %v2548 = vrot.slane %v2546, 4
    %v2549 = vrot.slane %v1872, 5
    %v2550 = vsel %vm661, %v2548, %v2549
    %v2551 = vrot.slane %v1873, 5
    %v2552 = vrot.slane %v2551, 4
    %v2553 = vrot.slane %v1874, 5
    %v2554 = vsel %vm661, %v2552, %v2553
    %v2555 = vrot.slane %v2553, 4
    %v2556 = vrot.slane %v1875, 5
    %v2557 = vsel %vm661, %v2555, %v2556
    %v2558 = vrot.slane %v1876, 5
    %v2559 = vrot.slane %v2558, 4
    %v2560 = vrot.slane %v1877, 5
    %v2561 = vsel %vm661, %v2559, %v2560
    %v2562 = vrot.slane %v2560, 4
    %v2563 = vrot.slane %v1878, 5
    %v2564 = vsel %vm661, %v2562, %v2563
    %v2565 = vrot.slane %v1879, 5
    %v2566 = vrot.slane %v2565, 4
    %v2567 = vrot.slane %v1880, 5
    %v2568 = vsel %vm661, %v2566, %v2567
    %v2569 = vrot.slane %v2567, 4
    %v2570 = vrot.slane %v1881, 5
    %v2571 = vsel %vm661, %v2569, %v2570
    %v2572 = vld [vmem:[%s1 + $0x200] sm:$0xf]
    %v2573 = vld [vmem:[%s1 + $0x204] sm:$0xf]
    %v2574 = vld [vmem:[%s1 + $0x208] sm:$0xf]
    %v2575 = vld [vmem:[%s1 + $0x20c] sm:$0xf]
    %v2576 = vld [vmem:[%s1 + $0x210] sm:$0xf]
    %v2577 = vld [vmem:[%s1 + $0x214] sm:$0xf]
    %v2578 = vld [vmem:[%s1 + $0x218] sm:$0xf]
    %v2579 = vld [vmem:[%s1 + $0x21c] sm:$0xf]
    %v2580 = vld [vmem:[%s1 + $0x220] sm:$0xf]
    %v2581 = vld [vmem:[%s1 + $0x224] sm:$0xf]
    %v2582 = vld [vmem:[%s1 + $0x228] sm:$0xf]
    %v2583 = vld [vmem:[%s1 + $0x22c] sm:$0xf]
    %v2584 = vld [vmem:[%s1 + $0x230] sm:$0xf]
    %v2585 = vld [vmem:[%s1 + $0x234] sm:$0xf]
    %v2586 = vld [vmem:[%s1 + $0x238] sm:$0xf]
    %v2587 = vld [vmem:[%s1 + $0x23c] sm:$0xf]
    %v2588 = vunpack.c.l.b16 %v2519
    %v2589 = vunpack.c.l.b16 %v2522
    %v2590 = vunpack.c.l.b16 %v2526
    %v2591 = vunpack.c.l.b16 %v2529
    %v2592 = vunpack.c.l.b16 %v2533
    %v2593 = vunpack.c.l.b16 %v2536
    %v2594 = vunpack.c.l.b16 %v2540
    %v2595 = vunpack.c.l.b16 %v2543
    %v2596 = vunpack.c.l.b16 %v2547
    %v2597 = vunpack.c.l.b16 %v2550
    %v2598 = vunpack.c.l.b16 %v2554
    %v2599 = vunpack.c.l.b16 %v2557
    %v2600 = vunpack.c.l.b16 %v2561
    %v2601 = vunpack.c.l.b16 %v2564
    %v2602 = vunpack.c.l.b16 %v2568
    %v2603 = vunpack.c.l.b16 %v2571
    %v2604 = vpack.c.b16 %v2589, %v2588
    %v2605 = vpack.c.b16 %v2591, %v2590
    %v2606 = vpack.c.b16 %v2593, %v2592
    %v2607 = vpack.c.b16 %v2595, %v2594
    %v2608 = vpack.c.b16 %v2597, %v2596
    %v2609 = vpack.c.b16 %v2599, %v2598
    %v2610 = vpack.c.b16 %v2601, %v2600
    %v2611 = vpack.c.b16 %v2603, %v2602
    %v2636 = vunpack.c.l.b16 %v2572
    %v2637 = vunpack.c.l.b16 %v2573
    %v2638 = vunpack.c.l.b16 %v2574
    %v2639 = vunpack.c.l.b16 %v2575
    %v2640 = vunpack.c.l.b16 %v2576
    %v2641 = vunpack.c.l.b16 %v2577
    %v2642 = vunpack.c.l.b16 %v2578
    %v2643 = vunpack.c.l.b16 %v2579
    %v2644 = vunpack.c.l.b16 %v2580
    %v2645 = vunpack.c.l.b16 %v2581
    %v2646 = vunpack.c.l.b16 %v2582
    %v2647 = vunpack.c.l.b16 %v2583
    %v2648 = vunpack.c.l.b16 %v2584
    %v2649 = vunpack.c.l.b16 %v2585
    %v2650 = vunpack.c.l.b16 %v2586
    %v2651 = vunpack.c.l.b16 %v2587
    %v2652 = vpack.c.b16 %v2637, %v2636
    %v2653 = vpack.c.b16 %v2639, %v2638
    %v2654 = vpack.c.b16 %v2641, %v2640
    %v2655 = vpack.c.b16 %v2643, %v2642
    %v2656 = vpack.c.b16 %v2645, %v2644
    %v2657 = vpack.c.b16 %v2647, %v2646
    %v2658 = vpack.c.b16 %v2649, %v2648
    %v2659 = vpack.c.b16 %v2651, %v2650
    %2668 = vmatprep.subr.bf16.mxu0 0
    %2669 = vmatpush1.bf16.msra.mxu0 %v2652
    %2670 = vmatprep.subr.bf16.mxu0 0
    %2671 = vmatpush1.bf16.msra.mxu0 %v2653
    %2672 = vmatprep.subr.bf16.mxu0 0
    %2673 = vmatpush1.bf16.msra.mxu0 %v2654
    %2674 = vmatprep.subr.bf16.mxu0 0
    %2675 = vmatpush1.bf16.msra.mxu0 %v2655
    %2676 = vmatprep.subr.bf16.mxu0 0
    %2677 = vmatpush1.bf16.msra.mxu0 %v2656
    %2678 = vmatprep.subr.bf16.mxu0 0
    %2679 = vmatpush1.bf16.msra.mxu0 %v2657
    %2680 = vmatprep.subr.bf16.mxu0 0
    %2681 = vmatpush1.bf16.msra.mxu0 %v2658
    %2682 = vmatprep.subr.bf16.mxu0 0
    %2683 = vmatpush1.bf16.msra.mxu0 %v2659
    %2684 = vmatprep.subr.bf16.mxu0 0
    %2685 = vmatpush1.bf16.msra.mxu0 0
    %2686 = vmatprep.subr.bf16.mxu0 0
    %2687 = vmatpush1.bf16.msra.mxu0 0
    %2688 = vmatprep.subr.bf16.mxu0 0
    %2689 = vmatpush1.bf16.msra.mxu0 0
    %2690 = vmatprep.subr.bf16.mxu0 0
    %2691 = vmatpush1.bf16.msra.mxu0 0
    %2692 = vmatprep.subr.bf16.mxu0 0
    %2693 = vmatpush1.bf16.msra.mxu0 0
    %2694 = vmatprep.subr.bf16.mxu0 0
    %2695 = vmatpush1.bf16.msra.mxu0 0
    %2696 = vmatprep.subr.bf16.mxu0 0
    %2697 = vmatpush1.bf16.msra.mxu0 0
    %2698 = vmatprep.subr.bf16.mxu0 0
    %2699 = vmatpush1.bf16.msra.mxu0 0
    %2700 = vmatprep.mubr.bf16.mxu0 0
    %2701 = vmatmul.mubr.bf16.gmra.mrb[0].mxu0 %v2604
    %v2702 = vpop.f32.mrb[0].mxu0
    %v2703 = vadd.f32 0.0, %v2702
    %v2704 = vpop.f32.mrb[0].mxu0
    %v2705 = vpop.f32.mrb[0].mxu0
    %v2706 = vadd.f32 0.0, %v2705
    %v2707 = vpop.f32.mrb[0].mxu0
    %2708 = vmatprep.mubr.bf16.mxu0 0
    %2709 = vmatmul.mubr.bf16.gmra.mrb[0].mxu0 %v2605
    %v2710 = vpop.f32.mrb[0].mxu0
    %v2711 = vadd.f32 0.0, %v2710
    %v2712 = vpop.f32.mrb[0].mxu0
    %v2713 = vpop.f32.mrb[0].mxu0
    %v2714 = vadd.f32 0.0, %v2713
    %v2715 = vpop.f32.mrb[0].mxu0
    %2716 = vmatprep.mubr.bf16.mxu0 0
    %2717 = vmatmul.mubr.bf16.gmra.mrb[0].mxu0 %v2606
    %v2718 = vpop.f32.mrb[0].mxu0
    %v2719 = vadd.f32 0.0, %v2718
    %v2720 = vpop.f32.mrb[0].mxu0
    %v2721 = vpop.f32.mrb[0].mxu0
    %v2722 = vadd.f32 0.0, %v2721
    %v2723 = vpop.f32.mrb[0].mxu0
    %2724 = vmatprep.mubr.bf16.mxu0 0
    %2725 = vmatmul.mubr.bf16.gmra.mrb[0].mxu0 %v2607
    %v2726 = vpop.f32.mrb[0].mxu0
    %v2727 = vadd.f32 0.0, %v2726
    %v2728 = vpop.f32.mrb[0].mxu0
    %v2729 = vpop.f32.mrb[0].mxu0
    %v2730 = vadd.f32 0.0, %v2729
    %v2731 = vpop.f32.mrb[0].mxu0
    %2732 = vmatprep.mubr.bf16.mxu0 0
    %2733 = vmatmul.mubr.bf16.gmra.mrb[0].mxu0 %v2608
    %v2734 = vpop.f32.mrb[0].mxu0
    %v2735 = vadd.f32 0.0, %v2734
    %v2736 = vpop.f32.mrb[0].mxu0
    %v2737 = vpop.f32.mrb[0].mxu0
    %v2738 = vadd.f32 0.0, %v2737
    %v2739 = vpop.f32.mrb[0].mxu0
    %2740 = vmatprep.mubr.bf16.mxu0 0
    %2741 = vmatmul.mubr.bf16.gmra.mrb[0].mxu0 %v2609
    %v2742 = vpop.f32.mrb[0].mxu0
    %v2743 = vadd.f32 0.0, %v2742
    %v2744 = vpop.f32.mrb[0].mxu0
    %v2745 = vpop.f32.mrb[0].mxu0
    %v2746 = vadd.f32 0.0, %v2745
    %v2747 = vpop.f32.mrb[0].mxu0
    %2748 = vmatprep.mubr.bf16.mxu0 0
    %2749 = vmatmul.mubr.bf16.gmra.mrb[0].mxu0 %v2610
    %v2750 = vpop.f32.mrb[0].mxu0
    %v2751 = vadd.f32 0.0, %v2750
    %v2752 = vpop.f32.mrb[0].mxu0
    %v2753 = vpop.f32.mrb[0].mxu0
    %v2754 = vadd.f32 0.0, %v2753
    %v2755 = vpop.f32.mrb[0].mxu0
    %2756 = vmatprep.mubr.bf16.mxu0 0
    %2757 = vmatmul.mubr.bf16.gmra.mrb[0].mxu0 %v2611
    %v2758 = vpop.f32.mrb[0].mxu0
    %v2759 = vadd.f32 0.0, %v2758
    %v2760 = vpop.f32.mrb[0].mxu0
    %v2761 = vpop.f32.mrb[0].mxu0
    %v2762 = vadd.f32 0.0, %v2761
    %v2763 = vpop.f32.mrb[0].mxu0
    %2764 = vdwg.mxu0
    %v2765 = vadd.f32 %v2492, %v2703
    %v2766 = vadd.f32 %v2493, %v2706
    %v2767 = vadd.f32 %v2494, %v2711
    %v2768 = vadd.f32 %v2495, %v2714
    %v2769 = vadd.f32 %v2496, %v2719
    %v2770 = vadd.f32 %v2497, %v2722
    %v2771 = vadd.f32 %v2498, %v2727
    %v2772 = vadd.f32 %v2499, %v2730
    %v2773 = vadd.f32 %v2500, %v2735
    %v2774 = vadd.f32 %v2501, %v2738
    %v2775 = vadd.f32 %v2502, %v2743
    %v2776 = vadd.f32 %v2503, %v2746
    %v2777 = vadd.f32 %v2504, %v2751
    %v2778 = vadd.f32 %v2505, %v2754
    %v2779 = vadd.f32 %v2506, %v2759
    %v2780 = vadd.f32 %v2507, %v2762
    %s2781 = smul.u32 %s26, 16
    %s2782 = scalar_lea.vmem [#allocation2], %s2781
    %2783 = vst [vmem:[%s2782] sm:$0xff] %v2765
    %2784 = vst [vmem:[%s2782 + $0x8] sm:$0xff] %v2766
    %2785 = vst [vmem:[%s2782 + $0x10] sm:$0xff] %v2767
    %2786 = vst [vmem:[%s2782 + $0x18] sm:$0xff] %v2768
    %2787 = vst [vmem:[%s2782 + $0x20] sm:$0xff] %v2769
    %2788 = vst [vmem:[%s2782 + $0x28] sm:$0xff] %v2770
    %2789 = vst [vmem:[%s2782 + $0x30] sm:$0xff] %v2771
    %2790 = vst [vmem:[%s2782 + $0x38] sm:$0xff] %v2772
    %2791 = vst [vmem:[%s2782 + $0x40] sm:$0xff] %v2773
    %2792 = vst [vmem:[%s2782 + $0x48] sm:$0xff] %v2774
    %2793 = vst [vmem:[%s2782 + $0x50] sm:$0xff] %v2775
    %2794 = vst [vmem:[%s2782 + $0x58] sm:$0xff] %v2776
    %2795 = vst [vmem:[%s2782 + $0x60] sm:$0xff] %v2777
    %2796 = vst [vmem:[%s2782 + $0x68] sm:$0xff] %v2778
    %2797 = vst [vmem:[%s2782 + $0x70] sm:$0xff] %v2779
    %2798 = vst [vmem:[%s2782 + $0x78] sm:$0xff] %v2780
    %v2799 = vld [vmem:[#allocation3] sm:$0x1]
    %v2800 = vadd.f32 %v2765, %v2766
    %v2801 = vadd.f32 %v2800, %v2767
    %v2802 = vadd.f32 %v2801, %v2768
    %v2803 = vadd.f32 %v2802, %v2769
    %v2804 = vadd.f32 %v2803, %v2770
    %v2805 = vadd.f32 %v2804, %v2771
    %v2806 = vadd.f32 %v2805, %v2772
    %v2807 = vadd.f32 %v2806, %v2773
    %v2808 = vadd.f32 %v2807, %v2774
    %v2809 = vadd.f32 %v2808, %v2775
    %v2810 = vadd.f32 %v2809, %v2776
    %v2811 = vadd.f32 %v2810, %v2777
    %v2812 = vadd.f32 %v2811, %v2778
    %v2813 = vadd.f32 %v2812, %v2779
    %v2814 = vadd.f32 %v2813, %v2780
    %v2815 = vrot.slane %v2814, 4
    %v2816 = vadd.f32 %v2814, %v2815
    %v2817 = vrot.slane %v2816, 2
    %v2818 = vadd.f32 %v2816, %v2817
    %v2819 = vrot.slane %v2818, 1
    %v2820 = vadd.f32 %v2818, %v2819
    %v2821 = vadd.f32 %v2799, %v2820
    %2822 = vst [vmem:[#allocation3] sm:$0x1] %v2821
    %v2823 = vld [vmem:[#allocation4] sm:$0x1]
    %v2824 = vmul.f32 %v2765, %v2765
    %v2825 = vmul.f32 %v2766, %v2766
    %v2826 = vmul.f32 %v2767, %v2767
    %v2827 = vmul.f32 %v2768, %v2768
    %v2828 = vmul.f32 %v2769, %v2769
    %v2829 = vmul.f32 %v2770, %v2770
    %v2830 = vmul.f32 %v2771, %v2771
    %v2831 = vmul.f32 %v2772, %v2772
    %v2832 = vmul.f32 %v2773, %v2773
    %v2833 = vmul.f32 %v2774, %v2774
    %v2834 = vmul.f32 %v2775, %v2775
    %v2835 = vmul.f32 %v2776, %v2776
    %v2836 = vmul.f32 %v2777, %v2777
    %v2837 = vmul.f32 %v2778, %v2778
    %v2838 = vmul.f32 %v2779, %v2779
    %v2839 = vmul.f32 %v2780, %v2780
    %v2840 = vadd.f32 %v2824, %v2825
    %v2841 = vadd.f32 %v2840, %v2826
    %v2842 = vadd.f32 %v2841, %v2827
    %v2843 = vadd.f32 %v2842, %v2828
    %v2844 = vadd.f32 %v2843, %v2829
    %v2845 = vadd.f32 %v2844, %v2830
    %v2846 = vadd.f32 %v2845, %v2831
    %v2847 = vadd.f32 %v2846, %v2832
    %v2848 = vadd.f32 %v2847, %v2833
    %v2849 = vadd.f32 %v2848, %v2834
    %v2850 = vadd.f32 %v2849, %v2835
    %v2851 = vadd.f32 %v2850, %v2836
    %v2852 = vadd.f32 %v2851, %v2837
    %v2853 = vadd.f32 %v2852, %v2838
    %v2854 = vadd.f32 %v2853, %v2839
    %v2855 = vrot.slane %v2854, 4
    %v2856 = vadd.f32 %v2854, %v2855
    %v2857 = vrot.slane %v2856, 2
    %v2858 = vadd.f32 %v2856, %v2857
    %v2859 = vrot.slane %v2858, 1
    %v2860 = vadd.f32 %v2858, %v2859
    %v2861 = vadd.f32 %v2823, %v2860
    %2862 = vst [vmem:[#allocation4] sm:$0x1] %v2861
  $region22: #{restnet_basic_block_forward.2} parent=0 // loop_footer
    %s25 = sadd.s32 1, %s21
  $region23: #{restnet_basic_block_forward.2} parent=0 // loop_footer_branch
    %20 = sbr.rel target = $region19
  $region24: #{restnet_basic_block_forward.2} parent=0 // loop_exit
    _
  loop: start=0, step=1, limit=2
  $region25: #{restnet_basic_block_forward.2} parent=0 // loop_pre_header
    _
  $region26: #{restnet_basic_block_forward.2} parent=0 // loop_header
    %s2864 = sphi 0, %s2868
    %p2865 = scmp.ge.s32.totalorder %s2864, 2
  $region27: #{restnet_basic_block_forward.2} parent=0 // loop_header_branch
    %2867 = sbr.rel (%p2865) target = $region31
  $region28: #{restnet_basic_block_forward.2} parent=0 // loop_body
    %s2869 = smul.u32 %s2864, 8
    %s2870 = smul.u32 %s2869, 3
    %s2871 = sadd.s32 %s2870, 54
    %s2872 = smul.addr %s2871, 4
    %s2873 = scalar_lea.vmem %s0, %s2872
    %v2874 = vld [vmem:[%s2873] sm:$0xf]
    %v2875 = vld [vmem:[%s2873 + $0x4] sm:$0xf]
    %v2876 = vld [vmem:[%s2873 + $0x8] sm:$0x1]
    %v2877 = vld [vmem:[%s2873 + $0xc] sm:$0xf]
    %v2878 = vld [vmem:[%s2873 + $0x10] sm:$0xf]
    %v2879 = vld [vmem:[%s2873 + $0x14] sm:$0x1]
    %v2880 = vld [vmem:[%s2873 + $0x18] sm:$0xf]
    %v2881 = vld [vmem:[%s2873 + $0x1c] sm:$0xf]
    %v2882 = vld [vmem:[%s2873 + $0x20] sm:$0x1]
    %v2883 = vld [vmem:[%s2873 + $0x24] sm:$0xf]
    %v2884 = vld [vmem:[%s2873 + $0x28] sm:$0xf]
    %v2885 = vld [vmem:[%s2873 + $0x2c] sm:$0x1]
    %v2886 = vld [vmem:[%s2873 + $0x30] sm:$0xf]
    %v2887 = vld [vmem:[%s2873 + $0x34] sm:$0xf]
    %v2888 = vld [vmem:[%s2873 + $0x38] sm:$0x1]
    %v2889 = vld [vmem:[%s2873 + $0x3c] sm:$0xf]
    %v2890 = vld [vmem:[%s2873 + $0x40] sm:$0xf]
    %v2891 = vld [vmem:[%s2873 + $0x44] sm:$0x1]
    %v2892 = vld [vmem:[%s2873 + $0x48] sm:$0xf]
    %v2893 = vld [vmem:[%s2873 + $0x4c] sm:$0xf]
    %v2894 = vld [vmem:[%s2873 + $0x50] sm:$0x1]
    %v2895 = vld [vmem:[%s2873 + $0x54] sm:$0xf]
    %v2896 = vld [vmem:[%s2873 + $0x58] sm:$0xf]
    %v2897 = vld [vmem:[%s2873 + $0x5c] sm:$0x1]
    %v2898 = vld [vmem:[%s1] sm:$0xf]
    %v2899 = vld [vmem:[%s1 + $0x4] sm:$0xf]
    %v2900 = vld [vmem:[%s1 + $0x8] sm:$0xf]
    %v2901 = vld [vmem:[%s1 + $0xc] sm:$0xf]
    %v2902 = vld [vmem:[%s1 + $0x10] sm:$0xf]
    %v2903 = vld [vmem:[%s1 + $0x14] sm:$0xf]
    %v2904 = vld [vmem:[%s1 + $0x18] sm:$0xf]
    %v2905 = vld [vmem:[%s1 + $0x1c] sm:$0xf]
    %v2906 = vld [vmem:[%s1 + $0x20] sm:$0xf]
    %v2907 = vld [vmem:[%s1 + $0x24] sm:$0xf]
    %v2908 = vld [vmem:[%s1 + $0x28] sm:$0xf]
    %v2909 = vld [vmem:[%s1 + $0x2c] sm:$0xf]
    %v2910 = vld [vmem:[%s1 + $0x30] sm:$0xf]
    %v2911 = vld [vmem:[%s1 + $0x34] sm:$0xf]
    %v2912 = vld [vmem:[%s1 + $0x38] sm:$0xf]
    %v2913 = vld [vmem:[%s1 + $0x3c] sm:$0xf]
    %vm2914 = vsmask.f32 3328
    %vm2915 = vsmask.f32 7440
    %vm2916 = vmor %vm2914, %vm2915
    %v2918 = vshrl.u32 %v2874, 16
    %v2920 = vrot.slane %v2918, 4
    %v2921 = vshll.u32 %v2874, 16
    %v2923 = vrot.slane %v2921, 5
    %v2924 = vor.u32 %v2920, %v2923
    %v2925 = vrot.slane %v2924, 4
    %v2927 = vshll.u32 %v2875, 16
    %v2929 = vrot.slane %v2927, 5
    %v2930 = vsel %vm2916, %v2925, %v2929
    %v2931 = vshrl.u32 %v2875, 16
    %v2933 = vrot.slane %v2931, 4
    %v2934 = vor.u32 %v2933, %v2929
    %v2935 = vrot.slane %v2934, 4
    %v2937 = vshll.u32 %v2876, 16
    %v2939 = vrot.slane %v2937, 5
    %v2940 = vsel %vm2916, %v2935, %v2939
    %v2942 = vshrl.u32 %v2877, 16
    %v2944 = vrot.slane %v2942, 4
    %v2945 = vshll.u32 %v2877, 16
    %v2947 = vrot.slane %v2945, 5
    %v2948 = vor.u32 %v2944, %v2947
    %v2949 = vrot.slane %v2948, 4
    %v2951 = vshll.u32 %v2878, 16
    %v2953 = vrot.slane %v2951, 5
    %v2954 = vsel %vm2916, %v2949, %v2953
    %v2955 = vshrl.u32 %v2878, 16
    %v2957 = vrot.slane %v2955, 4
    %v2958 = vor.u32 %v2957, %v2953
    %v2959 = vrot.slane %v2958, 4
    %v2961 = vshll.u32 %v2879, 16
    %v2963 = vrot.slane %v2961, 5
    %v2964 = vsel %vm2916, %v2959, %v2963
    %v2966 = vshrl.u32 %v2880, 16
    %v2968 = vrot.slane %v2966, 4
    %v2969 = vshll.u32 %v2880, 16
    %v2971 = vrot.slane %v2969, 5
    %v2972 = vor.u32 %v2968, %v2971
    %v2973 = vrot.slane %v2972, 4
    %v2975 = vshll.u32 %v2881, 16
    %v2977 = vrot.slane %v2975, 5
    %v2978 = vsel %vm2916, %v2973, %v2977
    %v2979 = vshrl.u32 %v2881, 16
    %v2981 = vrot.slane %v2979, 4
    %v2982 = vor.u32 %v2981, %v2977
    %v2983 = vrot.slane %v2982, 4
    %v2985 = vshll.u32 %v2882, 16
    %v2987 = vrot.slane %v2985, 5
    %v2988 = vsel %vm2916, %v2983, %v2987
    %v2990 = vshrl.u32 %v2883, 16
    %v2992 = vrot.slane %v2990, 4
    %v2993 = vshll.u32 %v2883, 16
    %v2995 = vrot.slane %v2993, 5
    %v2996 = vor.u32 %v2992, %v2995
    %v2997 = vrot.slane %v2996, 4
    %v2999 = vshll.u32 %v2884, 16
    %v3001 = vrot.slane %v2999, 5
    %v3002 = vsel %vm2916, %v2997, %v3001
    %v3003 = vshrl.u32 %v2884, 16
    %v3005 = vrot.slane %v3003, 4
    %v3006 = vor.u32 %v3005, %v3001
    %v3007 = vrot.slane %v3006, 4
    %v3009 = vshll.u32 %v2885, 16
    %v3011 = vrot.slane %v3009, 5
    %v3012 = vsel %vm2916, %v3007, %v3011
    %v3014 = vshrl.u32 %v2886, 16
    %v3016 = vrot.slane %v3014, 4
    %v3017 = vshll.u32 %v2886, 16
    %v3019 = vrot.slane %v3017, 5
    %v3020 = vor.u32 %v3016, %v3019
    %v3021 = vrot.slane %v3020, 4
    %v3023 = vshll.u32 %v2887, 16
    %v3025 = vrot.slane %v3023, 5
    %v3026 = vsel %vm2916, %v3021, %v3025
    %v3027 = vshrl.u32 %v2887, 16
    %v3029 = vrot.slane %v3027, 4
    %v3030 = vor.u32 %v3029, %v3025
    %v3031 = vrot.slane %v3030, 4
    %v3033 = vshll.u32 %v2888, 16
    %v3035 = vrot.slane %v3033, 5
    %v3036 = vsel %vm2916, %v3031, %v3035
    %v3038 = vshrl.u32 %v2889, 16
    %v3040 = vrot.slane %v3038, 4
    %v3041 = vshll.u32 %v2889, 16
    %v3043 = vrot.slane %v3041, 5
    %v3044 = vor.u32 %v3040, %v3043
    %v3045 = vrot.slane %v3044, 4
    %v3047 = vshll.u32 %v2890, 16
    %v3049 = vrot.slane %v3047, 5
    %v3050 = vsel %vm2916, %v3045, %v3049
    %v3051 = vshrl.u32 %v2890, 16
    %v3053 = vrot.slane %v3051, 4
    %v3054 = vor.u32 %v3053, %v3049
    %v3055 = vrot.slane %v3054, 4
    %v3057 = vshll.u32 %v2891, 16
    %v3059 = vrot.slane %v3057, 5
    %v3060 = vsel %vm2916, %v3055, %v3059
    %v3062 = vshrl.u32 %v2892, 16
    %v3064 = vrot.slane %v3062, 4
    %v3065 = vshll.u32 %v2892, 16
    %v3067 = vrot.slane %v3065, 5
    %v3068 = vor.u32 %v3064, %v3067
    %v3069 = vrot.slane %v3068, 4
    %v3071 = vshll.u32 %v2893, 16
    %v3073 = vrot.slane %v3071, 5
    %v3074 = vsel %vm2916, %v3069, %v3073
    %v3075 = vshrl.u32 %v2893, 16
    %v3077 = vrot.slane %v3075, 4
    %v3078 = vor.u32 %v3077, %v3073
    %v3079 = vrot.slane %v3078, 4
    %v3081 = vshll.u32 %v2894, 16
    %v3083 = vrot.slane %v3081, 5
    %v3084 = vsel %vm2916, %v3079, %v3083
    %v3086 = vshrl.u32 %v2895, 16
    %v3088 = vrot.slane %v3086, 4
    %v3089 = vshll.u32 %v2895, 16
    %v3091 = vrot.slane %v3089, 5
    %v3092 = vor.u32 %v3088, %v3091
    %v3093 = vrot.slane %v3092, 4
    %v3095 = vshll.u32 %v2896, 16
    %v3097 = vrot.slane %v3095, 5
    %v3098 = vsel %vm2916, %v3093, %v3097
    %v3099 = vshrl.u32 %v2896, 16
    %v3101 = vrot.slane %v3099, 4
    %v3102 = vor.u32 %v3101, %v3097
    %v3103 = vrot.slane %v3102, 4
    %v3105 = vshll.u32 %v2897, 16
    %v3107 = vrot.slane %v3105, 5
    %v3108 = vsel %vm2916, %v3103, %v3107
    %v3109 = vld [vmem:[%s1 + $0x40] sm:$0xf]
    %v3110 = vld [vmem:[%s1 + $0x44] sm:$0xf]
    %v3111 = vld [vmem:[%s1 + $0x48] sm:$0xf]
    %v3112 = vld [vmem:[%s1 + $0x4c] sm:$0xf]
    %v3113 = vld [vmem:[%s1 + $0x50] sm:$0xf]
    %v3114 = vld [vmem:[%s1 + $0x54] sm:$0xf]
    %v3115 = vld [vmem:[%s1 + $0x58] sm:$0xf]
    %v3116 = vld [vmem:[%s1 + $0x5c] sm:$0xf]
    %v3117 = vld [vmem:[%s1 + $0x60] sm:$0xf]
    %v3118 = vld [vmem:[%s1 + $0x64] sm:$0xf]
    %v3119 = vld [vmem:[%s1 + $0x68] sm:$0xf]
    %v3120 = vld [vmem:[%s1 + $0x6c] sm:$0xf]
    %v3121 = vld [vmem:[%s1 + $0x70] sm:$0xf]
    %v3122 = vld [vmem:[%s1 + $0x74] sm:$0xf]
    %v3123 = vld [vmem:[%s1 + $0x78] sm:$0xf]
    %v3124 = vld [vmem:[%s1 + $0x7c] sm:$0xf]
    %v3125 = vunpack.c.l.b16 %v2930
    %v3126 = vunpack.c.l.b16 %v2940
    %v3127 = vunpack.c.l.b16 %v2954
    %v3128 = vunpack.c.l.b16 %v2964
    %v3129 = vunpack.c.l.b16 %v2978
    %v3130 = vunpack.c.l.b16 %v2988
    %v3131 = vunpack.c.l.b16 %v3002
    %v3132 = vunpack.c.l.b16 %v3012
    %v3133 = vunpack.c.l.b16 %v3026
    %v3134 = vunpack.c.l.b16 %v3036
    %v3135 = vunpack.c.l.b16 %v3050
    %v3136 = vunpack.c.l.b16 %v3060
    %v3137 = vunpack.c.l.b16 %v3074
    %v3138 = vunpack.c.l.b16 %v3084
    %v3139 = vunpack.c.l.b16 %v3098
    %v3140 = vunpack.c.l.b16 %v3108
    %v3141 = vpack.c.b16 %v3126, %v3125
    %v3142 = vpack.c.b16 %v3128, %v3127
    %v3143 = vpack.c.b16 %v3130, %v3129
    %v3144 = vpack.c.b16 %v3132, %v3131
    %v3145 = vpack.c.b16 %v3134, %v3133
    %v3146 = vpack.c.b16 %v3136, %v3135
    %v3147 = vpack.c.b16 %v3138, %v3137
    %v3148 = vpack.c.b16 %v3140, %v3139
    %v3173 = vunpack.c.l.b16 %v3109
    %v3174 = vunpack.c.l.b16 %v3110
    %v3175 = vunpack.c.l.b16 %v3111
    %v3176 = vunpack.c.l.b16 %v3112
    %v3177 = vunpack.c.l.b16 %v3113
    %v3178 = vunpack.c.l.b16 %v3114
    %v3179 = vunpack.c.l.b16 %v3115
    %v3180 = vunpack.c.l.b16 %v3116
    %v3181 = vunpack.c.l.b16 %v3117
    %v3182 = vunpack.c.l.b16 %v3118
    %v3183 = vunpack.c.l.b16 %v3119
    %v3184 = vunpack.c.l.b16 %v3120
    %v3185 = vunpack.c.l.b16 %v3121
    %v3186 = vunpack.c.l.b16 %v3122
    %v3187 = vunpack.c.l.b16 %v3123
    %v3188 = vunpack.c.l.b16 %v3124
    %v3189 = vpack.c.b16 %v3174, %v3173
    %v3190 = vpack.c.b16 %v3176, %v3175
    %v3191 = vpack.c.b16 %v3178, %v3177
    %v3192 = vpack.c.b16 %v3180, %v3179
    %v3193 = vpack.c.b16 %v3182, %v3181
    %v3194 = vpack.c.b16 %v3184, %v3183
    %v3195 = vpack.c.b16 %v3186, %v3185
    %v3196 = vpack.c.b16 %v3188, %v3187
    %3205 = vmatprep.subr.bf16.mxu0 0
    %3206 = vmatpush1.bf16.msra.mxu0 %v3189
    %3207 = vmatprep.subr.bf16.mxu0 0
    %3208 = vmatpush1.bf16.msra.mxu0 %v3190
    %3209 = vmatprep.subr.bf16.mxu0 0
    %3210 = vmatpush1.bf16.msra.mxu0 %v3191
    %3211 = vmatprep.subr.bf16.mxu0 0
    %3212 = vmatpush1.bf16.msra.mxu0 %v3192
    %3213 = vmatprep.subr.bf16.mxu0 0
    %3214 = vmatpush1.bf16.msra.mxu0 %v3193
    %3215 = vmatprep.subr.bf16.mxu0 0
    %3216 = vmatpush1.bf16.msra.mxu0 %v3194
    %3217 = vmatprep.subr.bf16.mxu0 0
    %3218 = vmatpush1.bf16.msra.mxu0 %v3195
    %3219 = vmatprep.subr.bf16.mxu0 0
    %3220 = vmatpush1.bf16.msra.mxu0 %v3196
    %3221 = vmatprep.subr.bf16.mxu0 0
    %3222 = vmatpush1.bf16.msra.mxu0 0
    %3223 = vmatprep.subr.bf16.mxu0 0
    %3224 = vmatpush1.bf16.msra.mxu0 0
    %3225 = vmatprep.subr.bf16.mxu0 0
    %3226 = vmatpush1.bf16.msra.mxu0 0
    %3227 = vmatprep.subr.bf16.mxu0 0
    %3228 = vmatpush1.bf16.msra.mxu0 0
    %3229 = vmatprep.subr.bf16.mxu0 0
    %3230 = vmatpush1.bf16.msra.mxu0 0
    %3231 = vmatprep.subr.bf16.mxu0 0
    %3232 = vmatpush1.bf16.msra.mxu0 0
    %3233 = vmatprep.subr.bf16.mxu0 0
    %3234 = vmatpush1.bf16.msra.mxu0 0
    %3235 = vmatprep.subr.bf16.mxu0 0
    %3236 = vmatpush1.bf16.msra.mxu0 0
    %3237 = vmatprep.mubr.bf16.mxu0 0
    %3238 = vmatmul.mubr.bf16.gmra.mrb[0].mxu0 %v3141
    %v3239 = vpop.f32.mrb[0].mxu0
    %v3240 = vadd.f32 0.0, %v3239
    %v3241 = vpop.f32.mrb[0].mxu0
    %v3242 = vpop.f32.mrb[0].mxu0
    %v3243 = vadd.f32 0.0, %v3242
    %v3244 = vpop.f32.mrb[0].mxu0
    %3245 = vmatprep.mubr.bf16.mxu0 0
    %3246 = vmatmul.mubr.bf16.gmra.mrb[0].mxu0 %v3142
    %v3247 = vpop.f32.mrb[0].mxu0
    %v3248 = vadd.f32 0.0, %v3247
    %v3249 = vpop.f32.mrb[0].mxu0
    %v3250 = vpop.f32.mrb[0].mxu0
    %v3251 = vadd.f32 0.0, %v3250
    %v3252 = vpop.f32.mrb[0].mxu0
    %3253 = vmatprep.mubr.bf16.mxu0 0
    %3254 = vmatmul.mubr.bf16.gmra.mrb[0].mxu0 %v3143
    %v3255 = vpop.f32.mrb[0].mxu0
    %v3256 = vadd.f32 0.0, %v3255
    %v3257 = vpop.f32.mrb[0].mxu0
    %v3258 = vpop.f32.mrb[0].mxu0
    %v3259 = vadd.f32 0.0, %v3258
    %v3260 = vpop.f32.mrb[0].mxu0
    %3261 = vmatprep.mubr.bf16.mxu0 0
    %3262 = vmatmul.mubr.bf16.gmra.mrb[0].mxu0 %v3144
    %v3263 = vpop.f32.mrb[0].mxu0
    %v3264 = vadd.f32 0.0, %v3263
    %v3265 = vpop.f32.mrb[0].mxu0
    %v3266 = vpop.f32.mrb[0].mxu0
    %v3267 = vadd.f32 0.0, %v3266
    %v3268 = vpop.f32.mrb[0].mxu0
    %3269 = vmatprep.mubr.bf16.mxu0 0
    %3270 = vmatmul.mubr.bf16.gmra.mrb[0].mxu0 %v3145
    %v3271 = vpop.f32.mrb[0].mxu0
    %v3272 = vadd.f32 0.0, %v3271
    %v3273 = vpop.f32.mrb[0].mxu0
    %v3274 = vpop.f32.mrb[0].mxu0
    %v3275 = vadd.f32 0.0, %v3274
    %v3276 = vpop.f32.mrb[0].mxu0
    %3277 = vmatprep.mubr.bf16.mxu0 0
    %3278 = vmatmul.mubr.bf16.gmra.mrb[0].mxu0 %v3146
    %v3279 = vpop.f32.mrb[0].mxu0
    %v3280 = vadd.f32 0.0, %v3279
    %v3281 = vpop.f32.mrb[0].mxu0
    %v3282 = vpop.f32.mrb[0].mxu0
    %v3283 = vadd.f32 0.0, %v3282
    %v3284 = vpop.f32.mrb[0].mxu0
    %3285 = vmatprep.mubr.bf16.mxu0 0
    %3286 = vmatmul.mubr.bf16.gmra.mrb[0].mxu0 %v3147
    %v3287 = vpop.f32.mrb[0].mxu0
    %v3288 = vadd.f32 0.0, %v3287
    %v3289 = vpop.f32.mrb[0].mxu0
    %v3290 = vpop.f32.mrb[0].mxu0
    %v3291 = vadd.f32 0.0, %v3290
    %v3292 = vpop.f32.mrb[0].mxu0
    %3293 = vmatprep.mubr.bf16.mxu0 0
    %3294 = vmatmul.mubr.bf16.gmra.mrb[0].mxu0 %v3148
    %v3295 = vpop.f32.mrb[0].mxu0
    %v3296 = vadd.f32 0.0, %v3295
    %v3297 = vpop.f32.mrb[0].mxu0
    %v3298 = vpop.f32.mrb[0].mxu0
    %v3299 = vadd.f32 0.0, %v3298
    %v3300 = vpop.f32.mrb[0].mxu0
    %3301 = vdwg.mxu0
    %v3318 = vunpack.c.l.b16 %v2874
    %v3319 = vunpack.c.l.b16 %v2875
    %v3320 = vunpack.c.l.b16 %v2877
    %v3321 = vunpack.c.l.b16 %v2878
    %v3322 = vunpack.c.l.b16 %v2880
    %v3323 = vunpack.c.l.b16 %v2881
    %v3324 = vunpack.c.l.b16 %v2883
    %v3325 = vunpack.c.l.b16 %v2884
    %v3326 = vunpack.c.l.b16 %v2886
    %v3327 = vunpack.c.l.b16 %v2887
    %v3328 = vunpack.c.l.b16 %v2889
    %v3329 = vunpack.c.l.b16 %v2890
    %v3330 = vunpack.c.l.b16 %v2892
    %v3331 = vunpack.c.l.b16 %v2893
    %v3332 = vunpack.c.l.b16 %v2895
    %v3333 = vunpack.c.l.b16 %v2896
    %v3334 = vpack.c.b16 %v3319, %v3318
    %v3335 = vpack.c.b16 %v3321, %v3320
    %v3336 = vpack.c.b16 %v3323, %v3322
    %v3337 = vpack.c.b16 %v3325, %v3324
    %v3338 = vpack.c.b16 %v3327, %v3326
    %v3339 = vpack.c.b16 %v3329, %v3328
    %v3340 = vpack.c.b16 %v3331, %v3330
    %v3341 = vpack.c.b16 %v3333, %v3332
    %v3366 = vunpack.c.l.b16 %v2898
    %v3367 = vunpack.c.l.b16 %v2899
    %v3368 = vunpack.c.l.b16 %v2900
    %v3369 = vunpack.c.l.b16 %v2901
    %v3370 = vunpack.c.l.b16 %v2902
    %v3371 = vunpack.c.l.b16 %v2903
    %v3372 = vunpack.c.l.b16 %v2904
    %v3373 = vunpack.c.l.b16 %v2905
    %v3374 = vunpack.c.l.b16 %v2906
    %v3375 = vunpack.c.l.b16 %v2907
    %v3376 = vunpack.c.l.b16 %v2908
    %v3377 = vunpack.c.l.b16 %v2909
    %v3378 = vunpack.c.l.b16 %v2910
    %v3379 = vunpack.c.l.b16 %v2911
    %v3380 = vunpack.c.l.b16 %v2912
    %v3381 = vunpack.c.l.b16 %v2913
    %v3382 = vpack.c.b16 %v3367, %v3366
    %v3383 = vpack.c.b16 %v3369, %v3368
    %v3384 = vpack.c.b16 %v3371, %v3370
    %v3385 = vpack.c.b16 %v3373, %v3372
    %v3386 = vpack.c.b16 %v3375, %v3374
    %v3387 = vpack.c.b16 %v3377, %v3376
    %v3388 = vpack.c.b16 %v3379, %v3378
    %v3389 = vpack.c.b16 %v3381, %v3380
    %3398 = vmatprep.subr.bf16.mxu0 0
    %3399 = vmatpush1.bf16.msra.mxu0 %v3382
    %3400 = vmatprep.subr.bf16.mxu0 0
    %3401 = vmatpush1.bf16.msra.mxu0 %v3383
    %3402 = vmatprep.subr.bf16.mxu0 0
    %3403 = vmatpush1.bf16.msra.mxu0 %v3384
    %3404 = vmatprep.subr.bf16.mxu0 0
    %3405 = vmatpush1.bf16.msra.mxu0 %v3385
    %3406 = vmatprep.subr.bf16.mxu0 0
    %3407 = vmatpush1.bf16.msra.mxu0 %v3386
    %3408 = vmatprep.subr.bf16.mxu0 0
    %3409 = vmatpush1.bf16.msra.mxu0 %v3387
    %3410 = vmatprep.subr.bf16.mxu0 0
    %3411 = vmatpush1.bf16.msra.mxu0 %v3388
    %3412 = vmatprep.subr.bf16.mxu0 0
    %3413 = vmatpush1.bf16.msra.mxu0 %v3389
    %3414 = vmatprep.subr.bf16.mxu0 0
    %3415 = vmatpush1.bf16.msra.mxu0 0
    %3416 = vmatprep.subr.bf16.mxu0 0
    %3417 = vmatpush1.bf16.msra.mxu0 0
    %3418 = vmatprep.subr.bf16.mxu0 0
    %3419 = vmatpush1.bf16.msra.mxu0 0
    %3420 = vmatprep.subr.bf16.mxu0 0
    %3421 = vmatpush1.bf16.msra.mxu0 0
    %3422 = vmatprep.subr.bf16.mxu0 0
    %3423 = vmatpush1.bf16.msra.mxu0 0
    %3424 = vmatprep.subr.bf16.mxu0 0
    %3425 = vmatpush1.bf16.msra.mxu0 0
    %3426 = vmatprep.subr.bf16.mxu0 0
    %3427 = vmatpush1.bf16.msra.mxu0 0
    %3428 = vmatprep.subr.bf16.mxu0 0
    %3429 = vmatpush1.bf16.msra.mxu0 0
    %3430 = vmatprep.mubr.bf16.mxu0 0
    %3431 = vmatmul.mubr.bf16.gmra.mrb[0].mxu0 %v3334
    %v3432 = vpop.f32.mrb[0].mxu0
    %v3433 = vadd.f32 %v3240, %v3432
    %v3434 = vpop.f32.mrb[0].mxu0
    %v3435 = vpop.f32.mrb[0].mxu0
    %v3436 = vadd.f32 %v3243, %v3435
    %v3437 = vpop.f32.mrb[0].mxu0
    %3438 = vmatprep.mubr.bf16.mxu0 0
    %3439 = vmatmul.mubr.bf16.gmra.mrb[0].mxu0 %v3335
    %v3440 = vpop.f32.mrb[0].mxu0
    %v3441 = vadd.f32 %v3248, %v3440
    %v3442 = vpop.f32.mrb[0].mxu0
    %v3443 = vpop.f32.mrb[0].mxu0
    %v3444 = vadd.f32 %v3251, %v3443
    %v3445 = vpop.f32.mrb[0].mxu0
    %3446 = vmatprep.mubr.bf16.mxu0 0
    %3447 = vmatmul.mubr.bf16.gmra.mrb[0].mxu0 %v3336
    %v3448 = vpop.f32.mrb[0].mxu0
    %v3449 = vadd.f32 %v3256, %v3448
    %v3450 = vpop.f32.mrb[0].mxu0
    %v3451 = vpop.f32.mrb[0].mxu0
    %v3452 = vadd.f32 %v3259, %v3451
    %v3453 = vpop.f32.mrb[0].mxu0
    %3454 = vmatprep.mubr.bf16.mxu0 0
    %3455 = vmatmul.mubr.bf16.gmra.mrb[0].mxu0 %v3337
    %v3456 = vpop.f32.mrb[0].mxu0
    %v3457 = vadd.f32 %v3264, %v3456
    %v3458 = vpop.f32.mrb[0].mxu0
    %v3459 = vpop.f32.mrb[0].mxu0
    %v3460 = vadd.f32 %v3267, %v3459
    %v3461 = vpop.f32.mrb[0].mxu0
    %3462 = vmatprep.mubr.bf16.mxu0 0
    %3463 = vmatmul.mubr.bf16.gmra.mrb[0].mxu0 %v3338
    %v3464 = vpop.f32.mrb[0].mxu0
    %v3465 = vadd.f32 %v3272, %v3464
    %v3466 = vpop.f32.mrb[0].mxu0
    %v3467 = vpop.f32.mrb[0].mxu0
    %v3468 = vadd.f32 %v3275, %v3467
    %v3469 = vpop.f32.mrb[0].mxu0
    %3470 = vmatprep.mubr.bf16.mxu0 0
    %3471 = vmatmul.mubr.bf16.gmra.mrb[0].mxu0 %v3339
    %v3472 = vpop.f32.mrb[0].mxu0
    %v3473 = vadd.f32 %v3280, %v3472
    %v3474 = vpop.f32.mrb[0].mxu0
    %v3475 = vpop.f32.mrb[0].mxu0
    %v3476 = vadd.f32 %v3283, %v3475
    %v3477 = vpop.f32.mrb[0].mxu0
    %3478 = vmatprep.mubr.bf16.mxu0 0
    %3479 = vmatmul.mubr.bf16.gmra.mrb[0].mxu0 %v3340
    %v3480 = vpop.f32.mrb[0].mxu0
    %v3481 = vadd.f32 %v3288, %v3480
    %v3482 = vpop.f32.mrb[0].mxu0
    %v3483 = vpop.f32.mrb[0].mxu0
    %v3484 = vadd.f32 %v3291, %v3483
    %v3485 = vpop.f32.mrb[0].mxu0
    %3486 = vmatprep.mubr.bf16.mxu0 0
    %3487 = vmatmul.mubr.bf16.gmra.mrb[0].mxu0 %v3341
    %v3488 = vpop.f32.mrb[0].mxu0
    %v3489 = vadd.f32 %v3296, %v3488
    %v3490 = vpop.f32.mrb[0].mxu0
    %v3491 = vpop.f32.mrb[0].mxu0
    %v3492 = vadd.f32 %v3299, %v3491
    %v3493 = vpop.f32.mrb[0].mxu0
    %3494 = vdwg.mxu0
    %vm3503 = vcmask 1042432
    %vm3504 = vcmask 1046532
    %vm3505 = vmor %vm3503, %vm3504
    %v3506 = vrot.slane %v2874, 5
    %v3507 = vrot.slane %v3506, 4
    %v3508 = vrot.slane %v2875, 5
    %v3509 = vsel %vm3505, %v3507, %v3508
    %v3510 = vrot.slane %v3508, 4
    %v3511 = vrot.slane %v2876, 5
    %v3512 = vsel %vm3505, %v3510, %v3511
    %v3513 = vrot.slane %v2877, 5
    %v3514 = vrot.slane %v3513, 4
    %v3515 = vrot.slane %v2878, 5
    %v3516 = vsel %vm3505, %v3514, %v3515
    %v3517 = vrot.slane %v3515, 4
    %v3518 = vrot.slane %v2879, 5
    %v3519 = vsel %vm3505, %v3517, %v3518
    %v3520 = vrot.slane %v2880, 5
    %v3521 = vrot.slane %v3520, 4
    %v3522 = vrot.slane %v2881, 5
    %v3523 = vsel %vm3505, %v3521, %v3522
    %v3524 = vrot.slane %v3522, 4
    %v3525 = vrot.slane %v2882, 5
    %v3526 = vsel %vm3505, %v3524, %v3525
    %v3527 = vrot.slane %v2883, 5
    %v3528 = vrot.slane %v3527, 4
    %v3529 = vrot.slane %v2884, 5
    %v3530 = vsel %vm3505, %v3528, %v3529
    %v3531 = vrot.slane %v3529, 4
    %v3532 = vrot.slane %v2885, 5
    %v3533 = vsel %vm3505, %v3531, %v3532
    %v3534 = vrot.slane %v2886, 5
    %v3535 = vrot.slane %v3534, 4
    %v3536 = vrot.slane %v2887, 5
    %v3537 = vsel %vm3505, %v3535, %v3536
    %v3538 = vrot.slane %v3536, 4
    %v3539 = vrot.slane %v2888, 5
    %v3540 = vsel %vm3505, %v3538, %v3539
    %v3541 = vrot.slane %v2889, 5
    %v3542 = vrot.slane %v3541, 4
    %v3543 = vrot.slane %v2890, 5
    %v3544 = vsel %vm3505, %v3542, %v3543
    %v3545 = vrot.slane %v3543, 4
    %v3546 = vrot.slane %v2891, 5
    %v3547 = vsel %vm3505, %v3545, %v3546
    %v3548 = vrot.slane %v2892, 5
    %v3549 = vrot.slane %v3548, 4
    %v3550 = vrot.slane %v2893, 5
    %v3551 = vsel %vm3505, %v3549, %v3550
    %v3552 = vrot.slane %v3550, 4
    %v3553 = vrot.slane %v2894, 5
    %v3554 = vsel %vm3505, %v3552, %v3553
    %v3555 = vrot.slane %v2895, 5
    %v3556 = vrot.slane %v3555, 4
    %v3557 = vrot.slane %v2896, 5
    %v3558 = vsel %vm3505, %v3556, %v3557
    %v3559 = vrot.slane %v3557, 4
    %v3560 = vrot.slane %v2897, 5
    %v3561 = vsel %vm3505, %v3559, %v3560
    %v3562 = vld [vmem:[%s1 + $0x80] sm:$0xf]
    %v3563 = vld [vmem:[%s1 + $0x84] sm:$0xf]
    %v3564 = vld [vmem:[%s1 + $0x88] sm:$0xf]
    %v3565 = vld [vmem:[%s1 + $0x8c] sm:$0xf]
    %v3566 = vld [vmem:[%s1 + $0x90] sm:$0xf]
    %v3567 = vld [vmem:[%s1 + $0x94] sm:$0xf]
    %v3568 = vld [vmem:[%s1 + $0x98] sm:$0xf]
    %v3569 = vld [vmem:[%s1 + $0x9c] sm:$0xf]
    %v3570 = vld [vmem:[%s1 + $0xa0] sm:$0xf]
    %v3571 = vld [vmem:[%s1 + $0xa4] sm:$0xf]
    %v3572 = vld [vmem:[%s1 + $0xa8] sm:$0xf]
    %v3573 = vld [vmem:[%s1 + $0xac] sm:$0xf]
    %v3574 = vld [vmem:[%s1 + $0xb0] sm:$0xf]
    %v3575 = vld [vmem:[%s1 + $0xb4] sm:$0xf]
    %v3576 = vld [vmem:[%s1 + $0xb8] sm:$0xf]
    %v3577 = vld [vmem:[%s1 + $0xbc] sm:$0xf]
    %v3578 = vunpack.c.l.b16 %v3509
    %v3579 = vunpack.c.l.b16 %v3512
    %v3580 = vunpack.c.l.b16 %v3516
    %v3581 = vunpack.c.l.b16 %v3519
    %v3582 = vunpack.c.l.b16 %v3523
    %v3583 = vunpack.c.l.b16 %v3526
    %v3584 = vunpack.c.l.b16 %v3530
    %v3585 = vunpack.c.l.b16 %v3533
    %v3586 = vunpack.c.l.b16 %v3537
    %v3587 = vunpack.c.l.b16 %v3540
    %v3588 = vunpack.c.l.b16 %v3544
    %v3589 = vunpack.c.l.b16 %v3547
    %v3590 = vunpack.c.l.b16 %v3551
    %v3591 = vunpack.c.l.b16 %v3554
    %v3592 = vunpack.c.l.b16 %v3558
    %v3593 = vunpack.c.l.b16 %v3561
    %v3594 = vpack.c.b16 %v3579, %v3578
    %v3595 = vpack.c.b16 %v3581, %v3580
    %v3596 = vpack.c.b16 %v3583, %v3582
    %v3597 = vpack.c.b16 %v3585, %v3584
    %v3598 = vpack.c.b16 %v3587, %v3586
    %v3599 = vpack.c.b16 %v3589, %v3588
    %v3600 = vpack.c.b16 %v3591, %v3590
    %v3601 = vpack.c.b16 %v3593, %v3592
    %v3626 = vunpack.c.l.b16 %v3562
    %v3627 = vunpack.c.l.b16 %v3563
    %v3628 = vunpack.c.l.b16 %v3564
    %v3629 = vunpack.c.l.b16 %v3565
    %v3630 = vunpack.c.l.b16 %v3566
    %v3631 = vunpack.c.l.b16 %v3567
    %v3632 = vunpack.c.l.b16 %v3568
    %v3633 = vunpack.c.l.b16 %v3569
    %v3634 = vunpack.c.l.b16 %v3570
    %v3635 = vunpack.c.l.b16 %v3571
    %v3636 = vunpack.c.l.b16 %v3572
    %v3637 = vunpack.c.l.b16 %v3573
    %v3638 = vunpack.c.l.b16 %v3574
    %v3639 = vunpack.c.l.b16 %v3575
    %v3640 = vunpack.c.l.b16 %v3576
    %v3641 = vunpack.c.l.b16 %v3577
    %v3642 = vpack.c.b16 %v3627, %v3626
    %v3643 = vpack.c.b16 %v3629, %v3628
    %v3644 = vpack.c.b16 %v3631, %v3630
    %v3645 = vpack.c.b16 %v3633, %v3632
    %v3646 = vpack.c.b16 %v3635, %v3634
    %v3647 = vpack.c.b16 %v3637, %v3636
    %v3648 = vpack.c.b16 %v3639, %v3638
    %v3649 = vpack.c.b16 %v3641, %v3640
    %3658 = vmatprep.subr.bf16.mxu0 0
    %3659 = vmatpush1.bf16.msra.mxu0 %v3642
    %3660 = vmatprep.subr.bf16.mxu0 0
    %3661 = vmatpush1.bf16.msra.mxu0 %v3643
    %3662 = vmatprep.subr.bf16.mxu0 0
    %3663 = vmatpush1.bf16.msra.mxu0 %v3644
    %3664 = vmatprep.subr.bf16.mxu0 0
    %3665 = vmatpush1.bf16.msra.mxu0 %v3645
    %3666 = vmatprep.subr.bf16.mxu0 0
    %3667 = vmatpush1.bf16.msra.mxu0 %v3646
    %3668 = vmatprep.subr.bf16.mxu0 0
    %3669 = vmatpush1.bf16.msra.mxu0 %v3647
    %3670 = vmatprep.subr.bf16.mxu0 0
    %3671 = vmatpush1.bf16.msra.mxu0 %v3648
    %3672 = vmatprep.subr.bf16.mxu0 0
    %3673 = vmatpush1.bf16.msra.mxu0 %v3649
    %3674 = vmatprep.subr.bf16.mxu0 0
    %3675 = vmatpush1.bf16.msra.mxu0 0
    %3676 = vmatprep.subr.bf16.mxu0 0
    %3677 = vmatpush1.bf16.msra.mxu0 0
    %3678 = vmatprep.subr.bf16.mxu0 0
    %3679 = vmatpush1.bf16.msra.mxu0 0
    %3680 = vmatprep.subr.bf16.mxu0 0
    %3681 = vmatpush1.bf16.msra.mxu0 0
    %3682 = vmatprep.subr.bf16.mxu0 0
    %3683 = vmatpush1.bf16.msra.mxu0 0
    %3684 = vmatprep.subr.bf16.mxu0 0
    %3685 = vmatpush1.bf16.msra.mxu0 0
    %3686 = vmatprep.subr.bf16.mxu0 0
    %3687 = vmatpush1.bf16.msra.mxu0 0
    %3688 = vmatprep.subr.bf16.mxu0 0
    %3689 = vmatpush1.bf16.msra.mxu0 0
    %3690 = vmatprep.mubr.bf16.mxu0 0
    %3691 = vmatmul.mubr.bf16.gmra.mrb[0].mxu0 %v3594
    %v3692 = vpop.f32.mrb[0].mxu0
    %v3693 = vadd.f32 0.0, %v3692
    %v3694 = vpop.f32.mrb[0].mxu0
    %v3695 = vpop.f32.mrb[0].mxu0
    %v3696 = vadd.f32 0.0, %v3695
    %v3697 = vpop.f32.mrb[0].mxu0
    %3698 = vmatprep.mubr.bf16.mxu0 0
    %3699 = vmatmul.mubr.bf16.gmra.mrb[0].mxu0 %v3595
    %v3700 = vpop.f32.mrb[0].mxu0
    %v3701 = vadd.f32 0.0, %v3700
    %v3702 = vpop.f32.mrb[0].mxu0
    %v3703 = vpop.f32.mrb[0].mxu0
    %v3704 = vadd.f32 0.0, %v3703
    %v3705 = vpop.f32.mrb[0].mxu0
    %3706 = vmatprep.mubr.bf16.mxu0 0
    %3707 = vmatmul.mubr.bf16.gmra.mrb[0].mxu0 %v3596
    %v3708 = vpop.f32.mrb[0].mxu0
    %v3709 = vadd.f32 0.0, %v3708
    %v3710 = vpop.f32.mrb[0].mxu0
    %v3711 = vpop.f32.mrb[0].mxu0
    %v3712 = vadd.f32 0.0, %v3711
    %v3713 = vpop.f32.mrb[0].mxu0
    %3714 = vmatprep.mubr.bf16.mxu0 0
    %3715 = vmatmul.mubr.bf16.gmra.mrb[0].mxu0 %v3597
    %v3716 = vpop.f32.mrb[0].mxu0
    %v3717 = vadd.f32 0.0, %v3716
    %v3718 = vpop.f32.mrb[0].mxu0
    %v3719 = vpop.f32.mrb[0].mxu0
    %v3720 = vadd.f32 0.0, %v3719
    %v3721 = vpop.f32.mrb[0].mxu0
    %3722 = vmatprep.mubr.bf16.mxu0 0
    %3723 = vmatmul.mubr.bf16.gmra.mrb[0].mxu0 %v3598
    %v3724 = vpop.f32.mrb[0].mxu0
    %v3725 = vadd.f32 0.0, %v3724
    %v3726 = vpop.f32.mrb[0].mxu0
    %v3727 = vpop.f32.mrb[0].mxu0
    %v3728 = vadd.f32 0.0, %v3727
    %v3729 = vpop.f32.mrb[0].mxu0
    %3730 = vmatprep.mubr.bf16.mxu0 0
    %3731 = vmatmul.mubr.bf16.gmra.mrb[0].mxu0 %v3599
    %v3732 = vpop.f32.mrb[0].mxu0
    %v3733 = vadd.f32 0.0, %v3732
    %v3734 = vpop.f32.mrb[0].mxu0
    %v3735 = vpop.f32.mrb[0].mxu0
    %v3736 = vadd.f32 0.0, %v3735
    %v3737 = vpop.f32.mrb[0].mxu0
    %3738 = vmatprep.mubr.bf16.mxu0 0
    %3739 = vmatmul.mubr.bf16.gmra.mrb[0].mxu0 %v3600
    %v3740 = vpop.f32.mrb[0].mxu0
    %v3741 = vadd.f32 0.0, %v3740
    %v3742 = vpop.f32.mrb[0].mxu0
    %v3743 = vpop.f32.mrb[0].mxu0
    %v3744 = vadd.f32 0.0, %v3743
    %v3745 = vpop.f32.mrb[0].mxu0
    %3746 = vmatprep.mubr.bf16.mxu0 0
    %3747 = vmatmul.mubr.bf16.gmra.mrb[0].mxu0 %v3601
    %v3748 = vpop.f32.mrb[0].mxu0
    %v3749 = vadd.f32 0.0, %v3748
    %v3750 = vpop.f32.mrb[0].mxu0
    %v3751 = vpop.f32.mrb[0].mxu0
    %v3752 = vadd.f32 0.0, %v3751
    %v3753 = vpop.f32.mrb[0].mxu0
    %3754 = vdwg.mxu0
    %v3755 = vadd.f32 %v3433, %v3693
    %v3756 = vadd.f32 %v3436, %v3696
    %v3757 = vadd.f32 %v3441, %v3701
    %v3758 = vadd.f32 %v3444, %v3704
    %v3759 = vadd.f32 %v3449, %v3709
    %v3760 = vadd.f32 %v3452, %v3712
    %v3761 = vadd.f32 %v3457, %v3717
    %v3762 = vadd.f32 %v3460, %v3720
    %v3763 = vadd.f32 %v3465, %v3725
    %v3764 = vadd.f32 %v3468, %v3728
    %v3765 = vadd.f32 %v3473, %v3733
    %v3766 = vadd.f32 %v3476, %v3736
    %v3767 = vadd.f32 %v3481, %v3741
    %v3768 = vadd.f32 %v3484, %v3744
    %v3769 = vadd.f32 %v3489, %v3749
    %v3770 = vadd.f32 %v3492, %v3752
    %s3771 = sadd.s32 %s2869, 1
    %s3772 = smul.u32 %s3771, 3
    %s3773 = sadd.s32 %s3772, 54
    %s3774 = smul.addr %s3773, 4
    %s3775 = scalar_lea.vmem %s0, %s3774
    %v3776 = vld [vmem:[%s3775] sm:$0xf]
    %v3777 = vld [vmem:[%s3775 + $0x4] sm:$0xf]
    %v3778 = vld [vmem:[%s3775 + $0x8] sm:$0x1]
    %v3779 = vld [vmem:[%s3775 + $0xc] sm:$0xf]
    %v3780 = vld [vmem:[%s3775 + $0x10] sm:$0xf]
    %v3781 = vld [vmem:[%s3775 + $0x14] sm:$0x1]
    %v3782 = vld [vmem:[%s3775 + $0x18] sm:$0xf]
    %v3783 = vld [vmem:[%s3775 + $0x1c] sm:$0xf]
    %v3784 = vld [vmem:[%s3775 + $0x20] sm:$0x1]
    %v3785 = vld [vmem:[%s3775 + $0x24] sm:$0xf]
    %v3786 = vld [vmem:[%s3775 + $0x28] sm:$0xf]
    %v3787 = vld [vmem:[%s3775 + $0x2c] sm:$0x1]
    %v3788 = vld [vmem:[%s3775 + $0x30] sm:$0xf]
    %v3789 = vld [vmem:[%s3775 + $0x34] sm:$0xf]
    %v3790 = vld [vmem:[%s3775 + $0x38] sm:$0x1]
    %v3791 = vld [vmem:[%s3775 + $0x3c] sm:$0xf]
    %v3792 = vld [vmem:[%s3775 + $0x40] sm:$0xf]
    %v3793 = vld [vmem:[%s3775 + $0x44] sm:$0x1]
    %v3794 = vld [vmem:[%s3775 + $0x48] sm:$0xf]
    %v3795 = vld [vmem:[%s3775 + $0x4c] sm:$0xf]
    %v3796 = vld [vmem:[%s3775 + $0x50] sm:$0x1]
    %v3797 = vld [vmem:[%s3775 + $0x54] sm:$0xf]
    %v3798 = vld [vmem:[%s3775 + $0x58] sm:$0xf]
    %v3799 = vld [vmem:[%s3775 + $0x5c] sm:$0x1]
    %v3800 = vld [vmem:[%s1 + $0xc0] sm:$0xf]
    %v3801 = vld [vmem:[%s1 + $0xc4] sm:$0xf]
    %v3802 = vld [vmem:[%s1 + $0xc8] sm:$0xf]
    %v3803 = vld [vmem:[%s1 + $0xcc] sm:$0xf]
    %v3804 = vld [vmem:[%s1 + $0xd0] sm:$0xf]
    %v3805 = vld [vmem:[%s1 + $0xd4] sm:$0xf]
    %v3806 = vld [vmem:[%s1 + $0xd8] sm:$0xf]
    %v3807 = vld [vmem:[%s1 + $0xdc] sm:$0xf]
    %v3808 = vld [vmem:[%s1 + $0xe0] sm:$0xf]
    %v3809 = vld [vmem:[%s1 + $0xe4] sm:$0xf]
    %v3810 = vld [vmem:[%s1 + $0xe8] sm:$0xf]
    %v3811 = vld [vmem:[%s1 + $0xec] sm:$0xf]
    %v3812 = vld [vmem:[%s1 + $0xf0] sm:$0xf]
    %v3813 = vld [vmem:[%s1 + $0xf4] sm:$0xf]
    %v3814 = vld [vmem:[%s1 + $0xf8] sm:$0xf]
    %v3815 = vld [vmem:[%s1 + $0xfc] sm:$0xf]
    %v3832 = vunpack.c.l.b16 %v3776
    %v3833 = vunpack.c.l.b16 %v3777
    %v3834 = vunpack.c.l.b16 %v3779
    %v3835 = vunpack.c.l.b16 %v3780
    %v3836 = vunpack.c.l.b16 %v3782
    %v3837 = vunpack.c.l.b16 %v3783
    %v3838 = vunpack.c.l.b16 %v3785
    %v3839 = vunpack.c.l.b16 %v3786
    %v3840 = vunpack.c.l.b16 %v3788
    %v3841 = vunpack.c.l.b16 %v3789
    %v3842 = vunpack.c.l.b16 %v3791
    %v3843 = vunpack.c.l.b16 %v3792
    %v3844 = vunpack.c.l.b16 %v3794
    %v3845 = vunpack.c.l.b16 %v3795
    %v3846 = vunpack.c.l.b16 %v3797
    %v3847 = vunpack.c.l.b16 %v3798
    %v3848 = vpack.c.b16 %v3833, %v3832
    %v3849 = vpack.c.b16 %v3835, %v3834
    %v3850 = vpack.c.b16 %v3837, %v3836
    %v3851 = vpack.c.b16 %v3839, %v3838
    %v3852 = vpack.c.b16 %v3841, %v3840
    %v3853 = vpack.c.b16 %v3843, %v3842
    %v3854 = vpack.c.b16 %v3845, %v3844
    %v3855 = vpack.c.b16 %v3847, %v3846
    %v3880 = vunpack.c.l.b16 %v3800
    %v3881 = vunpack.c.l.b16 %v3801
    %v3882 = vunpack.c.l.b16 %v3802
    %v3883 = vunpack.c.l.b16 %v3803
    %v3884 = vunpack.c.l.b16 %v3804
    %v3885 = vunpack.c.l.b16 %v3805
    %v3886 = vunpack.c.l.b16 %v3806
    %v3887 = vunpack.c.l.b16 %v3807
    %v3888 = vunpack.c.l.b16 %v3808
    %v3889 = vunpack.c.l.b16 %v3809
    %v3890 = vunpack.c.l.b16 %v3810
    %v3891 = vunpack.c.l.b16 %v3811
    %v3892 = vunpack.c.l.b16 %v3812
    %v3893 = vunpack.c.l.b16 %v3813
    %v3894 = vunpack.c.l.b16 %v3814
    %v3895 = vunpack.c.l.b16 %v3815
    %v3896 = vpack.c.b16 %v3881, %v3880
    %v3897 = vpack.c.b16 %v3883, %v3882
    %v3898 = vpack.c.b16 %v3885, %v3884
    %v3899 = vpack.c.b16 %v3887, %v3886
    %v3900 = vpack.c.b16 %v3889, %v3888
    %v3901 = vpack.c.b16 %v3891, %v3890
    %v3902 = vpack.c.b16 %v3893, %v3892
    %v3903 = vpack.c.b16 %v3895, %v3894
    %3912 = vmatprep.subr.bf16.mxu0 0
    %3913 = vmatpush1.bf16.msra.mxu0 %v3896
    %3914 = vmatprep.subr.bf16.mxu0 0
    %3915 = vmatpush1.bf16.msra.mxu0 %v3897
    %3916 = vmatprep.subr.bf16.mxu0 0
    %3917 = vmatpush1.bf16.msra.mxu0 %v3898
    %3918 = vmatprep.subr.bf16.mxu0 0
    %3919 = vmatpush1.bf16.msra.mxu0 %v3899
    %3920 = vmatprep.subr.bf16.mxu0 0
    %3921 = vmatpush1.bf16.msra.mxu0 %v3900
    %3922 = vmatprep.subr.bf16.mxu0 0
    %3923 = vmatpush1.bf16.msra.mxu0 %v3901
    %3924 = vmatprep.subr.bf16.mxu0 0
    %3925 = vmatpush1.bf16.msra.mxu0 %v3902
    %3926 = vmatprep.subr.bf16.mxu0 0
    %3927 = vmatpush1.bf16.msra.mxu0 %v3903
    %3928 = vmatprep.subr.bf16.mxu0 0
    %3929 = vmatpush1.bf16.msra.mxu0 0
    %3930 = vmatprep.subr.bf16.mxu0 0
    %3931 = vmatpush1.bf16.msra.mxu0 0
    %3932 = vmatprep.subr.bf16.mxu0 0
    %3933 = vmatpush1.bf16.msra.mxu0 0
    %3934 = vmatprep.subr.bf16.mxu0 0
    %3935 = vmatpush1.bf16.msra.mxu0 0
    %3936 = vmatprep.subr.bf16.mxu0 0
    %3937 = vmatpush1.bf16.msra.mxu0 0
    %3938 = vmatprep.subr.bf16.mxu0 0
    %3939 = vmatpush1.bf16.msra.mxu0 0
    %3940 = vmatprep.subr.bf16.mxu0 0
    %3941 = vmatpush1.bf16.msra.mxu0 0
    %3942 = vmatprep.subr.bf16.mxu0 0
    %3943 = vmatpush1.bf16.msra.mxu0 0
    %3944 = vmatprep.mubr.bf16.mxu0 0
    %3945 = vmatmul.mubr.bf16.gmra.mrb[0].mxu0 %v3848
    %v3946 = vpop.f32.mrb[0].mxu0
    %v3947 = vadd.f32 0.0, %v3946
    %v3948 = vpop.f32.mrb[0].mxu0
    %v3949 = vpop.f32.mrb[0].mxu0
    %v3950 = vadd.f32 0.0, %v3949
    %v3951 = vpop.f32.mrb[0].mxu0
    %3952 = vmatprep.mubr.bf16.mxu0 0
    %3953 = vmatmul.mubr.bf16.gmra.mrb[0].mxu0 %v3849
    %v3954 = vpop.f32.mrb[0].mxu0
    %v3955 = vadd.f32 0.0, %v3954
    %v3956 = vpop.f32.mrb[0].mxu0
    %v3957 = vpop.f32.mrb[0].mxu0
    %v3958 = vadd.f32 0.0, %v3957
    %v3959 = vpop.f32.mrb[0].mxu0
    %3960 = vmatprep.mubr.bf16.mxu0 0
    %3961 = vmatmul.mubr.bf16.gmra.mrb[0].mxu0 %v3850
    %v3962 = vpop.f32.mrb[0].mxu0
    %v3963 = vadd.f32 0.0, %v3962
    %v3964 = vpop.f32.mrb[0].mxu0
    %v3965 = vpop.f32.mrb[0].mxu0
    %v3966 = vadd.f32 0.0, %v3965
    %v3967 = vpop.f32.mrb[0].mxu0
    %3968 = vmatprep.mubr.bf16.mxu0 0
    %3969 = vmatmul.mubr.bf16.gmra.mrb[0].mxu0 %v3851
    %v3970 = vpop.f32.mrb[0].mxu0
    %v3971 = vadd.f32 0.0, %v3970
    %v3972 = vpop.f32.mrb[0].mxu0
    %v3973 = vpop.f32.mrb[0].mxu0
    %v3974 = vadd.f32 0.0, %v3973
    %v3975 = vpop.f32.mrb[0].mxu0
    %3976 = vmatprep.mubr.bf16.mxu0 0
    %3977 = vmatmul.mubr.bf16.gmra.mrb[0].mxu0 %v3852
    %v3978 = vpop.f32.mrb[0].mxu0
    %v3979 = vadd.f32 0.0, %v3978
    %v3980 = vpop.f32.mrb[0].mxu0
    %v3981 = vpop.f32.mrb[0].mxu0
    %v3982 = vadd.f32 0.0, %v3981
    %v3983 = vpop.f32.mrb[0].mxu0
    %3984 = vmatprep.mubr.bf16.mxu0 0
    %3985 = vmatmul.mubr.bf16.gmra.mrb[0].mxu0 %v3853
    %v3986 = vpop.f32.mrb[0].mxu0
    %v3987 = vadd.f32 0.0, %v3986
    %v3988 = vpop.f32.mrb[0].mxu0
    %v3989 = vpop.f32.mrb[0].mxu0
    %v3990 = vadd.f32 0.0, %v3989
    %v3991 = vpop.f32.mrb[0].mxu0
    %3992 = vmatprep.mubr.bf16.mxu0 0
    %3993 = vmatmul.mubr.bf16.gmra.mrb[0].mxu0 %v3854
    %v3994 = vpop.f32.mrb[0].mxu0
    %v3995 = vadd.f32 0.0, %v3994
    %v3996 = vpop.f32.mrb[0].mxu0
    %v3997 = vpop.f32.mrb[0].mxu0
    %v3998 = vadd.f32 0.0, %v3997
    %v3999 = vpop.f32.mrb[0].mxu0
    %4000 = vmatprep.mubr.bf16.mxu0 0
    %4001 = vmatmul.mubr.bf16.gmra.mrb[0].mxu0 %v3855
    %v4002 = vpop.f32.mrb[0].mxu0
    %v4003 = vadd.f32 0.0, %v4002
    %v4004 = vpop.f32.mrb[0].mxu0
    %v4005 = vpop.f32.mrb[0].mxu0
    %v4006 = vadd.f32 0.0, %v4005
    %v4007 = vpop.f32.mrb[0].mxu0
    %4008 = vdwg.mxu0
    %v4009 = vadd.f32 %v3755, %v3947
    %v4010 = vadd.f32 %v3756, %v3950
    %v4011 = vadd.f32 %v3757, %v3955
    %v4012 = vadd.f32 %v3758, %v3958
    %v4013 = vadd.f32 %v3759, %v3963
    %v4014 = vadd.f32 %v3760, %v3966
    %v4015 = vadd.f32 %v3761, %v3971
    %v4016 = vadd.f32 %v3762, %v3974
    %v4017 = vadd.f32 %v3763, %v3979
    %v4018 = vadd.f32 %v3764, %v3982
    %v4019 = vadd.f32 %v3765, %v3987
    %v4020 = vadd.f32 %v3766, %v3990
    %v4021 = vadd.f32 %v3767, %v3995
    %v4022 = vadd.f32 %v3768, %v3998
    %v4023 = vadd.f32 %v3769, %v4003
    %v4024 = vadd.f32 %v3770, %v4006
    %v4026 = vshrl.u32 %v3776, 16
    %v4028 = vrot.slane %v4026, 4
    %v4029 = vshll.u32 %v3776, 16
    %v4031 = vrot.slane %v4029, 5
    %v4032 = vor.u32 %v4028, %v4031
    %v4033 = vrot.slane %v4032, 4
    %v4035 = vshll.u32 %v3777, 16
    %v4037 = vrot.slane %v4035, 5
    %v4038 = vsel %vm2916, %v4033, %v4037
    %v4039 = vshrl.u32 %v3777, 16
    %v4041 = vrot.slane %v4039, 4
    %v4042 = vor.u32 %v4041, %v4037
    %v4043 = vrot.slane %v4042, 4
    %v4045 = vshll.u32 %v3778, 16
    %v4047 = vrot.slane %v4045, 5
    %v4048 = vsel %vm2916, %v4043, %v4047
    %v4050 = vshrl.u32 %v3779, 16
    %v4052 = vrot.slane %v4050, 4
    %v4053 = vshll.u32 %v3779, 16
    %v4055 = vrot.slane %v4053, 5
    %v4056 = vor.u32 %v4052, %v4055
    %v4057 = vrot.slane %v4056, 4
    %v4059 = vshll.u32 %v3780, 16
    %v4061 = vrot.slane %v4059, 5
    %v4062 = vsel %vm2916, %v4057, %v4061
    %v4063 = vshrl.u32 %v3780, 16
    %v4065 = vrot.slane %v4063, 4
    %v4066 = vor.u32 %v4065, %v4061
    %v4067 = vrot.slane %v4066, 4
    %v4069 = vshll.u32 %v3781, 16
    %v4071 = vrot.slane %v4069, 5
    %v4072 = vsel %vm2916, %v4067, %v4071
    %v4074 = vshrl.u32 %v3782, 16
    %v4076 = vrot.slane %v4074, 4
    %v4077 = vshll.u32 %v3782, 16
    %v4079 = vrot.slane %v4077, 5
    %v4080 = vor.u32 %v4076, %v4079
    %v4081 = vrot.slane %v4080, 4
    %v4083 = vshll.u32 %v3783, 16
    %v4085 = vrot.slane %v4083, 5
    %v4086 = vsel %vm2916, %v4081, %v4085
    %v4087 = vshrl.u32 %v3783, 16
    %v4089 = vrot.slane %v4087, 4
    %v4090 = vor.u32 %v4089, %v4085
    %v4091 = vrot.slane %v4090, 4
    %v4093 = vshll.u32 %v3784, 16
    %v4095 = vrot.slane %v4093, 5
    %v4096 = vsel %vm2916, %v4091, %v4095
    %v4098 = vshrl.u32 %v3785, 16
    %v4100 = vrot.slane %v4098, 4
    %v4101 = vshll.u32 %v3785, 16
    %v4103 = vrot.slane %v4101, 5
    %v4104 = vor.u32 %v4100, %v4103
    %v4105 = vrot.slane %v4104, 4
    %v4107 = vshll.u32 %v3786, 16
    %v4109 = vrot.slane %v4107, 5
    %v4110 = vsel %vm2916, %v4105, %v4109
    %v4111 = vshrl.u32 %v3786, 16
    %v4113 = vrot.slane %v4111, 4
    %v4114 = vor.u32 %v4113, %v4109
    %v4115 = vrot.slane %v4114, 4
    %v4117 = vshll.u32 %v3787, 16
    %v4119 = vrot.slane %v4117, 5
    %v4120 = vsel %vm2916, %v4115, %v4119
    %v4122 = vshrl.u32 %v3788, 16
    %v4124 = vrot.slane %v4122, 4
    %v4125 = vshll.u32 %v3788, 16
    %v4127 = vrot.slane %v4125, 5
    %v4128 = vor.u32 %v4124, %v4127
    %v4129 = vrot.slane %v4128, 4
    %v4131 = vshll.u32 %v3789, 16
    %v4133 = vrot.slane %v4131, 5
    %v4134 = vsel %vm2916, %v4129, %v4133
    %v4135 = vshrl.u32 %v3789, 16
    %v4137 = vrot.slane %v4135, 4
    %v4138 = vor.u32 %v4137, %v4133
    %v4139 = vrot.slane %v4138, 4
    %v4141 = vshll.u32 %v3790, 16
    %v4143 = vrot.slane %v4141, 5
    %v4144 = vsel %vm2916, %v4139, %v4143
    %v4146 = vshrl.u32 %v3791, 16
    %v4148 = vrot.slane %v4146, 4
    %v4149 = vshll.u32 %v3791, 16
    %v4151 = vrot.slane %v4149, 5
    %v4152 = vor.u32 %v4148, %v4151
    %v4153 = vrot.slane %v4152, 4
    %v4155 = vshll.u32 %v3792, 16
    %v4157 = vrot.slane %v4155, 5
    %v4158 = vsel %vm2916, %v4153, %v4157
    %v4159 = vshrl.u32 %v3792, 16
    %v4161 = vrot.slane %v4159, 4
    %v4162 = vor.u32 %v4161, %v4157
    %v4163 = vrot.slane %v4162, 4
    %v4165 = vshll.u32 %v3793, 16
    %v4167 = vrot.slane %v4165, 5
    %v4168 = vsel %vm2916, %v4163, %v4167
    %v4170 = vshrl.u32 %v3794, 16
    %v4172 = vrot.slane %v4170, 4
    %v4173 = vshll.u32 %v3794, 16
    %v4175 = vrot.slane %v4173, 5
    %v4176 = vor.u32 %v4172, %v4175
    %v4177 = vrot.slane %v4176, 4
    %v4179 = vshll.u32 %v3795, 16
    %v4181 = vrot.slane %v4179, 5
    %v4182 = vsel %vm2916, %v4177, %v4181
    %v4183 = vshrl.u32 %v3795, 16
    %v4185 = vrot.slane %v4183, 4
    %v4186 = vor.u32 %v4185, %v4181
    %v4187 = vrot.slane %v4186, 4
    %v4189 = vshll.u32 %v3796, 16
    %v4191 = vrot.slane %v4189, 5
    %v4192 = vsel %vm2916, %v4187, %v4191
    %v4194 = vshrl.u32 %v3797, 16
    %v4196 = vrot.slane %v4194, 4
    %v4197 = vshll.u32 %v3797, 16
    %v4199 = vrot.slane %v4197, 5
    %v4200 = vor.u32 %v4196, %v4199
    %v4201 = vrot.slane %v4200, 4
    %v4203 = vshll.u32 %v3798, 16
    %v4205 = vrot.slane %v4203, 5
    %v4206 = vsel %vm2916, %v4201, %v4205
    %v4207 = vshrl.u32 %v3798, 16
    %v4209 = vrot.slane %v4207, 4
    %v4210 = vor.u32 %v4209, %v4205
    %v4211 = vrot.slane %v4210, 4
    %v4213 = vshll.u32 %v3799, 16
    %v4215 = vrot.slane %v4213, 5
    %v4216 = vsel %vm2916, %v4211, %v4215
    %v4217 = vld [vmem:[%s1 + $0x100] sm:$0xf]
    %v4218 = vld [vmem:[%s1 + $0x104] sm:$0xf]
    %v4219 = vld [vmem:[%s1 + $0x108] sm:$0xf]
    %v4220 = vld [vmem:[%s1 + $0x10c] sm:$0xf]
    %v4221 = vld [vmem:[%s1 + $0x110] sm:$0xf]
    %v4222 = vld [vmem:[%s1 + $0x114] sm:$0xf]
    %v4223 = vld [vmem:[%s1 + $0x118] sm:$0xf]
    %v4224 = vld [vmem:[%s1 + $0x11c] sm:$0xf]
    %v4225 = vld [vmem:[%s1 + $0x120] sm:$0xf]
    %v4226 = vld [vmem:[%s1 + $0x124] sm:$0xf]
    %v4227 = vld [vmem:[%s1 + $0x128] sm:$0xf]
    %v4228 = vld [vmem:[%s1 + $0x12c] sm:$0xf]
    %v4229 = vld [vmem:[%s1 + $0x130] sm:$0xf]
    %v4230 = vld [vmem:[%s1 + $0x134] sm:$0xf]
    %v4231 = vld [vmem:[%s1 + $0x138] sm:$0xf]
    %v4232 = vld [vmem:[%s1 + $0x13c] sm:$0xf]
    %v4233 = vunpack.c.l.b16 %v4038
    %v4234 = vunpack.c.l.b16 %v4048
    %v4235 = vunpack.c.l.b16 %v4062
    %v4236 = vunpack.c.l.b16 %v4072
    %v4237 = vunpack.c.l.b16 %v4086
    %v4238 = vunpack.c.l.b16 %v4096
    %v4239 = vunpack.c.l.b16 %v4110
    %v4240 = vunpack.c.l.b16 %v4120
    %v4241 = vunpack.c.l.b16 %v4134
    %v4242 = vunpack.c.l.b16 %v4144
    %v4243 = vunpack.c.l.b16 %v4158
    %v4244 = vunpack.c.l.b16 %v4168
    %v4245 = vunpack.c.l.b16 %v4182
    %v4246 = vunpack.c.l.b16 %v4192
    %v4247 = vunpack.c.l.b16 %v4206
    %v4248 = vunpack.c.l.b16 %v4216
    %v4249 = vpack.c.b16 %v4234, %v4233
    %v4250 = vpack.c.b16 %v4236, %v4235
    %v4251 = vpack.c.b16 %v4238, %v4237
    %v4252 = vpack.c.b16 %v4240, %v4239
    %v4253 = vpack.c.b16 %v4242, %v4241
    %v4254 = vpack.c.b16 %v4244, %v4243
    %v4255 = vpack.c.b16 %v4246, %v4245
    %v4256 = vpack.c.b16 %v4248, %v4247
    %v4281 = vunpack.c.l.b16 %v4217
    %v4282 = vunpack.c.l.b16 %v4218
    %v4283 = vunpack.c.l.b16 %v4219
    %v4284 = vunpack.c.l.b16 %v4220
    %v4285 = vunpack.c.l.b16 %v4221
    %v4286 = vunpack.c.l.b16 %v4222
    %v4287 = vunpack.c.l.b16 %v4223
    %v4288 = vunpack.c.l.b16 %v4224
    %v4289 = vunpack.c.l.b16 %v4225
    %v4290 = vunpack.c.l.b16 %v4226
    %v4291 = vunpack.c.l.b16 %v4227
    %v4292 = vunpack.c.l.b16 %v4228
    %v4293 = vunpack.c.l.b16 %v4229
    %v4294 = vunpack.c.l.b16 %v4230
    %v4295 = vunpack.c.l.b16 %v4231
    %v4296 = vunpack.c.l.b16 %v4232
    %v4297 = vpack.c.b16 %v4282, %v4281
    %v4298 = vpack.c.b16 %v4284, %v4283
    %v4299 = vpack.c.b16 %v4286, %v4285
    %v4300 = vpack.c.b16 %v4288, %v4287
    %v4301 = vpack.c.b16 %v4290, %v4289
    %v4302 = vpack.c.b16 %v4292, %v4291
    %v4303 = vpack.c.b16 %v4294, %v4293
    %v4304 = vpack.c.b16 %v4296, %v4295
    %4313 = vmatprep.subr.bf16.mxu0 0
    %4314 = vmatpush1.bf16.msra.mxu0 %v4297
    %4315 = vmatprep.subr.bf16.mxu0 0
    %4316 = vmatpush1.bf16.msra.mxu0 %v4298
    %4317 = vmatprep.subr.bf16.mxu0 0
    %4318 = vmatpush1.bf16.msra.mxu0 %v4299
    %4319 = vmatprep.subr.bf16.mxu0 0
    %4320 = vmatpush1.bf16.msra.mxu0 %v4300
    %4321 = vmatprep.subr.bf16.mxu0 0
    %4322 = vmatpush1.bf16.msra.mxu0 %v4301
    %4323 = vmatprep.subr.bf16.mxu0 0
    %4324 = vmatpush1.bf16.msra.mxu0 %v4302
    %4325 = vmatprep.subr.bf16.mxu0 0
    %4326 = vmatpush1.bf16.msra.mxu0 %v4303
    %4327 = vmatprep.subr.bf16.mxu0 0
    %4328 = vmatpush1.bf16.msra.mxu0 %v4304
    %4329 = vmatprep.subr.bf16.mxu0 0
    %4330 = vmatpush1.bf16.msra.mxu0 0
    %4331 = vmatprep.subr.bf16.mxu0 0
    %4332 = vmatpush1.bf16.msra.mxu0 0
    %4333 = vmatprep.subr.bf16.mxu0 0
    %4334 = vmatpush1.bf16.msra.mxu0 0
    %4335 = vmatprep.subr.bf16.mxu0 0
    %4336 = vmatpush1.bf16.msra.mxu0 0
    %4337 = vmatprep.subr.bf16.mxu0 0
    %4338 = vmatpush1.bf16.msra.mxu0 0
    %4339 = vmatprep.subr.bf16.mxu0 0
    %4340 = vmatpush1.bf16.msra.mxu0 0
    %4341 = vmatprep.subr.bf16.mxu0 0
    %4342 = vmatpush1.bf16.msra.mxu0 0
    %4343 = vmatprep.subr.bf16.mxu0 0
    %4344 = vmatpush1.bf16.msra.mxu0 0
    %4345 = vmatprep.mubr.bf16.mxu0 0
    %4346 = vmatmul.mubr.bf16.gmra.mrb[0].mxu0 %v4249
    %v4347 = vpop.f32.mrb[0].mxu0
    %v4348 = vadd.f32 0.0, %v4347
    %v4349 = vpop.f32.mrb[0].mxu0
    %v4350 = vpop.f32.mrb[0].mxu0
    %v4351 = vadd.f32 0.0, %v4350
    %v4352 = vpop.f32.mrb[0].mxu0
    %4353 = vmatprep.mubr.bf16.mxu0 0
    %4354 = vmatmul.mubr.bf16.gmra.mrb[0].mxu0 %v4250
    %v4355 = vpop.f32.mrb[0].mxu0
    %v4356 = vadd.f32 0.0, %v4355
    %v4357 = vpop.f32.mrb[0].mxu0
    %v4358 = vpop.f32.mrb[0].mxu0
    %v4359 = vadd.f32 0.0, %v4358
    %v4360 = vpop.f32.mrb[0].mxu0
    %4361 = vmatprep.mubr.bf16.mxu0 0
    %4362 = vmatmul.mubr.bf16.gmra.mrb[0].mxu0 %v4251
    %v4363 = vpop.f32.mrb[0].mxu0
    %v4364 = vadd.f32 0.0, %v4363
    %v4365 = vpop.f32.mrb[0].mxu0
    %v4366 = vpop.f32.mrb[0].mxu0
    %v4367 = vadd.f32 0.0, %v4366
    %v4368 = vpop.f32.mrb[0].mxu0
    %4369 = vmatprep.mubr.bf16.mxu0 0
    %4370 = vmatmul.mubr.bf16.gmra.mrb[0].mxu0 %v4252
    %v4371 = vpop.f32.mrb[0].mxu0
    %v4372 = vadd.f32 0.0, %v4371
    %v4373 = vpop.f32.mrb[0].mxu0
    %v4374 = vpop.f32.mrb[0].mxu0
    %v4375 = vadd.f32 0.0, %v4374
    %v4376 = vpop.f32.mrb[0].mxu0
    %4377 = vmatprep.mubr.bf16.mxu0 0
    %4378 = vmatmul.mubr.bf16.gmra.mrb[0].mxu0 %v4253
    %v4379 = vpop.f32.mrb[0].mxu0
    %v4380 = vadd.f32 0.0, %v4379
    %v4381 = vpop.f32.mrb[0].mxu0
    %v4382 = vpop.f32.mrb[0].mxu0
    %v4383 = vadd.f32 0.0, %v4382
    %v4384 = vpop.f32.mrb[0].mxu0
    %4385 = vmatprep.mubr.bf16.mxu0 0
    %4386 = vmatmul.mubr.bf16.gmra.mrb[0].mxu0 %v4254
    %v4387 = vpop.f32.mrb[0].mxu0
    %v4388 = vadd.f32 0.0, %v4387
    %v4389 = vpop.f32.mrb[0].mxu0
    %v4390 = vpop.f32.mrb[0].mxu0
    %v4391 = vadd.f32 0.0, %v4390
    %v4392 = vpop.f32.mrb[0].mxu0
    %4393 = vmatprep.mubr.bf16.mxu0 0
    %4394 = vmatmul.mubr.bf16.gmra.mrb[0].mxu0 %v4255
    %v4395 = vpop.f32.mrb[0].mxu0
    %v4396 = vadd.f32 0.0, %v4395
    %v4397 = vpop.f32.mrb[0].mxu0
    %v4398 = vpop.f32.mrb[0].mxu0
    %v4399 = vadd.f32 0.0, %v4398
    %v4400 = vpop.f32.mrb[0].mxu0
    %4401 = vmatprep.mubr.bf16.mxu0 0
    %4402 = vmatmul.mubr.bf16.gmra.mrb[0].mxu0 %v4256
    %v4403 = vpop.f32.mrb[0].mxu0
    %v4404 = vadd.f32 0.0, %v4403
    %v4405 = vpop.f32.mrb[0].mxu0
    %v4406 = vpop.f32.mrb[0].mxu0
    %v4407 = vadd.f32 0.0, %v4406
    %v4408 = vpop.f32.mrb[0].mxu0
    %4409 = vdwg.mxu0
    %v4410 = vadd.f32 %v4009, %v4348
    %v4411 = vadd.f32 %v4010, %v4351
    %v4412 = vadd.f32 %v4011, %v4356
    %v4413 = vadd.f32 %v4012, %v4359
    %v4414 = vadd.f32 %v4013, %v4364
    %v4415 = vadd.f32 %v4014, %v4367
    %v4416 = vadd.f32 %v4015, %v4372
    %v4417 = vadd.f32 %v4016, %v4375
    %v4418 = vadd.f32 %v4017, %v4380
    %v4419 = vadd.f32 %v4018, %v4383
    %v4420 = vadd.f32 %v4019, %v4388
    %v4421 = vadd.f32 %v4020, %v4391
    %v4422 = vadd.f32 %v4021, %v4396
    %v4423 = vadd.f32 %v4022, %v4399
    %v4424 = vadd.f32 %v4023, %v4404
    %v4425 = vadd.f32 %v4024, %v4407
    %v4434 = vrot.slane %v3776, 5
    %v4435 = vrot.slane %v4434, 4
    %v4436 = vrot.slane %v3777, 5
    %v4437 = vsel %vm3505, %v4435, %v4436
    %v4438 = vrot.slane %v4436, 4
    %v4439 = vrot.slane %v3778, 5
    %v4440 = vsel %vm3505, %v4438, %v4439
    %v4441 = vrot.slane %v3779, 5
    %v4442 = vrot.slane %v4441, 4
    %v4443 = vrot.slane %v3780, 5
    %v4444 = vsel %vm3505, %v4442, %v4443
    %v4445 = vrot.slane %v4443, 4
    %v4446 = vrot.slane %v3781, 5
    %v4447 = vsel %vm3505, %v4445, %v4446
    %v4448 = vrot.slane %v3782, 5
    %v4449 = vrot.slane %v4448, 4
    %v4450 = vrot.slane %v3783, 5
    %v4451 = vsel %vm3505, %v4449, %v4450
    %v4452 = vrot.slane %v4450, 4
    %v4453 = vrot.slane %v3784, 5
    %v4454 = vsel %vm3505, %v4452, %v4453
    %v4455 = vrot.slane %v3785, 5
    %v4456 = vrot.slane %v4455, 4
    %v4457 = vrot.slane %v3786, 5
    %v4458 = vsel %vm3505, %v4456, %v4457
    %v4459 = vrot.slane %v4457, 4
    %v4460 = vrot.slane %v3787, 5
    %v4461 = vsel %vm3505, %v4459, %v4460
    %v4462 = vrot.slane %v3788, 5
    %v4463 = vrot.slane %v4462, 4
    %v4464 = vrot.slane %v3789, 5
    %v4465 = vsel %vm3505, %v4463, %v4464
    %v4466 = vrot.slane %v4464, 4
    %v4467 = vrot.slane %v3790, 5
    %v4468 = vsel %vm3505, %v4466, %v4467
    %v4469 = vrot.slane %v3791, 5
    %v4470 = vrot.slane %v4469, 4
    %v4471 = vrot.slane %v3792, 5
    %v4472 = vsel %vm3505, %v4470, %v4471
    %v4473 = vrot.slane %v4471, 4
    %v4474 = vrot.slane %v3793, 5
    %v4475 = vsel %vm3505, %v4473, %v4474
    %v4476 = vrot.slane %v3794, 5
    %v4477 = vrot.slane %v4476, 4
    %v4478 = vrot.slane %v3795, 5
    %v4479 = vsel %vm3505, %v4477, %v4478
    %v4480 = vrot.slane %v4478, 4
    %v4481 = vrot.slane %v3796, 5
    %v4482 = vsel %vm3505, %v4480, %v4481
    %v4483 = vrot.slane %v3797, 5
    %v4484 = vrot.slane %v4483, 4
    %v4485 = vrot.slane %v3798, 5
    %v4486 = vsel %vm3505, %v4484, %v4485
    %v4487 = vrot.slane %v4485, 4
    %v4488 = vrot.slane %v3799, 5
    %v4489 = vsel %vm3505, %v4487, %v4488
    %v4490 = vld [vmem:[%s1 + $0x140] sm:$0xf]
    %v4491 = vld [vmem:[%s1 + $0x144] sm:$0xf]
    %v4492 = vld [vmem:[%s1 + $0x148] sm:$0xf]
    %v4493 = vld [vmem:[%s1 + $0x14c] sm:$0xf]
    %v4494 = vld [vmem:[%s1 + $0x150] sm:$0xf]
    %v4495 = vld [vmem:[%s1 + $0x154] sm:$0xf]
    %v4496 = vld [vmem:[%s1 + $0x158] sm:$0xf]
    %v4497 = vld [vmem:[%s1 + $0x15c] sm:$0xf]
    %v4498 = vld [vmem:[%s1 + $0x160] sm:$0xf]
    %v4499 = vld [vmem:[%s1 + $0x164] sm:$0xf]
    %v4500 = vld [vmem:[%s1 + $0x168] sm:$0xf]
    %v4501 = vld [vmem:[%s1 + $0x16c] sm:$0xf]
    %v4502 = vld [vmem:[%s1 + $0x170] sm:$0xf]
    %v4503 = vld [vmem:[%s1 + $0x174] sm:$0xf]
    %v4504 = vld [vmem:[%s1 + $0x178] sm:$0xf]
    %v4505 = vld [vmem:[%s1 + $0x17c] sm:$0xf]
    %v4506 = vunpack.c.l.b16 %v4437
    %v4507 = vunpack.c.l.b16 %v4440
    %v4508 = vunpack.c.l.b16 %v4444
    %v4509 = vunpack.c.l.b16 %v4447
    %v4510 = vunpack.c.l.b16 %v4451
    %v4511 = vunpack.c.l.b16 %v4454
    %v4512 = vunpack.c.l.b16 %v4458
    %v4513 = vunpack.c.l.b16 %v4461
    %v4514 = vunpack.c.l.b16 %v4465
    %v4515 = vunpack.c.l.b16 %v4468
    %v4516 = vunpack.c.l.b16 %v4472
    %v4517 = vunpack.c.l.b16 %v4475
    %v4518 = vunpack.c.l.b16 %v4479
    %v4519 = vunpack.c.l.b16 %v4482
    %v4520 = vunpack.c.l.b16 %v4486
    %v4521 = vunpack.c.l.b16 %v4489
    %v4522 = vpack.c.b16 %v4507, %v4506
    %v4523 = vpack.c.b16 %v4509, %v4508
    %v4524 = vpack.c.b16 %v4511, %v4510
    %v4525 = vpack.c.b16 %v4513, %v4512
    %v4526 = vpack.c.b16 %v4515, %v4514
    %v4527 = vpack.c.b16 %v4517, %v4516
    %v4528 = vpack.c.b16 %v4519, %v4518
    %v4529 = vpack.c.b16 %v4521, %v4520
    %v4554 = vunpack.c.l.b16 %v4490
    %v4555 = vunpack.c.l.b16 %v4491
    %v4556 = vunpack.c.l.b16 %v4492
    %v4557 = vunpack.c.l.b16 %v4493
    %v4558 = vunpack.c.l.b16 %v4494
    %v4559 = vunpack.c.l.b16 %v4495
    %v4560 = vunpack.c.l.b16 %v4496
    %v4561 = vunpack.c.l.b16 %v4497
    %v4562 = vunpack.c.l.b16 %v4498
    %v4563 = vunpack.c.l.b16 %v4499
    %v4564 = vunpack.c.l.b16 %v4500
    %v4565 = vunpack.c.l.b16 %v4501
    %v4566 = vunpack.c.l.b16 %v4502
    %v4567 = vunpack.c.l.b16 %v4503
    %v4568 = vunpack.c.l.b16 %v4504
    %v4569 = vunpack.c.l.b16 %v4505
    %v4570 = vpack.c.b16 %v4555, %v4554
    %v4571 = vpack.c.b16 %v4557, %v4556
    %v4572 = vpack.c.b16 %v4559, %v4558
    %v4573 = vpack.c.b16 %v4561, %v4560
    %v4574 = vpack.c.b16 %v4563, %v4562
    %v4575 = vpack.c.b16 %v4565, %v4564
    %v4576 = vpack.c.b16 %v4567, %v4566
    %v4577 = vpack.c.b16 %v4569, %v4568
    %4586 = vmatprep.subr.bf16.mxu0 0
    %4587 = vmatpush1.bf16.msra.mxu0 %v4570
    %4588 = vmatprep.subr.bf16.mxu0 0
    %4589 = vmatpush1.bf16.msra.mxu0 %v4571
    %4590 = vmatprep.subr.bf16.mxu0 0
    %4591 = vmatpush1.bf16.msra.mxu0 %v4572
    %4592 = vmatprep.subr.bf16.mxu0 0
    %4593 = vmatpush1.bf16.msra.mxu0 %v4573
    %4594 = vmatprep.subr.bf16.mxu0 0
    %4595 = vmatpush1.bf16.msra.mxu0 %v4574
    %4596 = vmatprep.subr.bf16.mxu0 0
    %4597 = vmatpush1.bf16.msra.mxu0 %v4575
    %4598 = vmatprep.subr.bf16.mxu0 0
    %4599 = vmatpush1.bf16.msra.mxu0 %v4576
    %4600 = vmatprep.subr.bf16.mxu0 0
    %4601 = vmatpush1.bf16.msra.mxu0 %v4577
    %4602 = vmatprep.subr.bf16.mxu0 0
    %4603 = vmatpush1.bf16.msra.mxu0 0
    %4604 = vmatprep.subr.bf16.mxu0 0
    %4605 = vmatpush1.bf16.msra.mxu0 0
    %4606 = vmatprep.subr.bf16.mxu0 0
    %4607 = vmatpush1.bf16.msra.mxu0 0
    %4608 = vmatprep.subr.bf16.mxu0 0
    %4609 = vmatpush1.bf16.msra.mxu0 0
    %4610 = vmatprep.subr.bf16.mxu0 0
    %4611 = vmatpush1.bf16.msra.mxu0 0
    %4612 = vmatprep.subr.bf16.mxu0 0
    %4613 = vmatpush1.bf16.msra.mxu0 0
    %4614 = vmatprep.subr.bf16.mxu0 0
    %4615 = vmatpush1.bf16.msra.mxu0 0
    %4616 = vmatprep.subr.bf16.mxu0 0
    %4617 = vmatpush1.bf16.msra.mxu0 0
    %4618 = vmatprep.mubr.bf16.mxu0 0
    %4619 = vmatmul.mubr.bf16.gmra.mrb[0].mxu0 %v4522
    %v4620 = vpop.f32.mrb[0].mxu0
    %v4621 = vadd.f32 0.0, %v4620
    %v4622 = vpop.f32.mrb[0].mxu0
    %v4623 = vpop.f32.mrb[0].mxu0
    %v4624 = vadd.f32 0.0, %v4623
    %v4625 = vpop.f32.mrb[0].mxu0
    %4626 = vmatprep.mubr.bf16.mxu0 0
    %4627 = vmatmul.mubr.bf16.gmra.mrb[0].mxu0 %v4523
    %v4628 = vpop.f32.mrb[0].mxu0
    %v4629 = vadd.f32 0.0, %v4628
    %v4630 = vpop.f32.mrb[0].mxu0
    %v4631 = vpop.f32.mrb[0].mxu0
    %v4632 = vadd.f32 0.0, %v4631
    %v4633 = vpop.f32.mrb[0].mxu0
    %4634 = vmatprep.mubr.bf16.mxu0 0
    %4635 = vmatmul.mubr.bf16.gmra.mrb[0].mxu0 %v4524
    %v4636 = vpop.f32.mrb[0].mxu0
    %v4637 = vadd.f32 0.0, %v4636
    %v4638 = vpop.f32.mrb[0].mxu0
    %v4639 = vpop.f32.mrb[0].mxu0
    %v4640 = vadd.f32 0.0, %v4639
    %v4641 = vpop.f32.mrb[0].mxu0
    %4642 = vmatprep.mubr.bf16.mxu0 0
    %4643 = vmatmul.mubr.bf16.gmra.mrb[0].mxu0 %v4525
    %v4644 = vpop.f32.mrb[0].mxu0
    %v4645 = vadd.f32 0.0, %v4644
    %v4646 = vpop.f32.mrb[0].mxu0
    %v4647 = vpop.f32.mrb[0].mxu0
    %v4648 = vadd.f32 0.0, %v4647
    %v4649 = vpop.f32.mrb[0].mxu0
    %4650 = vmatprep.mubr.bf16.mxu0 0
    %4651 = vmatmul.mubr.bf16.gmra.mrb[0].mxu0 %v4526
    %v4652 = vpop.f32.mrb[0].mxu0
    %v4653 = vadd.f32 0.0, %v4652
    %v4654 = vpop.f32.mrb[0].mxu0
    %v4655 = vpop.f32.mrb[0].mxu0
    %v4656 = vadd.f32 0.0, %v4655
    %v4657 = vpop.f32.mrb[0].mxu0
    %4658 = vmatprep.mubr.bf16.mxu0 0
    %4659 = vmatmul.mubr.bf16.gmra.mrb[0].mxu0 %v4527
    %v4660 = vpop.f32.mrb[0].mxu0
    %v4661 = vadd.f32 0.0, %v4660
    %v4662 = vpop.f32.mrb[0].mxu0
    %v4663 = vpop.f32.mrb[0].mxu0
    %v4664 = vadd.f32 0.0, %v4663
    %v4665 = vpop.f32.mrb[0].mxu0
    %4666 = vmatprep.mubr.bf16.mxu0 0
    %4667 = vmatmul.mubr.bf16.gmra.mrb[0].mxu0 %v4528
    %v4668 = vpop.f32.mrb[0].mxu0
    %v4669 = vadd.f32 0.0, %v4668
    %v4670 = vpop.f32.mrb[0].mxu0
    %v4671 = vpop.f32.mrb[0].mxu0
    %v4672 = vadd.f32 0.0, %v4671
    %v4673 = vpop.f32.mrb[0].mxu0
    %4674 = vmatprep.mubr.bf16.mxu0 0
    %4675 = vmatmul.mubr.bf16.gmra.mrb[0].mxu0 %v4529
    %v4676 = vpop.f32.mrb[0].mxu0
    %v4677 = vadd.f32 0.0, %v4676
    %v4678 = vpop.f32.mrb[0].mxu0
    %v4679 = vpop.f32.mrb[0].mxu0
    %v4680 = vadd.f32 0.0, %v4679
    %v4681 = vpop.f32.mrb[0].mxu0
    %4682 = vdwg.mxu0
    %v4683 = vadd.f32 %v4410, %v4621
    %v4684 = vadd.f32 %v4411, %v4624
    %v4685 = vadd.f32 %v4412, %v4629
    %v4686 = vadd.f32 %v4413, %v4632
    %v4687 = vadd.f32 %v4414, %v4637
    %v4688 = vadd.f32 %v4415, %v4640
    %v4689 = vadd.f32 %v4416, %v4645
    %v4690 = vadd.f32 %v4417, %v4648
    %v4691 = vadd.f32 %v4418, %v4653
    %v4692 = vadd.f32 %v4419, %v4656
    %v4693 = vadd.f32 %v4420, %v4661
    %v4694 = vadd.f32 %v4421, %v4664
    %v4695 = vadd.f32 %v4422, %v4669
    %v4696 = vadd.f32 %v4423, %v4672
    %v4697 = vadd.f32 %v4424, %v4677
    %v4698 = vadd.f32 %v4425, %v4680
    %s4699 = sadd.s32 %s2869, 2
    %s4700 = smul.u32 %s4699, 3
    %s4701 = sadd.s32 %s4700, 54
    %s4702 = smul.addr %s4701, 4
    %s4703 = scalar_lea.vmem %s0, %s4702
    %v4704 = vld [vmem:[%s4703] sm:$0xf]
    %v4705 = vld [vmem:[%s4703 + $0x4] sm:$0xf]
    %v4706 = vld [vmem:[%s4703 + $0x8] sm:$0x1]
    %v4707 = vld [vmem:[%s4703 + $0xc] sm:$0xf]
    %v4708 = vld [vmem:[%s4703 + $0x10] sm:$0xf]
    %v4709 = vld [vmem:[%s4703 + $0x14] sm:$0x1]
    %v4710 = vld [vmem:[%s4703 + $0x18] sm:$0xf]
    %v4711 = vld [vmem:[%s4703 + $0x1c] sm:$0xf]
    %v4712 = vld [vmem:[%s4703 + $0x20] sm:$0x1]
    %v4713 = vld [vmem:[%s4703 + $0x24] sm:$0xf]
    %v4714 = vld [vmem:[%s4703 + $0x28] sm:$0xf]
    %v4715 = vld [vmem:[%s4703 + $0x2c] sm:$0x1]
    %v4716 = vld [vmem:[%s4703 + $0x30] sm:$0xf]
    %v4717 = vld [vmem:[%s4703 + $0x34] sm:$0xf]
    %v4718 = vld [vmem:[%s4703 + $0x38] sm:$0x1]
    %v4719 = vld [vmem:[%s4703 + $0x3c] sm:$0xf]
    %v4720 = vld [vmem:[%s4703 + $0x40] sm:$0xf]
    %v4721 = vld [vmem:[%s4703 + $0x44] sm:$0x1]
    %v4722 = vld [vmem:[%s4703 + $0x48] sm:$0xf]
    %v4723 = vld [vmem:[%s4703 + $0x4c] sm:$0xf]
    %v4724 = vld [vmem:[%s4703 + $0x50] sm:$0x1]
    %v4725 = vld [vmem:[%s4703 + $0x54] sm:$0xf]
    %v4726 = vld [vmem:[%s4703 + $0x58] sm:$0xf]
    %v4727 = vld [vmem:[%s4703 + $0x5c] sm:$0x1]
    %v4728 = vld [vmem:[%s1 + $0x180] sm:$0xf]
    %v4729 = vld [vmem:[%s1 + $0x184] sm:$0xf]
    %v4730 = vld [vmem:[%s1 + $0x188] sm:$0xf]
    %v4731 = vld [vmem:[%s1 + $0x18c] sm:$0xf]
    %v4732 = vld [vmem:[%s1 + $0x190] sm:$0xf]
    %v4733 = vld [vmem:[%s1 + $0x194] sm:$0xf]
    %v4734 = vld [vmem:[%s1 + $0x198] sm:$0xf]
    %v4735 = vld [vmem:[%s1 + $0x19c] sm:$0xf]
    %v4736 = vld [vmem:[%s1 + $0x1a0] sm:$0xf]
    %v4737 = vld [vmem:[%s1 + $0x1a4] sm:$0xf]
    %v4738 = vld [vmem:[%s1 + $0x1a8] sm:$0xf]
    %v4739 = vld [vmem:[%s1 + $0x1ac] sm:$0xf]
    %v4740 = vld [vmem:[%s1 + $0x1b0] sm:$0xf]
    %v4741 = vld [vmem:[%s1 + $0x1b4] sm:$0xf]
    %v4742 = vld [vmem:[%s1 + $0x1b8] sm:$0xf]
    %v4743 = vld [vmem:[%s1 + $0x1bc] sm:$0xf]
    %v4760 = vunpack.c.l.b16 %v4704
    %v4761 = vunpack.c.l.b16 %v4705
    %v4762 = vunpack.c.l.b16 %v4707
    %v4763 = vunpack.c.l.b16 %v4708
    %v4764 = vunpack.c.l.b16 %v4710
    %v4765 = vunpack.c.l.b16 %v4711
    %v4766 = vunpack.c.l.b16 %v4713
    %v4767 = vunpack.c.l.b16 %v4714
    %v4768 = vunpack.c.l.b16 %v4716
    %v4769 = vunpack.c.l.b16 %v4717
    %v4770 = vunpack.c.l.b16 %v4719
    %v4771 = vunpack.c.l.b16 %v4720
    %v4772 = vunpack.c.l.b16 %v4722
    %v4773 = vunpack.c.l.b16 %v4723
    %v4774 = vunpack.c.l.b16 %v4725
    %v4775 = vunpack.c.l.b16 %v4726
    %v4776 = vpack.c.b16 %v4761, %v4760
    %v4777 = vpack.c.b16 %v4763, %v4762
    %v4778 = vpack.c.b16 %v4765, %v4764
    %v4779 = vpack.c.b16 %v4767, %v4766
    %v4780 = vpack.c.b16 %v4769, %v4768
    %v4781 = vpack.c.b16 %v4771, %v4770
    %v4782 = vpack.c.b16 %v4773, %v4772
    %v4783 = vpack.c.b16 %v4775, %v4774
    %v4808 = vunpack.c.l.b16 %v4728
    %v4809 = vunpack.c.l.b16 %v4729
    %v4810 = vunpack.c.l.b16 %v4730
    %v4811 = vunpack.c.l.b16 %v4731
    %v4812 = vunpack.c.l.b16 %v4732
    %v4813 = vunpack.c.l.b16 %v4733
    %v4814 = vunpack.c.l.b16 %v4734
    %v4815 = vunpack.c.l.b16 %v4735
    %v4816 = vunpack.c.l.b16 %v4736
    %v4817 = vunpack.c.l.b16 %v4737
    %v4818 = vunpack.c.l.b16 %v4738
    %v4819 = vunpack.c.l.b16 %v4739
    %v4820 = vunpack.c.l.b16 %v4740
    %v4821 = vunpack.c.l.b16 %v4741
    %v4822 = vunpack.c.l.b16 %v4742
    %v4823 = vunpack.c.l.b16 %v4743
    %v4824 = vpack.c.b16 %v4809, %v4808
    %v4825 = vpack.c.b16 %v4811, %v4810
    %v4826 = vpack.c.b16 %v4813, %v4812
    %v4827 = vpack.c.b16 %v4815, %v4814
    %v4828 = vpack.c.b16 %v4817, %v4816
    %v4829 = vpack.c.b16 %v4819, %v4818
    %v4830 = vpack.c.b16 %v4821, %v4820
    %v4831 = vpack.c.b16 %v4823, %v4822
    %4840 = vmatprep.subr.bf16.mxu0 0
    %4841 = vmatpush1.bf16.msra.mxu0 %v4824
    %4842 = vmatprep.subr.bf16.mxu0 0
    %4843 = vmatpush1.bf16.msra.mxu0 %v4825
    %4844 = vmatprep.subr.bf16.mxu0 0
    %4845 = vmatpush1.bf16.msra.mxu0 %v4826
    %4846 = vmatprep.subr.bf16.mxu0 0
    %4847 = vmatpush1.bf16.msra.mxu0 %v4827
    %4848 = vmatprep.subr.bf16.mxu0 0
    %4849 = vmatpush1.bf16.msra.mxu0 %v4828
    %4850 = vmatprep.subr.bf16.mxu0 0
    %4851 = vmatpush1.bf16.msra.mxu0 %v4829
    %4852 = vmatprep.subr.bf16.mxu0 0
    %4853 = vmatpush1.bf16.msra.mxu0 %v4830
    %4854 = vmatprep.subr.bf16.mxu0 0
    %4855 = vmatpush1.bf16.msra.mxu0 %v4831
    %4856 = vmatprep.subr.bf16.mxu0 0
    %4857 = vmatpush1.bf16.msra.mxu0 0
    %4858 = vmatprep.subr.bf16.mxu0 0
    %4859 = vmatpush1.bf16.msra.mxu0 0
    %4860 = vmatprep.subr.bf16.mxu0 0
    %4861 = vmatpush1.bf16.msra.mxu0 0
    %4862 = vmatprep.subr.bf16.mxu0 0
    %4863 = vmatpush1.bf16.msra.mxu0 0
    %4864 = vmatprep.subr.bf16.mxu0 0
    %4865 = vmatpush1.bf16.msra.mxu0 0
    %4866 = vmatprep.subr.bf16.mxu0 0
    %4867 = vmatpush1.bf16.msra.mxu0 0
    %4868 = vmatprep.subr.bf16.mxu0 0
    %4869 = vmatpush1.bf16.msra.mxu0 0
    %4870 = vmatprep.subr.bf16.mxu0 0
    %4871 = vmatpush1.bf16.msra.mxu0 0
    %4872 = vmatprep.mubr.bf16.mxu0 0
    %4873 = vmatmul.mubr.bf16.gmra.mrb[0].mxu0 %v4776
    %v4874 = vpop.f32.mrb[0].mxu0
    %v4875 = vadd.f32 0.0, %v4874
    %v4876 = vpop.f32.mrb[0].mxu0
    %v4877 = vpop.f32.mrb[0].mxu0
    %v4878 = vadd.f32 0.0, %v4877
    %v4879 = vpop.f32.mrb[0].mxu0
    %4880 = vmatprep.mubr.bf16.mxu0 0
    %4881 = vmatmul.mubr.bf16.gmra.mrb[0].mxu0 %v4777
    %v4882 = vpop.f32.mrb[0].mxu0
    %v4883 = vadd.f32 0.0, %v4882
    %v4884 = vpop.f32.mrb[0].mxu0
    %v4885 = vpop.f32.mrb[0].mxu0
    %v4886 = vadd.f32 0.0, %v4885
    %v4887 = vpop.f32.mrb[0].mxu0
    %4888 = vmatprep.mubr.bf16.mxu0 0
    %4889 = vmatmul.mubr.bf16.gmra.mrb[0].mxu0 %v4778
    %v4890 = vpop.f32.mrb[0].mxu0
    %v4891 = vadd.f32 0.0, %v4890
    %v4892 = vpop.f32.mrb[0].mxu0
    %v4893 = vpop.f32.mrb[0].mxu0
    %v4894 = vadd.f32 0.0, %v4893
    %v4895 = vpop.f32.mrb[0].mxu0
    %4896 = vmatprep.mubr.bf16.mxu0 0
    %4897 = vmatmul.mubr.bf16.gmra.mrb[0].mxu0 %v4779
    %v4898 = vpop.f32.mrb[0].mxu0
    %v4899 = vadd.f32 0.0, %v4898
    %v4900 = vpop.f32.mrb[0].mxu0
    %v4901 = vpop.f32.mrb[0].mxu0
    %v4902 = vadd.f32 0.0, %v4901
    %v4903 = vpop.f32.mrb[0].mxu0
    %4904 = vmatprep.mubr.bf16.mxu0 0
    %4905 = vmatmul.mubr.bf16.gmra.mrb[0].mxu0 %v4780
    %v4906 = vpop.f32.mrb[0].mxu0
    %v4907 = vadd.f32 0.0, %v4906
    %v4908 = vpop.f32.mrb[0].mxu0
    %v4909 = vpop.f32.mrb[0].mxu0
    %v4910 = vadd.f32 0.0, %v4909
    %v4911 = vpop.f32.mrb[0].mxu0
    %4912 = vmatprep.mubr.bf16.mxu0 0
    %4913 = vmatmul.mubr.bf16.gmra.mrb[0].mxu0 %v4781
    %v4914 = vpop.f32.mrb[0].mxu0
    %v4915 = vadd.f32 0.0, %v4914
    %v4916 = vpop.f32.mrb[0].mxu0
    %v4917 = vpop.f32.mrb[0].mxu0
    %v4918 = vadd.f32 0.0, %v4917
    %v4919 = vpop.f32.mrb[0].mxu0
    %4920 = vmatprep.mubr.bf16.mxu0 0
    %4921 = vmatmul.mubr.bf16.gmra.mrb[0].mxu0 %v4782
    %v4922 = vpop.f32.mrb[0].mxu0
    %v4923 = vadd.f32 0.0, %v4922
    %v4924 = vpop.f32.mrb[0].mxu0
    %v4925 = vpop.f32.mrb[0].mxu0
    %v4926 = vadd.f32 0.0, %v4925
    %v4927 = vpop.f32.mrb[0].mxu0
    %4928 = vmatprep.mubr.bf16.mxu0 0
    %4929 = vmatmul.mubr.bf16.gmra.mrb[0].mxu0 %v4783
    %v4930 = vpop.f32.mrb[0].mxu0
    %v4931 = vadd.f32 0.0, %v4930
    %v4932 = vpop.f32.mrb[0].mxu0
    %v4933 = vpop.f32.mrb[0].mxu0
    %v4934 = vadd.f32 0.0, %v4933
    %v4935 = vpop.f32.mrb[0].mxu0
    %4936 = vdwg.mxu0
    %v4937 = vadd.f32 %v4683, %v4875
    %v4938 = vadd.f32 %v4684, %v4878
    %v4939 = vadd.f32 %v4685, %v4883
    %v4940 = vadd.f32 %v4686, %v4886
    %v4941 = vadd.f32 %v4687, %v4891
    %v4942 = vadd.f32 %v4688, %v4894
    %v4943 = vadd.f32 %v4689, %v4899
    %v4944 = vadd.f32 %v4690, %v4902
    %v4945 = vadd.f32 %v4691, %v4907
    %v4946 = vadd.f32 %v4692, %v4910
    %v4947 = vadd.f32 %v4693, %v4915
    %v4948 = vadd.f32 %v4694, %v4918
    %v4949 = vadd.f32 %v4695, %v4923
    %v4950 = vadd.f32 %v4696, %v4926
    %v4951 = vadd.f32 %v4697, %v4931
    %v4952 = vadd.f32 %v4698, %v4934
    %v4954 = vshrl.u32 %v4704, 16
    %v4956 = vrot.slane %v4954, 4
    %v4957 = vshll.u32 %v4704, 16
    %v4959 = vrot.slane %v4957, 5
    %v4960 = vor.u32 %v4956, %v4959
    %v4961 = vrot.slane %v4960, 4
    %v4963 = vshll.u32 %v4705, 16
    %v4965 = vrot.slane %v4963, 5
    %v4966 = vsel %vm2916, %v4961, %v4965
    %v4967 = vshrl.u32 %v4705, 16
    %v4969 = vrot.slane %v4967, 4
    %v4970 = vor.u32 %v4969, %v4965
    %v4971 = vrot.slane %v4970, 4
    %v4973 = vshll.u32 %v4706, 16
    %v4975 = vrot.slane %v4973, 5
    %v4976 = vsel %vm2916, %v4971, %v4975
    %v4978 = vshrl.u32 %v4707, 16
    %v4980 = vrot.slane %v4978, 4
    %v4981 = vshll.u32 %v4707, 16
    %v4983 = vrot.slane %v4981, 5
    %v4984 = vor.u32 %v4980, %v4983
    %v4985 = vrot.slane %v4984, 4
    %v4987 = vshll.u32 %v4708, 16
    %v4989 = vrot.slane %v4987, 5
    %v4990 = vsel %vm2916, %v4985, %v4989
    %v4991 = vshrl.u32 %v4708, 16
    %v4993 = vrot.slane %v4991, 4
    %v4994 = vor.u32 %v4993, %v4989
    %v4995 = vrot.slane %v4994, 4
    %v4997 = vshll.u32 %v4709, 16
    %v4999 = vrot.slane %v4997, 5
    %v5000 = vsel %vm2916, %v4995, %v4999
    %v5002 = vshrl.u32 %v4710, 16
    %v5004 = vrot.slane %v5002, 4
    %v5005 = vshll.u32 %v4710, 16
    %v5007 = vrot.slane %v5005, 5
    %v5008 = vor.u32 %v5004, %v5007
    %v5009 = vrot.slane %v5008, 4
    %v5011 = vshll.u32 %v4711, 16
    %v5013 = vrot.slane %v5011, 5
    %v5014 = vsel %vm2916, %v5009, %v5013
    %v5015 = vshrl.u32 %v4711, 16
    %v5017 = vrot.slane %v5015, 4
    %v5018 = vor.u32 %v5017, %v5013
    %v5019 = vrot.slane %v5018, 4
    %v5021 = vshll.u32 %v4712, 16
    %v5023 = vrot.slane %v5021, 5
    %v5024 = vsel %vm2916, %v5019, %v5023
    %v5026 = vshrl.u32 %v4713, 16
    %v5028 = vrot.slane %v5026, 4
    %v5029 = vshll.u32 %v4713, 16
    %v5031 = vrot.slane %v5029, 5
    %v5032 = vor.u32 %v5028, %v5031
    %v5033 = vrot.slane %v5032, 4
    %v5035 = vshll.u32 %v4714, 16
    %v5037 = vrot.slane %v5035, 5
    %v5038 = vsel %vm2916, %v5033, %v5037
    %v5039 = vshrl.u32 %v4714, 16
    %v5041 = vrot.slane %v5039, 4
    %v5042 = vor.u32 %v5041, %v5037
    %v5043 = vrot.slane %v5042, 4
    %v5045 = vshll.u32 %v4715, 16
    %v5047 = vrot.slane %v5045, 5
    %v5048 = vsel %vm2916, %v5043, %v5047
    %v5050 = vshrl.u32 %v4716, 16
    %v5052 = vrot.slane %v5050, 4
    %v5053 = vshll.u32 %v4716, 16
    %v5055 = vrot.slane %v5053, 5
    %v5056 = vor.u32 %v5052, %v5055
    %v5057 = vrot.slane %v5056, 4
    %v5059 = vshll.u32 %v4717, 16
    %v5061 = vrot.slane %v5059, 5
    %v5062 = vsel %vm2916, %v5057, %v5061
    %v5063 = vshrl.u32 %v4717, 16
    %v5065 = vrot.slane %v5063, 4
    %v5066 = vor.u32 %v5065, %v5061
    %v5067 = vrot.slane %v5066, 4
    %v5069 = vshll.u32 %v4718, 16
    %v5071 = vrot.slane %v5069, 5
    %v5072 = vsel %vm2916, %v5067, %v5071
    %v5074 = vshrl.u32 %v4719, 16
    %v5076 = vrot.slane %v5074, 4
    %v5077 = vshll.u32 %v4719, 16
    %v5079 = vrot.slane %v5077, 5
    %v5080 = vor.u32 %v5076, %v5079
    %v5081 = vrot.slane %v5080, 4
    %v5083 = vshll.u32 %v4720, 16
    %v5085 = vrot.slane %v5083, 5
    %v5086 = vsel %vm2916, %v5081, %v5085
    %v5087 = vshrl.u32 %v4720, 16
    %v5089 = vrot.slane %v5087, 4
    %v5090 = vor.u32 %v5089, %v5085
    %v5091 = vrot.slane %v5090, 4
    %v5093 = vshll.u32 %v4721, 16
    %v5095 = vrot.slane %v5093, 5
    %v5096 = vsel %vm2916, %v5091, %v5095
    %v5098 = vshrl.u32 %v4722, 16
    %v5100 = vrot.slane %v5098, 4
    %v5101 = vshll.u32 %v4722, 16
    %v5103 = vrot.slane %v5101, 5
    %v5104 = vor.u32 %v5100, %v5103
    %v5105 = vrot.slane %v5104, 4
    %v5107 = vshll.u32 %v4723, 16
    %v5109 = vrot.slane %v5107, 5
    %v5110 = vsel %vm2916, %v5105, %v5109
    %v5111 = vshrl.u32 %v4723, 16
    %v5113 = vrot.slane %v5111, 4
    %v5114 = vor.u32 %v5113, %v5109
    %v5115 = vrot.slane %v5114, 4
    %v5117 = vshll.u32 %v4724, 16
    %v5119 = vrot.slane %v5117, 5
    %v5120 = vsel %vm2916, %v5115, %v5119
    %v5122 = vshrl.u32 %v4725, 16
    %v5124 = vrot.slane %v5122, 4
    %v5125 = vshll.u32 %v4725, 16
    %v5127 = vrot.slane %v5125, 5
    %v5128 = vor.u32 %v5124, %v5127
    %v5129 = vrot.slane %v5128, 4
    %v5131 = vshll.u32 %v4726, 16
    %v5133 = vrot.slane %v5131, 5
    %v5134 = vsel %vm2916, %v5129, %v5133
    %v5135 = vshrl.u32 %v4726, 16
    %v5137 = vrot.slane %v5135, 4
    %v5138 = vor.u32 %v5137, %v5133
    %v5139 = vrot.slane %v5138, 4
    %v5141 = vshll.u32 %v4727, 16
    %v5143 = vrot.slane %v5141, 5
    %v5144 = vsel %vm2916, %v5139, %v5143
    %v5145 = vld [vmem:[%s1 + $0x1c0] sm:$0xf]
    %v5146 = vld [vmem:[%s1 + $0x1c4] sm:$0xf]
    %v5147 = vld [vmem:[%s1 + $0x1c8] sm:$0xf]
    %v5148 = vld [vmem:[%s1 + $0x1cc] sm:$0xf]
    %v5149 = vld [vmem:[%s1 + $0x1d0] sm:$0xf]
    %v5150 = vld [vmem:[%s1 + $0x1d4] sm:$0xf]
    %v5151 = vld [vmem:[%s1 + $0x1d8] sm:$0xf]
    %v5152 = vld [vmem:[%s1 + $0x1dc] sm:$0xf]
    %v5153 = vld [vmem:[%s1 + $0x1e0] sm:$0xf]
    %v5154 = vld [vmem:[%s1 + $0x1e4] sm:$0xf]
    %v5155 = vld [vmem:[%s1 + $0x1e8] sm:$0xf]
    %v5156 = vld [vmem:[%s1 + $0x1ec] sm:$0xf]
    %v5157 = vld [vmem:[%s1 + $0x1f0] sm:$0xf]
    %v5158 = vld [vmem:[%s1 + $0x1f4] sm:$0xf]
    %v5159 = vld [vmem:[%s1 + $0x1f8] sm:$0xf]
    %v5160 = vld [vmem:[%s1 + $0x1fc] sm:$0xf]
    %v5161 = vunpack.c.l.b16 %v4966
    %v5162 = vunpack.c.l.b16 %v4976
    %v5163 = vunpack.c.l.b16 %v4990
    %v5164 = vunpack.c.l.b16 %v5000
    %v5165 = vunpack.c.l.b16 %v5014
    %v5166 = vunpack.c.l.b16 %v5024
    %v5167 = vunpack.c.l.b16 %v5038
    %v5168 = vunpack.c.l.b16 %v5048
    %v5169 = vunpack.c.l.b16 %v5062
    %v5170 = vunpack.c.l.b16 %v5072
    %v5171 = vunpack.c.l.b16 %v5086
    %v5172 = vunpack.c.l.b16 %v5096
    %v5173 = vunpack.c.l.b16 %v5110
    %v5174 = vunpack.c.l.b16 %v5120
    %v5175 = vunpack.c.l.b16 %v5134
    %v5176 = vunpack.c.l.b16 %v5144
    %v5177 = vpack.c.b16 %v5162, %v5161
    %v5178 = vpack.c.b16 %v5164, %v5163
    %v5179 = vpack.c.b16 %v5166, %v5165
    %v5180 = vpack.c.b16 %v5168, %v5167
    %v5181 = vpack.c.b16 %v5170, %v5169
    %v5182 = vpack.c.b16 %v5172, %v5171
    %v5183 = vpack.c.b16 %v5174, %v5173
    %v5184 = vpack.c.b16 %v5176, %v5175
    %v5209 = vunpack.c.l.b16 %v5145
    %v5210 = vunpack.c.l.b16 %v5146
    %v5211 = vunpack.c.l.b16 %v5147
    %v5212 = vunpack.c.l.b16 %v5148
    %v5213 = vunpack.c.l.b16 %v5149
    %v5214 = vunpack.c.l.b16 %v5150
    %v5215 = vunpack.c.l.b16 %v5151
    %v5216 = vunpack.c.l.b16 %v5152
    %v5217 = vunpack.c.l.b16 %v5153
    %v5218 = vunpack.c.l.b16 %v5154
    %v5219 = vunpack.c.l.b16 %v5155
    %v5220 = vunpack.c.l.b16 %v5156
    %v5221 = vunpack.c.l.b16 %v5157
    %v5222 = vunpack.c.l.b16 %v5158
    %v5223 = vunpack.c.l.b16 %v5159
    %v5224 = vunpack.c.l.b16 %v5160
    %v5225 = vpack.c.b16 %v5210, %v5209
    %v5226 = vpack.c.b16 %v5212, %v5211
    %v5227 = vpack.c.b16 %v5214, %v5213
    %v5228 = vpack.c.b16 %v5216, %v5215
    %v5229 = vpack.c.b16 %v5218, %v5217
    %v5230 = vpack.c.b16 %v5220, %v5219
    %v5231 = vpack.c.b16 %v5222, %v5221
    %v5232 = vpack.c.b16 %v5224, %v5223
    %5241 = vmatprep.subr.bf16.mxu0 0
    %5242 = vmatpush1.bf16.msra.mxu0 %v5225
    %5243 = vmatprep.subr.bf16.mxu0 0
    %5244 = vmatpush1.bf16.msra.mxu0 %v5226
    %5245 = vmatprep.subr.bf16.mxu0 0
    %5246 = vmatpush1.bf16.msra.mxu0 %v5227
    %5247 = vmatprep.subr.bf16.mxu0 0
    %5248 = vmatpush1.bf16.msra.mxu0 %v5228
    %5249 = vmatprep.subr.bf16.mxu0 0
    %5250 = vmatpush1.bf16.msra.mxu0 %v5229
    %5251 = vmatprep.subr.bf16.mxu0 0
    %5252 = vmatpush1.bf16.msra.mxu0 %v5230
    %5253 = vmatprep.subr.bf16.mxu0 0
    %5254 = vmatpush1.bf16.msra.mxu0 %v5231
    %5255 = vmatprep.subr.bf16.mxu0 0
    %5256 = vmatpush1.bf16.msra.mxu0 %v5232
    %5257 = vmatprep.subr.bf16.mxu0 0
    %5258 = vmatpush1.bf16.msra.mxu0 0
    %5259 = vmatprep.subr.bf16.mxu0 0
    %5260 = vmatpush1.bf16.msra.mxu0 0
    %5261 = vmatprep.subr.bf16.mxu0 0
    %5262 = vmatpush1.bf16.msra.mxu0 0
    %5263 = vmatprep.subr.bf16.mxu0 0
    %5264 = vmatpush1.bf16.msra.mxu0 0
    %5265 = vmatprep.subr.bf16.mxu0 0
    %5266 = vmatpush1.bf16.msra.mxu0 0
    %5267 = vmatprep.subr.bf16.mxu0 0
    %5268 = vmatpush1.bf16.msra.mxu0 0
    %5269 = vmatprep.subr.bf16.mxu0 0
    %5270 = vmatpush1.bf16.msra.mxu0 0
    %5271 = vmatprep.subr.bf16.mxu0 0
    %5272 = vmatpush1.bf16.msra.mxu0 0
    %5273 = vmatprep.mubr.bf16.mxu0 0
    %5274 = vmatmul.mubr.bf16.gmra.mrb[0].mxu0 %v5177
    %v5275 = vpop.f32.mrb[0].mxu0
    %v5276 = vadd.f32 0.0, %v5275
    %v5277 = vpop.f32.mrb[0].mxu0
    %v5278 = vpop.f32.mrb[0].mxu0
    %v5279 = vadd.f32 0.0, %v5278
    %v5280 = vpop.f32.mrb[0].mxu0
    %5281 = vmatprep.mubr.bf16.mxu0 0
    %5282 = vmatmul.mubr.bf16.gmra.mrb[0].mxu0 %v5178
    %v5283 = vpop.f32.mrb[0].mxu0
    %v5284 = vadd.f32 0.0, %v5283
    %v5285 = vpop.f32.mrb[0].mxu0
    %v5286 = vpop.f32.mrb[0].mxu0
    %v5287 = vadd.f32 0.0, %v5286
    %v5288 = vpop.f32.mrb[0].mxu0
    %5289 = vmatprep.mubr.bf16.mxu0 0
    %5290 = vmatmul.mubr.bf16.gmra.mrb[0].mxu0 %v5179
    %v5291 = vpop.f32.mrb[0].mxu0
    %v5292 = vadd.f32 0.0, %v5291
    %v5293 = vpop.f32.mrb[0].mxu0
    %v5294 = vpop.f32.mrb[0].mxu0
    %v5295 = vadd.f32 0.0, %v5294
    %v5296 = vpop.f32.mrb[0].mxu0
    %5297 = vmatprep.mubr.bf16.mxu0 0
    %5298 = vmatmul.mubr.bf16.gmra.mrb[0].mxu0 %v5180
    %v5299 = vpop.f32.mrb[0].mxu0
    %v5300 = vadd.f32 0.0, %v5299
    %v5301 = vpop.f32.mrb[0].mxu0
    %v5302 = vpop.f32.mrb[0].mxu0
    %v5303 = vadd.f32 0.0, %v5302
    %v5304 = vpop.f32.mrb[0].mxu0
    %5305 = vmatprep.mubr.bf16.mxu0 0
    %5306 = vmatmul.mubr.bf16.gmra.mrb[0].mxu0 %v5181
    %v5307 = vpop.f32.mrb[0].mxu0
    %v5308 = vadd.f32 0.0, %v5307
    %v5309 = vpop.f32.mrb[0].mxu0
    %v5310 = vpop.f32.mrb[0].mxu0
    %v5311 = vadd.f32 0.0, %v5310
    %v5312 = vpop.f32.mrb[0].mxu0
    %5313 = vmatprep.mubr.bf16.mxu0 0
    %5314 = vmatmul.mubr.bf16.gmra.mrb[0].mxu0 %v5182
    %v5315 = vpop.f32.mrb[0].mxu0
    %v5316 = vadd.f32 0.0, %v5315
    %v5317 = vpop.f32.mrb[0].mxu0
    %v5318 = vpop.f32.mrb[0].mxu0
    %v5319 = vadd.f32 0.0, %v5318
    %v5320 = vpop.f32.mrb[0].mxu0
    %5321 = vmatprep.mubr.bf16.mxu0 0
    %5322 = vmatmul.mubr.bf16.gmra.mrb[0].mxu0 %v5183
    %v5323 = vpop.f32.mrb[0].mxu0
    %v5324 = vadd.f32 0.0, %v5323
    %v5325 = vpop.f32.mrb[0].mxu0
    %v5326 = vpop.f32.mrb[0].mxu0
    %v5327 = vadd.f32 0.0, %v5326
    %v5328 = vpop.f32.mrb[0].mxu0
    %5329 = vmatprep.mubr.bf16.mxu0 0
    %5330 = vmatmul.mubr.bf16.gmra.mrb[0].mxu0 %v5184
    %v5331 = vpop.f32.mrb[0].mxu0
    %v5332 = vadd.f32 0.0, %v5331
    %v5333 = vpop.f32.mrb[0].mxu0
    %v5334 = vpop.f32.mrb[0].mxu0
    %v5335 = vadd.f32 0.0, %v5334
    %v5336 = vpop.f32.mrb[0].mxu0
    %5337 = vdwg.mxu0
    %v5338 = vadd.f32 %v4937, %v5276
    %v5339 = vadd.f32 %v4938, %v5279
    %v5340 = vadd.f32 %v4939, %v5284
    %v5341 = vadd.f32 %v4940, %v5287
    %v5342 = vadd.f32 %v4941, %v5292
    %v5343 = vadd.f32 %v4942, %v5295
    %v5344 = vadd.f32 %v4943, %v5300
    %v5345 = vadd.f32 %v4944, %v5303
    %v5346 = vadd.f32 %v4945, %v5308
    %v5347 = vadd.f32 %v4946, %v5311
    %v5348 = vadd.f32 %v4947, %v5316
    %v5349 = vadd.f32 %v4948, %v5319
    %v5350 = vadd.f32 %v4949, %v5324
    %v5351 = vadd.f32 %v4950, %v5327
    %v5352 = vadd.f32 %v4951, %v5332
    %v5353 = vadd.f32 %v4952, %v5335
    %v5362 = vrot.slane %v4704, 5
    %v5363 = vrot.slane %v5362, 4
    %v5364 = vrot.slane %v4705, 5
    %v5365 = vsel %vm3505, %v5363, %v5364
    %v5366 = vrot.slane %v5364, 4
    %v5367 = vrot.slane %v4706, 5
    %v5368 = vsel %vm3505, %v5366, %v5367
    %v5369 = vrot.slane %v4707, 5
    %v5370 = vrot.slane %v5369, 4
    %v5371 = vrot.slane %v4708, 5
    %v5372 = vsel %vm3505, %v5370, %v5371
    %v5373 = vrot.slane %v5371, 4
    %v5374 = vrot.slane %v4709, 5
    %v5375 = vsel %vm3505, %v5373, %v5374
    %v5376 = vrot.slane %v4710, 5
    %v5377 = vrot.slane %v5376, 4
    %v5378 = vrot.slane %v4711, 5
    %v5379 = vsel %vm3505, %v5377, %v5378
    %v5380 = vrot.slane %v5378, 4
    %v5381 = vrot.slane %v4712, 5
    %v5382 = vsel %vm3505, %v5380, %v5381
    %v5383 = vrot.slane %v4713, 5
    %v5384 = vrot.slane %v5383, 4
    %v5385 = vrot.slane %v4714, 5
    %v5386 = vsel %vm3505, %v5384, %v5385
    %v5387 = vrot.slane %v5385, 4
    %v5388 = vrot.slane %v4715, 5
    %v5389 = vsel %vm3505, %v5387, %v5388
    %v5390 = vrot.slane %v4716, 5
    %v5391 = vrot.slane %v5390, 4
    %v5392 = vrot.slane %v4717, 5
    %v5393 = vsel %vm3505, %v5391, %v5392
    %v5394 = vrot.slane %v5392, 4
    %v5395 = vrot.slane %v4718, 5
    %v5396 = vsel %vm3505, %v5394, %v5395
    %v5397 = vrot.slane %v4719, 5
    %v5398 = vrot.slane %v5397, 4
    %v5399 = vrot.slane %v4720, 5
    %v5400 = vsel %vm3505, %v5398, %v5399
    %v5401 = vrot.slane %v5399, 4
    %v5402 = vrot.slane %v4721, 5
    %v5403 = vsel %vm3505, %v5401, %v5402
    %v5404 = vrot.slane %v4722, 5
    %v5405 = vrot.slane %v5404, 4
    %v5406 = vrot.slane %v4723, 5
    %v5407 = vsel %vm3505, %v5405, %v5406
    %v5408 = vrot.slane %v5406, 4
    %v5409 = vrot.slane %v4724, 5
    %v5410 = vsel %vm3505, %v5408, %v5409
    %v5411 = vrot.slane %v4725, 5
    %v5412 = vrot.slane %v5411, 4
    %v5413 = vrot.slane %v4726, 5
    %v5414 = vsel %vm3505, %v5412, %v5413
    %v5415 = vrot.slane %v5413, 4
    %v5416 = vrot.slane %v4727, 5
    %v5417 = vsel %vm3505, %v5415, %v5416
    %v5418 = vld [vmem:[%s1 + $0x200] sm:$0xf]
    %v5419 = vld [vmem:[%s1 + $0x204] sm:$0xf]
    %v5420 = vld [vmem:[%s1 + $0x208] sm:$0xf]
    %v5421 = vld [vmem:[%s1 + $0x20c] sm:$0xf]
    %v5422 = vld [vmem:[%s1 + $0x210] sm:$0xf]
    %v5423 = vld [vmem:[%s1 + $0x214] sm:$0xf]
    %v5424 = vld [vmem:[%s1 + $0x218] sm:$0xf]
    %v5425 = vld [vmem:[%s1 + $0x21c] sm:$0xf]
    %v5426 = vld [vmem:[%s1 + $0x220] sm:$0xf]
    %v5427 = vld [vmem:[%s1 + $0x224] sm:$0xf]
    %v5428 = vld [vmem:[%s1 + $0x228] sm:$0xf]
    %v5429 = vld [vmem:[%s1 + $0x22c] sm:$0xf]
    %v5430 = vld [vmem:[%s1 + $0x230] sm:$0xf]
    %v5431 = vld [vmem:[%s1 + $0x234] sm:$0xf]
    %v5432 = vld [vmem:[%s1 + $0x238] sm:$0xf]
    %v5433 = vld [vmem:[%s1 + $0x23c] sm:$0xf]
    %v5434 = vunpack.c.l.b16 %v5365
    %v5435 = vunpack.c.l.b16 %v5368
    %v5436 = vunpack.c.l.b16 %v5372
    %v5437 = vunpack.c.l.b16 %v5375
    %v5438 = vunpack.c.l.b16 %v5379
    %v5439 = vunpack.c.l.b16 %v5382
    %v5440 = vunpack.c.l.b16 %v5386
    %v5441 = vunpack.c.l.b16 %v5389
    %v5442 = vunpack.c.l.b16 %v5393
    %v5443 = vunpack.c.l.b16 %v5396
    %v5444 = vunpack.c.l.b16 %v5400
    %v5445 = vunpack.c.l.b16 %v5403
    %v5446 = vunpack.c.l.b16 %v5407
    %v5447 = vunpack.c.l.b16 %v5410
    %v5448 = vunpack.c.l.b16 %v5414
    %v5449 = vunpack.c.l.b16 %v5417
    %v5450 = vpack.c.b16 %v5435, %v5434
    %v5451 = vpack.c.b16 %v5437, %v5436
    %v5452 = vpack.c.b16 %v5439, %v5438
    %v5453 = vpack.c.b16 %v5441, %v5440
    %v5454 = vpack.c.b16 %v5443, %v5442
    %v5455 = vpack.c.b16 %v5445, %v5444
    %v5456 = vpack.c.b16 %v5447, %v5446
    %v5457 = vpack.c.b16 %v5449, %v5448
    %v5482 = vunpack.c.l.b16 %v5418
    %v5483 = vunpack.c.l.b16 %v5419
    %v5484 = vunpack.c.l.b16 %v5420
    %v5485 = vunpack.c.l.b16 %v5421
    %v5486 = vunpack.c.l.b16 %v5422
    %v5487 = vunpack.c.l.b16 %v5423
    %v5488 = vunpack.c.l.b16 %v5424
    %v5489 = vunpack.c.l.b16 %v5425
    %v5490 = vunpack.c.l.b16 %v5426
    %v5491 = vunpack.c.l.b16 %v5427
    %v5492 = vunpack.c.l.b16 %v5428
    %v5493 = vunpack.c.l.b16 %v5429
    %v5494 = vunpack.c.l.b16 %v5430
    %v5495 = vunpack.c.l.b16 %v5431
    %v5496 = vunpack.c.l.b16 %v5432
    %v5497 = vunpack.c.l.b16 %v5433
    %v5498 = vpack.c.b16 %v5483, %v5482
    %v5499 = vpack.c.b16 %v5485, %v5484
    %v5500 = vpack.c.b16 %v5487, %v5486
    %v5501 = vpack.c.b16 %v5489, %v5488
    %v5502 = vpack.c.b16 %v5491, %v5490
    %v5503 = vpack.c.b16 %v5493, %v5492
    %v5504 = vpack.c.b16 %v5495, %v5494
    %v5505 = vpack.c.b16 %v5497, %v5496
    %5514 = vmatprep.subr.bf16.mxu0 0
    %5515 = vmatpush1.bf16.msra.mxu0 %v5498
    %5516 = vmatprep.subr.bf16.mxu0 0
    %5517 = vmatpush1.bf16.msra.mxu0 %v5499
    %5518 = vmatprep.subr.bf16.mxu0 0
    %5519 = vmatpush1.bf16.msra.mxu0 %v5500
    %5520 = vmatprep.subr.bf16.mxu0 0
    %5521 = vmatpush1.bf16.msra.mxu0 %v5501
    %5522 = vmatprep.subr.bf16.mxu0 0
    %5523 = vmatpush1.bf16.msra.mxu0 %v5502
    %5524 = vmatprep.subr.bf16.mxu0 0
    %5525 = vmatpush1.bf16.msra.mxu0 %v5503
    %5526 = vmatprep.subr.bf16.mxu0 0
    %5527 = vmatpush1.bf16.msra.mxu0 %v5504
    %5528 = vmatprep.subr.bf16.mxu0 0
    %5529 = vmatpush1.bf16.msra.mxu0 %v5505
    %5530 = vmatprep.subr.bf16.mxu0 0
    %5531 = vmatpush1.bf16.msra.mxu0 0
    %5532 = vmatprep.subr.bf16.mxu0 0
    %5533 = vmatpush1.bf16.msra.mxu0 0
    %5534 = vmatprep.subr.bf16.mxu0 0
    %5535 = vmatpush1.bf16.msra.mxu0 0
    %5536 = vmatprep.subr.bf16.mxu0 0
    %5537 = vmatpush1.bf16.msra.mxu0 0
    %5538 = vmatprep.subr.bf16.mxu0 0
    %5539 = vmatpush1.bf16.msra.mxu0 0
    %5540 = vmatprep.subr.bf16.mxu0 0
    %5541 = vmatpush1.bf16.msra.mxu0 0
    %5542 = vmatprep.subr.bf16.mxu0 0
    %5543 = vmatpush1.bf16.msra.mxu0 0
    %5544 = vmatprep.subr.bf16.mxu0 0
    %5545 = vmatpush1.bf16.msra.mxu0 0
    %5546 = vmatprep.mubr.bf16.mxu0 0
    %5547 = vmatmul.mubr.bf16.gmra.mrb[0].mxu0 %v5450
    %v5548 = vpop.f32.mrb[0].mxu0
    %v5549 = vadd.f32 0.0, %v5548
    %v5550 = vpop.f32.mrb[0].mxu0
    %v5551 = vpop.f32.mrb[0].mxu0
    %v5552 = vadd.f32 0.0, %v5551
    %v5553 = vpop.f32.mrb[0].mxu0
    %5554 = vmatprep.mubr.bf16.mxu0 0
    %5555 = vmatmul.mubr.bf16.gmra.mrb[0].mxu0 %v5451
    %v5556 = vpop.f32.mrb[0].mxu0
    %v5557 = vadd.f32 0.0, %v5556
    %v5558 = vpop.f32.mrb[0].mxu0
    %v5559 = vpop.f32.mrb[0].mxu0
    %v5560 = vadd.f32 0.0, %v5559
    %v5561 = vpop.f32.mrb[0].mxu0
    %5562 = vmatprep.mubr.bf16.mxu0 0
    %5563 = vmatmul.mubr.bf16.gmra.mrb[0].mxu0 %v5452
    %v5564 = vpop.f32.mrb[0].mxu0
    %v5565 = vadd.f32 0.0, %v5564
    %v5566 = vpop.f32.mrb[0].mxu0
    %v5567 = vpop.f32.mrb[0].mxu0
    %v5568 = vadd.f32 0.0, %v5567
    %v5569 = vpop.f32.mrb[0].mxu0
    %5570 = vmatprep.mubr.bf16.mxu0 0
    %5571 = vmatmul.mubr.bf16.gmra.mrb[0].mxu0 %v5453
    %v5572 = vpop.f32.mrb[0].mxu0
    %v5573 = vadd.f32 0.0, %v5572
    %v5574 = vpop.f32.mrb[0].mxu0
    %v5575 = vpop.f32.mrb[0].mxu0
    %v5576 = vadd.f32 0.0, %v5575
    %v5577 = vpop.f32.mrb[0].mxu0
    %5578 = vmatprep.mubr.bf16.mxu0 0
    %5579 = vmatmul.mubr.bf16.gmra.mrb[0].mxu0 %v5454
    %v5580 = vpop.f32.mrb[0].mxu0
    %v5581 = vadd.f32 0.0, %v5580
    %v5582 = vpop.f32.mrb[0].mxu0
    %v5583 = vpop.f32.mrb[0].mxu0
    %v5584 = vadd.f32 0.0, %v5583
    %v5585 = vpop.f32.mrb[0].mxu0
    %5586 = vmatprep.mubr.bf16.mxu0 0
    %5587 = vmatmul.mubr.bf16.gmra.mrb[0].mxu0 %v5455
    %v5588 = vpop.f32.mrb[0].mxu0
    %v5589 = vadd.f32 0.0, %v5588
    %v5590 = vpop.f32.mrb[0].mxu0
    %v5591 = vpop.f32.mrb[0].mxu0
    %v5592 = vadd.f32 0.0, %v5591
    %v5593 = vpop.f32.mrb[0].mxu0
    %5594 = vmatprep.mubr.bf16.mxu0 0
    %5595 = vmatmul.mubr.bf16.gmra.mrb[0].mxu0 %v5456
    %v5596 = vpop.f32.mrb[0].mxu0
    %v5597 = vadd.f32 0.0, %v5596
    %v5598 = vpop.f32.mrb[0].mxu0
    %v5599 = vpop.f32.mrb[0].mxu0
    %v5600 = vadd.f32 0.0, %v5599
    %v5601 = vpop.f32.mrb[0].mxu0
    %5602 = vmatprep.mubr.bf16.mxu0 0
    %5603 = vmatmul.mubr.bf16.gmra.mrb[0].mxu0 %v5457
    %v5604 = vpop.f32.mrb[0].mxu0
    %v5605 = vadd.f32 0.0, %v5604
    %v5606 = vpop.f32.mrb[0].mxu0
    %v5607 = vpop.f32.mrb[0].mxu0
    %v5608 = vadd.f32 0.0, %v5607
    %v5609 = vpop.f32.mrb[0].mxu0
    %5610 = vdwg.mxu0
    %v5611 = vadd.f32 %v5338, %v5549
    %v5612 = vadd.f32 %v5339, %v5552
    %v5613 = vadd.f32 %v5340, %v5557
    %v5614 = vadd.f32 %v5341, %v5560
    %v5615 = vadd.f32 %v5342, %v5565
    %v5616 = vadd.f32 %v5343, %v5568
    %v5617 = vadd.f32 %v5344, %v5573
    %v5618 = vadd.f32 %v5345, %v5576
    %v5619 = vadd.f32 %v5346, %v5581
    %v5620 = vadd.f32 %v5347, %v5584
    %v5621 = vadd.f32 %v5348, %v5589
    %v5622 = vadd.f32 %v5349, %v5592
    %v5623 = vadd.f32 %v5350, %v5597
    %v5624 = vadd.f32 %v5351, %v5600
    %v5625 = vadd.f32 %v5352, %v5605
    %v5626 = vadd.f32 %v5353, %v5608
    %s5627 = smul.u32 %s2869, 16
    %s5628 = sadd.s32 %s5627, 256
    %s5629 = scalar_lea.vmem [#allocation2], %s5628
    %5630 = vst [vmem:[%s5629] sm:$0xff] %v5611
    %5631 = vst [vmem:[%s5629 + $0x8] sm:$0xff] %v5612
    %5632 = vst [vmem:[%s5629 + $0x10] sm:$0xff] %v5613
    %5633 = vst [vmem:[%s5629 + $0x18] sm:$0xff] %v5614
    %5634 = vst [vmem:[%s5629 + $0x20] sm:$0xff] %v5615
    %5635 = vst [vmem:[%s5629 + $0x28] sm:$0xff] %v5616
    %5636 = vst [vmem:[%s5629 + $0x30] sm:$0xff] %v5617
    %5637 = vst [vmem:[%s5629 + $0x38] sm:$0xff] %v5618
    %5638 = vst [vmem:[%s5629 + $0x40] sm:$0xff] %v5619
    %5639 = vst [vmem:[%s5629 + $0x48] sm:$0xff] %v5620
    %5640 = vst [vmem:[%s5629 + $0x50] sm:$0xff] %v5621
    %5641 = vst [vmem:[%s5629 + $0x58] sm:$0xff] %v5622
    %5642 = vst [vmem:[%s5629 + $0x60] sm:$0xff] %v5623
    %5643 = vst [vmem:[%s5629 + $0x68] sm:$0xff] %v5624
    %5644 = vst [vmem:[%s5629 + $0x70] sm:$0xff] %v5625
    %5645 = vst [vmem:[%s5629 + $0x78] sm:$0xff] %v5626
    %v5646 = vld [vmem:[#allocation3] sm:$0x1]
    %v5647 = vadd.f32 %v5611, %v5612
    %v5648 = vadd.f32 %v5647, %v5613
    %v5649 = vadd.f32 %v5648, %v5614
    %v5650 = vadd.f32 %v5649, %v5615
    %v5651 = vadd.f32 %v5650, %v5616
    %v5652 = vadd.f32 %v5651, %v5617
    %v5653 = vadd.f32 %v5652, %v5618
    %v5654 = vadd.f32 %v5653, %v5619
    %v5655 = vadd.f32 %v5654, %v5620
    %v5656 = vadd.f32 %v5655, %v5621
    %v5657 = vadd.f32 %v5656, %v5622
    %v5658 = vadd.f32 %v5657, %v5623
    %v5659 = vadd.f32 %v5658, %v5624
    %v5660 = vadd.f32 %v5659, %v5625
    %v5661 = vadd.f32 %v5660, %v5626
    %v5662 = vrot.slane %v5661, 4
    %v5663 = vadd.f32 %v5661, %v5662
    %v5664 = vrot.slane %v5663, 2
    %v5665 = vadd.f32 %v5663, %v5664
    %v5666 = vrot.slane %v5665, 1
    %v5667 = vadd.f32 %v5665, %v5666
    %v5668 = vadd.f32 %v5646, %v5667
    %5669 = vst [vmem:[#allocation3] sm:$0x1] %v5668
    %v5670 = vld [vmem:[#allocation4] sm:$0x1]
    %v5671 = vmul.f32 %v5611, %v5611
    %v5672 = vmul.f32 %v5612, %v5612
    %v5673 = vmul.f32 %v5613, %v5613
    %v5674 = vmul.f32 %v5614, %v5614
    %v5675 = vmul.f32 %v5615, %v5615
    %v5676 = vmul.f32 %v5616, %v5616
    %v5677 = vmul.f32 %v5617, %v5617
    %v5678 = vmul.f32 %v5618, %v5618
    %v5679 = vmul.f32 %v5619, %v5619
    %v5680 = vmul.f32 %v5620, %v5620
    %v5681 = vmul.f32 %v5621, %v5621
    %v5682 = vmul.f32 %v5622, %v5622
    %v5683 = vmul.f32 %v5623, %v5623
    %v5684 = vmul.f32 %v5624, %v5624
    %v5685 = vmul.f32 %v5625, %v5625
    %v5686 = vmul.f32 %v5626, %v5626
    %v5687 = vadd.f32 %v5671, %v5672
    %v5688 = vadd.f32 %v5687, %v5673
    %v5689 = vadd.f32 %v5688, %v5674
    %v5690 = vadd.f32 %v5689, %v5675
    %v5691 = vadd.f32 %v5690, %v5676
    %v5692 = vadd.f32 %v5691, %v5677
    %v5693 = vadd.f32 %v5692, %v5678
    %v5694 = vadd.f32 %v5693, %v5679
    %v5695 = vadd.f32 %v5694, %v5680
    %v5696 = vadd.f32 %v5695, %v5681
    %v5697 = vadd.f32 %v5696, %v5682
    %v5698 = vadd.f32 %v5697, %v5683
    %v5699 = vadd.f32 %v5698, %v5684
    %v5700 = vadd.f32 %v5699, %v5685
    %v5701 = vadd.f32 %v5700, %v5686
    %v5702 = vrot.slane %v5701, 4
    %v5703 = vadd.f32 %v5701, %v5702
    %v5704 = vrot.slane %v5703, 2
    %v5705 = vadd.f32 %v5703, %v5704
    %v5706 = vrot.slane %v5705, 1
    %v5707 = vadd.f32 %v5705, %v5706
    %v5708 = vadd.f32 %v5670, %v5707
    %5709 = vst [vmem:[#allocation4] sm:$0x1] %v5708
  $region29: #{restnet_basic_block_forward.2} parent=0 // loop_footer
    %s2868 = sadd.s32 1, %s2864
  $region30: #{restnet_basic_block_forward.2} parent=0 // loop_footer_branch
    %2863 = sbr.rel target = $region26
  $region31: #{restnet_basic_block_forward.2} parent=0 // loop_exit
    _
  %v5710 = vld [vmem:[#allocation3] sm:$0x1]
  %v5711 = vmul.f32 %v5710, 0.001953125
  %v5712 = vld [vmem:[#allocation4] sm:$0x1]
  %v5713 = vmul.f32 %v5712, 0.001953125
  %v5714 = vmul.f32 %v5711, %v5711
  %v5715 = vsub.f32 %v5713, %v5714
  %v5716 = vld [vmem:[%s2] sm:$0x1]
  %v5717 = vadd.f32 %v5715, 1e-05
  %v5718 = vrsqrt.pop %v5717
  %v5719 = vmul.f32 %v5716, %v5718
  %v5720 = vld [vmem:[%s3] sm:$0x1]
  %v5721 = vmul.f32 %v5711, %v5719
  %v5722 = vsub.f32 %v5720, %v5721
  loop: start=0, step=1, limit=2
  $region32: #{restnet_basic_block_forward.2} parent=0 // loop_pre_header
    _
  $region33: #{restnet_basic_block_forward.2} parent=0 // loop_header
    %s5724 = sphi 0, %s5728
    %p5725 = scmp.ge.s32.totalorder %s5724, 2
  $region34: #{restnet_basic_block_forward.2} parent=0 // loop_header_branch
    %5727 = sbr.rel (%p5725) target = $region38
  $region35: #{restnet_basic_block_forward.2} parent=0 // loop_body
    %s5729 = smul.u32 %s5724, 8
    %s5730 = smul.u32 %s5729, 16
    %s5731 = scalar_lea.vmem [#allocation2], %s5730
    %v5732 = vld [vmem:[%s5731] sm:$0xff]
    %v5733 = vld [vmem:[%s5731 + $0x8] sm:$0xff]
    %v5734 = vld [vmem:[%s5731 + $0x10] sm:$0xff]
    %v5735 = vld [vmem:[%s5731 + $0x18] sm:$0xff]
    %v5736 = vld [vmem:[%s5731 + $0x20] sm:$0xff]
    %v5737 = vld [vmem:[%s5731 + $0x28] sm:$0xff]
    %v5738 = vld [vmem:[%s5731 + $0x30] sm:$0xff]
    %v5739 = vld [vmem:[%s5731 + $0x38] sm:$0xff]
    %v5740 = vld [vmem:[%s5731 + $0x40] sm:$0xff]
    %v5741 = vld [vmem:[%s5731 + $0x48] sm:$0xff]
    %v5742 = vld [vmem:[%s5731 + $0x50] sm:$0xff]
    %v5743 = vld [vmem:[%s5731 + $0x58] sm:$0xff]
    %v5744 = vld [vmem:[%s5731 + $0x60] sm:$0xff]
    %v5745 = vld [vmem:[%s5731 + $0x68] sm:$0xff]
    %v5746 = vld [vmem:[%s5731 + $0x70] sm:$0xff]
    %v5747 = vld [vmem:[%s5731 + $0x78] sm:$0xff]
    %v5749 = vlaneseq
    %v5750 = vshrl.u32 %v5749, 7
    %v5751 = vsub.s32 0, %v5750
    %v5752 = vrot.slane %v5719, %v5751
    %v5754 = vmul.f32 %v5732, %v5752
    %v5755 = vmul.f32 %v5733, %v5752
    %v5756 = vmul.f32 %v5734, %v5752
    %v5757 = vmul.f32 %v5735, %v5752
    %v5758 = vmul.f32 %v5736, %v5752
    %v5759 = vmul.f32 %v5737, %v5752
    %v5760 = vmul.f32 %v5738, %v5752
    %v5761 = vmul.f32 %v5739, %v5752
    %v5762 = vmul.f32 %v5740, %v5752
    %v5763 = vmul.f32 %v5741, %v5752
    %v5764 = vmul.f32 %v5742, %v5752
    %v5765 = vmul.f32 %v5743, %v5752
    %v5766 = vmul.f32 %v5744, %v5752
    %v5767 = vmul.f32 %v5745, %v5752
    %v5768 = vmul.f32 %v5746, %v5752
    %v5769 = vmul.f32 %v5747, %v5752
    %v5771 = vlaneseq
    %v5772 = vshrl.u32 %v5771, 7
    %v5773 = vsub.s32 0, %v5772
    %v5774 = vrot.slane %v5722, %v5773
    %v5776 = vadd.f32 %v5754, %v5774
    %v5777 = vadd.f32 %v5755, %v5774
    %v5778 = vadd.f32 %v5756, %v5774
    %v5779 = vadd.f32 %v5757, %v5774
    %v5780 = vadd.f32 %v5758, %v5774
    %v5781 = vadd.f32 %v5759, %v5774
    %v5782 = vadd.f32 %v5760, %v5774
    %v5783 = vadd.f32 %v5761, %v5774
    %v5784 = vadd.f32 %v5762, %v5774
    %v5785 = vadd.f32 %v5763, %v5774
    %v5786 = vadd.f32 %v5764, %v5774
    %v5787 = vadd.f32 %v5765, %v5774
    %v5788 = vadd.f32 %v5766, %v5774
    %v5789 = vadd.f32 %v5767, %v5774
    %v5790 = vadd.f32 %v5768, %v5774
    %v5791 = vadd.f32 %v5769, %v5774
    %v5792 = vmax.f32 %v5776, 0.0
    %v5793 = vmax.f32 %v5777, 0.0
    %v5794 = vmax.f32 %v5778, 0.0
    %v5795 = vmax.f32 %v5779, 0.0
    %v5796 = vmax.f32 %v5780, 0.0
    %v5797 = vmax.f32 %v5781, 0.0
    %v5798 = vmax.f32 %v5782, 0.0
    %v5799 = vmax.f32 %v5783, 0.0
    %v5800 = vmax.f32 %v5784, 0.0
    %v5801 = vmax.f32 %v5785, 0.0
    %v5802 = vmax.f32 %v5786, 0.0
    %v5803 = vmax.f32 %v5787, 0.0
    %v5804 = vmax.f32 %v5788, 0.0
    %v5805 = vmax.f32 %v5789, 0.0
    %v5806 = vmax.f32 %v5790, 0.0
    %v5807 = vmax.f32 %v5791, 0.0
    %v5808 = vpack.c.bf16 %v5793, %v5792
    %v5809 = vpack.c.bf16 %v5795, %v5794
    %v5810 = vpack.c.bf16 %v5797, %v5796
    %v5811 = vpack.c.bf16 %v5799, %v5798
    %v5812 = vpack.c.bf16 %v5801, %v5800
    %v5813 = vpack.c.bf16 %v5803, %v5802
    %v5814 = vpack.c.bf16 %v5805, %v5804
    %v5815 = vpack.c.bf16 %v5807, %v5806
    %v5824 = vunpack.c.l.b16 %v5808
    %v5825 = vunpack.c.h.b16 %v5808
    %v5826 = vunpack.c.l.b16 %v5809
    %v5827 = vunpack.c.h.b16 %v5809
    %v5828 = vunpack.c.l.b16 %v5810
    %v5829 = vunpack.c.h.b16 %v5810
    %v5830 = vunpack.c.l.b16 %v5811
    %v5831 = vunpack.c.h.b16 %v5811
    %v5832 = vunpack.c.l.b16 %v5812
    %v5833 = vunpack.c.h.b16 %v5812
    %v5834 = vunpack.c.l.b16 %v5813
    %v5835 = vunpack.c.h.b16 %v5813
    %v5836 = vunpack.c.l.b16 %v5814
    %v5837 = vunpack.c.h.b16 %v5814
    %v5838 = vunpack.c.l.b16 %v5815
    %v5839 = vunpack.c.h.b16 %v5815
    %v5840 = vpack.c.b16 %v5824, %v5824
    %v5841 = vpack.c.b16 %v5825, %v5825
    %v5842 = vpack.c.b16 %v5826, %v5826
    %v5843 = vpack.c.b16 %v5827, %v5827
    %v5844 = vpack.c.b16 %v5828, %v5828
    %v5845 = vpack.c.b16 %v5829, %v5829
    %v5846 = vpack.c.b16 %v5830, %v5830
    %v5847 = vpack.c.b16 %v5831, %v5831
    %v5848 = vpack.c.b16 %v5832, %v5832
    %v5849 = vpack.c.b16 %v5833, %v5833
    %v5850 = vpack.c.b16 %v5834, %v5834
    %v5851 = vpack.c.b16 %v5835, %v5835
    %v5852 = vpack.c.b16 %v5836, %v5836
    %v5853 = vpack.c.b16 %v5837, %v5837
    %v5854 = vpack.c.b16 %v5838, %v5838
    %v5855 = vpack.c.b16 %v5839, %v5839
    %s5872 = smul.u32 %s5729, 2
    %s5873 = smul.addr %s5872, 4
    %s5874 = scalar_lea.vmem %s4, %s5873
    %5875 = vst [vmem:[%s5874] sm:$0xf] %v5840
    %5876 = vst [vmem:[%s5874 + $0x4] sm:$0xf] %v5841
    %5877 = vst [vmem:[%s5874 + $0x8] sm:$0xf] %v5842
    %5878 = vst [vmem:[%s5874 + $0xc] sm:$0xf] %v5843
    %5879 = vst [vmem:[%s5874 + $0x10] sm:$0xf] %v5844
    %5880 = vst [vmem:[%s5874 + $0x14] sm:$0xf] %v5845
    %5881 = vst [vmem:[%s5874 + $0x18] sm:$0xf] %v5846
    %5882 = vst [vmem:[%s5874 + $0x1c] sm:$0xf] %v5847
    %5883 = vst [vmem:[%s5874 + $0x20] sm:$0xf] %v5848
    %5884 = vst [vmem:[%s5874 + $0x24] sm:$0xf] %v5849
    %5885 = vst [vmem:[%s5874 + $0x28] sm:$0xf] %v5850
    %5886 = vst [vmem:[%s5874 + $0x2c] sm:$0xf] %v5851
    %5887 = vst [vmem:[%s5874 + $0x30] sm:$0xf] %v5852
    %5888 = vst [vmem:[%s5874 + $0x34] sm:$0xf] %v5853
    %5889 = vst [vmem:[%s5874 + $0x38] sm:$0xf] %v5854
    %5890 = vst [vmem:[%s5874 + $0x3c] sm:$0xf] %v5855
  $region36: #{restnet_basic_block_forward.2} parent=0 // loop_footer
    %s5728 = sadd.s32 1, %s5724
  $region37: #{restnet_basic_block_forward.2} parent=0 // loop_footer_branch
    %5723 = sbr.rel target = $region33
  $region38: #{restnet_basic_block_forward.2} parent=0 // loop_exit
    _
  loop: start=0, step=1, limit=2
  $region39: #{restnet_basic_block_forward.2} parent=0 // loop_pre_header
    _
  $region40: #{restnet_basic_block_forward.2} parent=0 // loop_header
    %s5892 = sphi 0, %s5896
    %p5893 = scmp.ge.s32.totalorder %s5892, 2
  $region41: #{restnet_basic_block_forward.2} parent=0 // loop_header_branch
    %5895 = sbr.rel (%p5893) target = $region45
  $region42: #{restnet_basic_block_forward.2} parent=0 // loop_body
    %s5897 = smul.u32 %s5892, 8
    %s5898 = smul.u32 %s5897, 16
    %s5899 = sadd.s32 %s5898, 256
    %s5900 = scalar_lea.vmem [#allocation2], %s5899
    %v5901 = vld [vmem:[%s5900] sm:$0xff]
    %v5902 = vld [vmem:[%s5900 + $0x8] sm:$0xff]
    %v5903 = vld [vmem:[%s5900 + $0x10] sm:$0xff]
    %v5904 = vld [vmem:[%s5900 + $0x18] sm:$0xff]
    %v5905 = vld [vmem:[%s5900 + $0x20] sm:$0xff]
    %v5906 = vld [vmem:[%s5900 + $0x28] sm:$0xff]
    %v5907 = vld [vmem:[%s5900 + $0x30] sm:$0xff]
    %v5908 = vld [vmem:[%s5900 + $0x38] sm:$0xff]
    %v5909 = vld [vmem:[%s5900 + $0x40] sm:$0xff]
    %v5910 = vld [vmem:[%s5900 + $0x48] sm:$0xff]
    %v5911 = vld [vmem:[%s5900 + $0x50] sm:$0xff]
    %v5912 = vld [vmem:[%s5900 + $0x58] sm:$0xff]
    %v5913 = vld [vmem:[%s5900 + $0x60] sm:$0xff]
    %v5914 = vld [vmem:[%s5900 + $0x68] sm:$0xff]
    %v5915 = vld [vmem:[%s5900 + $0x70] sm:$0xff]
    %v5916 = vld [vmem:[%s5900 + $0x78] sm:$0xff]
    %v5918 = vlaneseq
    %v5919 = vshrl.u32 %v5918, 7
    %v5920 = vsub.s32 0, %v5919
    %v5921 = vrot.slane %v5719, %v5920
    %v5923 = vmul.f32 %v5901, %v5921
    %v5924 = vmul.f32 %v5902, %v5921
    %v5925 = vmul.f32 %v5903, %v5921
    %v5926 = vmul.f32 %v5904, %v5921
    %v5927 = vmul.f32 %v5905, %v5921
    %v5928 = vmul.f32 %v5906, %v5921
    %v5929 = vmul.f32 %v5907, %v5921
    %v5930 = vmul.f32 %v5908, %v5921
    %v5931 = vmul.f32 %v5909, %v5921
    %v5932 = vmul.f32 %v5910, %v5921
    %v5933 = vmul.f32 %v5911, %v5921
    %v5934 = vmul.f32 %v5912, %v5921
    %v5935 = vmul.f32 %v5913, %v5921
    %v5936 = vmul.f32 %v5914, %v5921
    %v5937 = vmul.f32 %v5915, %v5921
    %v5938 = vmul.f32 %v5916, %v5921
    %v5940 = vlaneseq
    %v5941 = vshrl.u32 %v5940, 7
    %v5942 = vsub.s32 0, %v5941
    %v5943 = vrot.slane %v5722, %v5942
    %v5945 = vadd.f32 %v5923, %v5943
    %v5946 = vadd.f32 %v5924, %v5943
    %v5947 = vadd.f32 %v5925, %v5943
    %v5948 = vadd.f32 %v5926, %v5943
    %v5949 = vadd.f32 %v5927, %v5943
    %v5950 = vadd.f32 %v5928, %v5943
    %v5951 = vadd.f32 %v5929, %v5943
    %v5952 = vadd.f32 %v5930, %v5943
    %v5953 = vadd.f32 %v5931, %v5943
    %v5954 = vadd.f32 %v5932, %v5943
    %v5955 = vadd.f32 %v5933, %v5943
    %v5956 = vadd.f32 %v5934, %v5943
    %v5957 = vadd.f32 %v5935, %v5943
    %v5958 = vadd.f32 %v5936, %v5943
    %v5959 = vadd.f32 %v5937, %v5943
    %v5960 = vadd.f32 %v5938, %v5943
    %v5961 = vmax.f32 %v5945, 0.0
    %v5962 = vmax.f32 %v5946, 0.0
    %v5963 = vmax.f32 %v5947, 0.0
    %v5964 = vmax.f32 %v5948, 0.0
    %v5965 = vmax.f32 %v5949, 0.0
    %v5966 = vmax.f32 %v5950, 0.0
    %v5967 = vmax.f32 %v5951, 0.0
    %v5968 = vmax.f32 %v5952, 0.0
    %v5969 = vmax.f32 %v5953, 0.0
    %v5970 = vmax.f32 %v5954, 0.0
    %v5971 = vmax.f32 %v5955, 0.0
    %v5972 = vmax.f32 %v5956, 0.0
    %v5973 = vmax.f32 %v5957, 0.0
    %v5974 = vmax.f32 %v5958, 0.0
    %v5975 = vmax.f32 %v5959, 0.0
    %v5976 = vmax.f32 %v5960, 0.0
    %v5977 = vpack.c.bf16 %v5962, %v5961
    %v5978 = vpack.c.bf16 %v5964, %v5963
    %v5979 = vpack.c.bf16 %v5966, %v5965
    %v5980 = vpack.c.bf16 %v5968, %v5967
    %v5981 = vpack.c.bf16 %v5970, %v5969
    %v5982 = vpack.c.bf16 %v5972, %v5971
    %v5983 = vpack.c.bf16 %v5974, %v5973
    %v5984 = vpack.c.bf16 %v5976, %v5975
    %v5993 = vunpack.c.l.b16 %v5977
    %v5994 = vunpack.c.h.b16 %v5977
    %v5995 = vunpack.c.l.b16 %v5978
    %v5996 = vunpack.c.h.b16 %v5978
    %v5997 = vunpack.c.l.b16 %v5979
    %v5998 = vunpack.c.h.b16 %v5979
    %v5999 = vunpack.c.l.b16 %v5980
    %v6000 = vunpack.c.h.b16 %v5980
    %v6001 = vunpack.c.l.b16 %v5981
    %v6002 = vunpack.c.h.b16 %v5981
    %v6003 = vunpack.c.l.b16 %v5982
    %v6004 = vunpack.c.h.b16 %v5982
    %v6005 = vunpack.c.l.b16 %v5983
    %v6006 = vunpack.c.h.b16 %v5983
    %v6007 = vunpack.c.l.b16 %v5984
    %v6008 = vunpack.c.h.b16 %v5984
    %v6009 = vpack.c.b16 %v5993, %v5993
    %v6010 = vpack.c.b16 %v5994, %v5994
    %v6011 = vpack.c.b16 %v5995, %v5995
    %v6012 = vpack.c.b16 %v5996, %v5996
    %v6013 = vpack.c.b16 %v5997, %v5997
    %v6014 = vpack.c.b16 %v5998, %v5998
    %v6015 = vpack.c.b16 %v5999, %v5999
    %v6016 = vpack.c.b16 %v6000, %v6000
    %v6017 = vpack.c.b16 %v6001, %v6001
    %v6018 = vpack.c.b16 %v6002, %v6002
    %v6019 = vpack.c.b16 %v6003, %v6003
    %v6020 = vpack.c.b16 %v6004, %v6004
    %v6021 = vpack.c.b16 %v6005, %v6005
    %v6022 = vpack.c.b16 %v6006, %v6006
    %v6023 = vpack.c.b16 %v6007, %v6007
    %v6024 = vpack.c.b16 %v6008, %v6008
    %s6041 = smul.u32 %s5897, 2
    %s6042 = sadd.s32 %s6041, 32
    %s6043 = smul.addr %s6042, 4
    %s6044 = scalar_lea.vmem %s4, %s6043
    %6045 = vst [vmem:[%s6044] sm:$0xf] %v6009
    %6046 = vst [vmem:[%s6044 + $0x4] sm:$0xf] %v6010
    %6047 = vst [vmem:[%s6044 + $0x8] sm:$0xf] %v6011
    %6048 = vst [vmem:[%s6044 + $0xc] sm:$0xf] %v6012
    %6049 = vst [vmem:[%s6044 + $0x10] sm:$0xf] %v6013
    %6050 = vst [vmem:[%s6044 + $0x14] sm:$0xf] %v6014
    %6051 = vst [vmem:[%s6044 + $0x18] sm:$0xf] %v6015
    %6052 = vst [vmem:[%s6044 + $0x1c] sm:$0xf] %v6016
    %6053 = vst [vmem:[%s6044 + $0x20] sm:$0xf] %v6017
    %6054 = vst [vmem:[%s6044 + $0x24] sm:$0xf] %v6018
    %6055 = vst [vmem:[%s6044 + $0x28] sm:$0xf] %v6019
    %6056 = vst [vmem:[%s6044 + $0x2c] sm:$0xf] %v6020
    %6057 = vst [vmem:[%s6044 + $0x30] sm:$0xf] %v6021
    %6058 = vst [vmem:[%s6044 + $0x34] sm:$0xf] %v6022
    %6059 = vst [vmem:[%s6044 + $0x38] sm:$0xf] %v6023
    %6060 = vst [vmem:[%s6044 + $0x3c] sm:$0xf] %v6024
  $region43: #{restnet_basic_block_forward.2} parent=0 // loop_footer
    %s5896 = sadd.s32 1, %s5892
  $region44: #{restnet_basic_block_forward.2} parent=0 // loop_footer_branch
    %5891 = sbr.rel target = $region40
  $region45: #{restnet_basic_block_forward.2} parent=0 // loop_exit
    _
  // Predicated region
  $region46: #{restnet_basic_block_forward.2} parent=0 // pred_check
    _
  $region47: #{restnet_basic_block_forward.2} parent=0 // pred_check_branch
    %6062 = sbr.rel (0) target = $region49
  $region48: #{restnet_basic_block_forward.2} parent=0 // pred_region
    _
  $region49: #{restnet_basic_block_forward.2} parent=0 // pred_fallthru
    _
  // Predicated region
  $region50: #{restnet_basic_block_forward.2} parent=0 // pred_check
    _
  $region51: #{restnet_basic_block_forward.2} parent=0 // pred_check_branch
    %6064 = sbr.rel (0) target = $region53
  $region52: #{restnet_basic_block_forward.2} parent=0 // pred_region
    _
  $region53: #{restnet_basic_block_forward.2} parent=0 // pred_fallthru
    _

</llo_original>
